<compile_context>
chip_gen: v5e
topology: v5e:2x2
jax: 0.10.0
libtpu: 0.0.40
codegen_flags: <defaults>
</compile_context>

<pallas_src>
import jax
import jax.numpy as jnp
from jax.experimental import pallas as pl
from jax.experimental.pallas import tpu as pltpu

LANES = 128          # padded channel / feature width (lane-dense everywhere)
NUM_CLASSES = 10


# ---------------------------------------------------------------------------
# Fused Pallas kernel: conv1+pool+relu -> conv2+pool+relu -> fc1+relu -> fc2
#                      -> log_softmax, all in VMEM.
# ---------------------------------------------------------------------------
def _fused_net_kernel(patch_ref, w1_ref, b1_ref, w2_ref, b2_ref,
                      wf1_ref, bf1_ref, wf2_ref, bf2_ref,
                      o_ref,
                      c1h_scr, p1_scr, c2h_scr):
    """Whole forward pass for one (small) batch.

    patch_ref : [N*24*24, 128] conv1 im2col patches (first 25 cols real)
    w1_ref    : [128, 128]     conv1 weight, rows = kh*5+kw, cols = out-ch
    w2_ref    : [5,5,128,128]  conv2 weight per (kh,kw): [in-ch, out-ch]
    wf1_ref   : [4,4,128,128]  fc1 weight per (h,w):     [in-ch, out]
    wf2_ref   : [128, 128]     fc2 weight
    b*_ref    : [1, 128]       zero-padded biases
    o_ref     : [N, 128]       log-softmax output (first 10 cols real)
    """
    N = o_ref.shape[0]
    C = LANES
    f32 = jnp.float32

    # ---- conv1 + bias + relu (relu commutes with the max-pool below) -------
    a1 = jnp.dot(patch_ref[...], w1_ref[...], preferred_element_type=f32)
    a1 = jnp.maximum(a1 + b1_ref[...], 0.0)                      # [N*576, C]

    # ---- max-pool 2x2: 24x24 -> 12x12 ---------------------------------------
    # Row pool: aligned sublane regrouping (free) + elementwise max.
    a1 = a1.reshape(N * 12, 2, 24, C)
    c1h_scr[...] = jnp.maximum(a1[:, 0, :, :], a1[:, 1, :, :])   # [N*12, 24, C]
    # Column pool: stride-2 sublane reads from VMEM scratch.
    p1 = jnp.maximum(c1h_scr[:, pl.ds(0, 12, 2), :],
                     c1h_scr[:, pl.ds(1, 12, 2), :])             # [N*12, 12, C]
    p1_scr[...] = p1.reshape(N, 12, 12, C)

    # ---- conv2 as 25 shifted, channel-dense MXU matmuls ---------------------
    acc2 = jnp.zeros((N * 64, C), f32)
    for kh in range(5):
        for kw in range(5):
            win = p1_scr[:, kh:kh + 8, kw:kw + 8, :].reshape(N * 64, C)
            acc2 = acc2 + jnp.dot(win, w2_ref[kh, kw],
                                  preferred_element_type=f32)
    # TODO(synk): Dropout2d train-mode channel mask not implemented (eval identity).
    a2 = jnp.maximum(acc2 + b2_ref[...], 0.0)                    # [N*64, C]

    # ---- max-pool 2x2: 8x8 -> 4x4 (row pool here; column pool fused in fc1) -
    a2 = a2.reshape(N * 4, 2, 8, C)
    c2h_scr[...] = jnp.maximum(a2[:, 0, :, :],
                               a2[:, 1, :, :]).reshape(N, 4, 8, C)

    # ---- fc1 + relu: flatten folded into per-position [128,128] weights -----
    hid = jnp.zeros((N, C), f32)
    for h in range(4):
        for w in range(4):
            xi = jnp.maximum(c2h_scr[:, h, 2 * w, :],
                             c2h_scr[:, h, 2 * w + 1, :])        # [N, C]
            hid = hid + jnp.dot(xi, wf1_ref[h, w], preferred_element_type=f32)
    hid = jnp.maximum(hid + bf1_ref[...], 0.0)
    # TODO(synk): F.dropout train-mode mask not implemented (eval identity).

    # ---- fc2 + log_softmax over the 10 real classes -------------------------
    logits = jnp.dot(hid, wf2_ref[...], preferred_element_type=f32) + bf2_ref[...]
    col = jax.lax.broadcasted_iota(jnp.int32, (N, C), 1)
    masked = jnp.where(col < NUM_CLASSES, logits, -1e30)
    m = jnp.max(masked, axis=-1, keepdims=True)
    s = masked - m
    lse = jnp.log(jnp.sum(jnp.exp(s), axis=-1, keepdims=True))
    o_ref[...] = (s - lse).astype(o_ref.dtype)


# ---------------------------------------------------------------------------
# Wrapper: input prep (tiny conv1 im2col) + the single fused pallas_call
# ---------------------------------------------------------------------------
def _conv1_patches(x):
    """x: [N,1,28,28] -> im2col patches [N*24*24, 128] (cols = kh*5+kw, 0-pad)."""
    N = x.shape[0]
    cols = [x[:, 0, kh:kh + 24, kw:kw + 24] for kh in range(5) for kw in range(5)]
    p = jnp.stack(cols, axis=-1).reshape(N * 24 * 24, 25)
    return jnp.pad(p, ((0, 0), (0, LANES - 25)))


def net_forward(kparams, x):
    """x: [N,1,28,28] float32 -> log-probs [N,10]. One fused Pallas kernel.

    Designed for small batches (single VMEM-resident block). For large N a
    batch grid over row tiles would be added; N=2 needs none.
    """
    N = x.shape[0]
    patches = _conv1_patches(x.astype(jnp.float32))
    out = pl.pallas_call(
        _fused_net_kernel,
        out_shape=jax.ShapeDtypeStruct((N, LANES), jnp.float32),
        scratch_shapes=[
            pltpu.VMEM((N * 12, 24, LANES), jnp.float32),   # conv1 row-pooled
            pltpu.VMEM((N, 12, 12, LANES), jnp.float32),    # conv1 pooled (conv2 in)
            pltpu.VMEM((N, 4, 8, LANES), jnp.float32),      # conv2 row-pooled
        ],
        compiler_params=pltpu.CompilerParams(
            vmem_limit_bytes=32 * 1024 * 1024),
    )(patches, kparams["w1"], kparams["b1"], kparams["w2"], kparams["b2"],
      kparams["wf1"], kparams["bf1"], kparams["wf2"], kparams["bf2"])
    return out[:, :NUM_CLASSES]


# ---------------------------------------------------------------------------
# Parameter handling (PyTorch layout -> lane-dense padded kernel tensors)
# ---------------------------------------------------------------------------
def init_params(key):
    """Deterministic PyTorch-like init, stored in PyTorch layouts."""
    def uni(k, shape, fan_in):
        bound = 1.0 / jnp.sqrt(float(fan_in))
        return jax.random.uniform(k, shape, jnp.float32, -bound, bound)

    ks = jax.random.split(key, 8)
    return {
        "conv1_w": uni(ks[0], (10, 1, 5, 5), 25),
        "conv1_b": uni(ks[1], (10,), 25),
        "conv2_w": uni(ks[2], (20, 10, 5, 5), 250),
        "conv2_b": uni(ks[3], (20,), 250),
        "fc1_w": uni(ks[4], (50, 320), 320),   # torch Linear: [out, in]
        "fc1_b": uni(ks[5], (50,), 320),
        "fc2_w": uni(ks[6], (10, 50), 50),
        "fc2_b": uni(ks[7], (10,), 50),
    }


def prepare_params(params):
    """Zero-pad / re-lay out params once into 128-lane kernel tensors."""
    f32 = jnp.float32
    w1 = params["conv1_w"].reshape(10, 25).T                         # [25, 10]
    w1p = jnp.zeros((LANES, LANES), f32).at[:25, :10].set(w1)
    b1p = jnp.zeros((1, LANES), f32).at[0, :10].set(params["conv1_b"])

    w2 = params["conv2_w"].transpose(2, 3, 1, 0)                     # [5,5,10,20]
    w2p = jnp.zeros((5, 5, LANES, LANES), f32).at[:, :, :10, :20].set(w2)
    b2p = jnp.zeros((1, LANES), f32).at[0, :20].set(params["conv2_b"])

    # torch flatten order: feature f = c*16 + h*4 + w  ->  wf1[h, w, c, j]
    wf1 = params["fc1_w"].reshape(50, 20, 4, 4).transpose(2, 3, 1, 0)  # [4,4,20,50]
    wf1p = jnp.zeros((4, 4, LANES, LANES), f32).at[:, :, :20, :50].set(wf1)
    bf1p = jnp.zeros((1, LANES), f32).at[0, :50].set(params["fc1_b"])

    wf2 = params["fc2_w"].T                                          # [50, 10]
    wf2p = jnp.zeros((LANES, LANES), f32).at[:50, :10].set(wf2)
    bf2p = jnp.zeros((1, LANES), f32).at[0, :10].set(params["fc2_b"])

    return dict(w1=w1p, b1=b1p, w2=w2p, b2=b2p,
                wf1=wf1p, bf1=bf1p, wf2=wf2p, bf2=bf2p)


# ---------------------------------------------------------------------------
# Pure-XLA reference (eval-mode semantics) for a numerical sanity check
# ---------------------------------------------------------------------------
def reference_forward(params, x):
    def conv(x, w, b):
        y = jax.lax.conv_general_dilated(
            x, w, window_strides=(1, 1), padding="VALID",
            dimension_numbers=("NCHW", "OIHW", "NCHW"))
        return y + b[None, :, None, None]

    def pool2(x):
        return jax.lax.reduce_window(x, -jnp.inf, jax.lax.max,
                                     (1, 1, 2, 2), (1, 1, 2, 2), "VALID")

    x = jax.nn.relu(pool2(conv(x, params["conv1_w"], params["conv1_b"])))
    x = jax.nn.relu(pool2(conv(x, params["conv2_w"], params["conv2_b"])))
    x = x.reshape(x.shape[0], 320)
    x = jax.nn.relu(x @ params["fc1_w"].T + params["fc1_b"])
    x = x @ params["fc2_w"].T + params["fc2_b"]
    return jax.nn.log_softmax(x, axis=-1)


# ---------------------------------------------------------------------------
if __name__ == "__main__":
    key = jax.random.PRNGKey(0)
    pkey, xkey = jax.random.split(key)
    params = init_params(pkey)
    kparams = prepare_params(params)

    # MNIST-shaped input implied by the module (320 = 20*4*4 after two conv5+pool2)
    x = jax.random.normal(xkey, (2, 1, 28, 28), dtype=jnp.float32)

    out = jax.jit(net_forward)(kparams, x)
    out = jax.block_until_ready(out)

    assert out.shape == (2, NUM_CLASSES), out.shape
    probs_sum = jnp.exp(out).sum(axis=1)
    assert jnp.allclose(probs_sum, 1.0, atol=1e-4), probs_sum

    ref = reference_forward(params, x)
    assert jnp.allclose(out, ref, atol=1e-2, rtol=1e-2), jnp.max(jnp.abs(out - ref))

    print("KERNEL_OK")
</pallas_src>

<mosaic_0001>
module attributes {stable_mosaic.version = 11 : i64} {
  func.func @_fused_net_kernel(%arg0: memref<1152x128xf32, #tpu.memory_space<vmem>>, %arg1: memref<128x128xf32, #tpu.memory_space<vmem>>, %arg2: memref<1x128xf32, #tpu.memory_space<vmem>>, %arg3: memref<5x5x128x128xf32, #tpu.memory_space<vmem>>, %arg4: memref<1x128xf32, #tpu.memory_space<vmem>>, %arg5: memref<4x4x128x128xf32, #tpu.memory_space<vmem>>, %arg6: memref<1x128xf32, #tpu.memory_space<vmem>>, %arg7: memref<128x128xf32, #tpu.memory_space<vmem>>, %arg8: memref<1x128xf32, #tpu.memory_space<vmem>>, %arg9: memref<2x128xf32, #tpu.memory_space<vmem>>, %arg10: memref<24x24x128xf32, #tpu.memory_space<vmem>>, %arg11: memref<2x12x12x128xf32, #tpu.memory_space<vmem>>, %arg12: memref<2x4x8x128xf32, #tpu.memory_space<vmem>>) attributes {dimension_semantics = [], scalar_prefetch = 0 : i64, scratch_operands = 3 : i64, tpu.core_type = #tpu.core_type<tc>} {
    %c0 = arith.constant 0 : index
    %c0_0 = arith.constant 0 : index
    %0 = vector.load %arg0[%c0, %c0_0] : memref<1152x128xf32, #tpu.memory_space<vmem>>, vector<1152x128xf32>
    %c0_1 = arith.constant 0 : index
    %c0_2 = arith.constant 0 : index
    %1 = vector.load %arg1[%c0_1, %c0_2] : memref<128x128xf32, #tpu.memory_space<vmem>>, vector<128x128xf32>
    %cst = arith.constant dense<0.000000e+00> : vector<1152x128xf32>
    %2 = tpu.matmul %0, %1, %cst {dimension_numbers = #tpu.dot_dimension_numbers<[1], [0], [0], [1], [0, 0, 1, 1], [], []>} : vector<1152x128xf32>, vector<128x128xf32>, vector<1152x128xf32> -> vector<1152x128xf32>
    %c0_3 = arith.constant 0 : index
    %c0_4 = arith.constant 0 : index
    %3 = vector.load %arg2[%c0_3, %c0_4] : memref<1x128xf32, #tpu.memory_space<vmem>>, vector<1x128xf32>
    %4 = vector.broadcast %3 : vector<1x128xf32> to vector<1152x128xf32>
    %5 = arith.addf %2, %4 : vector<1152x128xf32>
    %cst_5 = arith.constant 0.000000e+00 : f32
    %6 = vector.broadcast %cst_5 : f32 to vector<1152x128xf32>
    %7 = arith.maximumf %5, %6 : vector<1152x128xf32>
    %8 = vector.shape_cast %7 : vector<1152x128xf32> to vector<24x2x24x128xf32>
    %9 = vector.extract_strided_slice %8 {offsets = [0, 0, 0, 0], sizes = [24, 1, 24, 128], strides = [1, 1, 1, 1]} : vector<24x2x24x128xf32> to vector<24x1x24x128xf32>
    %10 = vector.shape_cast %9 : vector<24x1x24x128xf32> to vector<24x24x128xf32>
    %11 = vector.extract_strided_slice %8 {offsets = [0, 1, 0, 0], sizes = [24, 1, 24, 128], strides = [1, 1, 1, 1]} : vector<24x2x24x128xf32> to vector<24x1x24x128xf32>
    %12 = vector.shape_cast %11 : vector<24x1x24x128xf32> to vector<24x24x128xf32>
    %13 = arith.maximumf %10, %12 : vector<24x24x128xf32>
    %c0_6 = arith.constant 0 : index
    %c0_7 = arith.constant 0 : index
    %c0_8 = arith.constant 0 : index
    %14 = vector.load %arg10[%c0_6, %c0_7, %c0_8] : memref<24x24x128xf32, #tpu.memory_space<vmem>>, vector<24x24x128xf32>
    tpu.vector_store %arg10[%c0_6, %c0_7, %c0_8], %13 {strides = array<i32>} : memref<24x24x128xf32, #tpu.memory_space<vmem>>, vector<24x24x128xf32>,
    %c0_9 = arith.constant 0 : index
    %c0_10 = arith.constant 0 : index
    %c0_11 = arith.constant 0 : index
    %15 = tpu.strided_load %arg10[%c0_9, %c0_10, %c0_11] {strides = array<i32: 1, 2, 1>} : memref<24x24x128xf32, #tpu.memory_space<vmem>>, vector<24x12x128xf32>
    %c0_12 = arith.constant 0 : index
    %c1 = arith.constant 1 : index
    %c0_13 = arith.constant 0 : index
    %16 = tpu.strided_load %arg10[%c0_12, %c1, %c0_13] {strides = array<i32: 1, 2, 1>} : memref<24x24x128xf32, #tpu.memory_space<vmem>>, vector<24x12x128xf32>
    %17 = arith.maximumf %15, %16 : vector<24x12x128xf32>
    %18 = vector.shape_cast %17 : vector<24x12x128xf32> to vector<2x12x12x128xf32>
    %c0_14 = arith.constant 0 : index
    %c0_15 = arith.constant 0 : index
    %c0_16 = arith.constant 0 : index
    %c0_17 = arith.constant 0 : index
    %19 = vector.load %arg11[%c0_14, %c0_15, %c0_16, %c0_17] : memref<2x12x12x128xf32, #tpu.memory_space<vmem>>, vector<2x12x12x128xf32>
    tpu.vector_store %arg11[%c0_14, %c0_15, %c0_16, %c0_17], %18 {strides = array<i32>} : memref<2x12x12x128xf32, #tpu.memory_space<vmem>>, vector<2x12x12x128xf32>,
    %cst_18 = arith.constant 0.000000e+00 : f32
    %20 = vector.broadcast %cst_18 : f32 to vector<128x128xf32>
    %c0_19 = arith.constant 0 : index
    %c0_20 = arith.constant 0 : index
    %c0_21 = arith.constant 0 : index
    %c0_22 = arith.constant 0 : index
    %21 = vector.load %arg11[%c0_19, %c0_20, %c0_21, %c0_22] : memref<2x12x12x128xf32, #tpu.memory_space<vmem>>, vector<2x8x8x128xf32>
    %22 = vector.shape_cast %21 : vector<2x8x8x128xf32> to vector<128x128xf32>
    %c0_23 = arith.constant 0 : index
    %c0_24 = arith.constant 0 : index
    %c0_25 = arith.constant 0 : index
    %c0_26 = arith.constant 0 : index
    %23 = vector.load %arg3[%c0_23, %c0_24, %c0_25, %c0_26] : memref<5x5x128x128xf32, #tpu.memory_space<vmem>>, vector<1x1x128x128xf32>
    %24 = vector.shape_cast %23 : vector<1x1x128x128xf32> to vector<128x128xf32>
    %cst_27 = arith.constant dense<0.000000e+00> : vector<128x128xf32>
    %25 = tpu.matmul %22, %24, %cst_27 {dimension_numbers = #tpu.dot_dimension_numbers<[1], [0], [0], [1], [0, 0, 1, 1], [], []>} : vector<128x128xf32>, vector<128x128xf32>, vector<128x128xf32> -> vector<128x128xf32>
    %26 = arith.addf %20, %25 : vector<128x128xf32>
    %c0_28 = arith.constant 0 : index
    %c0_29 = arith.constant 0 : index
    %c1_30 = arith.constant 1 : index
    %c0_31 = arith.constant 0 : index
    %27 = vector.load %arg11[%c0_28, %c0_29, %c1_30, %c0_31] : memref<2x12x12x128xf32, #tpu.memory_space<vmem>>, vector<2x8x8x128xf32>
    %28 = vector.shape_cast %27 : vector<2x8x8x128xf32> to vector<128x128xf32>
    %c0_32 = arith.constant 0 : index
    %c1_33 = arith.constant 1 : index
    %c0_34 = arith.constant 0 : index
    %c0_35 = arith.constant 0 : index
    %29 = vector.load %arg3[%c0_32, %c1_33, %c0_34, %c0_35] : memref<5x5x128x128xf32, #tpu.memory_space<vmem>>, vector<1x1x128x128xf32>
    %30 = vector.shape_cast %29 : vector<1x1x128x128xf32> to vector<128x128xf32>
    %cst_36 = arith.constant dense<0.000000e+00> : vector<128x128xf32>
    %31 = tpu.matmul %28, %30, %cst_36 {dimension_numbers = #tpu.dot_dimension_numbers<[1], [0], [0], [1], [0, 0, 1, 1], [], []>} : vector<128x128xf32>, vector<128x128xf32>, vector<128x128xf32> -> vector<128x128xf32>
    %32 = arith.addf %26, %31 : vector<128x128xf32>
    %c0_37 = arith.constant 0 : index
    %c0_38 = arith.constant 0 : index
    %c2 = arith.constant 2 : index
    %c0_39 = arith.constant 0 : index
    %33 = vector.load %arg11[%c0_37, %c0_38, %c2, %c0_39] : memref<2x12x12x128xf32, #tpu.memory_space<vmem>>, vector<2x8x8x128xf32>
    %34 = vector.shape_cast %33 : vector<2x8x8x128xf32> to vector<128x128xf32>
    %c0_40 = arith.constant 0 : index
    %c2_41 = arith.constant 2 : index
    %c0_42 = arith.constant 0 : index
    %c0_43 = arith.constant 0 : index
    %35 = vector.load %arg3[%c0_40, %c2_41, %c0_42, %c0_43] : memref<5x5x128x128xf32, #tpu.memory_space<vmem>>, vector<1x1x128x128xf32>
    %36 = vector.shape_cast %35 : vector<1x1x128x128xf32> to vector<128x128xf32>
    %cst_44 = arith.constant dense<0.000000e+00> : vector<128x128xf32>
    %37 = tpu.matmul %34, %36, %cst_44 {dimension_numbers = #tpu.dot_dimension_numbers<[1], [0], [0], [1], [0, 0, 1, 1], [], []>} : vector<128x128xf32>, vector<128x128xf32>, vector<128x128xf32> -> vector<128x128xf32>
    %38 = arith.addf %32, %37 : vector<128x128xf32>
    %c0_45 = arith.constant 0 : index
    %c0_46 = arith.constant 0 : index
    %c3 = arith.constant 3 : index
    %c0_47 = arith.constant 0 : index
    %39 = vector.load %arg11[%c0_45, %c0_46, %c3, %c0_47] : memref<2x12x12x128xf32, #tpu.memory_space<vmem>>, vector<2x8x8x128xf32>
    %40 = vector.shape_cast %39 : vector<2x8x8x128xf32> to vector<128x128xf32>
    %c0_48 = arith.constant 0 : index
    %c3_49 = arith.constant 3 : index
    %c0_50 = arith.constant 0 : index
    %c0_51 = arith.constant 0 : index
    %41 = vector.load %arg3[%c0_48, %c3_49, %c0_50, %c0_51] : memref<5x5x128x128xf32, #tpu.memory_space<vmem>>, vector<1x1x128x128xf32>
    %42 = vector.shape_cast %41 : vector<1x1x128x128xf32> to vector<128x128xf32>
    %cst_52 = arith.constant dense<0.000000e+00> : vector<128x128xf32>
    %43 = tpu.matmul %40, %42, %cst_52 {dimension_numbers = #tpu.dot_dimension_numbers<[1], [0], [0], [1], [0, 0, 1, 1], [], []>} : vector<128x128xf32>, vector<128x128xf32>, vector<128x128xf32> -> vector<128x128xf32>
    %44 = arith.addf %38, %43 : vector<128x128xf32>
    %c0_53 = arith.constant 0 : index
    %c0_54 = arith.constant 0 : index
    %c4 = arith.constant 4 : index
    %c0_55 = arith.constant 0 : index
    %45 = vector.load %arg11[%c0_53, %c0_54, %c4, %c0_55] : memref<2x12x12x128xf32, #tpu.memory_space<vmem>>, vector<2x8x8x128xf32>
    %46 = vector.shape_cast %45 : vector<2x8x8x128xf32> to vector<128x128xf32>
    %c0_56 = arith.constant 0 : index
    %c4_57 = arith.constant 4 : index
    %c0_58 = arith.constant 0 : index
    %c0_59 = arith.constant 0 : index
    %47 = vector.load %arg3[%c0_56, %c4_57, %c0_58, %c0_59] : memref<5x5x128x128xf32, #tpu.memory_space<vmem>>, vector<1x1x128x128xf32>
    %48 = vector.shape_cast %47 : vector<1x1x128x128xf32> to vector<128x128xf32>
    %cst_60 = arith.constant dense<0.000000e+00> : vector<128x128xf32>
    %49 = tpu.matmul %46, %48, %cst_60 {dimension_numbers = #tpu.dot_dimension_numbers<[1], [0], [0], [1], [0, 0, 1, 1], [], []>} : vector<128x128xf32>, vector<128x128xf32>, vector<128x128xf32> -> vector<128x128xf32>
    %50 = arith.addf %44, %49 : vector<128x128xf32>
    %c0_61 = arith.constant 0 : index
    %c1_62 = arith.constant 1 : index
    %c0_63 = arith.constant 0 : index
    %c0_64 = arith.constant 0 : index
    %51 = vector.load %arg11[%c0_61, %c1_62, %c0_63, %c0_64] : memref<2x12x12x128xf32, #tpu.memory_space<vmem>>, vector<2x8x8x128xf32>
    %52 = vector.shape_cast %51 : vector<2x8x8x128xf32> to vector<128x128xf32>
    %c1_65 = arith.constant 1 : index
    %c0_66 = arith.constant 0 : index
    %c0_67 = arith.constant 0 : index
    %c0_68 = arith.constant 0 : index
    %53 = vector.load %arg3[%c1_65, %c0_66, %c0_67, %c0_68] : memref<5x5x128x128xf32, #tpu.memory_space<vmem>>, vector<1x1x128x128xf32>
    %54 = vector.shape_cast %53 : vector<1x1x128x128xf32> to vector<128x128xf32>
    %cst_69 = arith.constant dense<0.000000e+00> : vector<128x128xf32>
    %55 = tpu.matmul %52, %54, %cst_69 {dimension_numbers = #tpu.dot_dimension_numbers<[1], [0], [0], [1], [0, 0, 1, 1], [], []>} : vector<128x128xf32>, vector<128x128xf32>, vector<128x128xf32> -> vector<128x128xf32>
    %56 = arith.addf %50, %55 : vector<128x128xf32>
    %c0_70 = arith.constant 0 : index
    %c1_71 = arith.constant 1 : index
    %c1_72 = arith.constant 1 : index
    %c0_73 = arith.constant 0 : index
    %57 = vector.load %arg11[%c0_70, %c1_71, %c1_72, %c0_73] : memref<2x12x12x128xf32, #tpu.memory_space<vmem>>, vector<2x8x8x128xf32>
    %58 = vector.shape_cast %57 : vector<2x8x8x128xf32> to vector<128x128xf32>
    %c1_74 = arith.constant 1 : index
    %c1_75 = arith.constant 1 : index
    %c0_76 = arith.constant 0 : index
    %c0_77 = arith.constant 0 : index
    %59 = vector.load %arg3[%c1_74, %c1_75, %c0_76, %c0_77] : memref<5x5x128x128xf32, #tpu.memory_space<vmem>>, vector<1x1x128x128xf32>
    %60 = vector.shape_cast %59 : vector<1x1x128x128xf32> to vector<128x128xf32>
    %cst_78 = arith.constant dense<0.000000e+00> : vector<128x128xf32>
    %61 = tpu.matmul %58, %60, %cst_78 {dimension_numbers = #tpu.dot_dimension_numbers<[1], [0], [0], [1], [0, 0, 1, 1], [], []>} : vector<128x128xf32>, vector<128x128xf32>, vector<128x128xf32> -> vector<128x128xf32>
    %62 = arith.addf %56, %61 : vector<128x128xf32>
    %c0_79 = arith.constant 0 : index
    %c1_80 = arith.constant 1 : index
    %c2_81 = arith.constant 2 : index
    %c0_82 = arith.constant 0 : index
    %63 = vector.load %arg11[%c0_79, %c1_80, %c2_81, %c0_82] : memref<2x12x12x128xf32, #tpu.memory_space<vmem>>, vector<2x8x8x128xf32>
    %64 = vector.shape_cast %63 : vector<2x8x8x128xf32> to vector<128x128xf32>
    %c1_83 = arith.constant 1 : index
    %c2_84 = arith.constant 2 : index
    %c0_85 = arith.constant 0 : index
    %c0_86 = arith.constant 0 : index
    %65 = vector.load %arg3[%c1_83, %c2_84, %c0_85, %c0_86] : memref<5x5x128x128xf32, #tpu.memory_space<vmem>>, vector<1x1x128x128xf32>
    %66 = vector.shape_cast %65 : vector<1x1x128x128xf32> to vector<128x128xf32>
    %cst_87 = arith.constant dense<0.000000e+00> : vector<128x128xf32>
    %67 = tpu.matmul %64, %66, %cst_87 {dimension_numbers = #tpu.dot_dimension_numbers<[1], [0], [0], [1], [0, 0, 1, 1], [], []>} : vector<128x128xf32>, vector<128x128xf32>, vector<128x128xf32> -> vector<128x128xf32>
    %68 = arith.addf %62, %67 : vector<128x128xf32>
    %c0_88 = arith.constant 0 : index
    %c1_89 = arith.constant 1 : index
    %c3_90 = arith.constant 3 : index
    %c0_91 = arith.constant 0 : index
    %69 = vector.load %arg11[%c0_88, %c1_89, %c3_90, %c0_91] : memref<2x12x12x128xf32, #tpu.memory_space<vmem>>, vector<2x8x8x128xf32>
    %70 = vector.shape_cast %69 : vector<2x8x8x128xf32> to vector<128x128xf32>
    %c1_92 = arith.constant 1 : index
    %c3_93 = arith.constant 3 : index
    %c0_94 = arith.constant 0 : index
    %c0_95 = arith.constant 0 : index
    %71 = vector.load %arg3[%c1_92, %c3_93, %c0_94, %c0_95] : memref<5x5x128x128xf32, #tpu.memory_space<vmem>>, vector<1x1x128x128xf32>
    %72 = vector.shape_cast %71 : vector<1x1x128x128xf32> to vector<128x128xf32>
    %cst_96 = arith.constant dense<0.000000e+00> : vector<128x128xf32>
    %73 = tpu.matmul %70, %72, %cst_96 {dimension_numbers = #tpu.dot_dimension_numbers<[1], [0], [0], [1], [0, 0, 1, 1], [], []>} : vector<128x128xf32>, vector<128x128xf32>, vector<128x128xf32> -> vector<128x128xf32>
    %74 = arith.addf %68, %73 : vector<128x128xf32>
    %c0_97 = arith.constant 0 : index
    %c1_98 = arith.constant 1 : index
    %c4_99 = arith.constant 4 : index
    %c0_100 = arith.constant 0 : index
    %75 = vector.load %arg11[%c0_97, %c1_98, %c4_99, %c0_100] : memref<2x12x12x128xf32, #tpu.memory_space<vmem>>, vector<2x8x8x128xf32>
    %76 = vector.shape_cast %75 : vector<2x8x8x128xf32> to vector<128x128xf32>
    %c1_101 = arith.constant 1 : index
    %c4_102 = arith.constant 4 : index
    %c0_103 = arith.constant 0 : index
    %c0_104 = arith.constant 0 : index
    %77 = vector.load %arg3[%c1_101, %c4_102, %c0_103, %c0_104] : memref<5x5x128x128xf32, #tpu.memory_space<vmem>>, vector<1x1x128x128xf32>
    %78 = vector.shape_cast %77 : vector<1x1x128x128xf32> to vector<128x128xf32>
    %cst_105 = arith.constant dense<0.000000e+00> : vector<128x128xf32>
    %79 = tpu.matmul %76, %78, %cst_105 {dimension_numbers = #tpu.dot_dimension_numbers<[1], [0], [0], [1], [0, 0, 1, 1], [], []>} : vector<128x128xf32>, vector<128x128xf32>, vector<128x128xf32> -> vector<128x128xf32>
    %80 = arith.addf %74, %79 : vector<128x128xf32>
    %c0_106 = arith.constant 0 : index
    %c2_107 = arith.constant 2 : index
    %c0_108 = arith.constant 0 : index
    %c0_109 = arith.constant 0 : index
    %81 = vector.load %arg11[%c0_106, %c2_107, %c0_108, %c0_109] : memref<2x12x12x128xf32, #tpu.memory_space<vmem>>, vector<2x8x8x128xf32>
    %82 = vector.shape_cast %81 : vector<2x8x8x128xf32> to vector<128x128xf32>
    %c2_110 = arith.constant 2 : index
    %c0_111 = arith.constant 0 : index
    %c0_112 = arith.constant 0 : index
    %c0_113 = arith.constant 0 : index
    %83 = vector.load %arg3[%c2_110, %c0_111, %c0_112, %c0_113] : memref<5x5x128x128xf32, #tpu.memory_space<vmem>>, vector<1x1x128x128xf32>
    %84 = vector.shape_cast %83 : vector<1x1x128x128xf32> to vector<128x128xf32>
    %cst_114 = arith.constant dense<0.000000e+00> : vector<128x128xf32>
    %85 = tpu.matmul %82, %84, %cst_114 {dimension_numbers = #tpu.dot_dimension_numbers<[1], [0], [0], [1], [0, 0, 1, 1], [], []>} : vector<128x128xf32>, vector<128x128xf32>, vector<128x128xf32> -> vector<128x128xf32>
    %86 = arith.addf %80, %85 : vector<128x128xf32>
    %c0_115 = arith.constant 0 : index
    %c2_116 = arith.constant 2 : index
    %c1_117 = arith.constant 1 : index
    %c0_118 = arith.constant 0 : index
    %87 = vector.load %arg11[%c0_115, %c2_116, %c1_117, %c0_118] : memref<2x12x12x128xf32, #tpu.memory_space<vmem>>, vector<2x8x8x128xf32>
    %88 = vector.shape_cast %87 : vector<2x8x8x128xf32> to vector<128x128xf32>
    %c2_119 = arith.constant 2 : index
    %c1_120 = arith.constant 1 : index
    %c0_121 = arith.constant 0 : index
    %c0_122 = arith.constant 0 : index
    %89 = vector.load %arg3[%c2_119, %c1_120, %c0_121, %c0_122] : memref<5x5x128x128xf32, #tpu.memory_space<vmem>>, vector<1x1x128x128xf32>
    %90 = vector.shape_cast %89 : vector<1x1x128x128xf32> to vector<128x128xf32>
    %cst_123 = arith.constant dense<0.000000e+00> : vector<128x128xf32>
    %91 = tpu.matmul %88, %90, %cst_123 {dimension_numbers = #tpu.dot_dimension_numbers<[1], [0], [0], [1], [0, 0, 1, 1], [], []>} : vector<128x128xf32>, vector<128x128xf32>, vector<128x128xf32> -> vector<128x128xf32>
    %92 = arith.addf %86, %91 : vector<128x128xf32>
    %c0_124 = arith.constant 0 : index
    %c2_125 = arith.constant 2 : index
    %c2_126 = arith.constant 2 : index
    %c0_127 = arith.constant 0 : index
    %93 = vector.load %arg11[%c0_124, %c2_125, %c2_126, %c0_127] : memref<2x12x12x128xf32, #tpu.memory_space<vmem>>, vector<2x8x8x128xf32>
    %94 = vector.shape_cast %93 : vector<2x8x8x128xf32> to vector<128x128xf32>
    %c2_128 = arith.constant 2 : index
    %c2_129 = arith.constant 2 : index
    %c0_130 = arith.constant 0 : index
    %c0_131 = arith.constant 0 : index
    %95 = vector.load %arg3[%c2_128, %c2_129, %c0_130, %c0_131] : memref<5x5x128x128xf32, #tpu.memory_space<vmem>>, vector<1x1x128x128xf32>
    %96 = vector.shape_cast %95 : vector<1x1x128x128xf32> to vector<128x128xf32>
    %cst_132 = arith.constant dense<0.000000e+00> : vector<128x128xf32>
    %97 = tpu.matmul %94, %96, %cst_132 {dimension_numbers = #tpu.dot_dimension_numbers<[1], [0], [0], [1], [0, 0, 1, 1], [], []>} : vector<128x128xf32>, vector<128x128xf32>, vector<128x128xf32> -> vector<128x128xf32>
    %98 = arith.addf %92, %97 : vector<128x128xf32>
    %c0_133 = arith.constant 0 : index
    %c2_134 = arith.constant 2 : index
    %c3_135 = arith.constant 3 : index
    %c0_136 = arith.constant 0 : index
    %99 = vector.load %arg11[%c0_133, %c2_134, %c3_135, %c0_136] : memref<2x12x12x128xf32, #tpu.memory_space<vmem>>, vector<2x8x8x128xf32>
    %100 = vector.shape_cast %99 : vector<2x8x8x128xf32> to vector<128x128xf32>
    %c2_137 = arith.constant 2 : index
    %c3_138 = arith.constant 3 : index
    %c0_139 = arith.constant 0 : index
    %c0_140 = arith.constant 0 : index
    %101 = vector.load %arg3[%c2_137, %c3_138, %c0_139, %c0_140] : memref<5x5x128x128xf32, #tpu.memory_space<vmem>>, vector<1x1x128x128xf32>
    %102 = vector.shape_cast %101 : vector<1x1x128x128xf32> to vector<128x128xf32>
    %cst_141 = arith.constant dense<0.000000e+00> : vector<128x128xf32>
    %103 = tpu.matmul %100, %102, %cst_141 {dimension_numbers = #tpu.dot_dimension_numbers<[1], [0], [0], [1], [0, 0, 1, 1], [], []>} : vector<128x128xf32>, vector<128x128xf32>, vector<128x128xf32> -> vector<128x128xf32>
    %104 = arith.addf %98, %103 : vector<128x128xf32>
    %c0_142 = arith.constant 0 : index
    %c2_143 = arith.constant 2 : index
    %c4_144 = arith.constant 4 : index
    %c0_145 = arith.constant 0 : index
    %105 = vector.load %arg11[%c0_142, %c2_143, %c4_144, %c0_145] : memref<2x12x12x128xf32, #tpu.memory_space<vmem>>, vector<2x8x8x128xf32>
    %106 = vector.shape_cast %105 : vector<2x8x8x128xf32> to vector<128x128xf32>
    %c2_146 = arith.constant 2 : index
    %c4_147 = arith.constant 4 : index
    %c0_148 = arith.constant 0 : index
    %c0_149 = arith.constant 0 : index
    %107 = vector.load %arg3[%c2_146, %c4_147, %c0_148, %c0_149] : memref<5x5x128x128xf32, #tpu.memory_space<vmem>>, vector<1x1x128x128xf32>
    %108 = vector.shape_cast %107 : vector<1x1x128x128xf32> to vector<128x128xf32>
    %cst_150 = arith.constant dense<0.000000e+00> : vector<128x128xf32>
    %109 = tpu.matmul %106, %108, %cst_150 {dimension_numbers = #tpu.dot_dimension_numbers<[1], [0], [0], [1], [0, 0, 1, 1], [], []>} : vector<128x128xf32>, vector<128x128xf32>, vector<128x128xf32> -> vector<128x128xf32>
    %110 = arith.addf %104, %109 : vector<128x128xf32>
    %c0_151 = arith.constant 0 : index
    %c3_152 = arith.constant 3 : index
    %c0_153 = arith.constant 0 : index
    %c0_154 = arith.constant 0 : index
    %111 = vector.load %arg11[%c0_151, %c3_152, %c0_153, %c0_154] : memref<2x12x12x128xf32, #tpu.memory_space<vmem>>, vector<2x8x8x128xf32>
    %112 = vector.shape_cast %111 : vector<2x8x8x128xf32> to vector<128x128xf32>
    %c3_155 = arith.constant 3 : index
    %c0_156 = arith.constant 0 : index
    %c0_157 = arith.constant 0 : index
    %c0_158 = arith.constant 0 : index
    %113 = vector.load %arg3[%c3_155, %c0_156, %c0_157, %c0_158] : memref<5x5x128x128xf32, #tpu.memory_space<vmem>>, vector<1x1x128x128xf32>
    %114 = vector.shape_cast %113 : vector<1x1x128x128xf32> to vector<128x128xf32>
    %cst_159 = arith.constant dense<0.000000e+00> : vector<128x128xf32>
    %115 = tpu.matmul %112, %114, %cst_159 {dimension_numbers = #tpu.dot_dimension_numbers<[1], [0], [0], [1], [0, 0, 1, 1], [], []>} : vector<128x128xf32>, vector<128x128xf32>, vector<128x128xf32> -> vector<128x128xf32>
    %116 = arith.addf %110, %115 : vector<128x128xf32>
    %c0_160 = arith.constant 0 : index
    %c3_161 = arith.constant 3 : index
    %c1_162 = arith.constant 1 : index
    %c0_163 = arith.constant 0 : index
    %117 = vector.load %arg11[%c0_160, %c3_161, %c1_162, %c0_163] : memref<2x12x12x128xf32, #tpu.memory_space<vmem>>, vector<2x8x8x128xf32>
    %118 = vector.shape_cast %117 : vector<2x8x8x128xf32> to vector<128x128xf32>
    %c3_164 = arith.constant 3 : index
    %c1_165 = arith.constant 1 : index
    %c0_166 = arith.constant 0 : index
    %c0_167 = arith.constant 0 : index
    %119 = vector.load %arg3[%c3_164, %c1_165, %c0_166, %c0_167] : memref<5x5x128x128xf32, #tpu.memory_space<vmem>>, vector<1x1x128x128xf32>
    %120 = vector.shape_cast %119 : vector<1x1x128x128xf32> to vector<128x128xf32>
    %cst_168 = arith.constant dense<0.000000e+00> : vector<128x128xf32>
    %121 = tpu.matmul %118, %120, %cst_168 {dimension_numbers = #tpu.dot_dimension_numbers<[1], [0], [0], [1], [0, 0, 1, 1], [], []>} : vector<128x128xf32>, vector<128x128xf32>, vector<128x128xf32> -> vector<128x128xf32>
    %122 = arith.addf %116, %121 : vector<128x128xf32>
    %c0_169 = arith.constant 0 : index
    %c3_170 = arith.constant 3 : index
    %c2_171 = arith.constant 2 : index
    %c0_172 = arith.constant 0 : index
    %123 = vector.load %arg11[%c0_169, %c3_170, %c2_171, %c0_172] : memref<2x12x12x128xf32, #tpu.memory_space<vmem>>, vector<2x8x8x128xf32>
    %124 = vector.shape_cast %123 : vector<2x8x8x128xf32> to vector<128x128xf32>
    %c3_173 = arith.constant 3 : index
    %c2_174 = arith.constant 2 : index
    %c0_175 = arith.constant 0 : index
    %c0_176 = arith.constant 0 : index
    %125 = vector.load %arg3[%c3_173, %c2_174, %c0_175, %c0_176] : memref<5x5x128x128xf32, #tpu.memory_space<vmem>>, vector<1x1x128x128xf32>
    %126 = vector.shape_cast %125 : vector<1x1x128x128xf32> to vector<128x128xf32>
    %cst_177 = arith.constant dense<0.000000e+00> : vector<128x128xf32>
    %127 = tpu.matmul %124, %126, %cst_177 {dimension_numbers = #tpu.dot_dimension_numbers<[1], [0], [0], [1], [0, 0, 1, 1], [], []>} : vector<128x128xf32>, vector<128x128xf32>, vector<128x128xf32> -> vector<128x128xf32>
    %128 = arith.addf %122, %127 : vector<128x128xf32>
    %c0_178 = arith.constant 0 : index
    %c3_179 = arith.constant 3 : index
    %c3_180 = arith.constant 3 : index
    %c0_181 = arith.constant 0 : index
    %129 = vector.load %arg11[%c0_178, %c3_179, %c3_180, %c0_181] : memref<2x12x12x128xf32, #tpu.memory_space<vmem>>, vector<2x8x8x128xf32>
    %130 = vector.shape_cast %129 : vector<2x8x8x128xf32> to vector<128x128xf32>
    %c3_182 = arith.constant 3 : index
    %c3_183 = arith.constant 3 : index
    %c0_184 = arith.constant 0 : index
    %c0_185 = arith.constant 0 : index
    %131 = vector.load %arg3[%c3_182, %c3_183, %c0_184, %c0_185] : memref<5x5x128x128xf32, #tpu.memory_space<vmem>>, vector<1x1x128x128xf32>
    %132 = vector.shape_cast %131 : vector<1x1x128x128xf32> to vector<128x128xf32>
    %cst_186 = arith.constant dense<0.000000e+00> : vector<128x128xf32>
    %133 = tpu.matmul %130, %132, %cst_186 {dimension_numbers = #tpu.dot_dimension_numbers<[1], [0], [0], [1], [0, 0, 1, 1], [], []>} : vector<128x128xf32>, vector<128x128xf32>, vector<128x128xf32> -> vector<128x128xf32>
    %134 = arith.addf %128, %133 : vector<128x128xf32>
    %c0_187 = arith.constant 0 : index
    %c3_188 = arith.constant 3 : index
    %c4_189 = arith.constant 4 : index
    %c0_190 = arith.constant 0 : index
    %135 = vector.load %arg11[%c0_187, %c3_188, %c4_189, %c0_190] : memref<2x12x12x128xf32, #tpu.memory_space<vmem>>, vector<2x8x8x128xf32>
    %136 = vector.shape_cast %135 : vector<2x8x8x128xf32> to vector<128x128xf32>
    %c3_191 = arith.constant 3 : index
    %c4_192 = arith.constant 4 : index
    %c0_193 = arith.constant 0 : index
    %c0_194 = arith.constant 0 : index
    %137 = vector.load %arg3[%c3_191, %c4_192, %c0_193, %c0_194] : memref<5x5x128x128xf32, #tpu.memory_space<vmem>>, vector<1x1x128x128xf32>
    %138 = vector.shape_cast %137 : vector<1x1x128x128xf32> to vector<128x128xf32>
    %cst_195 = arith.constant dense<0.000000e+00> : vector<128x128xf32>
    %139 = tpu.matmul %136, %138, %cst_195 {dimension_numbers = #tpu.dot_dimension_numbers<[1], [0], [0], [1], [0, 0, 1, 1], [], []>} : vector<128x128xf32>, vector<128x128xf32>, vector<128x128xf32> -> vector<128x128xf32>
    %140 = arith.addf %134, %139 : vector<128x128xf32>
    %c0_196 = arith.constant 0 : index
    %c4_197 = arith.constant 4 : index
    %c0_198 = arith.constant 0 : index
    %c0_199 = arith.constant 0 : index
    %141 = vector.load %arg11[%c0_196, %c4_197, %c0_198, %c0_199] : memref<2x12x12x128xf32, #tpu.memory_space<vmem>>, vector<2x8x8x128xf32>
    %142 = vector.shape_cast %141 : vector<2x8x8x128xf32> to vector<128x128xf32>
    %c4_200 = arith.constant 4 : index
    %c0_201 = arith.constant 0 : index
    %c0_202 = arith.constant 0 : index
    %c0_203 = arith.constant 0 : index
    %143 = vector.load %arg3[%c4_200, %c0_201, %c0_202, %c0_203] : memref<5x5x128x128xf32, #tpu.memory_space<vmem>>, vector<1x1x128x128xf32>
    %144 = vector.shape_cast %143 : vector<1x1x128x128xf32> to vector<128x128xf32>
    %cst_204 = arith.constant dense<0.000000e+00> : vector<128x128xf32>
    %145 = tpu.matmul %142, %144, %cst_204 {dimension_numbers = #tpu.dot_dimension_numbers<[1], [0], [0], [1], [0, 0, 1, 1], [], []>} : vector<128x128xf32>, vector<128x128xf32>, vector<128x128xf32> -> vector<128x128xf32>
    %146 = arith.addf %140, %145 : vector<128x128xf32>
    %c0_205 = arith.constant 0 : index
    %c4_206 = arith.constant 4 : index
    %c1_207 = arith.constant 1 : index
    %c0_208 = arith.constant 0 : index
    %147 = vector.load %arg11[%c0_205, %c4_206, %c1_207, %c0_208] : memref<2x12x12x128xf32, #tpu.memory_space<vmem>>, vector<2x8x8x128xf32>
    %148 = vector.shape_cast %147 : vector<2x8x8x128xf32> to vector<128x128xf32>
    %c4_209 = arith.constant 4 : index
    %c1_210 = arith.constant 1 : index
    %c0_211 = arith.constant 0 : index
    %c0_212 = arith.constant 0 : index
    %149 = vector.load %arg3[%c4_209, %c1_210, %c0_211, %c0_212] : memref<5x5x128x128xf32, #tpu.memory_space<vmem>>, vector<1x1x128x128xf32>
    %150 = vector.shape_cast %149 : vector<1x1x128x128xf32> to vector<128x128xf32>
    %cst_213 = arith.constant dense<0.000000e+00> : vector<128x128xf32>
    %151 = tpu.matmul %148, %150, %cst_213 {dimension_numbers = #tpu.dot_dimension_numbers<[1], [0], [0], [1], [0, 0, 1, 1], [], []>} : vector<128x128xf32>, vector<128x128xf32>, vector<128x128xf32> -> vector<128x128xf32>
    %152 = arith.addf %146, %151 : vector<128x128xf32>
    %c0_214 = arith.constant 0 : index
    %c4_215 = arith.constant 4 : index
    %c2_216 = arith.constant 2 : index
    %c0_217 = arith.constant 0 : index
    %153 = vector.load %arg11[%c0_214, %c4_215, %c2_216, %c0_217] : memref<2x12x12x128xf32, #tpu.memory_space<vmem>>, vector<2x8x8x128xf32>
    %154 = vector.shape_cast %153 : vector<2x8x8x128xf32> to vector<128x128xf32>
    %c4_218 = arith.constant 4 : index
    %c2_219 = arith.constant 2 : index
    %c0_220 = arith.constant 0 : index
    %c0_221 = arith.constant 0 : index
    %155 = vector.load %arg3[%c4_218, %c2_219, %c0_220, %c0_221] : memref<5x5x128x128xf32, #tpu.memory_space<vmem>>, vector<1x1x128x128xf32>
    %156 = vector.shape_cast %155 : vector<1x1x128x128xf32> to vector<128x128xf32>
    %cst_222 = arith.constant dense<0.000000e+00> : vector<128x128xf32>
    %157 = tpu.matmul %154, %156, %cst_222 {dimension_numbers = #tpu.dot_dimension_numbers<[1], [0], [0], [1], [0, 0, 1, 1], [], []>} : vector<128x128xf32>, vector<128x128xf32>, vector<128x128xf32> -> vector<128x128xf32>
    %158 = arith.addf %152, %157 : vector<128x128xf32>
    %c0_223 = arith.constant 0 : index
    %c4_224 = arith.constant 4 : index
    %c3_225 = arith.constant 3 : index
    %c0_226 = arith.constant 0 : index
    %159 = vector.load %arg11[%c0_223, %c4_224, %c3_225, %c0_226] : memref<2x12x12x128xf32, #tpu.memory_space<vmem>>, vector<2x8x8x128xf32>
    %160 = vector.shape_cast %159 : vector<2x8x8x128xf32> to vector<128x128xf32>
    %c4_227 = arith.constant 4 : index
    %c3_228 = arith.constant 3 : index
    %c0_229 = arith.constant 0 : index
    %c0_230 = arith.constant 0 : index
    %161 = vector.load %arg3[%c4_227, %c3_228, %c0_229, %c0_230] : memref<5x5x128x128xf32, #tpu.memory_space<vmem>>, vector<1x1x128x128xf32>
    %162 = vector.shape_cast %161 : vector<1x1x128x128xf32> to vector<128x128xf32>
    %cst_231 = arith.constant dense<0.000000e+00> : vector<128x128xf32>
    %163 = tpu.matmul %160, %162, %cst_231 {dimension_numbers = #tpu.dot_dimension_numbers<[1], [0], [0], [1], [0, 0, 1, 1], [], []>} : vector<128x128xf32>, vector<128x128xf32>, vector<128x128xf32> -> vector<128x128xf32>
    %164 = arith.addf %158, %163 : vector<128x128xf32>
    %c0_232 = arith.constant 0 : index
    %c4_233 = arith.constant 4 : index
    %c4_234 = arith.constant 4 : index
    %c0_235 = arith.constant 0 : index
    %165 = vector.load %arg11[%c0_232, %c4_233, %c4_234, %c0_235] : memref<2x12x12x128xf32, #tpu.memory_space<vmem>>, vector<2x8x8x128xf32>
    %166 = vector.shape_cast %165 : vector<2x8x8x128xf32> to vector<128x128xf32>
    %c4_236 = arith.constant 4 : index
    %c4_237 = arith.constant 4 : index
    %c0_238 = arith.constant 0 : index
    %c0_239 = arith.constant 0 : index
    %167 = vector.load %arg3[%c4_236, %c4_237, %c0_238, %c0_239] : memref<5x5x128x128xf32, #tpu.memory_space<vmem>>, vector<1x1x128x128xf32>
    %168 = vector.shape_cast %167 : vector<1x1x128x128xf32> to vector<128x128xf32>
    %cst_240 = arith.constant dense<0.000000e+00> : vector<128x128xf32>
    %169 = tpu.matmul %166, %168, %cst_240 {dimension_numbers = #tpu.dot_dimension_numbers<[1], [0], [0], [1], [0, 0, 1, 1], [], []>} : vector<128x128xf32>, vector<128x128xf32>, vector<128x128xf32> -> vector<128x128xf32>
    %170 = arith.addf %164, %169 : vector<128x128xf32>
    %c0_241 = arith.constant 0 : index
    %c0_242 = arith.constant 0 : index
    %171 = vector.load %arg4[%c0_241, %c0_242] : memref<1x128xf32, #tpu.memory_space<vmem>>, vector<1x128xf32>
    %172 = vector.broadcast %171 : vector<1x128xf32> to vector<128x128xf32>
    %173 = arith.addf %170, %172 : vector<128x128xf32>
    %cst_243 = arith.constant 0.000000e+00 : f32
    %174 = vector.broadcast %cst_243 : f32 to vector<128x128xf32>
    %175 = arith.maximumf %173, %174 : vector<128x128xf32>
    %176 = vector.shape_cast %175 : vector<128x128xf32> to vector<8x2x8x128xf32>
    %177 = vector.extract_strided_slice %176 {offsets = [0, 0, 0, 0], sizes = [8, 1, 8, 128], strides = [1, 1, 1, 1]} : vector<8x2x8x128xf32> to vector<8x1x8x128xf32>
    %178 = vector.shape_cast %177 : vector<8x1x8x128xf32> to vector<8x8x128xf32>
    %179 = vector.extract_strided_slice %176 {offsets = [0, 1, 0, 0], sizes = [8, 1, 8, 128], strides = [1, 1, 1, 1]} : vector<8x2x8x128xf32> to vector<8x1x8x128xf32>
    %180 = vector.shape_cast %179 : vector<8x1x8x128xf32> to vector<8x8x128xf32>
    %181 = arith.maximumf %178, %180 : vector<8x8x128xf32>
    %182 = vector.shape_cast %181 : vector<8x8x128xf32> to vector<2x4x8x128xf32>
    %c0_244 = arith.constant 0 : index
    %c0_245 = arith.constant 0 : index
    %c0_246 = arith.constant 0 : index
    %c0_247 = arith.constant 0 : index
    %183 = vector.load %arg12[%c0_244, %c0_245, %c0_246, %c0_247] : memref<2x4x8x128xf32, #tpu.memory_space<vmem>>, vector<2x4x8x128xf32>
    tpu.vector_store %arg12[%c0_244, %c0_245, %c0_246, %c0_247], %182 {strides = array<i32>} : memref<2x4x8x128xf32, #tpu.memory_space<vmem>>, vector<2x4x8x128xf32>,
    %cst_248 = arith.constant 0.000000e+00 : f32
    %184 = vector.broadcast %cst_248 : f32 to vector<2x128xf32>
    %c0_249 = arith.constant 0 : index
    %c0_250 = arith.constant 0 : index
    %c0_251 = arith.constant 0 : index
    %c0_252 = arith.constant 0 : index
    %185 = vector.load %arg12[%c0_249, %c0_250, %c0_251, %c0_252] : memref<2x4x8x128xf32, #tpu.memory_space<vmem>>, vector<2x1x1x128xf32>
    %186 = vector.shape_cast %185 : vector<2x1x1x128xf32> to vector<2x128xf32>
    %c0_253 = arith.constant 0 : index
    %c0_254 = arith.constant 0 : index
    %c1_255 = arith.constant 1 : index
    %c0_256 = arith.constant 0 : index
    %187 = vector.load %arg12[%c0_253, %c0_254, %c1_255, %c0_256] : memref<2x4x8x128xf32, #tpu.memory_space<vmem>>, vector<2x1x1x128xf32>
    %188 = vector.shape_cast %187 : vector<2x1x1x128xf32> to vector<2x128xf32>
    %189 = arith.maximumf %186, %188 : vector<2x128xf32>
    %c0_257 = arith.constant 0 : index
    %c0_258 = arith.constant 0 : index
    %c0_259 = arith.constant 0 : index
    %c0_260 = arith.constant 0 : index
    %190 = vector.load %arg5[%c0_257, %c0_258, %c0_259, %c0_260] : memref<4x4x128x128xf32, #tpu.memory_space<vmem>>, vector<1x1x128x128xf32>
    %191 = vector.shape_cast %190 : vector<1x1x128x128xf32> to vector<128x128xf32>
    %cst_261 = arith.constant dense<0.000000e+00> : vector<2x128xf32>
    %192 = tpu.matmul %189, %191, %cst_261 {dimension_numbers = #tpu.dot_dimension_numbers<[1], [0], [0], [1], [0, 0, 1, 1], [], []>} : vector<2x128xf32>, vector<128x128xf32>, vector<2x128xf32> -> vector<2x128xf32>
    %193 = arith.addf %184, %192 : vector<2x128xf32>
    %c0_262 = arith.constant 0 : index
    %c0_263 = arith.constant 0 : index
    %c2_264 = arith.constant 2 : index
    %c0_265 = arith.constant 0 : index
    %194 = vector.load %arg12[%c0_262, %c0_263, %c2_264, %c0_265] : memref<2x4x8x128xf32, #tpu.memory_space<vmem>>, vector<2x1x1x128xf32>
    %195 = vector.shape_cast %194 : vector<2x1x1x128xf32> to vector<2x128xf32>
    %c0_266 = arith.constant 0 : index
    %c0_267 = arith.constant 0 : index
    %c3_268 = arith.constant 3 : index
    %c0_269 = arith.constant 0 : index
    %196 = vector.load %arg12[%c0_266, %c0_267, %c3_268, %c0_269] : memref<2x4x8x128xf32, #tpu.memory_space<vmem>>, vector<2x1x1x128xf32>
    %197 = vector.shape_cast %196 : vector<2x1x1x128xf32> to vector<2x128xf32>
    %198 = arith.maximumf %195, %197 : vector<2x128xf32>
    %c0_270 = arith.constant 0 : index
    %c1_271 = arith.constant 1 : index
    %c0_272 = arith.constant 0 : index
    %c0_273 = arith.constant 0 : index
    %199 = vector.load %arg5[%c0_270, %c1_271, %c0_272, %c0_273] : memref<4x4x128x128xf32, #tpu.memory_space<vmem>>, vector<1x1x128x128xf32>
    %200 = vector.shape_cast %199 : vector<1x1x128x128xf32> to vector<128x128xf32>
    %cst_274 = arith.constant dense<0.000000e+00> : vector<2x128xf32>
    %201 = tpu.matmul %198, %200, %cst_274 {dimension_numbers = #tpu.dot_dimension_numbers<[1], [0], [0], [1], [0, 0, 1, 1], [], []>} : vector<2x128xf32>, vector<128x128xf32>, vector<2x128xf32> -> vector<2x128xf32>
    %202 = arith.addf %193, %201 : vector<2x128xf32>
    %c0_275 = arith.constant 0 : index
    %c0_276 = arith.constant 0 : index
    %c4_277 = arith.constant 4 : index
    %c0_278 = arith.constant 0 : index
    %203 = vector.load %arg12[%c0_275, %c0_276, %c4_277, %c0_278] : memref<2x4x8x128xf32, #tpu.memory_space<vmem>>, vector<2x1x1x128xf32>
    %204 = vector.shape_cast %203 : vector<2x1x1x128xf32> to vector<2x128xf32>
    %c0_279 = arith.constant 0 : index
    %c0_280 = arith.constant 0 : index
    %c5 = arith.constant 5 : index
    %c0_281 = arith.constant 0 : index
    %205 = vector.load %arg12[%c0_279, %c0_280, %c5, %c0_281] : memref<2x4x8x128xf32, #tpu.memory_space<vmem>>, vector<2x1x1x128xf32>
    %206 = vector.shape_cast %205 : vector<2x1x1x128xf32> to vector<2x128xf32>
    %207 = arith.maximumf %204, %206 : vector<2x128xf32>
    %c0_282 = arith.constant 0 : index
    %c2_283 = arith.constant 2 : index
    %c0_284 = arith.constant 0 : index
    %c0_285 = arith.constant 0 : index
    %208 = vector.load %arg5[%c0_282, %c2_283, %c0_284, %c0_285] : memref<4x4x128x128xf32, #tpu.memory_space<vmem>>, vector<1x1x128x128xf32>
    %209 = vector.shape_cast %208 : vector<1x1x128x128xf32> to vector<128x128xf32>
    %cst_286 = arith.constant dense<0.000000e+00> : vector<2x128xf32>
    %210 = tpu.matmul %207, %209, %cst_286 {dimension_numbers = #tpu.dot_dimension_numbers<[1], [0], [0], [1], [0, 0, 1, 1], [], []>} : vector<2x128xf32>, vector<128x128xf32>, vector<2x128xf32> -> vector<2x128xf32>
    %211 = arith.addf %202, %210 : vector<2x128xf32>
    %c0_287 = arith.constant 0 : index
    %c0_288 = arith.constant 0 : index
    %c6 = arith.constant 6 : index
    %c0_289 = arith.constant 0 : index
    %212 = vector.load %arg12[%c0_287, %c0_288, %c6, %c0_289] : memref<2x4x8x128xf32, #tpu.memory_space<vmem>>, vector<2x1x1x128xf32>
    %213 = vector.shape_cast %212 : vector<2x1x1x128xf32> to vector<2x128xf32>
    %c0_290 = arith.constant 0 : index
    %c0_291 = arith.constant 0 : index
    %c7 = arith.constant 7 : index
    %c0_292 = arith.constant 0 : index
    %214 = vector.load %arg12[%c0_290, %c0_291, %c7, %c0_292] : memref<2x4x8x128xf32, #tpu.memory_space<vmem>>, vector<2x1x1x128xf32>
    %215 = vector.shape_cast %214 : vector<2x1x1x128xf32> to vector<2x128xf32>
    %216 = arith.maximumf %213, %215 : vector<2x128xf32>
    %c0_293 = arith.constant 0 : index
    %c3_294 = arith.constant 3 : index
    %c0_295 = arith.constant 0 : index
    %c0_296 = arith.constant 0 : index
    %217 = vector.load %arg5[%c0_293, %c3_294, %c0_295, %c0_296] : memref<4x4x128x128xf32, #tpu.memory_space<vmem>>, vector<1x1x128x128xf32>
    %218 = vector.shape_cast %217 : vector<1x1x128x128xf32> to vector<128x128xf32>
    %cst_297 = arith.constant dense<0.000000e+00> : vector<2x128xf32>
    %219 = tpu.matmul %216, %218, %cst_297 {dimension_numbers = #tpu.dot_dimension_numbers<[1], [0], [0], [1], [0, 0, 1, 1], [], []>} : vector<2x128xf32>, vector<128x128xf32>, vector<2x128xf32> -> vector<2x128xf32>
    %220 = arith.addf %211, %219 : vector<2x128xf32>
    %c0_298 = arith.constant 0 : index
    %c1_299 = arith.constant 1 : index
    %c0_300 = arith.constant 0 : index
    %c0_301 = arith.constant 0 : index
    %221 = vector.load %arg12[%c0_298, %c1_299, %c0_300, %c0_301] : memref<2x4x8x128xf32, #tpu.memory_space<vmem>>, vector<2x1x1x128xf32>
    %222 = vector.shape_cast %221 : vector<2x1x1x128xf32> to vector<2x128xf32>
    %c0_302 = arith.constant 0 : index
    %c1_303 = arith.constant 1 : index
    %c1_304 = arith.constant 1 : index
    %c0_305 = arith.constant 0 : index
    %223 = vector.load %arg12[%c0_302, %c1_303, %c1_304, %c0_305] : memref<2x4x8x128xf32, #tpu.memory_space<vmem>>, vector<2x1x1x128xf32>
    %224 = vector.shape_cast %223 : vector<2x1x1x128xf32> to vector<2x128xf32>
    %225 = arith.maximumf %222, %224 : vector<2x128xf32>
    %c1_306 = arith.constant 1 : index
    %c0_307 = arith.constant 0 : index
    %c0_308 = arith.constant 0 : index
    %c0_309 = arith.constant 0 : index
    %226 = vector.load %arg5[%c1_306, %c0_307, %c0_308, %c0_309] : memref<4x4x128x128xf32, #tpu.memory_space<vmem>>, vector<1x1x128x128xf32>
    %227 = vector.shape_cast %226 : vector<1x1x128x128xf32> to vector<128x128xf32>
    %cst_310 = arith.constant dense<0.000000e+00> : vector<2x128xf32>
    %228 = tpu.matmul %225, %227, %cst_310 {dimension_numbers = #tpu.dot_dimension_numbers<[1], [0], [0], [1], [0, 0, 1, 1], [], []>} : vector<2x128xf32>, vector<128x128xf32>, vector<2x128xf32> -> vector<2x128xf32>
    %229 = arith.addf %220, %228 : vector<2x128xf32>
    %c0_311 = arith.constant 0 : index
    %c1_312 = arith.constant 1 : index
    %c2_313 = arith.constant 2 : index
    %c0_314 = arith.constant 0 : index
    %230 = vector.load %arg12[%c0_311, %c1_312, %c2_313, %c0_314] : memref<2x4x8x128xf32, #tpu.memory_space<vmem>>, vector<2x1x1x128xf32>
    %231 = vector.shape_cast %230 : vector<2x1x1x128xf32> to vector<2x128xf32>
    %c0_315 = arith.constant 0 : index
    %c1_316 = arith.constant 1 : index
    %c3_317 = arith.constant 3 : index
    %c0_318 = arith.constant 0 : index
    %232 = vector.load %arg12[%c0_315, %c1_316, %c3_317, %c0_318] : memref<2x4x8x128xf32, #tpu.memory_space<vmem>>, vector<2x1x1x128xf32>
    %233 = vector.shape_cast %232 : vector<2x1x1x128xf32> to vector<2x128xf32>
    %234 = arith.maximumf %231, %233 : vector<2x128xf32>
    %c1_319 = arith.constant 1 : index
    %c1_320 = arith.constant 1 : index
    %c0_321 = arith.constant 0 : index
    %c0_322 = arith.constant 0 : index
    %235 = vector.load %arg5[%c1_319, %c1_320, %c0_321, %c0_322] : memref<4x4x128x128xf32, #tpu.memory_space<vmem>>, vector<1x1x128x128xf32>
    %236 = vector.shape_cast %235 : vector<1x1x128x128xf32> to vector<128x128xf32>
    %cst_323 = arith.constant dense<0.000000e+00> : vector<2x128xf32>
    %237 = tpu.matmul %234, %236, %cst_323 {dimension_numbers = #tpu.dot_dimension_numbers<[1], [0], [0], [1], [0, 0, 1, 1], [], []>} : vector<2x128xf32>, vector<128x128xf32>, vector<2x128xf32> -> vector<2x128xf32>
    %238 = arith.addf %229, %237 : vector<2x128xf32>
    %c0_324 = arith.constant 0 : index
    %c1_325 = arith.constant 1 : index
    %c4_326 = arith.constant 4 : index
    %c0_327 = arith.constant 0 : index
    %239 = vector.load %arg12[%c0_324, %c1_325, %c4_326, %c0_327] : memref<2x4x8x128xf32, #tpu.memory_space<vmem>>, vector<2x1x1x128xf32>
    %240 = vector.shape_cast %239 : vector<2x1x1x128xf32> to vector<2x128xf32>
    %c0_328 = arith.constant 0 : index
    %c1_329 = arith.constant 1 : index
    %c5_330 = arith.constant 5 : index
    %c0_331 = arith.constant 0 : index
    %241 = vector.load %arg12[%c0_328, %c1_329, %c5_330, %c0_331] : memref<2x4x8x128xf32, #tpu.memory_space<vmem>>, vector<2x1x1x128xf32>
    %242 = vector.shape_cast %241 : vector<2x1x1x128xf32> to vector<2x128xf32>
    %243 = arith.maximumf %240, %242 : vector<2x128xf32>
    %c1_332 = arith.constant 1 : index
    %c2_333 = arith.constant 2 : index
    %c0_334 = arith.constant 0 : index
    %c0_335 = arith.constant 0 : index
    %244 = vector.load %arg5[%c1_332, %c2_333, %c0_334, %c0_335] : memref<4x4x128x128xf32, #tpu.memory_space<vmem>>, vector<1x1x128x128xf32>
    %245 = vector.shape_cast %244 : vector<1x1x128x128xf32> to vector<128x128xf32>
    %cst_336 = arith.constant dense<0.000000e+00> : vector<2x128xf32>
    %246 = tpu.matmul %243, %245, %cst_336 {dimension_numbers = #tpu.dot_dimension_numbers<[1], [0], [0], [1], [0, 0, 1, 1], [], []>} : vector<2x128xf32>, vector<128x128xf32>, vector<2x128xf32> -> vector<2x128xf32>
    %247 = arith.addf %238, %246 : vector<2x128xf32>
    %c0_337 = arith.constant 0 : index
    %c1_338 = arith.constant 1 : index
    %c6_339 = arith.constant 6 : index
    %c0_340 = arith.constant 0 : index
    %248 = vector.load %arg12[%c0_337, %c1_338, %c6_339, %c0_340] : memref<2x4x8x128xf32, #tpu.memory_space<vmem>>, vector<2x1x1x128xf32>
    %249 = vector.shape_cast %248 : vector<2x1x1x128xf32> to vector<2x128xf32>
    %c0_341 = arith.constant 0 : index
    %c1_342 = arith.constant 1 : index
    %c7_343 = arith.constant 7 : index
    %c0_344 = arith.constant 0 : index
    %250 = vector.load %arg12[%c0_341, %c1_342, %c7_343, %c0_344] : memref<2x4x8x128xf32, #tpu.memory_space<vmem>>, vector<2x1x1x128xf32>
    %251 = vector.shape_cast %250 : vector<2x1x1x128xf32> to vector<2x128xf32>
    %252 = arith.maximumf %249, %251 : vector<2x128xf32>
    %c1_345 = arith.constant 1 : index
    %c3_346 = arith.constant 3 : index
    %c0_347 = arith.constant 0 : index
    %c0_348 = arith.constant 0 : index
    %253 = vector.load %arg5[%c1_345, %c3_346, %c0_347, %c0_348] : memref<4x4x128x128xf32, #tpu.memory_space<vmem>>, vector<1x1x128x128xf32>
    %254 = vector.shape_cast %253 : vector<1x1x128x128xf32> to vector<128x128xf32>
    %cst_349 = arith.constant dense<0.000000e+00> : vector<2x128xf32>
    %255 = tpu.matmul %252, %254, %cst_349 {dimension_numbers = #tpu.dot_dimension_numbers<[1], [0], [0], [1], [0, 0, 1, 1], [], []>} : vector<2x128xf32>, vector<128x128xf32>, vector<2x128xf32> -> vector<2x128xf32>
    %256 = arith.addf %247, %255 : vector<2x128xf32>
    %c0_350 = arith.constant 0 : index
    %c2_351 = arith.constant 2 : index
    %c0_352 = arith.constant 0 : index
    %c0_353 = arith.constant 0 : index
    %257 = vector.load %arg12[%c0_350, %c2_351, %c0_352, %c0_353] : memref<2x4x8x128xf32, #tpu.memory_space<vmem>>, vector<2x1x1x128xf32>
    %258 = vector.shape_cast %257 : vector<2x1x1x128xf32> to vector<2x128xf32>
    %c0_354 = arith.constant 0 : index
    %c2_355 = arith.constant 2 : index
    %c1_356 = arith.constant 1 : index
    %c0_357 = arith.constant 0 : index
    %259 = vector.load %arg12[%c0_354, %c2_355, %c1_356, %c0_357] : memref<2x4x8x128xf32, #tpu.memory_space<vmem>>, vector<2x1x1x128xf32>
    %260 = vector.shape_cast %259 : vector<2x1x1x128xf32> to vector<2x128xf32>
    %261 = arith.maximumf %258, %260 : vector<2x128xf32>
    %c2_358 = arith.constant 2 : index
    %c0_359 = arith.constant 0 : index
    %c0_360 = arith.constant 0 : index
    %c0_361 = arith.constant 0 : index
    %262 = vector.load %arg5[%c2_358, %c0_359, %c0_360, %c0_361] : memref<4x4x128x128xf32, #tpu.memory_space<vmem>>, vector<1x1x128x128xf32>
    %263 = vector.shape_cast %262 : vector<1x1x128x128xf32> to vector<128x128xf32>
    %cst_362 = arith.constant dense<0.000000e+00> : vector<2x128xf32>
    %264 = tpu.matmul %261, %263, %cst_362 {dimension_numbers = #tpu.dot_dimension_numbers<[1], [0], [0], [1], [0, 0, 1, 1], [], []>} : vector<2x128xf32>, vector<128x128xf32>, vector<2x128xf32> -> vector<2x128xf32>
    %265 = arith.addf %256, %264 : vector<2x128xf32>
    %c0_363 = arith.constant 0 : index
    %c2_364 = arith.constant 2 : index
    %c2_365 = arith.constant 2 : index
    %c0_366 = arith.constant 0 : index
    %266 = vector.load %arg12[%c0_363, %c2_364, %c2_365, %c0_366] : memref<2x4x8x128xf32, #tpu.memory_space<vmem>>, vector<2x1x1x128xf32>
    %267 = vector.shape_cast %266 : vector<2x1x1x128xf32> to vector<2x128xf32>
    %c0_367 = arith.constant 0 : index
    %c2_368 = arith.constant 2 : index
    %c3_369 = arith.constant 3 : index
    %c0_370 = arith.constant 0 : index
    %268 = vector.load %arg12[%c0_367, %c2_368, %c3_369, %c0_370] : memref<2x4x8x128xf32, #tpu.memory_space<vmem>>, vector<2x1x1x128xf32>
    %269 = vector.shape_cast %268 : vector<2x1x1x128xf32> to vector<2x128xf32>
    %270 = arith.maximumf %267, %269 : vector<2x128xf32>
    %c2_371 = arith.constant 2 : index
    %c1_372 = arith.constant 1 : index
    %c0_373 = arith.constant 0 : index
    %c0_374 = arith.constant 0 : index
    %271 = vector.load %arg5[%c2_371, %c1_372, %c0_373, %c0_374] : memref<4x4x128x128xf32, #tpu.memory_space<vmem>>, vector<1x1x128x128xf32>
    %272 = vector.shape_cast %271 : vector<1x1x128x128xf32> to vector<128x128xf32>
    %cst_375 = arith.constant dense<0.000000e+00> : vector<2x128xf32>
    %273 = tpu.matmul %270, %272, %cst_375 {dimension_numbers = #tpu.dot_dimension_numbers<[1], [0], [0], [1], [0, 0, 1, 1], [], []>} : vector<2x128xf32>, vector<128x128xf32>, vector<2x128xf32> -> vector<2x128xf32>
    %274 = arith.addf %265, %273 : vector<2x128xf32>
    %c0_376 = arith.constant 0 : index
    %c2_377 = arith.constant 2 : index
    %c4_378 = arith.constant 4 : index
    %c0_379 = arith.constant 0 : index
    %275 = vector.load %arg12[%c0_376, %c2_377, %c4_378, %c0_379] : memref<2x4x8x128xf32, #tpu.memory_space<vmem>>, vector<2x1x1x128xf32>
    %276 = vector.shape_cast %275 : vector<2x1x1x128xf32> to vector<2x128xf32>
    %c0_380 = arith.constant 0 : index
    %c2_381 = arith.constant 2 : index
    %c5_382 = arith.constant 5 : index
    %c0_383 = arith.constant 0 : index
    %277 = vector.load %arg12[%c0_380, %c2_381, %c5_382, %c0_383] : memref<2x4x8x128xf32, #tpu.memory_space<vmem>>, vector<2x1x1x128xf32>
    %278 = vector.shape_cast %277 : vector<2x1x1x128xf32> to vector<2x128xf32>
    %279 = arith.maximumf %276, %278 : vector<2x128xf32>
    %c2_384 = arith.constant 2 : index
    %c2_385 = arith.constant 2 : index
    %c0_386 = arith.constant 0 : index
    %c0_387 = arith.constant 0 : index
    %280 = vector.load %arg5[%c2_384, %c2_385, %c0_386, %c0_387] : memref<4x4x128x128xf32, #tpu.memory_space<vmem>>, vector<1x1x128x128xf32>
    %281 = vector.shape_cast %280 : vector<1x1x128x128xf32> to vector<128x128xf32>
    %cst_388 = arith.constant dense<0.000000e+00> : vector<2x128xf32>
    %282 = tpu.matmul %279, %281, %cst_388 {dimension_numbers = #tpu.dot_dimension_numbers<[1], [0], [0], [1], [0, 0, 1, 1], [], []>} : vector<2x128xf32>, vector<128x128xf32>, vector<2x128xf32> -> vector<2x128xf32>
    %283 = arith.addf %274, %282 : vector<2x128xf32>
    %c0_389 = arith.constant 0 : index
    %c2_390 = arith.constant 2 : index
    %c6_391 = arith.constant 6 : index
    %c0_392 = arith.constant 0 : index
    %284 = vector.load %arg12[%c0_389, %c2_390, %c6_391, %c0_392] : memref<2x4x8x128xf32, #tpu.memory_space<vmem>>, vector<2x1x1x128xf32>
    %285 = vector.shape_cast %284 : vector<2x1x1x128xf32> to vector<2x128xf32>
    %c0_393 = arith.constant 0 : index
    %c2_394 = arith.constant 2 : index
    %c7_395 = arith.constant 7 : index
    %c0_396 = arith.constant 0 : index
    %286 = vector.load %arg12[%c0_393, %c2_394, %c7_395, %c0_396] : memref<2x4x8x128xf32, #tpu.memory_space<vmem>>, vector<2x1x1x128xf32>
    %287 = vector.shape_cast %286 : vector<2x1x1x128xf32> to vector<2x128xf32>
    %288 = arith.maximumf %285, %287 : vector<2x128xf32>
    %c2_397 = arith.constant 2 : index
    %c3_398 = arith.constant 3 : index
    %c0_399 = arith.constant 0 : index
    %c0_400 = arith.constant 0 : index
    %289 = vector.load %arg5[%c2_397, %c3_398, %c0_399, %c0_400] : memref<4x4x128x128xf32, #tpu.memory_space<vmem>>, vector<1x1x128x128xf32>
    %290 = vector.shape_cast %289 : vector<1x1x128x128xf32> to vector<128x128xf32>
    %cst_401 = arith.constant dense<0.000000e+00> : vector<2x128xf32>
    %291 = tpu.matmul %288, %290, %cst_401 {dimension_numbers = #tpu.dot_dimension_numbers<[1], [0], [0], [1], [0, 0, 1, 1], [], []>} : vector<2x128xf32>, vector<128x128xf32>, vector<2x128xf32> -> vector<2x128xf32>
    %292 = arith.addf %283, %291 : vector<2x128xf32>
    %c0_402 = arith.constant 0 : index
    %c3_403 = arith.constant 3 : index
    %c0_404 = arith.constant 0 : index
    %c0_405 = arith.constant 0 : index
    %293 = vector.load %arg12[%c0_402, %c3_403, %c0_404, %c0_405] : memref<2x4x8x128xf32, #tpu.memory_space<vmem>>, vector<2x1x1x128xf32>
    %294 = vector.shape_cast %293 : vector<2x1x1x128xf32> to vector<2x128xf32>
    %c0_406 = arith.constant 0 : index
    %c3_407 = arith.constant 3 : index
    %c1_408 = arith.constant 1 : index
    %c0_409 = arith.constant 0 : index
    %295 = vector.load %arg12[%c0_406, %c3_407, %c1_408, %c0_409] : memref<2x4x8x128xf32, #tpu.memory_space<vmem>>, vector<2x1x1x128xf32>
    %296 = vector.shape_cast %295 : vector<2x1x1x128xf32> to vector<2x128xf32>
    %297 = arith.maximumf %294, %296 : vector<2x128xf32>
    %c3_410 = arith.constant 3 : index
    %c0_411 = arith.constant 0 : index
    %c0_412 = arith.constant 0 : index
    %c0_413 = arith.constant 0 : index
    %298 = vector.load %arg5[%c3_410, %c0_411, %c0_412, %c0_413] : memref<4x4x128x128xf32, #tpu.memory_space<vmem>>, vector<1x1x128x128xf32>
    %299 = vector.shape_cast %298 : vector<1x1x128x128xf32> to vector<128x128xf32>
    %cst_414 = arith.constant dense<0.000000e+00> : vector<2x128xf32>
    %300 = tpu.matmul %297, %299, %cst_414 {dimension_numbers = #tpu.dot_dimension_numbers<[1], [0], [0], [1], [0, 0, 1, 1], [], []>} : vector<2x128xf32>, vector<128x128xf32>, vector<2x128xf32> -> vector<2x128xf32>
    %301 = arith.addf %292, %300 : vector<2x128xf32>
    %c0_415 = arith.constant 0 : index
    %c3_416 = arith.constant 3 : index
    %c2_417 = arith.constant 2 : index
    %c0_418 = arith.constant 0 : index
    %302 = vector.load %arg12[%c0_415, %c3_416, %c2_417, %c0_418] : memref<2x4x8x128xf32, #tpu.memory_space<vmem>>, vector<2x1x1x128xf32>
    %303 = vector.shape_cast %302 : vector<2x1x1x128xf32> to vector<2x128xf32>
    %c0_419 = arith.constant 0 : index
    %c3_420 = arith.constant 3 : index
    %c3_421 = arith.constant 3 : index
    %c0_422 = arith.constant 0 : index
    %304 = vector.load %arg12[%c0_419, %c3_420, %c3_421, %c0_422] : memref<2x4x8x128xf32, #tpu.memory_space<vmem>>, vector<2x1x1x128xf32>
    %305 = vector.shape_cast %304 : vector<2x1x1x128xf32> to vector<2x128xf32>
    %306 = arith.maximumf %303, %305 : vector<2x128xf32>
    %c3_423 = arith.constant 3 : index
    %c1_424 = arith.constant 1 : index
    %c0_425 = arith.constant 0 : index
    %c0_426 = arith.constant 0 : index
    %307 = vector.load %arg5[%c3_423, %c1_424, %c0_425, %c0_426] : memref<4x4x128x128xf32, #tpu.memory_space<vmem>>, vector<1x1x128x128xf32>
    %308 = vector.shape_cast %307 : vector<1x1x128x128xf32> to vector<128x128xf32>
    %cst_427 = arith.constant dense<0.000000e+00> : vector<2x128xf32>
    %309 = tpu.matmul %306, %308, %cst_427 {dimension_numbers = #tpu.dot_dimension_numbers<[1], [0], [0], [1], [0, 0, 1, 1], [], []>} : vector<2x128xf32>, vector<128x128xf32>, vector<2x128xf32> -> vector<2x128xf32>
    %310 = arith.addf %301, %309 : vector<2x128xf32>
    %c0_428 = arith.constant 0 : index
    %c3_429 = arith.constant 3 : index
    %c4_430 = arith.constant 4 : index
    %c0_431 = arith.constant 0 : index
    %311 = vector.load %arg12[%c0_428, %c3_429, %c4_430, %c0_431] : memref<2x4x8x128xf32, #tpu.memory_space<vmem>>, vector<2x1x1x128xf32>
    %312 = vector.shape_cast %311 : vector<2x1x1x128xf32> to vector<2x128xf32>
    %c0_432 = arith.constant 0 : index
    %c3_433 = arith.constant 3 : index
    %c5_434 = arith.constant 5 : index
    %c0_435 = arith.constant 0 : index
    %313 = vector.load %arg12[%c0_432, %c3_433, %c5_434, %c0_435] : memref<2x4x8x128xf32, #tpu.memory_space<vmem>>, vector<2x1x1x128xf32>
    %314 = vector.shape_cast %313 : vector<2x1x1x128xf32> to vector<2x128xf32>
    %315 = arith.maximumf %312, %314 : vector<2x128xf32>
    %c3_436 = arith.constant 3 : index
    %c2_437 = arith.constant 2 : index
    %c0_438 = arith.constant 0 : index
    %c0_439 = arith.constant 0 : index
    %316 = vector.load %arg5[%c3_436, %c2_437, %c0_438, %c0_439] : memref<4x4x128x128xf32, #tpu.memory_space<vmem>>, vector<1x1x128x128xf32>
    %317 = vector.shape_cast %316 : vector<1x1x128x128xf32> to vector<128x128xf32>
    %cst_440 = arith.constant dense<0.000000e+00> : vector<2x128xf32>
    %318 = tpu.matmul %315, %317, %cst_440 {dimension_numbers = #tpu.dot_dimension_numbers<[1], [0], [0], [1], [0, 0, 1, 1], [], []>} : vector<2x128xf32>, vector<128x128xf32>, vector<2x128xf32> -> vector<2x128xf32>
    %319 = arith.addf %310, %318 : vector<2x128xf32>
    %c0_441 = arith.constant 0 : index
    %c3_442 = arith.constant 3 : index
    %c6_443 = arith.constant 6 : index
    %c0_444 = arith.constant 0 : index
    %320 = vector.load %arg12[%c0_441, %c3_442, %c6_443, %c0_444] : memref<2x4x8x128xf32, #tpu.memory_space<vmem>>, vector<2x1x1x128xf32>
    %321 = vector.shape_cast %320 : vector<2x1x1x128xf32> to vector<2x128xf32>
    %c0_445 = arith.constant 0 : index
    %c3_446 = arith.constant 3 : index
    %c7_447 = arith.constant 7 : index
    %c0_448 = arith.constant 0 : index
    %322 = vector.load %arg12[%c0_445, %c3_446, %c7_447, %c0_448] : memref<2x4x8x128xf32, #tpu.memory_space<vmem>>, vector<2x1x1x128xf32>
    %323 = vector.shape_cast %322 : vector<2x1x1x128xf32> to vector<2x128xf32>
    %324 = arith.maximumf %321, %323 : vector<2x128xf32>
    %c3_449 = arith.constant 3 : index
    %c3_450 = arith.constant 3 : index
    %c0_451 = arith.constant 0 : index
    %c0_452 = arith.constant 0 : index
    %325 = vector.load %arg5[%c3_449, %c3_450, %c0_451, %c0_452] : memref<4x4x128x128xf32, #tpu.memory_space<vmem>>, vector<1x1x128x128xf32>
    %326 = vector.shape_cast %325 : vector<1x1x128x128xf32> to vector<128x128xf32>
    %cst_453 = arith.constant dense<0.000000e+00> : vector<2x128xf32>
    %327 = tpu.matmul %324, %326, %cst_453 {dimension_numbers = #tpu.dot_dimension_numbers<[1], [0], [0], [1], [0, 0, 1, 1], [], []>} : vector<2x128xf32>, vector<128x128xf32>, vector<2x128xf32> -> vector<2x128xf32>
    %328 = arith.addf %319, %327 : vector<2x128xf32>
    %c0_454 = arith.constant 0 : index
    %c0_455 = arith.constant 0 : index
    %329 = vector.load %arg6[%c0_454, %c0_455] : memref<1x128xf32, #tpu.memory_space<vmem>>, vector<1x128xf32>
    %330 = vector.broadcast %329 : vector<1x128xf32> to vector<2x128xf32>
    %331 = arith.addf %328, %330 : vector<2x128xf32>
    %cst_456 = arith.constant 0.000000e+00 : f32
    %332 = vector.broadcast %cst_456 : f32 to vector<2x128xf32>
    %333 = arith.maximumf %331, %332 : vector<2x128xf32>
    %c0_457 = arith.constant 0 : index
    %c0_458 = arith.constant 0 : index
    %334 = vector.load %arg7[%c0_457, %c0_458] : memref<128x128xf32, #tpu.memory_space<vmem>>, vector<128x128xf32>
    %cst_459 = arith.constant dense<0.000000e+00> : vector<2x128xf32>
    %335 = tpu.matmul %333, %334, %cst_459 {dimension_numbers = #tpu.dot_dimension_numbers<[1], [0], [0], [1], [0, 0, 1, 1], [], []>} : vector<2x128xf32>, vector<128x128xf32>, vector<2x128xf32> -> vector<2x128xf32>
    %c0_460 = arith.constant 0 : index
    %c0_461 = arith.constant 0 : index
    %336 = vector.load %arg8[%c0_460, %c0_461] : memref<1x128xf32, #tpu.memory_space<vmem>>, vector<1x128xf32>
    %337 = vector.broadcast %336 : vector<1x128xf32> to vector<2x128xf32>
    %338 = arith.addf %335, %337 : vector<2x128xf32>
    %339 = tpu.iota {dimensions = array<i32: 1>} : vector<2x128xi32>
    %c10_i32 = arith.constant 10 : i32
    %340 = vector.broadcast %c10_i32 : i32 to vector<2x128xi32>
    %341 = arith.cmpi slt, %339, %340 : vector<2x128xi32>
    %cst_462 = arith.constant -1.000000e+30 : f32
    %342 = vector.broadcast %cst_462 : f32 to vector<2x128xf32>
    %343 = arith.select %341, %338, %342 : vector<2x128xi1>, vector<2x128xf32>
    %cst_463 = arith.constant dense<0xFF800000> : vector<2xf32>
    %344 = vector.multi_reduction <maximumf>, %343, %cst_463 [1] : vector<2x128xf32> to vector<2xf32>
    %345 = vector.shape_cast %344 : vector<2xf32> to vector<2x1xf32>
    %346 = vector.broadcast %345 : vector<2x1xf32> to vector<2x128xf32>
    %347 = arith.subf %343, %346 : vector<2x128xf32>
    %348 = math.exp %347 : vector<2x128xf32>
    %cst_464 = arith.constant dense<0.000000e+00> : vector<2xf32>
    %349 = vector.multi_reduction <add>, %348, %cst_464 [1] : vector<2x128xf32> to vector<2xf32>
    %350 = vector.shape_cast %349 : vector<2xf32> to vector<2x1xf32>
    %351 = math.log %350 : vector<2x1xf32>
    %352 = vector.broadcast %351 : vector<2x1xf32> to vector<2x128xf32>
    %353 = arith.subf %347, %352 : vector<2x128xf32>
    %c0_465 = arith.constant 0 : index
    %c0_466 = arith.constant 0 : index
    %354 = vector.load %arg9[%c0_465, %c0_466] : memref<2x128xf32, #tpu.memory_space<vmem>>, vector<2x128xf32>
    tpu.vector_store %arg9[%c0_465, %c0_466], %353 {strides = array<i32>} : memref<2x128xf32, #tpu.memory_space<vmem>>, vector<2x128xf32>,
    return
  }
}

</mosaic_0001>

<llo_original>
// kernel: net_forward.1
$region0: #{net_forward.1}
  #allocation0 [shape = 'u32[]', space=smem, size = 0x4, offset = 0x4, fixed_abs, tag = 'smem constant byte address 0x4 - core index']
  #allocation1 [shape = 'u32[72,128]{1,0:T(1,128)}', space=vmem, size = 0x9000, scoped, tag = 'internal scratch']
  #allocation2 [shape = 'f32[24,24,128]{2,1,0:T(8,128)}', space=vmem, size = 0x48000, scoped, tag = 'scratch operand']
  #allocation3 [shape = 'f32[2,12,12,128]{3,2,1,0:T(8,128)}', space=vmem, size = 0x30000, scoped, tag = 'scratch operand']
  #allocation4 [shape = 'f32[2,4,8,128]{3,2,1,0:T(8,128)}', space=vmem, size = 0x8000, scoped, tag = 'scratch operand']
  %s0 = inlined_call_operand.vmem [shape: f32[1152,128], index: 0, kind: input, shape index: {}]
  %s1 = inlined_call_operand.vmem [shape: f32[128,128], index: 1, kind: input, shape index: {}]
  %s2 = inlined_call_operand.vmem [shape: f32[1,128], index: 2, kind: input, shape index: {}]
  %s3 = inlined_call_operand.vmem [shape: f32[5,5,128,128], index: 3, kind: input, shape index: {}]
  %s4 = inlined_call_operand.vmem [shape: f32[1,128], index: 4, kind: input, shape index: {}]
  %s5 = inlined_call_operand.vmem [shape: f32[4,4,128,128], index: 5, kind: input, shape index: {}]
  %s6 = inlined_call_operand.vmem [shape: f32[1,128], index: 6, kind: input, shape index: {}]
  %s7 = inlined_call_operand.vmem [shape: f32[128,128], index: 7, kind: input, shape index: {}]
  %s8 = inlined_call_operand.vmem [shape: f32[1,128], index: 8, kind: input, shape index: {}]
  %s9 = inlined_call_operand.hbm [shape: f32[2,128], index: 9, kind: output, shape index: {}]
  %s10 = sld [smem:[#allocation0]]
  $region46: #{net_forward.1} parent=0
    _
  %s12 = ssub.s32 1, %s10
  %s13 = scalar_select 0, %s12, %s10
  $region1: #{net_forward.1} parent=0
    #allocation5 [shape = 'u8[1024]{0}', space=vmem, size = 0x400, scoped, tag = 'output window, operand 0, single buffered']
    #allocation6 [shape = 's32[1]{0}', space=sflag, size = 0x4, scoped, tag = 'scoped memory for net_forward.1']
    %14 = vsyncpa [#allocation6], 0
    // Predicated region
    $region2: #{net_forward.1} parent=1 // pred_check
      _
    $region3: #{net_forward.1} parent=1 // pred_check_branch
      %16 = sbr.rel (0) target = $region5
    $region4: #{net_forward.1} parent=1 // pred_region
      _
    $region5: #{net_forward.1} parent=1 // pred_fallthru
      _
    // Predicated region
    $region6: #{net_forward.1} parent=1 // pred_check
      _
    $region7: #{net_forward.1} parent=1 // pred_check_branch
      %18 = sbr.rel (0) target = $region9
    $region8: #{net_forward.1} parent=1 // pred_region
      _
    $region9: #{net_forward.1} parent=1 // pred_fallthru
      _
    // Predicated region
    $region10: #{net_forward.1} parent=1 // pred_check
      _
    $region11: #{net_forward.1} parent=1 // pred_check_branch
      %20 = sbr.rel (0) target = $region13
    $region12: #{net_forward.1} parent=1 // pred_region
      _
    $region13: #{net_forward.1} parent=1 // pred_fallthru
      _
    // Predicated region
    $region14: #{net_forward.1} parent=1 // pred_check
      _
    $region15: #{net_forward.1} parent=1 // pred_check_branch
      %22 = sbr.rel (0) target = $region17
    $region16: #{net_forward.1} parent=1 // pred_region
      _
    $region17: #{net_forward.1} parent=1 // pred_fallthru
      _
    // Predicated region
    $region18: #{net_forward.1} parent=1 // pred_check
      _
    $region19: #{net_forward.1} parent=1 // pred_check_branch
      %24 = sbr.rel (0) target = $region21
    $region20: #{net_forward.1} parent=1 // pred_region
      _
    $region21: #{net_forward.1} parent=1 // pred_fallthru
      _
    // Predicated region
    $region22: #{net_forward.1} parent=1 // pred_check
      _
    $region23: #{net_forward.1} parent=1 // pred_check_branch
      %26 = sbr.rel (0) target = $region25
    $region24: #{net_forward.1} parent=1 // pred_region
      _
    $region25: #{net_forward.1} parent=1 // pred_fallthru
      _
    // Predicated region
    $region26: #{net_forward.1} parent=1 // pred_check
      _
    $region27: #{net_forward.1} parent=1 // pred_check_branch
      %28 = sbr.rel (0) target = $region29
    $region28: #{net_forward.1} parent=1 // pred_region
      _
    $region29: #{net_forward.1} parent=1 // pred_fallthru
      _
    // Predicated region
    $region30: #{net_forward.1} parent=1 // pred_check
      _
    $region31: #{net_forward.1} parent=1 // pred_check_branch
      %30 = sbr.rel (0) target = $region33
    $region32: #{net_forward.1} parent=1 // pred_region
      _
    $region33: #{net_forward.1} parent=1 // pred_fallthru
      _
    // Predicated region
    $region34: #{net_forward.1} parent=1 // pred_check
      _
    $region35: #{net_forward.1} parent=1 // pred_check_branch
      %32 = sbr.rel (0) target = $region37
    $region36: #{net_forward.1} parent=1 // pred_region
      _
    $region37: #{net_forward.1} parent=1 // pred_fallthru
      _
    %v33 = vld [vmem:[%s0] sm:$0xff]
    %v34 = vld [vmem:[%s0 + $0x8] sm:$0xff]
    %v35 = vld [vmem:[%s0 + $0x10] sm:$0xff]
    %v36 = vld [vmem:[%s0 + $0x18] sm:$0xff]
    %v37 = vld [vmem:[%s0 + $0x20] sm:$0xff]
    %v38 = vld [vmem:[%s0 + $0x28] sm:$0xff]
    %v39 = vld [vmem:[%s0 + $0x30] sm:$0xff]
    %v40 = vld [vmem:[%s0 + $0x38] sm:$0xff]
    %v41 = vld [vmem:[%s0 + $0x40] sm:$0xff]
    %v42 = vld [vmem:[%s0 + $0x48] sm:$0xff]
    %v43 = vld [vmem:[%s0 + $0x50] sm:$0xff]
    %v44 = vld [vmem:[%s0 + $0x58] sm:$0xff]
    %v45 = vld [vmem:[%s0 + $0x60] sm:$0xff]
    %v46 = vld [vmem:[%s0 + $0x68] sm:$0xff]
    %v47 = vld [vmem:[%s0 + $0x70] sm:$0xff]
    %v48 = vld [vmem:[%s0 + $0x78] sm:$0xff]
    %v49 = vld [vmem:[%s0 + $0x80] sm:$0xff]
    %v50 = vld [vmem:[%s0 + $0x88] sm:$0xff]
    %v51 = vld [vmem:[%s0 + $0x90] sm:$0xff]
    %v52 = vld [vmem:[%s0 + $0x98] sm:$0xff]
    %v53 = vld [vmem:[%s0 + $0xa0] sm:$0xff]
    %v54 = vld [vmem:[%s0 + $0xa8] sm:$0xff]
    %v55 = vld [vmem:[%s0 + $0xb0] sm:$0xff]
    %v56 = vld [vmem:[%s0 + $0xb8] sm:$0xff]
    %v57 = vld [vmem:[%s0 + $0xc0] sm:$0xff]
    %v58 = vld [vmem:[%s0 + $0xc8] sm:$0xff]
    %v59 = vld [vmem:[%s0 + $0xd0] sm:$0xff]
    %v60 = vld [vmem:[%s0 + $0xd8] sm:$0xff]
    %v61 = vld [vmem:[%s0 + $0xe0] sm:$0xff]
    %v62 = vld [vmem:[%s0 + $0xe8] sm:$0xff]
    %v63 = vld [vmem:[%s0 + $0xf0] sm:$0xff]
    %v64 = vld [vmem:[%s0 + $0xf8] sm:$0xff]
    %v65 = vld [vmem:[%s0 + $0x100] sm:$0xff]
    %v66 = vld [vmem:[%s0 + $0x108] sm:$0xff]
    %v67 = vld [vmem:[%s0 + $0x110] sm:$0xff]
    %v68 = vld [vmem:[%s0 + $0x118] sm:$0xff]
    %v69 = vld [vmem:[%s0 + $0x120] sm:$0xff]
    %v70 = vld [vmem:[%s0 + $0x128] sm:$0xff]
    %v71 = vld [vmem:[%s0 + $0x130] sm:$0xff]
    %v72 = vld [vmem:[%s0 + $0x138] sm:$0xff]
    %v73 = vld [vmem:[%s0 + $0x140] sm:$0xff]
    %v74 = vld [vmem:[%s0 + $0x148] sm:$0xff]
    %v75 = vld [vmem:[%s0 + $0x150] sm:$0xff]
    %v76 = vld [vmem:[%s0 + $0x158] sm:$0xff]
    %v77 = vld [vmem:[%s0 + $0x160] sm:$0xff]
    %v78 = vld [vmem:[%s0 + $0x168] sm:$0xff]
    %v79 = vld [vmem:[%s0 + $0x170] sm:$0xff]
    %v80 = vld [vmem:[%s0 + $0x178] sm:$0xff]
    %v81 = vld [vmem:[%s0 + $0x180] sm:$0xff]
    %v82 = vld [vmem:[%s0 + $0x188] sm:$0xff]
    %v83 = vld [vmem:[%s0 + $0x190] sm:$0xff]
    %v84 = vld [vmem:[%s0 + $0x198] sm:$0xff]
    %v85 = vld [vmem:[%s0 + $0x1a0] sm:$0xff]
    %v86 = vld [vmem:[%s0 + $0x1a8] sm:$0xff]
    %v87 = vld [vmem:[%s0 + $0x1b0] sm:$0xff]
    %v88 = vld [vmem:[%s0 + $0x1b8] sm:$0xff]
    %v89 = vld [vmem:[%s0 + $0x1c0] sm:$0xff]
    %v90 = vld [vmem:[%s0 + $0x1c8] sm:$0xff]
    %v91 = vld [vmem:[%s0 + $0x1d0] sm:$0xff]
    %v92 = vld [vmem:[%s0 + $0x1d8] sm:$0xff]
    %v93 = vld [vmem:[%s0 + $0x1e0] sm:$0xff]
    %v94 = vld [vmem:[%s0 + $0x1e8] sm:$0xff]
    %v95 = vld [vmem:[%s0 + $0x1f0] sm:$0xff]
    %v96 = vld [vmem:[%s0 + $0x1f8] sm:$0xff]
    %v97 = vld [vmem:[%s0 + $0x200] sm:$0xff]
    %v98 = vld [vmem:[%s0 + $0x208] sm:$0xff]
    %v99 = vld [vmem:[%s0 + $0x210] sm:$0xff]
    %v100 = vld [vmem:[%s0 + $0x218] sm:$0xff]
    %v101 = vld [vmem:[%s0 + $0x220] sm:$0xff]
    %v102 = vld [vmem:[%s0 + $0x228] sm:$0xff]
    %v103 = vld [vmem:[%s0 + $0x230] sm:$0xff]
    %v104 = vld [vmem:[%s0 + $0x238] sm:$0xff]
    %v105 = vld [vmem:[%s0 + $0x240] sm:$0xff]
    %v106 = vld [vmem:[%s0 + $0x248] sm:$0xff]
    %v107 = vld [vmem:[%s0 + $0x250] sm:$0xff]
    %v108 = vld [vmem:[%s0 + $0x258] sm:$0xff]
    %v109 = vld [vmem:[%s0 + $0x260] sm:$0xff]
    %v110 = vld [vmem:[%s0 + $0x268] sm:$0xff]
    %v111 = vld [vmem:[%s0 + $0x270] sm:$0xff]
    %v112 = vld [vmem:[%s0 + $0x278] sm:$0xff]
    %v113 = vld [vmem:[%s0 + $0x280] sm:$0xff]
    %v114 = vld [vmem:[%s0 + $0x288] sm:$0xff]
    %v115 = vld [vmem:[%s0 + $0x290] sm:$0xff]
    %v116 = vld [vmem:[%s0 + $0x298] sm:$0xff]
    %v117 = vld [vmem:[%s0 + $0x2a0] sm:$0xff]
    %v118 = vld [vmem:[%s0 + $0x2a8] sm:$0xff]
    %v119 = vld [vmem:[%s0 + $0x2b0] sm:$0xff]
    %v120 = vld [vmem:[%s0 + $0x2b8] sm:$0xff]
    %v121 = vld [vmem:[%s0 + $0x2c0] sm:$0xff]
    %v122 = vld [vmem:[%s0 + $0x2c8] sm:$0xff]
    %v123 = vld [vmem:[%s0 + $0x2d0] sm:$0xff]
    %v124 = vld [vmem:[%s0 + $0x2d8] sm:$0xff]
    %v125 = vld [vmem:[%s0 + $0x2e0] sm:$0xff]
    %v126 = vld [vmem:[%s0 + $0x2e8] sm:$0xff]
    %v127 = vld [vmem:[%s0 + $0x2f0] sm:$0xff]
    %v128 = vld [vmem:[%s0 + $0x2f8] sm:$0xff]
    %v129 = vld [vmem:[%s0 + $0x300] sm:$0xff]
    %v130 = vld [vmem:[%s0 + $0x308] sm:$0xff]
    %v131 = vld [vmem:[%s0 + $0x310] sm:$0xff]
    %v132 = vld [vmem:[%s0 + $0x318] sm:$0xff]
    %v133 = vld [vmem:[%s0 + $0x320] sm:$0xff]
    %v134 = vld [vmem:[%s0 + $0x328] sm:$0xff]
    %v135 = vld [vmem:[%s0 + $0x330] sm:$0xff]
    %v136 = vld [vmem:[%s0 + $0x338] sm:$0xff]
    %v137 = vld [vmem:[%s0 + $0x340] sm:$0xff]
    %v138 = vld [vmem:[%s0 + $0x348] sm:$0xff]
    %v139 = vld [vmem:[%s0 + $0x350] sm:$0xff]
    %v140 = vld [vmem:[%s0 + $0x358] sm:$0xff]
    %v141 = vld [vmem:[%s0 + $0x360] sm:$0xff]
    %v142 = vld [vmem:[%s0 + $0x368] sm:$0xff]
    %v143 = vld [vmem:[%s0 + $0x370] sm:$0xff]
    %v144 = vld [vmem:[%s0 + $0x378] sm:$0xff]
    %v145 = vld [vmem:[%s0 + $0x380] sm:$0xff]
    %v146 = vld [vmem:[%s0 + $0x388] sm:$0xff]
    %v147 = vld [vmem:[%s0 + $0x390] sm:$0xff]
    %v148 = vld [vmem:[%s0 + $0x398] sm:$0xff]
    %v149 = vld [vmem:[%s0 + $0x3a0] sm:$0xff]
    %v150 = vld [vmem:[%s0 + $0x3a8] sm:$0xff]
    %v151 = vld [vmem:[%s0 + $0x3b0] sm:$0xff]
    %v152 = vld [vmem:[%s0 + $0x3b8] sm:$0xff]
    %v153 = vld [vmem:[%s0 + $0x3c0] sm:$0xff]
    %v154 = vld [vmem:[%s0 + $0x3c8] sm:$0xff]
    %v155 = vld [vmem:[%s0 + $0x3d0] sm:$0xff]
    %v156 = vld [vmem:[%s0 + $0x3d8] sm:$0xff]
    %v157 = vld [vmem:[%s0 + $0x3e0] sm:$0xff]
    %v158 = vld [vmem:[%s0 + $0x3e8] sm:$0xff]
    %v159 = vld [vmem:[%s0 + $0x3f0] sm:$0xff]
    %v160 = vld [vmem:[%s0 + $0x3f8] sm:$0xff]
    %v161 = vld [vmem:[%s0 + $0x400] sm:$0xff]
    %v162 = vld [vmem:[%s0 + $0x408] sm:$0xff]
    %v163 = vld [vmem:[%s0 + $0x410] sm:$0xff]
    %v164 = vld [vmem:[%s0 + $0x418] sm:$0xff]
    %v165 = vld [vmem:[%s0 + $0x420] sm:$0xff]
    %v166 = vld [vmem:[%s0 + $0x428] sm:$0xff]
    %v167 = vld [vmem:[%s0 + $0x430] sm:$0xff]
    %v168 = vld [vmem:[%s0 + $0x438] sm:$0xff]
    %v169 = vld [vmem:[%s0 + $0x440] sm:$0xff]
    %v170 = vld [vmem:[%s0 + $0x448] sm:$0xff]
    %v171 = vld [vmem:[%s0 + $0x450] sm:$0xff]
    %v172 = vld [vmem:[%s0 + $0x458] sm:$0xff]
    %v173 = vld [vmem:[%s0 + $0x460] sm:$0xff]
    %v174 = vld [vmem:[%s0 + $0x468] sm:$0xff]
    %v175 = vld [vmem:[%s0 + $0x470] sm:$0xff]
    %v176 = vld [vmem:[%s0 + $0x478] sm:$0xff]
    %v177 = vld [vmem:[%s1] sm:$0xff]
    %v178 = vld [vmem:[%s1 + $0x8] sm:$0xff]
    %v179 = vld [vmem:[%s1 + $0x10] sm:$0xff]
    %v180 = vld [vmem:[%s1 + $0x18] sm:$0xff]
    %v181 = vld [vmem:[%s1 + $0x20] sm:$0xff]
    %v182 = vld [vmem:[%s1 + $0x28] sm:$0xff]
    %v183 = vld [vmem:[%s1 + $0x30] sm:$0xff]
    %v184 = vld [vmem:[%s1 + $0x38] sm:$0xff]
    %v185 = vld [vmem:[%s1 + $0x40] sm:$0xff]
    %v186 = vld [vmem:[%s1 + $0x48] sm:$0xff]
    %v187 = vld [vmem:[%s1 + $0x50] sm:$0xff]
    %v188 = vld [vmem:[%s1 + $0x58] sm:$0xff]
    %v189 = vld [vmem:[%s1 + $0x60] sm:$0xff]
    %v190 = vld [vmem:[%s1 + $0x68] sm:$0xff]
    %v191 = vld [vmem:[%s1 + $0x70] sm:$0xff]
    %v192 = vld [vmem:[%s1 + $0x78] sm:$0xff]
    %v193 = vld [vmem:[%s2] sm:$0x1]
    %v195 = vperm.slane %v193, 0
    %197 = vmatpush.msra.mxu0 %v192
    %198 = vmatpush.msra.mxu0 %v191
    %199 = vmatpush.msra.mxu0 %v190
    %200 = vmatpush.msra.mxu0 %v189
    %201 = vmatpush.msra.mxu0 %v188
    %202 = vmatpush.msra.mxu0 %v187
    %203 = vmatpush.msra.mxu0 %v186
    %204 = vmatpush.msra.mxu0 %v185
    %205 = vmatpush.msra.mxu0 %v184
    %206 = vmatpush.msra.mxu0 %v183
    %207 = vmatpush.msra.mxu0 %v182
    %208 = vmatpush.msra.mxu0 %v181
    %209 = vmatpush.msra.mxu0 %v180
    %210 = vmatpush.msra.mxu0 %v179
    %211 = vmatpush.msra.mxu0 %v178
    %212 = vmatpush.msra.mxu0 %v177
    %213 = vmatmul.f32.gmra.mxu0 %v33
    %v214 = vpop.f32.mrf.mxu0
    %v215 = vadd.f32 %v195, %v214
    %216 = vmatmul.f32.gmra.mxu0 %v34
    %v217 = vpop.f32.mrf.mxu0
    %v218 = vadd.f32 %v195, %v217
    %219 = vmatmul.f32.gmra.mxu0 %v35
    %v220 = vpop.f32.mrf.mxu0
    %v221 = vadd.f32 %v195, %v220
    %222 = vmatmul.f32.gmra.mxu0 %v36
    %v223 = vpop.f32.mrf.mxu0
    %v224 = vadd.f32 %v195, %v223
    %225 = vmatmul.f32.gmra.mxu0 %v37
    %v226 = vpop.f32.mrf.mxu0
    %v227 = vadd.f32 %v195, %v226
    %228 = vmatmul.f32.gmra.mxu0 %v38
    %v229 = vpop.f32.mrf.mxu0
    %v230 = vadd.f32 %v195, %v229
    %231 = vmatmul.f32.gmra.mxu0 %v39
    %v232 = vpop.f32.mrf.mxu0
    %v233 = vadd.f32 %v195, %v232
    %234 = vmatmul.f32.gmra.mxu0 %v40
    %v235 = vpop.f32.mrf.mxu0
    %v236 = vadd.f32 %v195, %v235
    %237 = vmatmul.f32.gmra.mxu0 %v41
    %v238 = vpop.f32.mrf.mxu0
    %v239 = vadd.f32 %v195, %v238
    %240 = vmatmul.f32.gmra.mxu0 %v42
    %v241 = vpop.f32.mrf.mxu0
    %v242 = vadd.f32 %v195, %v241
    %243 = vmatmul.f32.gmra.mxu0 %v43
    %v244 = vpop.f32.mrf.mxu0
    %v245 = vadd.f32 %v195, %v244
    %246 = vmatmul.f32.gmra.mxu0 %v44
    %v247 = vpop.f32.mrf.mxu0
    %v248 = vadd.f32 %v195, %v247
    %249 = vmatmul.f32.gmra.mxu0 %v45
    %v250 = vpop.f32.mrf.mxu0
    %v251 = vadd.f32 %v195, %v250
    %252 = vmatmul.f32.gmra.mxu0 %v46
    %v253 = vpop.f32.mrf.mxu0
    %v254 = vadd.f32 %v195, %v253
    %255 = vmatmul.f32.gmra.mxu0 %v47
    %v256 = vpop.f32.mrf.mxu0
    %v257 = vadd.f32 %v195, %v256
    %258 = vmatmul.f32.gmra.mxu0 %v48
    %v259 = vpop.f32.mrf.mxu0
    %v260 = vadd.f32 %v195, %v259
    %261 = vmatmul.f32.gmra.mxu0 %v49
    %v262 = vpop.f32.mrf.mxu0
    %v263 = vadd.f32 %v195, %v262
    %264 = vmatmul.f32.gmra.mxu0 %v50
    %v265 = vpop.f32.mrf.mxu0
    %v266 = vadd.f32 %v195, %v265
    %267 = vmatmul.f32.gmra.mxu0 %v51
    %v268 = vpop.f32.mrf.mxu0
    %v269 = vadd.f32 %v195, %v268
    %270 = vmatmul.f32.gmra.mxu0 %v52
    %v271 = vpop.f32.mrf.mxu0
    %v272 = vadd.f32 %v195, %v271
    %273 = vmatmul.f32.gmra.mxu0 %v53
    %v274 = vpop.f32.mrf.mxu0
    %v275 = vadd.f32 %v195, %v274
    %276 = vmatmul.f32.gmra.mxu0 %v54
    %v277 = vpop.f32.mrf.mxu0
    %v278 = vadd.f32 %v195, %v277
    %279 = vmatmul.f32.gmra.mxu0 %v55
    %v280 = vpop.f32.mrf.mxu0
    %v281 = vadd.f32 %v195, %v280
    %282 = vmatmul.f32.gmra.mxu0 %v56
    %v283 = vpop.f32.mrf.mxu0
    %v284 = vadd.f32 %v195, %v283
    %285 = vmatmul.f32.gmra.mxu0 %v57
    %v286 = vpop.f32.mrf.mxu0
    %v287 = vadd.f32 %v195, %v286
    %288 = vmatmul.f32.gmra.mxu0 %v58
    %v289 = vpop.f32.mrf.mxu0
    %v290 = vadd.f32 %v195, %v289
    %291 = vmatmul.f32.gmra.mxu0 %v59
    %v292 = vpop.f32.mrf.mxu0
    %v293 = vadd.f32 %v195, %v292
    %294 = vmatmul.f32.gmra.mxu0 %v60
    %v295 = vpop.f32.mrf.mxu0
    %v296 = vadd.f32 %v195, %v295
    %297 = vmatmul.f32.gmra.mxu0 %v61
    %v298 = vpop.f32.mrf.mxu0
    %v299 = vadd.f32 %v195, %v298
    %300 = vmatmul.f32.gmra.mxu0 %v62
    %v301 = vpop.f32.mrf.mxu0
    %v302 = vadd.f32 %v195, %v301
    %303 = vmatmul.f32.gmra.mxu0 %v63
    %v304 = vpop.f32.mrf.mxu0
    %v305 = vadd.f32 %v195, %v304
    %306 = vmatmul.f32.gmra.mxu0 %v64
    %v307 = vpop.f32.mrf.mxu0
    %v308 = vadd.f32 %v195, %v307
    %309 = vmatmul.f32.gmra.mxu0 %v65
    %v310 = vpop.f32.mrf.mxu0
    %v311 = vadd.f32 %v195, %v310
    %312 = vmatmul.f32.gmra.mxu0 %v66
    %v313 = vpop.f32.mrf.mxu0
    %v314 = vadd.f32 %v195, %v313
    %315 = vmatmul.f32.gmra.mxu0 %v67
    %v316 = vpop.f32.mrf.mxu0
    %v317 = vadd.f32 %v195, %v316
    %318 = vmatmul.f32.gmra.mxu0 %v68
    %v319 = vpop.f32.mrf.mxu0
    %v320 = vadd.f32 %v195, %v319
    %321 = vmatmul.f32.gmra.mxu0 %v69
    %v322 = vpop.f32.mrf.mxu0
    %v323 = vadd.f32 %v195, %v322
    %324 = vmatmul.f32.gmra.mxu0 %v70
    %v325 = vpop.f32.mrf.mxu0
    %v326 = vadd.f32 %v195, %v325
    %327 = vmatmul.f32.gmra.mxu0 %v71
    %v328 = vpop.f32.mrf.mxu0
    %v329 = vadd.f32 %v195, %v328
    %330 = vmatmul.f32.gmra.mxu0 %v72
    %v331 = vpop.f32.mrf.mxu0
    %v332 = vadd.f32 %v195, %v331
    %333 = vmatmul.f32.gmra.mxu0 %v73
    %v334 = vpop.f32.mrf.mxu0
    %v335 = vadd.f32 %v195, %v334
    %336 = vmatmul.f32.gmra.mxu0 %v74
    %v337 = vpop.f32.mrf.mxu0
    %v338 = vadd.f32 %v195, %v337
    %339 = vmatmul.f32.gmra.mxu0 %v75
    %v340 = vpop.f32.mrf.mxu0
    %v341 = vadd.f32 %v195, %v340
    %342 = vmatmul.f32.gmra.mxu0 %v76
    %v343 = vpop.f32.mrf.mxu0
    %v344 = vadd.f32 %v195, %v343
    %345 = vmatmul.f32.gmra.mxu0 %v77
    %v346 = vpop.f32.mrf.mxu0
    %v347 = vadd.f32 %v195, %v346
    %348 = vmatmul.f32.gmra.mxu0 %v78
    %v349 = vpop.f32.mrf.mxu0
    %v350 = vadd.f32 %v195, %v349
    %351 = vmatmul.f32.gmra.mxu0 %v79
    %v352 = vpop.f32.mrf.mxu0
    %v353 = vadd.f32 %v195, %v352
    %354 = vmatmul.f32.gmra.mxu0 %v80
    %v355 = vpop.f32.mrf.mxu0
    %v356 = vadd.f32 %v195, %v355
    %357 = vmatmul.f32.gmra.mxu0 %v81
    %v358 = vpop.f32.mrf.mxu0
    %v359 = vadd.f32 %v195, %v358
    %360 = vmatmul.f32.gmra.mxu0 %v82
    %v361 = vpop.f32.mrf.mxu0
    %v362 = vadd.f32 %v195, %v361
    %363 = vmatmul.f32.gmra.mxu0 %v83
    %v364 = vpop.f32.mrf.mxu0
    %v365 = vadd.f32 %v195, %v364
    %366 = vmatmul.f32.gmra.mxu0 %v84
    %v367 = vpop.f32.mrf.mxu0
    %v368 = vadd.f32 %v195, %v367
    %369 = vmatmul.f32.gmra.mxu0 %v85
    %v370 = vpop.f32.mrf.mxu0
    %v371 = vadd.f32 %v195, %v370
    %372 = vmatmul.f32.gmra.mxu0 %v86
    %v373 = vpop.f32.mrf.mxu0
    %v374 = vadd.f32 %v195, %v373
    %375 = vmatmul.f32.gmra.mxu0 %v87
    %v376 = vpop.f32.mrf.mxu0
    %v377 = vadd.f32 %v195, %v376
    %378 = vmatmul.f32.gmra.mxu0 %v88
    %v379 = vpop.f32.mrf.mxu0
    %v380 = vadd.f32 %v195, %v379
    %381 = vmatmul.f32.gmra.mxu0 %v89
    %v382 = vpop.f32.mrf.mxu0
    %v383 = vadd.f32 %v195, %v382
    %384 = vmatmul.f32.gmra.mxu0 %v90
    %v385 = vpop.f32.mrf.mxu0
    %v386 = vadd.f32 %v195, %v385
    %387 = vmatmul.f32.gmra.mxu0 %v91
    %v388 = vpop.f32.mrf.mxu0
    %v389 = vadd.f32 %v195, %v388
    %390 = vmatmul.f32.gmra.mxu0 %v92
    %v391 = vpop.f32.mrf.mxu0
    %v392 = vadd.f32 %v195, %v391
    %393 = vmatmul.f32.gmra.mxu0 %v93
    %v394 = vpop.f32.mrf.mxu0
    %v395 = vadd.f32 %v195, %v394
    %396 = vmatmul.f32.gmra.mxu0 %v94
    %v397 = vpop.f32.mrf.mxu0
    %v398 = vadd.f32 %v195, %v397
    %399 = vmatmul.f32.gmra.mxu0 %v95
    %v400 = vpop.f32.mrf.mxu0
    %v401 = vadd.f32 %v195, %v400
    %402 = vmatmul.f32.gmra.mxu0 %v96
    %v403 = vpop.f32.mrf.mxu0
    %v404 = vadd.f32 %v195, %v403
    %405 = vmatmul.f32.gmra.mxu0 %v97
    %v406 = vpop.f32.mrf.mxu0
    %v407 = vadd.f32 %v195, %v406
    %408 = vmatmul.f32.gmra.mxu0 %v98
    %v409 = vpop.f32.mrf.mxu0
    %v410 = vadd.f32 %v195, %v409
    %411 = vmatmul.f32.gmra.mxu0 %v99
    %v412 = vpop.f32.mrf.mxu0
    %v413 = vadd.f32 %v195, %v412
    %414 = vmatmul.f32.gmra.mxu0 %v100
    %v415 = vpop.f32.mrf.mxu0
    %v416 = vadd.f32 %v195, %v415
    %417 = vmatmul.f32.gmra.mxu0 %v101
    %v418 = vpop.f32.mrf.mxu0
    %v419 = vadd.f32 %v195, %v418
    %420 = vmatmul.f32.gmra.mxu0 %v102
    %v421 = vpop.f32.mrf.mxu0
    %v422 = vadd.f32 %v195, %v421
    %423 = vmatmul.f32.gmra.mxu0 %v103
    %v424 = vpop.f32.mrf.mxu0
    %v425 = vadd.f32 %v195, %v424
    %426 = vmatmul.f32.gmra.mxu0 %v104
    %v427 = vpop.f32.mrf.mxu0
    %v428 = vadd.f32 %v195, %v427
    %429 = vmatmul.f32.gmra.mxu0 %v105
    %v430 = vpop.f32.mrf.mxu0
    %v431 = vadd.f32 %v195, %v430
    %432 = vmatmul.f32.gmra.mxu0 %v106
    %v433 = vpop.f32.mrf.mxu0
    %v434 = vadd.f32 %v195, %v433
    %435 = vmatmul.f32.gmra.mxu0 %v107
    %v436 = vpop.f32.mrf.mxu0
    %v437 = vadd.f32 %v195, %v436
    %438 = vmatmul.f32.gmra.mxu0 %v108
    %v439 = vpop.f32.mrf.mxu0
    %v440 = vadd.f32 %v195, %v439
    %441 = vmatmul.f32.gmra.mxu0 %v109
    %v442 = vpop.f32.mrf.mxu0
    %v443 = vadd.f32 %v195, %v442
    %444 = vmatmul.f32.gmra.mxu0 %v110
    %v445 = vpop.f32.mrf.mxu0
    %v446 = vadd.f32 %v195, %v445
    %447 = vmatmul.f32.gmra.mxu0 %v111
    %v448 = vpop.f32.mrf.mxu0
    %v449 = vadd.f32 %v195, %v448
    %450 = vmatmul.f32.gmra.mxu0 %v112
    %v451 = vpop.f32.mrf.mxu0
    %v452 = vadd.f32 %v195, %v451
    %453 = vmatmul.f32.gmra.mxu0 %v113
    %v454 = vpop.f32.mrf.mxu0
    %v455 = vadd.f32 %v195, %v454
    %456 = vmatmul.f32.gmra.mxu0 %v114
    %v457 = vpop.f32.mrf.mxu0
    %v458 = vadd.f32 %v195, %v457
    %459 = vmatmul.f32.gmra.mxu0 %v115
    %v460 = vpop.f32.mrf.mxu0
    %v461 = vadd.f32 %v195, %v460
    %462 = vmatmul.f32.gmra.mxu0 %v116
    %v463 = vpop.f32.mrf.mxu0
    %v464 = vadd.f32 %v195, %v463
    %465 = vmatmul.f32.gmra.mxu0 %v117
    %v466 = vpop.f32.mrf.mxu0
    %v467 = vadd.f32 %v195, %v466
    %468 = vmatmul.f32.gmra.mxu0 %v118
    %v469 = vpop.f32.mrf.mxu0
    %v470 = vadd.f32 %v195, %v469
    %471 = vmatmul.f32.gmra.mxu0 %v119
    %v472 = vpop.f32.mrf.mxu0
    %v473 = vadd.f32 %v195, %v472
    %474 = vmatmul.f32.gmra.mxu0 %v120
    %v475 = vpop.f32.mrf.mxu0
    %v476 = vadd.f32 %v195, %v475
    %477 = vmatmul.f32.gmra.mxu0 %v121
    %v478 = vpop.f32.mrf.mxu0
    %v479 = vadd.f32 %v195, %v478
    %480 = vmatmul.f32.gmra.mxu0 %v122
    %v481 = vpop.f32.mrf.mxu0
    %v482 = vadd.f32 %v195, %v481
    %483 = vmatmul.f32.gmra.mxu0 %v123
    %v484 = vpop.f32.mrf.mxu0
    %v485 = vadd.f32 %v195, %v484
    %486 = vmatmul.f32.gmra.mxu0 %v124
    %v487 = vpop.f32.mrf.mxu0
    %v488 = vadd.f32 %v195, %v487
    %489 = vmatmul.f32.gmra.mxu0 %v125
    %v490 = vpop.f32.mrf.mxu0
    %v491 = vadd.f32 %v195, %v490
    %492 = vmatmul.f32.gmra.mxu0 %v126
    %v493 = vpop.f32.mrf.mxu0
    %v494 = vadd.f32 %v195, %v493
    %495 = vmatmul.f32.gmra.mxu0 %v127
    %v496 = vpop.f32.mrf.mxu0
    %v497 = vadd.f32 %v195, %v496
    %498 = vmatmul.f32.gmra.mxu0 %v128
    %v499 = vpop.f32.mrf.mxu0
    %v500 = vadd.f32 %v195, %v499
    %501 = vmatmul.f32.gmra.mxu0 %v129
    %v502 = vpop.f32.mrf.mxu0
    %v503 = vadd.f32 %v195, %v502
    %504 = vmatmul.f32.gmra.mxu0 %v130
    %v505 = vpop.f32.mrf.mxu0
    %v506 = vadd.f32 %v195, %v505
    %507 = vmatmul.f32.gmra.mxu0 %v131
    %v508 = vpop.f32.mrf.mxu0
    %v509 = vadd.f32 %v195, %v508
    %510 = vmatmul.f32.gmra.mxu0 %v132
    %v511 = vpop.f32.mrf.mxu0
    %v512 = vadd.f32 %v195, %v511
    %513 = vmatmul.f32.gmra.mxu0 %v133
    %v514 = vpop.f32.mrf.mxu0
    %v515 = vadd.f32 %v195, %v514
    %516 = vmatmul.f32.gmra.mxu0 %v134
    %v517 = vpop.f32.mrf.mxu0
    %v518 = vadd.f32 %v195, %v517
    %519 = vmatmul.f32.gmra.mxu0 %v135
    %v520 = vpop.f32.mrf.mxu0
    %v521 = vadd.f32 %v195, %v520
    %522 = vmatmul.f32.gmra.mxu0 %v136
    %v523 = vpop.f32.mrf.mxu0
    %v524 = vadd.f32 %v195, %v523
    %525 = vmatmul.f32.gmra.mxu0 %v137
    %v526 = vpop.f32.mrf.mxu0
    %v527 = vadd.f32 %v195, %v526
    %528 = vmatmul.f32.gmra.mxu0 %v138
    %v529 = vpop.f32.mrf.mxu0
    %v530 = vadd.f32 %v195, %v529
    %531 = vmatmul.f32.gmra.mxu0 %v139
    %v532 = vpop.f32.mrf.mxu0
    %v533 = vadd.f32 %v195, %v532
    %534 = vmatmul.f32.gmra.mxu0 %v140
    %v535 = vpop.f32.mrf.mxu0
    %v536 = vadd.f32 %v195, %v535
    %537 = vmatmul.f32.gmra.mxu0 %v141
    %v538 = vpop.f32.mrf.mxu0
    %v539 = vadd.f32 %v195, %v538
    %540 = vmatmul.f32.gmra.mxu0 %v142
    %v541 = vpop.f32.mrf.mxu0
    %v542 = vadd.f32 %v195, %v541
    %543 = vmatmul.f32.gmra.mxu0 %v143
    %v544 = vpop.f32.mrf.mxu0
    %v545 = vadd.f32 %v195, %v544
    %546 = vmatmul.f32.gmra.mxu0 %v144
    %v547 = vpop.f32.mrf.mxu0
    %v548 = vadd.f32 %v195, %v547
    %549 = vmatmul.f32.gmra.mxu0 %v145
    %v550 = vpop.f32.mrf.mxu0
    %v551 = vadd.f32 %v195, %v550
    %552 = vmatmul.f32.gmra.mxu0 %v146
    %v553 = vpop.f32.mrf.mxu0
    %v554 = vadd.f32 %v195, %v553
    %555 = vmatmul.f32.gmra.mxu0 %v147
    %v556 = vpop.f32.mrf.mxu0
    %v557 = vadd.f32 %v195, %v556
    %558 = vmatmul.f32.gmra.mxu0 %v148
    %v559 = vpop.f32.mrf.mxu0
    %v560 = vadd.f32 %v195, %v559
    %561 = vmatmul.f32.gmra.mxu0 %v149
    %v562 = vpop.f32.mrf.mxu0
    %v563 = vadd.f32 %v195, %v562
    %564 = vmatmul.f32.gmra.mxu0 %v150
    %v565 = vpop.f32.mrf.mxu0
    %v566 = vadd.f32 %v195, %v565
    %567 = vmatmul.f32.gmra.mxu0 %v151
    %v568 = vpop.f32.mrf.mxu0
    %v569 = vadd.f32 %v195, %v568
    %570 = vmatmul.f32.gmra.mxu0 %v152
    %v571 = vpop.f32.mrf.mxu0
    %v572 = vadd.f32 %v195, %v571
    %573 = vmatmul.f32.gmra.mxu0 %v153
    %v574 = vpop.f32.mrf.mxu0
    %v575 = vadd.f32 %v195, %v574
    %576 = vmatmul.f32.gmra.mxu0 %v154
    %v577 = vpop.f32.mrf.mxu0
    %v578 = vadd.f32 %v195, %v577
    %579 = vmatmul.f32.gmra.mxu0 %v155
    %v580 = vpop.f32.mrf.mxu0
    %v581 = vadd.f32 %v195, %v580
    %582 = vmatmul.f32.gmra.mxu0 %v156
    %v583 = vpop.f32.mrf.mxu0
    %v584 = vadd.f32 %v195, %v583
    %585 = vmatmul.f32.gmra.mxu0 %v157
    %v586 = vpop.f32.mrf.mxu0
    %v587 = vadd.f32 %v195, %v586
    %588 = vmatmul.f32.gmra.mxu0 %v158
    %v589 = vpop.f32.mrf.mxu0
    %v590 = vadd.f32 %v195, %v589
    %591 = vmatmul.f32.gmra.mxu0 %v159
    %v592 = vpop.f32.mrf.mxu0
    %v593 = vadd.f32 %v195, %v592
    %594 = vmatmul.f32.gmra.mxu0 %v160
    %v595 = vpop.f32.mrf.mxu0
    %v596 = vadd.f32 %v195, %v595
    %597 = vmatmul.f32.gmra.mxu0 %v161
    %v598 = vpop.f32.mrf.mxu0
    %v599 = vadd.f32 %v195, %v598
    %600 = vmatmul.f32.gmra.mxu0 %v162
    %v601 = vpop.f32.mrf.mxu0
    %v602 = vadd.f32 %v195, %v601
    %603 = vmatmul.f32.gmra.mxu0 %v163
    %v604 = vpop.f32.mrf.mxu0
    %v605 = vadd.f32 %v195, %v604
    %606 = vmatmul.f32.gmra.mxu0 %v164
    %v607 = vpop.f32.mrf.mxu0
    %v608 = vadd.f32 %v195, %v607
    %609 = vmatmul.f32.gmra.mxu0 %v165
    %v610 = vpop.f32.mrf.mxu0
    %v611 = vadd.f32 %v195, %v610
    %612 = vmatmul.f32.gmra.mxu0 %v166
    %v613 = vpop.f32.mrf.mxu0
    %v614 = vadd.f32 %v195, %v613
    %615 = vmatmul.f32.gmra.mxu0 %v167
    %v616 = vpop.f32.mrf.mxu0
    %v617 = vadd.f32 %v195, %v616
    %618 = vmatmul.f32.gmra.mxu0 %v168
    %v619 = vpop.f32.mrf.mxu0
    %v620 = vadd.f32 %v195, %v619
    %621 = vmatmul.f32.gmra.mxu0 %v169
    %v622 = vpop.f32.mrf.mxu0
    %v623 = vadd.f32 %v195, %v622
    %624 = vmatmul.f32.gmra.mxu0 %v170
    %v625 = vpop.f32.mrf.mxu0
    %v626 = vadd.f32 %v195, %v625
    %627 = vmatmul.f32.gmra.mxu0 %v171
    %v628 = vpop.f32.mrf.mxu0
    %v629 = vadd.f32 %v195, %v628
    %630 = vmatmul.f32.gmra.mxu0 %v172
    %v631 = vpop.f32.mrf.mxu0
    %v632 = vadd.f32 %v195, %v631
    %633 = vmatmul.f32.gmra.mxu0 %v173
    %v634 = vpop.f32.mrf.mxu0
    %v635 = vadd.f32 %v195, %v634
    %636 = vmatmul.f32.gmra.mxu0 %v174
    %v637 = vpop.f32.mrf.mxu0
    %v638 = vadd.f32 %v195, %v637
    %639 = vmatmul.f32.gmra.mxu0 %v175
    %v640 = vpop.f32.mrf.mxu0
    %v641 = vadd.f32 %v195, %v640
    %642 = vmatmul.f32.gmra.mxu0 %v176
    %v643 = vpop.f32.mrf.mxu0
    %v644 = vadd.f32 %v195, %v643
    %645 = vdwg.mxu0
    %v646 = vmax.f32 %v215, 0.0
    %v647 = vmax.f32 %v218, 0.0
    %v648 = vmax.f32 %v221, 0.0
    %v649 = vmax.f32 %v224, 0.0
    %v650 = vmax.f32 %v227, 0.0
    %v651 = vmax.f32 %v230, 0.0
    %v652 = vmax.f32 %v233, 0.0
    %v653 = vmax.f32 %v236, 0.0
    %v654 = vmax.f32 %v239, 0.0
    %v655 = vmax.f32 %v242, 0.0
    %v656 = vmax.f32 %v245, 0.0
    %v657 = vmax.f32 %v248, 0.0
    %v658 = vmax.f32 %v251, 0.0
    %v659 = vmax.f32 %v254, 0.0
    %v660 = vmax.f32 %v257, 0.0
    %v661 = vmax.f32 %v260, 0.0
    %v662 = vmax.f32 %v263, 0.0
    %v663 = vmax.f32 %v266, 0.0
    %v664 = vmax.f32 %v269, 0.0
    %v665 = vmax.f32 %v272, 0.0
    %v666 = vmax.f32 %v275, 0.0
    %v667 = vmax.f32 %v278, 0.0
    %v668 = vmax.f32 %v281, 0.0
    %v669 = vmax.f32 %v284, 0.0
    %v670 = vmax.f32 %v287, 0.0
    %v671 = vmax.f32 %v290, 0.0
    %v672 = vmax.f32 %v293, 0.0
    %v673 = vmax.f32 %v296, 0.0
    %v674 = vmax.f32 %v299, 0.0
    %v675 = vmax.f32 %v302, 0.0
    %v676 = vmax.f32 %v305, 0.0
    %v677 = vmax.f32 %v308, 0.0
    %v678 = vmax.f32 %v311, 0.0
    %v679 = vmax.f32 %v314, 0.0
    %v680 = vmax.f32 %v317, 0.0
    %v681 = vmax.f32 %v320, 0.0
    %v682 = vmax.f32 %v323, 0.0
    %v683 = vmax.f32 %v326, 0.0
    %v684 = vmax.f32 %v329, 0.0
    %v685 = vmax.f32 %v332, 0.0
    %v686 = vmax.f32 %v335, 0.0
    %v687 = vmax.f32 %v338, 0.0
    %v688 = vmax.f32 %v341, 0.0
    %v689 = vmax.f32 %v344, 0.0
    %v690 = vmax.f32 %v347, 0.0
    %v691 = vmax.f32 %v350, 0.0
    %v692 = vmax.f32 %v353, 0.0
    %v693 = vmax.f32 %v356, 0.0
    %v694 = vmax.f32 %v359, 0.0
    %v695 = vmax.f32 %v362, 0.0
    %v696 = vmax.f32 %v365, 0.0
    %v697 = vmax.f32 %v368, 0.0
    %v698 = vmax.f32 %v371, 0.0
    %v699 = vmax.f32 %v374, 0.0
    %v700 = vmax.f32 %v377, 0.0
    %v701 = vmax.f32 %v380, 0.0
    %v702 = vmax.f32 %v383, 0.0
    %v703 = vmax.f32 %v386, 0.0
    %v704 = vmax.f32 %v389, 0.0
    %v705 = vmax.f32 %v392, 0.0
    %v706 = vmax.f32 %v395, 0.0
    %v707 = vmax.f32 %v398, 0.0
    %v708 = vmax.f32 %v401, 0.0
    %v709 = vmax.f32 %v404, 0.0
    %v710 = vmax.f32 %v407, 0.0
    %v711 = vmax.f32 %v410, 0.0
    %v712 = vmax.f32 %v413, 0.0
    %v713 = vmax.f32 %v416, 0.0
    %v714 = vmax.f32 %v419, 0.0
    %v715 = vmax.f32 %v422, 0.0
    %v716 = vmax.f32 %v425, 0.0
    %v717 = vmax.f32 %v428, 0.0
    %v718 = vmax.f32 %v431, 0.0
    %v719 = vmax.f32 %v434, 0.0
    %v720 = vmax.f32 %v437, 0.0
    %v721 = vmax.f32 %v440, 0.0
    %v722 = vmax.f32 %v443, 0.0
    %v723 = vmax.f32 %v446, 0.0
    %v724 = vmax.f32 %v449, 0.0
    %v725 = vmax.f32 %v452, 0.0
    %v726 = vmax.f32 %v455, 0.0
    %v727 = vmax.f32 %v458, 0.0
    %v728 = vmax.f32 %v461, 0.0
    %v729 = vmax.f32 %v464, 0.0
    %v730 = vmax.f32 %v467, 0.0
    %v731 = vmax.f32 %v470, 0.0
    %v732 = vmax.f32 %v473, 0.0
    %v733 = vmax.f32 %v476, 0.0
    %v734 = vmax.f32 %v479, 0.0
    %v735 = vmax.f32 %v482, 0.0
    %v736 = vmax.f32 %v485, 0.0
    %v737 = vmax.f32 %v488, 0.0
    %v738 = vmax.f32 %v491, 0.0
    %v739 = vmax.f32 %v494, 0.0
    %v740 = vmax.f32 %v497, 0.0
    %v741 = vmax.f32 %v500, 0.0
    %v742 = vmax.f32 %v503, 0.0
    %v743 = vmax.f32 %v506, 0.0
    %v744 = vmax.f32 %v509, 0.0
    %v745 = vmax.f32 %v512, 0.0
    %v746 = vmax.f32 %v515, 0.0
    %v747 = vmax.f32 %v518, 0.0
    %v748 = vmax.f32 %v521, 0.0
    %v749 = vmax.f32 %v524, 0.0
    %v750 = vmax.f32 %v527, 0.0
    %v751 = vmax.f32 %v530, 0.0
    %v752 = vmax.f32 %v533, 0.0
    %v753 = vmax.f32 %v536, 0.0
    %v754 = vmax.f32 %v539, 0.0
    %v755 = vmax.f32 %v542, 0.0
    %v756 = vmax.f32 %v545, 0.0
    %v757 = vmax.f32 %v548, 0.0
    %v758 = vmax.f32 %v551, 0.0
    %v759 = vmax.f32 %v554, 0.0
    %v760 = vmax.f32 %v557, 0.0
    %v761 = vmax.f32 %v560, 0.0
    %v762 = vmax.f32 %v563, 0.0
    %v763 = vmax.f32 %v566, 0.0
    %v764 = vmax.f32 %v569, 0.0
    %v765 = vmax.f32 %v572, 0.0
    %v766 = vmax.f32 %v575, 0.0
    %v767 = vmax.f32 %v578, 0.0
    %v768 = vmax.f32 %v581, 0.0
    %v769 = vmax.f32 %v584, 0.0
    %v770 = vmax.f32 %v587, 0.0
    %v771 = vmax.f32 %v590, 0.0
    %v772 = vmax.f32 %v593, 0.0
    %v773 = vmax.f32 %v596, 0.0
    %v774 = vmax.f32 %v599, 0.0
    %v775 = vmax.f32 %v602, 0.0
    %v776 = vmax.f32 %v605, 0.0
    %v777 = vmax.f32 %v608, 0.0
    %v778 = vmax.f32 %v611, 0.0
    %v779 = vmax.f32 %v614, 0.0
    %v780 = vmax.f32 %v617, 0.0
    %v781 = vmax.f32 %v620, 0.0
    %v782 = vmax.f32 %v623, 0.0
    %v783 = vmax.f32 %v626, 0.0
    %v784 = vmax.f32 %v629, 0.0
    %v785 = vmax.f32 %v632, 0.0
    %v786 = vmax.f32 %v635, 0.0
    %v787 = vmax.f32 %v638, 0.0
    %v788 = vmax.f32 %v641, 0.0
    %v789 = vmax.f32 %v644, 0.0
    %v790 = vmax.f32 %v646, %v649
    %v791 = vmax.f32 %v647, %v650
    %v792 = vmax.f32 %v648, %v651
    %v793 = vmax.f32 %v652, %v655
    %v794 = vmax.f32 %v653, %v656
    %v795 = vmax.f32 %v654, %v657
    %v796 = vmax.f32 %v658, %v661
    %v797 = vmax.f32 %v659, %v662
    %v798 = vmax.f32 %v660, %v663
    %v799 = vmax.f32 %v664, %v667
    %v800 = vmax.f32 %v665, %v668
    %v801 = vmax.f32 %v666, %v669
    %v802 = vmax.f32 %v670, %v673
    %v803 = vmax.f32 %v671, %v674
    %v804 = vmax.f32 %v672, %v675
    %v805 = vmax.f32 %v676, %v679
    %v806 = vmax.f32 %v677, %v680
    %v807 = vmax.f32 %v678, %v681
    %v808 = vmax.f32 %v682, %v685
    %v809 = vmax.f32 %v683, %v686
    %v810 = vmax.f32 %v684, %v687
    %v811 = vmax.f32 %v688, %v691
    %v812 = vmax.f32 %v689, %v692
    %v813 = vmax.f32 %v690, %v693
    %v814 = vmax.f32 %v694, %v697
    %v815 = vmax.f32 %v695, %v698
    %v816 = vmax.f32 %v696, %v699
    %v817 = vmax.f32 %v700, %v703
    %v818 = vmax.f32 %v701, %v704
    %v819 = vmax.f32 %v702, %v705
    %v820 = vmax.f32 %v706, %v709
    %v821 = vmax.f32 %v707, %v710
    %v822 = vmax.f32 %v708, %v711
    %v823 = vmax.f32 %v712, %v715
    %v824 = vmax.f32 %v713, %v716
    %v825 = vmax.f32 %v714, %v717
    %v826 = vmax.f32 %v718, %v721
    %v827 = vmax.f32 %v719, %v722
    %v828 = vmax.f32 %v720, %v723
    %v829 = vmax.f32 %v724, %v727
    %v830 = vmax.f32 %v725, %v728
    %v831 = vmax.f32 %v726, %v729
    %v832 = vmax.f32 %v730, %v733
    %v833 = vmax.f32 %v731, %v734
    %v834 = vmax.f32 %v732, %v735
    %v835 = vmax.f32 %v736, %v739
    %v836 = vmax.f32 %v737, %v740
    %v837 = vmax.f32 %v738, %v741
    %v838 = vmax.f32 %v742, %v745
    %v839 = vmax.f32 %v743, %v746
    %v840 = vmax.f32 %v744, %v747
    %v841 = vmax.f32 %v748, %v751
    %v842 = vmax.f32 %v749, %v752
    %v843 = vmax.f32 %v750, %v753
    %v844 = vmax.f32 %v754, %v757
    %v845 = vmax.f32 %v755, %v758
    %v846 = vmax.f32 %v756, %v759
    %v847 = vmax.f32 %v760, %v763
    %v848 = vmax.f32 %v761, %v764
    %v849 = vmax.f32 %v762, %v765
    %v850 = vmax.f32 %v766, %v769
    %v851 = vmax.f32 %v767, %v770
    %v852 = vmax.f32 %v768, %v771
    %v853 = vmax.f32 %v772, %v775
    %v854 = vmax.f32 %v773, %v776
    %v855 = vmax.f32 %v774, %v777
    %v856 = vmax.f32 %v778, %v781
    %v857 = vmax.f32 %v779, %v782
    %v858 = vmax.f32 %v780, %v783
    %v859 = vmax.f32 %v784, %v787
    %v860 = vmax.f32 %v785, %v788
    %v861 = vmax.f32 %v786, %v789
    %862 = vst [vmem:[#allocation2] sm:$0xff] %v790
    %863 = vst [vmem:[#allocation2 + $0x8] sm:$0xff] %v791
    %864 = vst [vmem:[#allocation2 + $0x10] sm:$0xff] %v792
    %865 = vst [vmem:[#allocation2 + $0x18] sm:$0xff] %v793
    %866 = vst [vmem:[#allocation2 + $0x20] sm:$0xff] %v794
    %867 = vst [vmem:[#allocation2 + $0x28] sm:$0xff] %v795
    %868 = vst [vmem:[#allocation2 + $0x30] sm:$0xff] %v796
    %869 = vst [vmem:[#allocation2 + $0x38] sm:$0xff] %v797
    %870 = vst [vmem:[#allocation2 + $0x40] sm:$0xff] %v798
    %871 = vst [vmem:[#allocation2 + $0x48] sm:$0xff] %v799
    %872 = vst [vmem:[#allocation2 + $0x50] sm:$0xff] %v800
    %873 = vst [vmem:[#allocation2 + $0x58] sm:$0xff] %v801
    %874 = vst [vmem:[#allocation2 + $0x60] sm:$0xff] %v802
    %875 = vst [vmem:[#allocation2 + $0x68] sm:$0xff] %v803
    %876 = vst [vmem:[#allocation2 + $0x70] sm:$0xff] %v804
    %877 = vst [vmem:[#allocation2 + $0x78] sm:$0xff] %v805
    %878 = vst [vmem:[#allocation2 + $0x80] sm:$0xff] %v806
    %879 = vst [vmem:[#allocation2 + $0x88] sm:$0xff] %v807
    %880 = vst [vmem:[#allocation2 + $0x90] sm:$0xff] %v808
    %881 = vst [vmem:[#allocation2 + $0x98] sm:$0xff] %v809
    %882 = vst [vmem:[#allocation2 + $0xa0] sm:$0xff] %v810
    %883 = vst [vmem:[#allocation2 + $0xa8] sm:$0xff] %v811
    %884 = vst [vmem:[#allocation2 + $0xb0] sm:$0xff] %v812
    %885 = vst [vmem:[#allocation2 + $0xb8] sm:$0xff] %v813
    %886 = vst [vmem:[#allocation2 + $0xc0] sm:$0xff] %v814
    %887 = vst [vmem:[#allocation2 + $0xc8] sm:$0xff] %v815
    %888 = vst [vmem:[#allocation2 + $0xd0] sm:$0xff] %v816
    %889 = vst [vmem:[#allocation2 + $0xd8] sm:$0xff] %v817
    %890 = vst [vmem:[#allocation2 + $0xe0] sm:$0xff] %v818
    %891 = vst [vmem:[#allocation2 + $0xe8] sm:$0xff] %v819
    %892 = vst [vmem:[#allocation2 + $0xf0] sm:$0xff] %v820
    %893 = vst [vmem:[#allocation2 + $0xf8] sm:$0xff] %v821
    %894 = vst [vmem:[#allocation2 + $0x100] sm:$0xff] %v822
    %895 = vst [vmem:[#allocation2 + $0x108] sm:$0xff] %v823
    %896 = vst [vmem:[#allocation2 + $0x110] sm:$0xff] %v824
    %897 = vst [vmem:[#allocation2 + $0x118] sm:$0xff] %v825
    %898 = vst [vmem:[#allocation2 + $0x120] sm:$0xff] %v826
    %899 = vst [vmem:[#allocation2 + $0x128] sm:$0xff] %v827
    %900 = vst [vmem:[#allocation2 + $0x130] sm:$0xff] %v828
    %901 = vst [vmem:[#allocation2 + $0x138] sm:$0xff] %v829
    %902 = vst [vmem:[#allocation2 + $0x140] sm:$0xff] %v830
    %903 = vst [vmem:[#allocation2 + $0x148] sm:$0xff] %v831
    %904 = vst [vmem:[#allocation2 + $0x150] sm:$0xff] %v832
    %905 = vst [vmem:[#allocation2 + $0x158] sm:$0xff] %v833
    %906 = vst [vmem:[#allocation2 + $0x160] sm:$0xff] %v834
    %907 = vst [vmem:[#allocation2 + $0x168] sm:$0xff] %v835
    %908 = vst [vmem:[#allocation2 + $0x170] sm:$0xff] %v836
    %909 = vst [vmem:[#allocation2 + $0x178] sm:$0xff] %v837
    %910 = vst [vmem:[#allocation2 + $0x180] sm:$0xff] %v838
    %911 = vst [vmem:[#allocation2 + $0x188] sm:$0xff] %v839
    %912 = vst [vmem:[#allocation2 + $0x190] sm:$0xff] %v840
    %913 = vst [vmem:[#allocation2 + $0x198] sm:$0xff] %v841
    %914 = vst [vmem:[#allocation2 + $0x1a0] sm:$0xff] %v842
    %915 = vst [vmem:[#allocation2 + $0x1a8] sm:$0xff] %v843
    %916 = vst [vmem:[#allocation2 + $0x1b0] sm:$0xff] %v844
    %917 = vst [vmem:[#allocation2 + $0x1b8] sm:$0xff] %v845
    %918 = vst [vmem:[#allocation2 + $0x1c0] sm:$0xff] %v846
    %919 = vst [vmem:[#allocation2 + $0x1c8] sm:$0xff] %v847
    %920 = vst [vmem:[#allocation2 + $0x1d0] sm:$0xff] %v848
    %921 = vst [vmem:[#allocation2 + $0x1d8] sm:$0xff] %v849
    %922 = vst [vmem:[#allocation2 + $0x1e0] sm:$0xff] %v850
    %923 = vst [vmem:[#allocation2 + $0x1e8] sm:$0xff] %v851
    %924 = vst [vmem:[#allocation2 + $0x1f0] sm:$0xff] %v852
    %925 = vst [vmem:[#allocation2 + $0x1f8] sm:$0xff] %v853
    %926 = vst [vmem:[#allocation2 + $0x200] sm:$0xff] %v854
    %927 = vst [vmem:[#allocation2 + $0x208] sm:$0xff] %v855
    %928 = vst [vmem:[#allocation2 + $0x210] sm:$0xff] %v856
    %929 = vst [vmem:[#allocation2 + $0x218] sm:$0xff] %v857
    %930 = vst [vmem:[#allocation2 + $0x220] sm:$0xff] %v858
    %931 = vst [vmem:[#allocation2 + $0x228] sm:$0xff] %v859
    %932 = vst [vmem:[#allocation2 + $0x230] sm:$0xff] %v860
    %933 = vst [vmem:[#allocation2 + $0x238] sm:$0xff] %v861
    %v934 = vld [vmem:[#allocation2] ss:$2 sm:$0xff]
    %s935 = scalar_lea.vmem [#allocation2], 16
    %v936 = vld [vmem:[%s935] ss:$2 sm:$0xf]
    %s937 = scalar_lea.vmem [#allocation2], 24
    %v938 = vld [vmem:[%s937] ss:$2 sm:$0xff]
    %s939 = scalar_lea.vmem [#allocation2], 40
    %v940 = vld [vmem:[%s939] ss:$2 sm:$0xf]
    %s941 = scalar_lea.vmem [#allocation2], 48
    %v942 = vld [vmem:[%s941] ss:$2 sm:$0xff]
    %s943 = scalar_lea.vmem [#allocation2], 64
    %v944 = vld [vmem:[%s943] ss:$2 sm:$0xf]
    %s945 = scalar_lea.vmem [#allocation2], 72
    %v946 = vld [vmem:[%s945] ss:$2 sm:$0xff]
    %s947 = scalar_lea.vmem [#allocation2], 88
    %v948 = vld [vmem:[%s947] ss:$2 sm:$0xf]
    %s949 = scalar_lea.vmem [#allocation2], 96
    %v950 = vld [vmem:[%s949] ss:$2 sm:$0xff]
    %s951 = scalar_lea.vmem [#allocation2], 112
    %v952 = vld [vmem:[%s951] ss:$2 sm:$0xf]
    %s953 = scalar_lea.vmem [#allocation2], 120
    %v954 = vld [vmem:[%s953] ss:$2 sm:$0xff]
    %s955 = scalar_lea.vmem [#allocation2], 136
    %v956 = vld [vmem:[%s955] ss:$2 sm:$0xf]
    %s957 = scalar_lea.vmem [#allocation2], 144
    %v958 = vld [vmem:[%s957] ss:$2 sm:$0xff]
    %s959 = scalar_lea.vmem [#allocation2], 160
    %v960 = vld [vmem:[%s959] ss:$2 sm:$0xf]
    %s961 = scalar_lea.vmem [#allocation2], 168
    %v962 = vld [vmem:[%s961] ss:$2 sm:$0xff]
    %s963 = scalar_lea.vmem [#allocation2], 184
    %v964 = vld [vmem:[%s963] ss:$2 sm:$0xf]
    %s965 = scalar_lea.vmem [#allocation2], 192
    %v966 = vld [vmem:[%s965] ss:$2 sm:$0xff]
    %s967 = scalar_lea.vmem [#allocation2], 208
    %v968 = vld [vmem:[%s967] ss:$2 sm:$0xf]
    %s969 = scalar_lea.vmem [#allocation2], 216
    %v970 = vld [vmem:[%s969] ss:$2 sm:$0xff]
    %s971 = scalar_lea.vmem [#allocation2], 232
    %v972 = vld [vmem:[%s971] ss:$2 sm:$0xf]
    %s973 = scalar_lea.vmem [#allocation2], 240
    %v974 = vld [vmem:[%s973] ss:$2 sm:$0xff]
    %s975 = scalar_lea.vmem [#allocation2], 256
    %v976 = vld [vmem:[%s975] ss:$2 sm:$0xf]
    %s977 = scalar_lea.vmem [#allocation2], 264
    %v978 = vld [vmem:[%s977] ss:$2 sm:$0xff]
    %s979 = scalar_lea.vmem [#allocation2], 280
    %v980 = vld [vmem:[%s979] ss:$2 sm:$0xf]
    %s981 = scalar_lea.vmem [#allocation2], 288
    %v982 = vld [vmem:[%s981] ss:$2 sm:$0xff]
    %s983 = scalar_lea.vmem [#allocation2], 304
    %v984 = vld [vmem:[%s983] ss:$2 sm:$0xf]
    %s985 = scalar_lea.vmem [#allocation2], 312
    %v986 = vld [vmem:[%s985] ss:$2 sm:$0xff]
    %s987 = scalar_lea.vmem [#allocation2], 328
    %v988 = vld [vmem:[%s987] ss:$2 sm:$0xf]
    %s989 = scalar_lea.vmem [#allocation2], 336
    %v990 = vld [vmem:[%s989] ss:$2 sm:$0xff]
    %s991 = scalar_lea.vmem [#allocation2], 352
    %v992 = vld [vmem:[%s991] ss:$2 sm:$0xf]
    %s993 = scalar_lea.vmem [#allocation2], 360
    %v994 = vld [vmem:[%s993] ss:$2 sm:$0xff]
    %s995 = scalar_lea.vmem [#allocation2], 376
    %v996 = vld [vmem:[%s995] ss:$2 sm:$0xf]
    %s997 = scalar_lea.vmem [#allocation2], 384
    %v998 = vld [vmem:[%s997] ss:$2 sm:$0xff]
    %s999 = scalar_lea.vmem [#allocation2], 400
    %v1000 = vld [vmem:[%s999] ss:$2 sm:$0xf]
    %s1001 = scalar_lea.vmem [#allocation2], 408
    %v1002 = vld [vmem:[%s1001] ss:$2 sm:$0xff]
    %s1003 = scalar_lea.vmem [#allocation2], 424
    %v1004 = vld [vmem:[%s1003] ss:$2 sm:$0xf]
    %s1005 = scalar_lea.vmem [#allocation2], 432
    %v1006 = vld [vmem:[%s1005] ss:$2 sm:$0xff]
    %s1007 = scalar_lea.vmem [#allocation2], 448
    %v1008 = vld [vmem:[%s1007] ss:$2 sm:$0xf]
    %s1009 = scalar_lea.vmem [#allocation2], 456
    %v1010 = vld [vmem:[%s1009] ss:$2 sm:$0xff]
    %s1011 = scalar_lea.vmem [#allocation2], 472
    %v1012 = vld [vmem:[%s1011] ss:$2 sm:$0xf]
    %s1013 = scalar_lea.vmem [#allocation2], 480
    %v1014 = vld [vmem:[%s1013] ss:$2 sm:$0xff]
    %s1015 = scalar_lea.vmem [#allocation2], 496
    %v1016 = vld [vmem:[%s1015] ss:$2 sm:$0xf]
    %s1017 = scalar_lea.vmem [#allocation2], 504
    %v1018 = vld [vmem:[%s1017] ss:$2 sm:$0xff]
    %s1019 = scalar_lea.vmem [#allocation2], 520
    %v1020 = vld [vmem:[%s1019] ss:$2 sm:$0xf]
    %s1021 = scalar_lea.vmem [#allocation2], 528
    %v1022 = vld [vmem:[%s1021] ss:$2 sm:$0xff]
    %s1023 = scalar_lea.vmem [#allocation2], 544
    %v1024 = vld [vmem:[%s1023] ss:$2 sm:$0xf]
    %s1025 = scalar_lea.vmem [#allocation2], 552
    %v1026 = vld [vmem:[%s1025] ss:$2 sm:$0xff]
    %s1027 = scalar_lea.vmem [#allocation2], 568
    %v1028 = vld [vmem:[%s1027] ss:$2 sm:$0xf]
    %s1029 = scalar_lea.vmem [#allocation2], 1
    %v1030 = vld [vmem:[%s1029] ss:$2 sm:$0xff]
    %s1031 = scalar_lea.vmem [#allocation2], 17
    %v1032 = vld [vmem:[%s1031] ss:$2 sm:$0xf]
    %s1033 = scalar_lea.vmem [#allocation2], 25
    %v1034 = vld [vmem:[%s1033] ss:$2 sm:$0xff]
    %s1035 = scalar_lea.vmem [#allocation2], 41
    %v1036 = vld [vmem:[%s1035] ss:$2 sm:$0xf]
    %s1037 = scalar_lea.vmem [#allocation2], 49
    %v1038 = vld [vmem:[%s1037] ss:$2 sm:$0xff]
    %s1039 = scalar_lea.vmem [#allocation2], 65
    %v1040 = vld [vmem:[%s1039] ss:$2 sm:$0xf]
    %s1041 = scalar_lea.vmem [#allocation2], 73
    %v1042 = vld [vmem:[%s1041] ss:$2 sm:$0xff]
    %s1043 = scalar_lea.vmem [#allocation2], 89
    %v1044 = vld [vmem:[%s1043] ss:$2 sm:$0xf]
    %s1045 = scalar_lea.vmem [#allocation2], 97
    %v1046 = vld [vmem:[%s1045] ss:$2 sm:$0xff]
    %s1047 = scalar_lea.vmem [#allocation2], 113
    %v1048 = vld [vmem:[%s1047] ss:$2 sm:$0xf]
    %s1049 = scalar_lea.vmem [#allocation2], 121
    %v1050 = vld [vmem:[%s1049] ss:$2 sm:$0xff]
    %s1051 = scalar_lea.vmem [#allocation2], 137
    %v1052 = vld [vmem:[%s1051] ss:$2 sm:$0xf]
    %s1053 = scalar_lea.vmem [#allocation2], 145
    %v1054 = vld [vmem:[%s1053] ss:$2 sm:$0xff]
    %s1055 = scalar_lea.vmem [#allocation2], 161
    %v1056 = vld [vmem:[%s1055] ss:$2 sm:$0xf]
    %s1057 = scalar_lea.vmem [#allocation2], 169
    %v1058 = vld [vmem:[%s1057] ss:$2 sm:$0xff]
    %s1059 = scalar_lea.vmem [#allocation2], 185
    %v1060 = vld [vmem:[%s1059] ss:$2 sm:$0xf]
    %s1061 = scalar_lea.vmem [#allocation2], 193
    %v1062 = vld [vmem:[%s1061] ss:$2 sm:$0xff]
    %s1063 = scalar_lea.vmem [#allocation2], 209
    %v1064 = vld [vmem:[%s1063] ss:$2 sm:$0xf]
    %s1065 = scalar_lea.vmem [#allocation2], 217
    %v1066 = vld [vmem:[%s1065] ss:$2 sm:$0xff]
    %s1067 = scalar_lea.vmem [#allocation2], 233
    %v1068 = vld [vmem:[%s1067] ss:$2 sm:$0xf]
    %s1069 = scalar_lea.vmem [#allocation2], 241
    %v1070 = vld [vmem:[%s1069] ss:$2 sm:$0xff]
    %s1071 = scalar_lea.vmem [#allocation2], 257
    %v1072 = vld [vmem:[%s1071] ss:$2 sm:$0xf]
    %s1073 = scalar_lea.vmem [#allocation2], 265
    %v1074 = vld [vmem:[%s1073] ss:$2 sm:$0xff]
    %s1075 = scalar_lea.vmem [#allocation2], 281
    %v1076 = vld [vmem:[%s1075] ss:$2 sm:$0xf]
    %s1077 = scalar_lea.vmem [#allocation2], 289
    %v1078 = vld [vmem:[%s1077] ss:$2 sm:$0xff]
    %s1079 = scalar_lea.vmem [#allocation2], 305
    %v1080 = vld [vmem:[%s1079] ss:$2 sm:$0xf]
    %s1081 = scalar_lea.vmem [#allocation2], 313
    %v1082 = vld [vmem:[%s1081] ss:$2 sm:$0xff]
    %s1083 = scalar_lea.vmem [#allocation2], 329
    %v1084 = vld [vmem:[%s1083] ss:$2 sm:$0xf]
    %s1085 = scalar_lea.vmem [#allocation2], 337
    %v1086 = vld [vmem:[%s1085] ss:$2 sm:$0xff]
    %s1087 = scalar_lea.vmem [#allocation2], 353
    %v1088 = vld [vmem:[%s1087] ss:$2 sm:$0xf]
    %s1089 = scalar_lea.vmem [#allocation2], 361
    %v1090 = vld [vmem:[%s1089] ss:$2 sm:$0xff]
    %s1091 = scalar_lea.vmem [#allocation2], 377
    %v1092 = vld [vmem:[%s1091] ss:$2 sm:$0xf]
    %s1093 = scalar_lea.vmem [#allocation2], 385
    %v1094 = vld [vmem:[%s1093] ss:$2 sm:$0xff]
    %s1095 = scalar_lea.vmem [#allocation2], 401
    %v1096 = vld [vmem:[%s1095] ss:$2 sm:$0xf]
    %s1097 = scalar_lea.vmem [#allocation2], 409
    %v1098 = vld [vmem:[%s1097] ss:$2 sm:$0xff]
    %s1099 = scalar_lea.vmem [#allocation2], 425
    %v1100 = vld [vmem:[%s1099] ss:$2 sm:$0xf]
    %s1101 = scalar_lea.vmem [#allocation2], 433
    %v1102 = vld [vmem:[%s1101] ss:$2 sm:$0xff]
    %s1103 = scalar_lea.vmem [#allocation2], 449
    %v1104 = vld [vmem:[%s1103] ss:$2 sm:$0xf]
    %s1105 = scalar_lea.vmem [#allocation2], 457
    %v1106 = vld [vmem:[%s1105] ss:$2 sm:$0xff]
    %s1107 = scalar_lea.vmem [#allocation2], 473
    %v1108 = vld [vmem:[%s1107] ss:$2 sm:$0xf]
    %s1109 = scalar_lea.vmem [#allocation2], 481
    %v1110 = vld [vmem:[%s1109] ss:$2 sm:$0xff]
    %s1111 = scalar_lea.vmem [#allocation2], 497
    %v1112 = vld [vmem:[%s1111] ss:$2 sm:$0xf]
    %s1113 = scalar_lea.vmem [#allocation2], 505
    %v1114 = vld [vmem:[%s1113] ss:$2 sm:$0xff]
    %s1115 = scalar_lea.vmem [#allocation2], 521
    %v1116 = vld [vmem:[%s1115] ss:$2 sm:$0xf]
    %s1117 = scalar_lea.vmem [#allocation2], 529
    %v1118 = vld [vmem:[%s1117] ss:$2 sm:$0xff]
    %s1119 = scalar_lea.vmem [#allocation2], 545
    %v1120 = vld [vmem:[%s1119] ss:$2 sm:$0xf]
    %s1121 = scalar_lea.vmem [#allocation2], 553
    %v1122 = vld [vmem:[%s1121] ss:$2 sm:$0xff]
    %s1123 = scalar_lea.vmem [#allocation2], 569
    %v1124 = vld [vmem:[%s1123] ss:$2 sm:$0xf]
    %v1125 = vmax.f32 %v934, %v1030
    %v1126 = vmax.f32 %v936, %v1032
    %v1127 = vmax.f32 %v938, %v1034
    %v1128 = vmax.f32 %v940, %v1036
    %v1129 = vmax.f32 %v942, %v1038
    %v1130 = vmax.f32 %v944, %v1040
    %v1131 = vmax.f32 %v946, %v1042
    %v1132 = vmax.f32 %v948, %v1044
    %v1133 = vmax.f32 %v950, %v1046
    %v1134 = vmax.f32 %v952, %v1048
    %v1135 = vmax.f32 %v954, %v1050
    %v1136 = vmax.f32 %v956, %v1052
    %v1137 = vmax.f32 %v958, %v1054
    %v1138 = vmax.f32 %v960, %v1056
    %v1139 = vmax.f32 %v962, %v1058
    %v1140 = vmax.f32 %v964, %v1060
    %v1141 = vmax.f32 %v966, %v1062
    %v1142 = vmax.f32 %v968, %v1064
    %v1143 = vmax.f32 %v970, %v1066
    %v1144 = vmax.f32 %v972, %v1068
    %v1145 = vmax.f32 %v974, %v1070
    %v1146 = vmax.f32 %v976, %v1072
    %v1147 = vmax.f32 %v978, %v1074
    %v1148 = vmax.f32 %v980, %v1076
    %v1149 = vmax.f32 %v982, %v1078
    %v1150 = vmax.f32 %v984, %v1080
    %v1151 = vmax.f32 %v986, %v1082
    %v1152 = vmax.f32 %v988, %v1084
    %v1153 = vmax.f32 %v990, %v1086
    %v1154 = vmax.f32 %v992, %v1088
    %v1155 = vmax.f32 %v994, %v1090
    %v1156 = vmax.f32 %v996, %v1092
    %v1157 = vmax.f32 %v998, %v1094
    %v1158 = vmax.f32 %v1000, %v1096
    %v1159 = vmax.f32 %v1002, %v1098
    %v1160 = vmax.f32 %v1004, %v1100
    %v1161 = vmax.f32 %v1006, %v1102
    %v1162 = vmax.f32 %v1008, %v1104
    %v1163 = vmax.f32 %v1010, %v1106
    %v1164 = vmax.f32 %v1012, %v1108
    %v1165 = vmax.f32 %v1014, %v1110
    %v1166 = vmax.f32 %v1016, %v1112
    %v1167 = vmax.f32 %v1018, %v1114
    %v1168 = vmax.f32 %v1020, %v1116
    %v1169 = vmax.f32 %v1022, %v1118
    %v1170 = vmax.f32 %v1024, %v1120
    %v1171 = vmax.f32 %v1026, %v1122
    %v1172 = vmax.f32 %v1028, %v1124
    %1173 = vst [vmem:[#allocation3] sm:$0xff] %v1125
    %1174 = vst [vmem:[#allocation3 + $0x8] sm:$0xf] %v1126
    %1175 = vst [vmem:[#allocation3 + $0x10] sm:$0xff] %v1127
    %1176 = vst [vmem:[#allocation3 + $0x18] sm:$0xf] %v1128
    %1177 = vst [vmem:[#allocation3 + $0x20] sm:$0xff] %v1129
    %1178 = vst [vmem:[#allocation3 + $0x28] sm:$0xf] %v1130
    %1179 = vst [vmem:[#allocation3 + $0x30] sm:$0xff] %v1131
    %1180 = vst [vmem:[#allocation3 + $0x38] sm:$0xf] %v1132
    %1181 = vst [vmem:[#allocation3 + $0x40] sm:$0xff] %v1133
    %1182 = vst [vmem:[#allocation3 + $0x48] sm:$0xf] %v1134
    %1183 = vst [vmem:[#allocation3 + $0x50] sm:$0xff] %v1135
    %1184 = vst [vmem:[#allocation3 + $0x58] sm:$0xf] %v1136
    %1185 = vst [vmem:[#allocation3 + $0x60] sm:$0xff] %v1137
    %1186 = vst [vmem:[#allocation3 + $0x68] sm:$0xf] %v1138
    %1187 = vst [vmem:[#allocation3 + $0x70] sm:$0xff] %v1139
    %1188 = vst [vmem:[#allocation3 + $0x78] sm:$0xf] %v1140
    %1189 = vst [vmem:[#allocation3 + $0x80] sm:$0xff] %v1141
    %1190 = vst [vmem:[#allocation3 + $0x88] sm:$0xf] %v1142
    %1191 = vst [vmem:[#allocation3 + $0x90] sm:$0xff] %v1143
    %1192 = vst [vmem:[#allocation3 + $0x98] sm:$0xf] %v1144
    %1193 = vst [vmem:[#allocation3 + $0xa0] sm:$0xff] %v1145
    %1194 = vst [vmem:[#allocation3 + $0xa8] sm:$0xf] %v1146
    %1195 = vst [vmem:[#allocation3 + $0xb0] sm:$0xff] %v1147
    %1196 = vst [vmem:[#allocation3 + $0xb8] sm:$0xf] %v1148
    %1197 = vst [vmem:[#allocation3 + $0xc0] sm:$0xff] %v1149
    %1198 = vst [vmem:[#allocation3 + $0xc8] sm:$0xf] %v1150
    %1199 = vst [vmem:[#allocation3 + $0xd0] sm:$0xff] %v1151
    %1200 = vst [vmem:[#allocation3 + $0xd8] sm:$0xf] %v1152
    %1201 = vst [vmem:[#allocation3 + $0xe0] sm:$0xff] %v1153
    %1202 = vst [vmem:[#allocation3 + $0xe8] sm:$0xf] %v1154
    %1203 = vst [vmem:[#allocation3 + $0xf0] sm:$0xff] %v1155
    %1204 = vst [vmem:[#allocation3 + $0xf8] sm:$0xf] %v1156
    %1205 = vst [vmem:[#allocation3 + $0x100] sm:$0xff] %v1157
    %1206 = vst [vmem:[#allocation3 + $0x108] sm:$0xf] %v1158
    %1207 = vst [vmem:[#allocation3 + $0x110] sm:$0xff] %v1159
    %1208 = vst [vmem:[#allocation3 + $0x118] sm:$0xf] %v1160
    %1209 = vst [vmem:[#allocation3 + $0x120] sm:$0xff] %v1161
    %1210 = vst [vmem:[#allocation3 + $0x128] sm:$0xf] %v1162
    %1211 = vst [vmem:[#allocation3 + $0x130] sm:$0xff] %v1163
    %1212 = vst [vmem:[#allocation3 + $0x138] sm:$0xf] %v1164
    %1213 = vst [vmem:[#allocation3 + $0x140] sm:$0xff] %v1165
    %1214 = vst [vmem:[#allocation3 + $0x148] sm:$0xf] %v1166
    %1215 = vst [vmem:[#allocation3 + $0x150] sm:$0xff] %v1167
    %1216 = vst [vmem:[#allocation3 + $0x158] sm:$0xf] %v1168
    %1217 = vst [vmem:[#allocation3 + $0x160] sm:$0xff] %v1169
    %1218 = vst [vmem:[#allocation3 + $0x168] sm:$0xf] %v1170
    %1219 = vst [vmem:[#allocation3 + $0x170] sm:$0xff] %v1171
    %1220 = vst [vmem:[#allocation3 + $0x178] sm:$0xf] %v1172
    %v1221 = vld [vmem:[#allocation3] sm:$0xff]
    %v1222 = vld [vmem:[#allocation3 + $0x10] sm:$0xff]
    %v1223 = vld [vmem:[#allocation3 + $0x20] sm:$0xff]
    %v1224 = vld [vmem:[#allocation3 + $0x30] sm:$0xff]
    %v1225 = vld [vmem:[#allocation3 + $0x40] sm:$0xff]
    %v1226 = vld [vmem:[#allocation3 + $0x50] sm:$0xff]
    %v1227 = vld [vmem:[#allocation3 + $0x60] sm:$0xff]
    %v1228 = vld [vmem:[#allocation3 + $0x70] sm:$0xff]
    %v1229 = vld [vmem:[#allocation3 + $0xc0] sm:$0xff]
    %v1230 = vld [vmem:[#allocation3 + $0xd0] sm:$0xff]
    %v1231 = vld [vmem:[#allocation3 + $0xe0] sm:$0xff]
    %v1232 = vld [vmem:[#allocation3 + $0xf0] sm:$0xff]
    %v1233 = vld [vmem:[#allocation3 + $0x100] sm:$0xff]
    %v1234 = vld [vmem:[#allocation3 + $0x110] sm:$0xff]
    %v1235 = vld [vmem:[#allocation3 + $0x120] sm:$0xff]
    %v1236 = vld [vmem:[#allocation3 + $0x130] sm:$0xff]
    %v1237 = vld [vmem:[%s3] sm:$0xff]
    %v1238 = vld [vmem:[%s3 + $0x8] sm:$0xff]
    %v1239 = vld [vmem:[%s3 + $0x10] sm:$0xff]
    %v1240 = vld [vmem:[%s3 + $0x18] sm:$0xff]
    %v1241 = vld [vmem:[%s3 + $0x20] sm:$0xff]
    %v1242 = vld [vmem:[%s3 + $0x28] sm:$0xff]
    %v1243 = vld [vmem:[%s3 + $0x30] sm:$0xff]
    %v1244 = vld [vmem:[%s3 + $0x38] sm:$0xff]
    %v1245 = vld [vmem:[%s3 + $0x40] sm:$0xff]
    %v1246 = vld [vmem:[%s3 + $0x48] sm:$0xff]
    %v1247 = vld [vmem:[%s3 + $0x50] sm:$0xff]
    %v1248 = vld [vmem:[%s3 + $0x58] sm:$0xff]
    %v1249 = vld [vmem:[%s3 + $0x60] sm:$0xff]
    %v1250 = vld [vmem:[%s3 + $0x68] sm:$0xff]
    %v1251 = vld [vmem:[%s3 + $0x70] sm:$0xff]
    %v1252 = vld [vmem:[%s3 + $0x78] sm:$0xff]
    %v1253 = vld [vmem:[#allocation3 + $0x1] sm:$0xff]
    %v1254 = vld [vmem:[#allocation3 + $0x11] sm:$0xff]
    %v1255 = vld [vmem:[#allocation3 + $0x21] sm:$0xff]
    %v1256 = vld [vmem:[#allocation3 + $0x31] sm:$0xff]
    %v1257 = vld [vmem:[#allocation3 + $0x41] sm:$0xff]
    %v1258 = vld [vmem:[#allocation3 + $0x51] sm:$0xff]
    %v1259 = vld [vmem:[#allocation3 + $0x61] sm:$0xff]
    %v1260 = vld [vmem:[#allocation3 + $0x71] sm:$0xff]
    %v1261 = vld [vmem:[#allocation3 + $0xc1] sm:$0xff]
    %v1262 = vld [vmem:[#allocation3 + $0xd1] sm:$0xff]
    %v1263 = vld [vmem:[#allocation3 + $0xe1] sm:$0xff]
    %v1264 = vld [vmem:[#allocation3 + $0xf1] sm:$0xff]
    %v1265 = vld [vmem:[#allocation3 + $0x101] sm:$0xff]
    %v1266 = vld [vmem:[#allocation3 + $0x111] sm:$0xff]
    %v1267 = vld [vmem:[#allocation3 + $0x121] sm:$0xff]
    %v1268 = vld [vmem:[#allocation3 + $0x131] sm:$0xff]
    %s1269 = scalar_lea.vmem %s3, 128
    %v1270 = vld [vmem:[%s1269] sm:$0xff]
    %v1271 = vld [vmem:[%s1269 + $0x8] sm:$0xff]
    %v1272 = vld [vmem:[%s1269 + $0x10] sm:$0xff]
    %v1273 = vld [vmem:[%s1269 + $0x18] sm:$0xff]
    %v1274 = vld [vmem:[%s1269 + $0x20] sm:$0xff]
    %v1275 = vld [vmem:[%s1269 + $0x28] sm:$0xff]
    %v1276 = vld [vmem:[%s1269 + $0x30] sm:$0xff]
    %v1277 = vld [vmem:[%s1269 + $0x38] sm:$0xff]
    %v1278 = vld [vmem:[%s1269 + $0x40] sm:$0xff]
    %v1279 = vld [vmem:[%s1269 + $0x48] sm:$0xff]
    %v1280 = vld [vmem:[%s1269 + $0x50] sm:$0xff]
    %v1281 = vld [vmem:[%s1269 + $0x58] sm:$0xff]
    %v1282 = vld [vmem:[%s1269 + $0x60] sm:$0xff]
    %v1283 = vld [vmem:[%s1269 + $0x68] sm:$0xff]
    %v1284 = vld [vmem:[%s1269 + $0x70] sm:$0xff]
    %v1285 = vld [vmem:[%s1269 + $0x78] sm:$0xff]
    %1286 = vmatpush.msra.mxu0 %v1285
    %1287 = vmatpush.msra.mxu0 %v1284
    %1288 = vmatpush.msra.mxu0 %v1283
    %1289 = vmatpush.msra.mxu0 %v1282
    %1290 = vmatpush.msra.mxu0 %v1281
    %1291 = vmatpush.msra.mxu0 %v1280
    %1292 = vmatpush.msra.mxu0 %v1279
    %1293 = vmatpush.msra.mxu0 %v1278
    %1294 = vmatpush.msra.mxu0 %v1277
    %1295 = vmatpush.msra.mxu0 %v1276
    %1296 = vmatpush.msra.mxu0 %v1275
    %1297 = vmatpush.msra.mxu0 %v1274
    %1298 = vmatpush.msra.mxu0 %v1273
    %1299 = vmatpush.msra.mxu0 %v1272
    %1300 = vmatpush.msra.mxu0 %v1271
    %1301 = vmatpush.msra.mxu0 %v1270
    %1302 = vmatmul.f32.gmra.mxu0 %v1253
    %v1303 = vpop.f32.mrf.mxu0
    %v1304 = vadd.f32 0.0, %v1303
    %1305 = vmatmul.f32.gmra.mxu0 %v1254
    %v1306 = vpop.f32.mrf.mxu0
    %v1307 = vadd.f32 0.0, %v1306
    %1308 = vmatmul.f32.gmra.mxu0 %v1255
    %v1309 = vpop.f32.mrf.mxu0
    %v1310 = vadd.f32 0.0, %v1309
    %1311 = vmatmul.f32.gmra.mxu0 %v1256
    %v1312 = vpop.f32.mrf.mxu0
    %v1313 = vadd.f32 0.0, %v1312
    %1314 = vmatmul.f32.gmra.mxu0 %v1257
    %v1315 = vpop.f32.mrf.mxu0
    %v1316 = vadd.f32 0.0, %v1315
    %1317 = vmatmul.f32.gmra.mxu0 %v1258
    %v1318 = vpop.f32.mrf.mxu0
    %v1319 = vadd.f32 0.0, %v1318
    %1320 = vmatmul.f32.gmra.mxu0 %v1259
    %v1321 = vpop.f32.mrf.mxu0
    %v1322 = vadd.f32 0.0, %v1321
    %1323 = vmatmul.f32.gmra.mxu0 %v1260
    %v1324 = vpop.f32.mrf.mxu0
    %v1325 = vadd.f32 0.0, %v1324
    %1326 = vmatmul.f32.gmra.mxu0 %v1261
    %v1327 = vpop.f32.mrf.mxu0
    %v1328 = vadd.f32 0.0, %v1327
    %1329 = vmatmul.f32.gmra.mxu0 %v1262
    %v1330 = vpop.f32.mrf.mxu0
    %v1331 = vadd.f32 0.0, %v1330
    %1332 = vmatmul.f32.gmra.mxu0 %v1263
    %v1333 = vpop.f32.mrf.mxu0
    %v1334 = vadd.f32 0.0, %v1333
    %1335 = vmatmul.f32.gmra.mxu0 %v1264
    %v1336 = vpop.f32.mrf.mxu0
    %v1337 = vadd.f32 0.0, %v1336
    %1338 = vmatmul.f32.gmra.mxu0 %v1265
    %v1339 = vpop.f32.mrf.mxu0
    %v1340 = vadd.f32 0.0, %v1339
    %1341 = vmatmul.f32.gmra.mxu0 %v1266
    %v1342 = vpop.f32.mrf.mxu0
    %v1343 = vadd.f32 0.0, %v1342
    %1344 = vmatmul.f32.gmra.mxu0 %v1267
    %v1345 = vpop.f32.mrf.mxu0
    %v1346 = vadd.f32 0.0, %v1345
    %1347 = vmatmul.f32.gmra.mxu0 %v1268
    %v1348 = vpop.f32.mrf.mxu0
    %v1349 = vadd.f32 0.0, %v1348
    %1350 = vdwg.mxu0
    %1351 = vmatpush.msra.mxu0 %v1252
    %1352 = vmatpush.msra.mxu0 %v1251
    %1353 = vmatpush.msra.mxu0 %v1250
    %1354 = vmatpush.msra.mxu0 %v1249
    %1355 = vmatpush.msra.mxu0 %v1248
    %1356 = vmatpush.msra.mxu0 %v1247
    %1357 = vmatpush.msra.mxu0 %v1246
    %1358 = vmatpush.msra.mxu0 %v1245
    %1359 = vmatpush.msra.mxu0 %v1244
    %1360 = vmatpush.msra.mxu0 %v1243
    %1361 = vmatpush.msra.mxu0 %v1242
    %1362 = vmatpush.msra.mxu0 %v1241
    %1363 = vmatpush.msra.mxu0 %v1240
    %1364 = vmatpush.msra.mxu0 %v1239
    %1365 = vmatpush.msra.mxu0 %v1238
    %1366 = vmatpush.msra.mxu0 %v1237
    %1367 = vmatmul.f32.gmra.mxu0 %v1221
    %v1368 = vpop.f32.mrf.mxu0
    %v1369 = vadd.f32 %v1304, %v1368
    %1370 = vmatmul.f32.gmra.mxu0 %v1222
    %v1371 = vpop.f32.mrf.mxu0
    %v1372 = vadd.f32 %v1307, %v1371
    %1373 = vmatmul.f32.gmra.mxu0 %v1223
    %v1374 = vpop.f32.mrf.mxu0
    %v1375 = vadd.f32 %v1310, %v1374
    %1376 = vmatmul.f32.gmra.mxu0 %v1224
    %v1377 = vpop.f32.mrf.mxu0
    %v1378 = vadd.f32 %v1313, %v1377
    %1379 = vmatmul.f32.gmra.mxu0 %v1225
    %v1380 = vpop.f32.mrf.mxu0
    %v1381 = vadd.f32 %v1316, %v1380
    %1382 = vmatmul.f32.gmra.mxu0 %v1226
    %v1383 = vpop.f32.mrf.mxu0
    %v1384 = vadd.f32 %v1319, %v1383
    %1385 = vmatmul.f32.gmra.mxu0 %v1227
    %v1386 = vpop.f32.mrf.mxu0
    %v1387 = vadd.f32 %v1322, %v1386
    %1388 = vmatmul.f32.gmra.mxu0 %v1228
    %v1389 = vpop.f32.mrf.mxu0
    %v1390 = vadd.f32 %v1325, %v1389
    %1391 = vmatmul.f32.gmra.mxu0 %v1229
    %v1392 = vpop.f32.mrf.mxu0
    %v1393 = vadd.f32 %v1328, %v1392
    %1394 = vmatmul.f32.gmra.mxu0 %v1230
    %v1395 = vpop.f32.mrf.mxu0
    %v1396 = vadd.f32 %v1331, %v1395
    %1397 = vmatmul.f32.gmra.mxu0 %v1231
    %v1398 = vpop.f32.mrf.mxu0
    %v1399 = vadd.f32 %v1334, %v1398
    %1400 = vmatmul.f32.gmra.mxu0 %v1232
    %v1401 = vpop.f32.mrf.mxu0
    %v1402 = vadd.f32 %v1337, %v1401
    %1403 = vmatmul.f32.gmra.mxu0 %v1233
    %v1404 = vpop.f32.mrf.mxu0
    %v1405 = vadd.f32 %v1340, %v1404
    %1406 = vmatmul.f32.gmra.mxu0 %v1234
    %v1407 = vpop.f32.mrf.mxu0
    %v1408 = vadd.f32 %v1343, %v1407
    %1409 = vmatmul.f32.gmra.mxu0 %v1235
    %v1410 = vpop.f32.mrf.mxu0
    %v1411 = vadd.f32 %v1346, %v1410
    %1412 = vmatmul.f32.gmra.mxu0 %v1236
    %v1413 = vpop.f32.mrf.mxu0
    %v1414 = vadd.f32 %v1349, %v1413
    %1415 = vdwg.mxu0
    %v1416 = vld [vmem:[#allocation3 + $0x2] sm:$0xff]
    %v1417 = vld [vmem:[#allocation3 + $0x12] sm:$0xff]
    %v1418 = vld [vmem:[#allocation3 + $0x22] sm:$0xff]
    %v1419 = vld [vmem:[#allocation3 + $0x32] sm:$0xff]
    %v1420 = vld [vmem:[#allocation3 + $0x42] sm:$0xff]
    %v1421 = vld [vmem:[#allocation3 + $0x52] sm:$0xff]
    %v1422 = vld [vmem:[#allocation3 + $0x62] sm:$0xff]
    %v1423 = vld [vmem:[#allocation3 + $0x72] sm:$0xff]
    %v1424 = vld [vmem:[#allocation3 + $0xc2] sm:$0xff]
    %v1425 = vld [vmem:[#allocation3 + $0xd2] sm:$0xff]
    %v1426 = vld [vmem:[#allocation3 + $0xe2] sm:$0xff]
    %v1427 = vld [vmem:[#allocation3 + $0xf2] sm:$0xff]
    %v1428 = vld [vmem:[#allocation3 + $0x102] sm:$0xff]
    %v1429 = vld [vmem:[#allocation3 + $0x112] sm:$0xff]
    %v1430 = vld [vmem:[#allocation3 + $0x122] sm:$0xff]
    %v1431 = vld [vmem:[#allocation3 + $0x132] sm:$0xff]
    %s1432 = scalar_lea.vmem %s3, 256
    %v1433 = vld [vmem:[%s1432] sm:$0xff]
    %v1434 = vld [vmem:[%s1432 + $0x8] sm:$0xff]
    %v1435 = vld [vmem:[%s1432 + $0x10] sm:$0xff]
    %v1436 = vld [vmem:[%s1432 + $0x18] sm:$0xff]
    %v1437 = vld [vmem:[%s1432 + $0x20] sm:$0xff]
    %v1438 = vld [vmem:[%s1432 + $0x28] sm:$0xff]
    %v1439 = vld [vmem:[%s1432 + $0x30] sm:$0xff]
    %v1440 = vld [vmem:[%s1432 + $0x38] sm:$0xff]
    %v1441 = vld [vmem:[%s1432 + $0x40] sm:$0xff]
    %v1442 = vld [vmem:[%s1432 + $0x48] sm:$0xff]
    %v1443 = vld [vmem:[%s1432 + $0x50] sm:$0xff]
    %v1444 = vld [vmem:[%s1432 + $0x58] sm:$0xff]
    %v1445 = vld [vmem:[%s1432 + $0x60] sm:$0xff]
    %v1446 = vld [vmem:[%s1432 + $0x68] sm:$0xff]
    %v1447 = vld [vmem:[%s1432 + $0x70] sm:$0xff]
    %v1448 = vld [vmem:[%s1432 + $0x78] sm:$0xff]
    %1449 = vmatpush.msra.mxu0 %v1448
    %1450 = vmatpush.msra.mxu0 %v1447
    %1451 = vmatpush.msra.mxu0 %v1446
    %1452 = vmatpush.msra.mxu0 %v1445
    %1453 = vmatpush.msra.mxu0 %v1444
    %1454 = vmatpush.msra.mxu0 %v1443
    %1455 = vmatpush.msra.mxu0 %v1442
    %1456 = vmatpush.msra.mxu0 %v1441
    %1457 = vmatpush.msra.mxu0 %v1440
    %1458 = vmatpush.msra.mxu0 %v1439
    %1459 = vmatpush.msra.mxu0 %v1438
    %1460 = vmatpush.msra.mxu0 %v1437
    %1461 = vmatpush.msra.mxu0 %v1436
    %1462 = vmatpush.msra.mxu0 %v1435
    %1463 = vmatpush.msra.mxu0 %v1434
    %1464 = vmatpush.msra.mxu0 %v1433
    %1465 = vmatmul.f32.gmra.mxu0 %v1416
    %v1466 = vpop.f32.mrf.mxu0
    %v1467 = vadd.f32 0.0, %v1466
    %1468 = vmatmul.f32.gmra.mxu0 %v1417
    %v1469 = vpop.f32.mrf.mxu0
    %v1470 = vadd.f32 0.0, %v1469
    %1471 = vmatmul.f32.gmra.mxu0 %v1418
    %v1472 = vpop.f32.mrf.mxu0
    %v1473 = vadd.f32 0.0, %v1472
    %1474 = vmatmul.f32.gmra.mxu0 %v1419
    %v1475 = vpop.f32.mrf.mxu0
    %v1476 = vadd.f32 0.0, %v1475
    %1477 = vmatmul.f32.gmra.mxu0 %v1420
    %v1478 = vpop.f32.mrf.mxu0
    %v1479 = vadd.f32 0.0, %v1478
    %1480 = vmatmul.f32.gmra.mxu0 %v1421
    %v1481 = vpop.f32.mrf.mxu0
    %v1482 = vadd.f32 0.0, %v1481
    %1483 = vmatmul.f32.gmra.mxu0 %v1422
    %v1484 = vpop.f32.mrf.mxu0
    %v1485 = vadd.f32 0.0, %v1484
    %1486 = vmatmul.f32.gmra.mxu0 %v1423
    %v1487 = vpop.f32.mrf.mxu0
    %v1488 = vadd.f32 0.0, %v1487
    %1489 = vmatmul.f32.gmra.mxu0 %v1424
    %v1490 = vpop.f32.mrf.mxu0
    %v1491 = vadd.f32 0.0, %v1490
    %1492 = vmatmul.f32.gmra.mxu0 %v1425
    %v1493 = vpop.f32.mrf.mxu0
    %v1494 = vadd.f32 0.0, %v1493
    %1495 = vmatmul.f32.gmra.mxu0 %v1426
    %v1496 = vpop.f32.mrf.mxu0
    %v1497 = vadd.f32 0.0, %v1496
    %1498 = vmatmul.f32.gmra.mxu0 %v1427
    %v1499 = vpop.f32.mrf.mxu0
    %v1500 = vadd.f32 0.0, %v1499
    %1501 = vmatmul.f32.gmra.mxu0 %v1428
    %v1502 = vpop.f32.mrf.mxu0
    %v1503 = vadd.f32 0.0, %v1502
    %1504 = vmatmul.f32.gmra.mxu0 %v1429
    %v1505 = vpop.f32.mrf.mxu0
    %v1506 = vadd.f32 0.0, %v1505
    %1507 = vmatmul.f32.gmra.mxu0 %v1430
    %v1508 = vpop.f32.mrf.mxu0
    %v1509 = vadd.f32 0.0, %v1508
    %1510 = vmatmul.f32.gmra.mxu0 %v1431
    %v1511 = vpop.f32.mrf.mxu0
    %v1512 = vadd.f32 0.0, %v1511
    %1513 = vdwg.mxu0
    %v1514 = vadd.f32 %v1369, %v1467
    %v1515 = vadd.f32 %v1372, %v1470
    %v1516 = vadd.f32 %v1375, %v1473
    %v1517 = vadd.f32 %v1378, %v1476
    %v1518 = vadd.f32 %v1381, %v1479
    %v1519 = vadd.f32 %v1384, %v1482
    %v1520 = vadd.f32 %v1387, %v1485
    %v1521 = vadd.f32 %v1390, %v1488
    %v1522 = vadd.f32 %v1393, %v1491
    %v1523 = vadd.f32 %v1396, %v1494
    %v1524 = vadd.f32 %v1399, %v1497
    %v1525 = vadd.f32 %v1402, %v1500
    %v1526 = vadd.f32 %v1405, %v1503
    %v1527 = vadd.f32 %v1408, %v1506
    %v1528 = vadd.f32 %v1411, %v1509
    %v1529 = vadd.f32 %v1414, %v1512
    %v1530 = vld [vmem:[#allocation3 + $0x3] sm:$0xff]
    %v1531 = vld [vmem:[#allocation3 + $0x13] sm:$0xff]
    %v1532 = vld [vmem:[#allocation3 + $0x23] sm:$0xff]
    %v1533 = vld [vmem:[#allocation3 + $0x33] sm:$0xff]
    %v1534 = vld [vmem:[#allocation3 + $0x43] sm:$0xff]
    %v1535 = vld [vmem:[#allocation3 + $0x53] sm:$0xff]
    %v1536 = vld [vmem:[#allocation3 + $0x63] sm:$0xff]
    %v1537 = vld [vmem:[#allocation3 + $0x73] sm:$0xff]
    %v1538 = vld [vmem:[#allocation3 + $0xc3] sm:$0xff]
    %v1539 = vld [vmem:[#allocation3 + $0xd3] sm:$0xff]
    %v1540 = vld [vmem:[#allocation3 + $0xe3] sm:$0xff]
    %v1541 = vld [vmem:[#allocation3 + $0xf3] sm:$0xff]
    %v1542 = vld [vmem:[#allocation3 + $0x103] sm:$0xff]
    %v1543 = vld [vmem:[#allocation3 + $0x113] sm:$0xff]
    %v1544 = vld [vmem:[#allocation3 + $0x123] sm:$0xff]
    %v1545 = vld [vmem:[#allocation3 + $0x133] sm:$0xff]
    %s1546 = scalar_lea.vmem %s3, 384
    %v1547 = vld [vmem:[%s1546] sm:$0xff]
    %v1548 = vld [vmem:[%s1546 + $0x8] sm:$0xff]
    %v1549 = vld [vmem:[%s1546 + $0x10] sm:$0xff]
    %v1550 = vld [vmem:[%s1546 + $0x18] sm:$0xff]
    %v1551 = vld [vmem:[%s1546 + $0x20] sm:$0xff]
    %v1552 = vld [vmem:[%s1546 + $0x28] sm:$0xff]
    %v1553 = vld [vmem:[%s1546 + $0x30] sm:$0xff]
    %v1554 = vld [vmem:[%s1546 + $0x38] sm:$0xff]
    %v1555 = vld [vmem:[%s1546 + $0x40] sm:$0xff]
    %v1556 = vld [vmem:[%s1546 + $0x48] sm:$0xff]
    %v1557 = vld [vmem:[%s1546 + $0x50] sm:$0xff]
    %v1558 = vld [vmem:[%s1546 + $0x58] sm:$0xff]
    %v1559 = vld [vmem:[%s1546 + $0x60] sm:$0xff]
    %v1560 = vld [vmem:[%s1546 + $0x68] sm:$0xff]
    %v1561 = vld [vmem:[%s1546 + $0x70] sm:$0xff]
    %v1562 = vld [vmem:[%s1546 + $0x78] sm:$0xff]
    %1563 = vmatpush.msra.mxu0 %v1562
    %1564 = vmatpush.msra.mxu0 %v1561
    %1565 = vmatpush.msra.mxu0 %v1560
    %1566 = vmatpush.msra.mxu0 %v1559
    %1567 = vmatpush.msra.mxu0 %v1558
    %1568 = vmatpush.msra.mxu0 %v1557
    %1569 = vmatpush.msra.mxu0 %v1556
    %1570 = vmatpush.msra.mxu0 %v1555
    %1571 = vmatpush.msra.mxu0 %v1554
    %1572 = vmatpush.msra.mxu0 %v1553
    %1573 = vmatpush.msra.mxu0 %v1552
    %1574 = vmatpush.msra.mxu0 %v1551
    %1575 = vmatpush.msra.mxu0 %v1550
    %1576 = vmatpush.msra.mxu0 %v1549
    %1577 = vmatpush.msra.mxu0 %v1548
    %1578 = vmatpush.msra.mxu0 %v1547
    %1579 = vmatmul.f32.gmra.mxu0 %v1530
    %v1580 = vpop.f32.mrf.mxu0
    %v1581 = vadd.f32 0.0, %v1580
    %1582 = vmatmul.f32.gmra.mxu0 %v1531
    %v1583 = vpop.f32.mrf.mxu0
    %v1584 = vadd.f32 0.0, %v1583
    %1585 = vmatmul.f32.gmra.mxu0 %v1532
    %v1586 = vpop.f32.mrf.mxu0
    %v1587 = vadd.f32 0.0, %v1586
    %1588 = vmatmul.f32.gmra.mxu0 %v1533
    %v1589 = vpop.f32.mrf.mxu0
    %v1590 = vadd.f32 0.0, %v1589
    %1591 = vmatmul.f32.gmra.mxu0 %v1534
    %v1592 = vpop.f32.mrf.mxu0
    %v1593 = vadd.f32 0.0, %v1592
    %1594 = vmatmul.f32.gmra.mxu0 %v1535
    %v1595 = vpop.f32.mrf.mxu0
    %v1596 = vadd.f32 0.0, %v1595
    %1597 = vmatmul.f32.gmra.mxu0 %v1536
    %v1598 = vpop.f32.mrf.mxu0
    %v1599 = vadd.f32 0.0, %v1598
    %1600 = vmatmul.f32.gmra.mxu0 %v1537
    %v1601 = vpop.f32.mrf.mxu0
    %v1602 = vadd.f32 0.0, %v1601
    %1603 = vmatmul.f32.gmra.mxu0 %v1538
    %v1604 = vpop.f32.mrf.mxu0
    %v1605 = vadd.f32 0.0, %v1604
    %1606 = vmatmul.f32.gmra.mxu0 %v1539
    %v1607 = vpop.f32.mrf.mxu0
    %v1608 = vadd.f32 0.0, %v1607
    %1609 = vmatmul.f32.gmra.mxu0 %v1540
    %v1610 = vpop.f32.mrf.mxu0
    %v1611 = vadd.f32 0.0, %v1610
    %1612 = vmatmul.f32.gmra.mxu0 %v1541
    %v1613 = vpop.f32.mrf.mxu0
    %v1614 = vadd.f32 0.0, %v1613
    %1615 = vmatmul.f32.gmra.mxu0 %v1542
    %v1616 = vpop.f32.mrf.mxu0
    %v1617 = vadd.f32 0.0, %v1616
    %1618 = vmatmul.f32.gmra.mxu0 %v1543
    %v1619 = vpop.f32.mrf.mxu0
    %v1620 = vadd.f32 0.0, %v1619
    %1621 = vmatmul.f32.gmra.mxu0 %v1544
    %v1622 = vpop.f32.mrf.mxu0
    %v1623 = vadd.f32 0.0, %v1622
    %1624 = vmatmul.f32.gmra.mxu0 %v1545
    %v1625 = vpop.f32.mrf.mxu0
    %v1626 = vadd.f32 0.0, %v1625
    %1627 = vdwg.mxu0
    %v1628 = vadd.f32 %v1514, %v1581
    %v1629 = vadd.f32 %v1515, %v1584
    %v1630 = vadd.f32 %v1516, %v1587
    %v1631 = vadd.f32 %v1517, %v1590
    %v1632 = vadd.f32 %v1518, %v1593
    %v1633 = vadd.f32 %v1519, %v1596
    %v1634 = vadd.f32 %v1520, %v1599
    %v1635 = vadd.f32 %v1521, %v1602
    %v1636 = vadd.f32 %v1522, %v1605
    %v1637 = vadd.f32 %v1523, %v1608
    %v1638 = vadd.f32 %v1524, %v1611
    %v1639 = vadd.f32 %v1525, %v1614
    %v1640 = vadd.f32 %v1526, %v1617
    %v1641 = vadd.f32 %v1527, %v1620
    %v1642 = vadd.f32 %v1528, %v1623
    %v1643 = vadd.f32 %v1529, %v1626
    %v1644 = vld [vmem:[#allocation3 + $0x4] sm:$0xff]
    %v1645 = vld [vmem:[#allocation3 + $0x14] sm:$0xff]
    %v1646 = vld [vmem:[#allocation3 + $0x24] sm:$0xff]
    %v1647 = vld [vmem:[#allocation3 + $0x34] sm:$0xff]
    %v1648 = vld [vmem:[#allocation3 + $0x44] sm:$0xff]
    %v1649 = vld [vmem:[#allocation3 + $0x54] sm:$0xff]
    %v1650 = vld [vmem:[#allocation3 + $0x64] sm:$0xff]
    %v1651 = vld [vmem:[#allocation3 + $0x74] sm:$0xff]
    %v1652 = vld [vmem:[#allocation3 + $0xc4] sm:$0xff]
    %v1653 = vld [vmem:[#allocation3 + $0xd4] sm:$0xff]
    %v1654 = vld [vmem:[#allocation3 + $0xe4] sm:$0xff]
    %v1655 = vld [vmem:[#allocation3 + $0xf4] sm:$0xff]
    %v1656 = vld [vmem:[#allocation3 + $0x104] sm:$0xff]
    %v1657 = vld [vmem:[#allocation3 + $0x114] sm:$0xff]
    %v1658 = vld [vmem:[#allocation3 + $0x124] sm:$0xff]
    %v1659 = vld [vmem:[#allocation3 + $0x134] sm:$0xff]
    %s1660 = scalar_lea.vmem %s3, 512
    %v1661 = vld [vmem:[%s1660] sm:$0xff]
    %v1662 = vld [vmem:[%s1660 + $0x8] sm:$0xff]
    %v1663 = vld [vmem:[%s1660 + $0x10] sm:$0xff]
    %v1664 = vld [vmem:[%s1660 + $0x18] sm:$0xff]
    %v1665 = vld [vmem:[%s1660 + $0x20] sm:$0xff]
    %v1666 = vld [vmem:[%s1660 + $0x28] sm:$0xff]
    %v1667 = vld [vmem:[%s1660 + $0x30] sm:$0xff]
    %v1668 = vld [vmem:[%s1660 + $0x38] sm:$0xff]
    %v1669 = vld [vmem:[%s1660 + $0x40] sm:$0xff]
    %v1670 = vld [vmem:[%s1660 + $0x48] sm:$0xff]
    %v1671 = vld [vmem:[%s1660 + $0x50] sm:$0xff]
    %v1672 = vld [vmem:[%s1660 + $0x58] sm:$0xff]
    %v1673 = vld [vmem:[%s1660 + $0x60] sm:$0xff]
    %v1674 = vld [vmem:[%s1660 + $0x68] sm:$0xff]
    %v1675 = vld [vmem:[%s1660 + $0x70] sm:$0xff]
    %v1676 = vld [vmem:[%s1660 + $0x78] sm:$0xff]
    %1677 = vmatpush.msra.mxu0 %v1676
    %1678 = vmatpush.msra.mxu0 %v1675
    %1679 = vmatpush.msra.mxu0 %v1674
    %1680 = vmatpush.msra.mxu0 %v1673
    %1681 = vmatpush.msra.mxu0 %v1672
    %1682 = vmatpush.msra.mxu0 %v1671
    %1683 = vmatpush.msra.mxu0 %v1670
    %1684 = vmatpush.msra.mxu0 %v1669
    %1685 = vmatpush.msra.mxu0 %v1668
    %1686 = vmatpush.msra.mxu0 %v1667
    %1687 = vmatpush.msra.mxu0 %v1666
    %1688 = vmatpush.msra.mxu0 %v1665
    %1689 = vmatpush.msra.mxu0 %v1664
    %1690 = vmatpush.msra.mxu0 %v1663
    %1691 = vmatpush.msra.mxu0 %v1662
    %1692 = vmatpush.msra.mxu0 %v1661
    %1693 = vmatmul.f32.gmra.mxu0 %v1644
    %v1694 = vpop.f32.mrf.mxu0
    %v1695 = vadd.f32 0.0, %v1694
    %1696 = vmatmul.f32.gmra.mxu0 %v1645
    %v1697 = vpop.f32.mrf.mxu0
    %v1698 = vadd.f32 0.0, %v1697
    %1699 = vmatmul.f32.gmra.mxu0 %v1646
    %v1700 = vpop.f32.mrf.mxu0
    %v1701 = vadd.f32 0.0, %v1700
    %1702 = vmatmul.f32.gmra.mxu0 %v1647
    %v1703 = vpop.f32.mrf.mxu0
    %v1704 = vadd.f32 0.0, %v1703
    %1705 = vmatmul.f32.gmra.mxu0 %v1648
    %v1706 = vpop.f32.mrf.mxu0
    %v1707 = vadd.f32 0.0, %v1706
    %1708 = vmatmul.f32.gmra.mxu0 %v1649
    %v1709 = vpop.f32.mrf.mxu0
    %v1710 = vadd.f32 0.0, %v1709
    %1711 = vmatmul.f32.gmra.mxu0 %v1650
    %v1712 = vpop.f32.mrf.mxu0
    %v1713 = vadd.f32 0.0, %v1712
    %1714 = vmatmul.f32.gmra.mxu0 %v1651
    %v1715 = vpop.f32.mrf.mxu0
    %v1716 = vadd.f32 0.0, %v1715
    %1717 = vmatmul.f32.gmra.mxu0 %v1652
    %v1718 = vpop.f32.mrf.mxu0
    %v1719 = vadd.f32 0.0, %v1718
    %1720 = vmatmul.f32.gmra.mxu0 %v1653
    %v1721 = vpop.f32.mrf.mxu0
    %v1722 = vadd.f32 0.0, %v1721
    %1723 = vmatmul.f32.gmra.mxu0 %v1654
    %v1724 = vpop.f32.mrf.mxu0
    %v1725 = vadd.f32 0.0, %v1724
    %1726 = vmatmul.f32.gmra.mxu0 %v1655
    %v1727 = vpop.f32.mrf.mxu0
    %v1728 = vadd.f32 0.0, %v1727
    %1729 = vmatmul.f32.gmra.mxu0 %v1656
    %v1730 = vpop.f32.mrf.mxu0
    %v1731 = vadd.f32 0.0, %v1730
    %1732 = vmatmul.f32.gmra.mxu0 %v1657
    %v1733 = vpop.f32.mrf.mxu0
    %v1734 = vadd.f32 0.0, %v1733
    %1735 = vmatmul.f32.gmra.mxu0 %v1658
    %v1736 = vpop.f32.mrf.mxu0
    %v1737 = vadd.f32 0.0, %v1736
    %1738 = vmatmul.f32.gmra.mxu0 %v1659
    %v1739 = vpop.f32.mrf.mxu0
    %v1740 = vadd.f32 0.0, %v1739
    %1741 = vdwg.mxu0
    %v1742 = vadd.f32 %v1628, %v1695
    %v1743 = vadd.f32 %v1629, %v1698
    %v1744 = vadd.f32 %v1630, %v1701
    %v1745 = vadd.f32 %v1631, %v1704
    %v1746 = vadd.f32 %v1632, %v1707
    %v1747 = vadd.f32 %v1633, %v1710
    %v1748 = vadd.f32 %v1634, %v1713
    %v1749 = vadd.f32 %v1635, %v1716
    %v1750 = vadd.f32 %v1636, %v1719
    %v1751 = vadd.f32 %v1637, %v1722
    %v1752 = vadd.f32 %v1638, %v1725
    %v1753 = vadd.f32 %v1639, %v1728
    %v1754 = vadd.f32 %v1640, %v1731
    %v1755 = vadd.f32 %v1641, %v1734
    %v1756 = vadd.f32 %v1642, %v1737
    %v1757 = vadd.f32 %v1643, %v1740
    %s1758 = scalar_lea.vmem [#allocation3], 16
    %v1759 = vld [vmem:[%s1758] sm:$0xff]
    %v1760 = vld [vmem:[%s1758 + $0x10] sm:$0xff]
    %v1761 = vld [vmem:[%s1758 + $0x20] sm:$0xff]
    %v1762 = vld [vmem:[%s1758 + $0x30] sm:$0xff]
    %v1763 = vld [vmem:[%s1758 + $0x40] sm:$0xff]
    %v1764 = vld [vmem:[%s1758 + $0x50] sm:$0xff]
    %v1765 = vld [vmem:[%s1758 + $0x60] sm:$0xff]
    %v1766 = vld [vmem:[%s1758 + $0x70] sm:$0xff]
    %v1767 = vld [vmem:[%s1758 + $0xc0] sm:$0xff]
    %v1768 = vld [vmem:[%s1758 + $0xd0] sm:$0xff]
    %v1769 = vld [vmem:[%s1758 + $0xe0] sm:$0xff]
    %v1770 = vld [vmem:[%s1758 + $0xf0] sm:$0xff]
    %v1771 = vld [vmem:[%s1758 + $0x100] sm:$0xff]
    %v1772 = vld [vmem:[%s1758 + $0x110] sm:$0xff]
    %v1773 = vld [vmem:[%s1758 + $0x120] sm:$0xff]
    %v1774 = vld [vmem:[%s1758 + $0x130] sm:$0xff]
    %s1775 = scalar_lea.vmem %s3, 640
    %v1776 = vld [vmem:[%s1775] sm:$0xff]
    %v1777 = vld [vmem:[%s1775 + $0x8] sm:$0xff]
    %v1778 = vld [vmem:[%s1775 + $0x10] sm:$0xff]
    %v1779 = vld [vmem:[%s1775 + $0x18] sm:$0xff]
    %v1780 = vld [vmem:[%s1775 + $0x20] sm:$0xff]
    %v1781 = vld [vmem:[%s1775 + $0x28] sm:$0xff]
    %v1782 = vld [vmem:[%s1775 + $0x30] sm:$0xff]
    %v1783 = vld [vmem:[%s1775 + $0x38] sm:$0xff]
    %v1784 = vld [vmem:[%s1775 + $0x40] sm:$0xff]
    %v1785 = vld [vmem:[%s1775 + $0x48] sm:$0xff]
    %v1786 = vld [vmem:[%s1775 + $0x50] sm:$0xff]
    %v1787 = vld [vmem:[%s1775 + $0x58] sm:$0xff]
    %v1788 = vld [vmem:[%s1775 + $0x60] sm:$0xff]
    %v1789 = vld [vmem:[%s1775 + $0x68] sm:$0xff]
    %v1790 = vld [vmem:[%s1775 + $0x70] sm:$0xff]
    %v1791 = vld [vmem:[%s1775 + $0x78] sm:$0xff]
    %1792 = vmatpush.msra.mxu0 %v1791
    %1793 = vmatpush.msra.mxu0 %v1790
    %1794 = vmatpush.msra.mxu0 %v1789
    %1795 = vmatpush.msra.mxu0 %v1788
    %1796 = vmatpush.msra.mxu0 %v1787
    %1797 = vmatpush.msra.mxu0 %v1786
    %1798 = vmatpush.msra.mxu0 %v1785
    %1799 = vmatpush.msra.mxu0 %v1784
    %1800 = vmatpush.msra.mxu0 %v1783
    %1801 = vmatpush.msra.mxu0 %v1782
    %1802 = vmatpush.msra.mxu0 %v1781
    %1803 = vmatpush.msra.mxu0 %v1780
    %1804 = vmatpush.msra.mxu0 %v1779
    %1805 = vmatpush.msra.mxu0 %v1778
    %1806 = vmatpush.msra.mxu0 %v1777
    %1807 = vmatpush.msra.mxu0 %v1776
    %1808 = vmatmul.f32.gmra.mxu0 %v1759
    %v1809 = vpop.f32.mrf.mxu0
    %v1810 = vadd.f32 0.0, %v1809
    %1811 = vmatmul.f32.gmra.mxu0 %v1760
    %v1812 = vpop.f32.mrf.mxu0
    %v1813 = vadd.f32 0.0, %v1812
    %1814 = vmatmul.f32.gmra.mxu0 %v1761
    %v1815 = vpop.f32.mrf.mxu0
    %v1816 = vadd.f32 0.0, %v1815
    %1817 = vmatmul.f32.gmra.mxu0 %v1762
    %v1818 = vpop.f32.mrf.mxu0
    %v1819 = vadd.f32 0.0, %v1818
    %1820 = vmatmul.f32.gmra.mxu0 %v1763
    %v1821 = vpop.f32.mrf.mxu0
    %v1822 = vadd.f32 0.0, %v1821
    %1823 = vmatmul.f32.gmra.mxu0 %v1764
    %v1824 = vpop.f32.mrf.mxu0
    %v1825 = vadd.f32 0.0, %v1824
    %1826 = vmatmul.f32.gmra.mxu0 %v1765
    %v1827 = vpop.f32.mrf.mxu0
    %v1828 = vadd.f32 0.0, %v1827
    %1829 = vmatmul.f32.gmra.mxu0 %v1766
    %v1830 = vpop.f32.mrf.mxu0
    %v1831 = vadd.f32 0.0, %v1830
    %1832 = vmatmul.f32.gmra.mxu0 %v1767
    %v1833 = vpop.f32.mrf.mxu0
    %v1834 = vadd.f32 0.0, %v1833
    %1835 = vmatmul.f32.gmra.mxu0 %v1768
    %v1836 = vpop.f32.mrf.mxu0
    %v1837 = vadd.f32 0.0, %v1836
    %1838 = vmatmul.f32.gmra.mxu0 %v1769
    %v1839 = vpop.f32.mrf.mxu0
    %v1840 = vadd.f32 0.0, %v1839
    %1841 = vmatmul.f32.gmra.mxu0 %v1770
    %v1842 = vpop.f32.mrf.mxu0
    %v1843 = vadd.f32 0.0, %v1842
    %1844 = vmatmul.f32.gmra.mxu0 %v1771
    %v1845 = vpop.f32.mrf.mxu0
    %v1846 = vadd.f32 0.0, %v1845
    %1847 = vmatmul.f32.gmra.mxu0 %v1772
    %v1848 = vpop.f32.mrf.mxu0
    %v1849 = vadd.f32 0.0, %v1848
    %1850 = vmatmul.f32.gmra.mxu0 %v1773
    %v1851 = vpop.f32.mrf.mxu0
    %v1852 = vadd.f32 0.0, %v1851
    %1853 = vmatmul.f32.gmra.mxu0 %v1774
    %v1854 = vpop.f32.mrf.mxu0
    %v1855 = vadd.f32 0.0, %v1854
    %1856 = vdwg.mxu0
    %v1857 = vadd.f32 %v1742, %v1810
    %v1858 = vadd.f32 %v1743, %v1813
    %v1859 = vadd.f32 %v1744, %v1816
    %v1860 = vadd.f32 %v1745, %v1819
    %v1861 = vadd.f32 %v1746, %v1822
    %v1862 = vadd.f32 %v1747, %v1825
    %v1863 = vadd.f32 %v1748, %v1828
    %v1864 = vadd.f32 %v1749, %v1831
    %v1865 = vadd.f32 %v1750, %v1834
    %v1866 = vadd.f32 %v1751, %v1837
    %v1867 = vadd.f32 %v1752, %v1840
    %v1868 = vadd.f32 %v1753, %v1843
    %v1869 = vadd.f32 %v1754, %v1846
    %v1870 = vadd.f32 %v1755, %v1849
    %v1871 = vadd.f32 %v1756, %v1852
    %v1872 = vadd.f32 %v1757, %v1855
    %v1873 = vld [vmem:[%s1758 + $0x1] sm:$0xff]
    %v1874 = vld [vmem:[%s1758 + $0x11] sm:$0xff]
    %v1875 = vld [vmem:[%s1758 + $0x21] sm:$0xff]
    %v1876 = vld [vmem:[%s1758 + $0x31] sm:$0xff]
    %v1877 = vld [vmem:[%s1758 + $0x41] sm:$0xff]
    %v1878 = vld [vmem:[%s1758 + $0x51] sm:$0xff]
    %v1879 = vld [vmem:[%s1758 + $0x61] sm:$0xff]
    %v1880 = vld [vmem:[%s1758 + $0x71] sm:$0xff]
    %v1881 = vld [vmem:[%s1758 + $0xc1] sm:$0xff]
    %v1882 = vld [vmem:[%s1758 + $0xd1] sm:$0xff]
    %v1883 = vld [vmem:[%s1758 + $0xe1] sm:$0xff]
    %v1884 = vld [vmem:[%s1758 + $0xf1] sm:$0xff]
    %v1885 = vld [vmem:[%s1758 + $0x101] sm:$0xff]
    %v1886 = vld [vmem:[%s1758 + $0x111] sm:$0xff]
    %v1887 = vld [vmem:[%s1758 + $0x121] sm:$0xff]
    %v1888 = vld [vmem:[%s1758 + $0x131] sm:$0xff]
    %s1889 = scalar_lea.vmem %s3, 768
    %v1890 = vld [vmem:[%s1889] sm:$0xff]
    %v1891 = vld [vmem:[%s1889 + $0x8] sm:$0xff]
    %v1892 = vld [vmem:[%s1889 + $0x10] sm:$0xff]
    %v1893 = vld [vmem:[%s1889 + $0x18] sm:$0xff]
    %v1894 = vld [vmem:[%s1889 + $0x20] sm:$0xff]
    %v1895 = vld [vmem:[%s1889 + $0x28] sm:$0xff]
    %v1896 = vld [vmem:[%s1889 + $0x30] sm:$0xff]
    %v1897 = vld [vmem:[%s1889 + $0x38] sm:$0xff]
    %v1898 = vld [vmem:[%s1889 + $0x40] sm:$0xff]
    %v1899 = vld [vmem:[%s1889 + $0x48] sm:$0xff]
    %v1900 = vld [vmem:[%s1889 + $0x50] sm:$0xff]
    %v1901 = vld [vmem:[%s1889 + $0x58] sm:$0xff]
    %v1902 = vld [vmem:[%s1889 + $0x60] sm:$0xff]
    %v1903 = vld [vmem:[%s1889 + $0x68] sm:$0xff]
    %v1904 = vld [vmem:[%s1889 + $0x70] sm:$0xff]
    %v1905 = vld [vmem:[%s1889 + $0x78] sm:$0xff]
    %1906 = vmatpush.msra.mxu0 %v1905
    %1907 = vmatpush.msra.mxu0 %v1904
    %1908 = vmatpush.msra.mxu0 %v1903
    %1909 = vmatpush.msra.mxu0 %v1902
    %1910 = vmatpush.msra.mxu0 %v1901
    %1911 = vmatpush.msra.mxu0 %v1900
    %1912 = vmatpush.msra.mxu0 %v1899
    %1913 = vmatpush.msra.mxu0 %v1898
    %1914 = vmatpush.msra.mxu0 %v1897
    %1915 = vmatpush.msra.mxu0 %v1896
    %1916 = vmatpush.msra.mxu0 %v1895
    %1917 = vmatpush.msra.mxu0 %v1894
    %1918 = vmatpush.msra.mxu0 %v1893
    %1919 = vmatpush.msra.mxu0 %v1892
    %1920 = vmatpush.msra.mxu0 %v1891
    %1921 = vmatpush.msra.mxu0 %v1890
    %1922 = vmatmul.f32.gmra.mxu0 %v1873
    %v1923 = vpop.f32.mrf.mxu0
    %v1924 = vadd.f32 0.0, %v1923
    %1925 = vmatmul.f32.gmra.mxu0 %v1874
    %v1926 = vpop.f32.mrf.mxu0
    %v1927 = vadd.f32 0.0, %v1926
    %1928 = vmatmul.f32.gmra.mxu0 %v1875
    %v1929 = vpop.f32.mrf.mxu0
    %v1930 = vadd.f32 0.0, %v1929
    %1931 = vmatmul.f32.gmra.mxu0 %v1876
    %v1932 = vpop.f32.mrf.mxu0
    %v1933 = vadd.f32 0.0, %v1932
    %1934 = vmatmul.f32.gmra.mxu0 %v1877
    %v1935 = vpop.f32.mrf.mxu0
    %v1936 = vadd.f32 0.0, %v1935
    %1937 = vmatmul.f32.gmra.mxu0 %v1878
    %v1938 = vpop.f32.mrf.mxu0
    %v1939 = vadd.f32 0.0, %v1938
    %1940 = vmatmul.f32.gmra.mxu0 %v1879
    %v1941 = vpop.f32.mrf.mxu0
    %v1942 = vadd.f32 0.0, %v1941
    %1943 = vmatmul.f32.gmra.mxu0 %v1880
    %v1944 = vpop.f32.mrf.mxu0
    %v1945 = vadd.f32 0.0, %v1944
    %1946 = vmatmul.f32.gmra.mxu0 %v1881
    %v1947 = vpop.f32.mrf.mxu0
    %v1948 = vadd.f32 0.0, %v1947
    %1949 = vmatmul.f32.gmra.mxu0 %v1882
    %v1950 = vpop.f32.mrf.mxu0
    %v1951 = vadd.f32 0.0, %v1950
    %1952 = vmatmul.f32.gmra.mxu0 %v1883
    %v1953 = vpop.f32.mrf.mxu0
    %v1954 = vadd.f32 0.0, %v1953
    %1955 = vmatmul.f32.gmra.mxu0 %v1884
    %v1956 = vpop.f32.mrf.mxu0
    %v1957 = vadd.f32 0.0, %v1956
    %1958 = vmatmul.f32.gmra.mxu0 %v1885
    %v1959 = vpop.f32.mrf.mxu0
    %v1960 = vadd.f32 0.0, %v1959
    %1961 = vmatmul.f32.gmra.mxu0 %v1886
    %v1962 = vpop.f32.mrf.mxu0
    %v1963 = vadd.f32 0.0, %v1962
    %1964 = vmatmul.f32.gmra.mxu0 %v1887
    %v1965 = vpop.f32.mrf.mxu0
    %v1966 = vadd.f32 0.0, %v1965
    %1967 = vmatmul.f32.gmra.mxu0 %v1888
    %v1968 = vpop.f32.mrf.mxu0
    %v1969 = vadd.f32 0.0, %v1968
    %1970 = vdwg.mxu0
    %v1971 = vadd.f32 %v1857, %v1924
    %v1972 = vadd.f32 %v1858, %v1927
    %v1973 = vadd.f32 %v1859, %v1930
    %v1974 = vadd.f32 %v1860, %v1933
    %v1975 = vadd.f32 %v1861, %v1936
    %v1976 = vadd.f32 %v1862, %v1939
    %v1977 = vadd.f32 %v1863, %v1942
    %v1978 = vadd.f32 %v1864, %v1945
    %v1979 = vadd.f32 %v1865, %v1948
    %v1980 = vadd.f32 %v1866, %v1951
    %v1981 = vadd.f32 %v1867, %v1954
    %v1982 = vadd.f32 %v1868, %v1957
    %v1983 = vadd.f32 %v1869, %v1960
    %v1984 = vadd.f32 %v1870, %v1963
    %v1985 = vadd.f32 %v1871, %v1966
    %v1986 = vadd.f32 %v1872, %v1969
    %v1987 = vld [vmem:[%s1758 + $0x2] sm:$0xff]
    %v1988 = vld [vmem:[%s1758 + $0x12] sm:$0xff]
    %v1989 = vld [vmem:[%s1758 + $0x22] sm:$0xff]
    %v1990 = vld [vmem:[%s1758 + $0x32] sm:$0xff]
    %v1991 = vld [vmem:[%s1758 + $0x42] sm:$0xff]
    %v1992 = vld [vmem:[%s1758 + $0x52] sm:$0xff]
    %v1993 = vld [vmem:[%s1758 + $0x62] sm:$0xff]
    %v1994 = vld [vmem:[%s1758 + $0x72] sm:$0xff]
    %v1995 = vld [vmem:[%s1758 + $0xc2] sm:$0xff]
    %v1996 = vld [vmem:[%s1758 + $0xd2] sm:$0xff]
    %v1997 = vld [vmem:[%s1758 + $0xe2] sm:$0xff]
    %v1998 = vld [vmem:[%s1758 + $0xf2] sm:$0xff]
    %v1999 = vld [vmem:[%s1758 + $0x102] sm:$0xff]
    %v2000 = vld [vmem:[%s1758 + $0x112] sm:$0xff]
    %v2001 = vld [vmem:[%s1758 + $0x122] sm:$0xff]
    %v2002 = vld [vmem:[%s1758 + $0x132] sm:$0xff]
    %s2003 = scalar_lea.vmem %s3, 896
    %v2004 = vld [vmem:[%s2003] sm:$0xff]
    %v2005 = vld [vmem:[%s2003 + $0x8] sm:$0xff]
    %v2006 = vld [vmem:[%s2003 + $0x10] sm:$0xff]
    %v2007 = vld [vmem:[%s2003 + $0x18] sm:$0xff]
    %v2008 = vld [vmem:[%s2003 + $0x20] sm:$0xff]
    %v2009 = vld [vmem:[%s2003 + $0x28] sm:$0xff]
    %v2010 = vld [vmem:[%s2003 + $0x30] sm:$0xff]
    %v2011 = vld [vmem:[%s2003 + $0x38] sm:$0xff]
    %v2012 = vld [vmem:[%s2003 + $0x40] sm:$0xff]
    %v2013 = vld [vmem:[%s2003 + $0x48] sm:$0xff]
    %v2014 = vld [vmem:[%s2003 + $0x50] sm:$0xff]
    %v2015 = vld [vmem:[%s2003 + $0x58] sm:$0xff]
    %v2016 = vld [vmem:[%s2003 + $0x60] sm:$0xff]
    %v2017 = vld [vmem:[%s2003 + $0x68] sm:$0xff]
    %v2018 = vld [vmem:[%s2003 + $0x70] sm:$0xff]
    %v2019 = vld [vmem:[%s2003 + $0x78] sm:$0xff]
    %2020 = vmatpush.msra.mxu0 %v2019
    %2021 = vmatpush.msra.mxu0 %v2018
    %2022 = vmatpush.msra.mxu0 %v2017
    %2023 = vmatpush.msra.mxu0 %v2016
    %2024 = vmatpush.msra.mxu0 %v2015
    %2025 = vmatpush.msra.mxu0 %v2014
    %2026 = vmatpush.msra.mxu0 %v2013
    %2027 = vmatpush.msra.mxu0 %v2012
    %2028 = vmatpush.msra.mxu0 %v2011
    %2029 = vmatpush.msra.mxu0 %v2010
    %2030 = vmatpush.msra.mxu0 %v2009
    %2031 = vmatpush.msra.mxu0 %v2008
    %2032 = vmatpush.msra.mxu0 %v2007
    %2033 = vmatpush.msra.mxu0 %v2006
    %2034 = vmatpush.msra.mxu0 %v2005
    %2035 = vmatpush.msra.mxu0 %v2004
    %2036 = vmatmul.f32.gmra.mxu0 %v1987
    %v2037 = vpop.f32.mrf.mxu0
    %v2038 = vadd.f32 0.0, %v2037
    %2039 = vmatmul.f32.gmra.mxu0 %v1988
    %v2040 = vpop.f32.mrf.mxu0
    %v2041 = vadd.f32 0.0, %v2040
    %2042 = vmatmul.f32.gmra.mxu0 %v1989
    %v2043 = vpop.f32.mrf.mxu0
    %v2044 = vadd.f32 0.0, %v2043
    %2045 = vmatmul.f32.gmra.mxu0 %v1990
    %v2046 = vpop.f32.mrf.mxu0
    %v2047 = vadd.f32 0.0, %v2046
    %2048 = vmatmul.f32.gmra.mxu0 %v1991
    %v2049 = vpop.f32.mrf.mxu0
    %v2050 = vadd.f32 0.0, %v2049
    %2051 = vmatmul.f32.gmra.mxu0 %v1992
    %v2052 = vpop.f32.mrf.mxu0
    %v2053 = vadd.f32 0.0, %v2052
    %2054 = vmatmul.f32.gmra.mxu0 %v1993
    %v2055 = vpop.f32.mrf.mxu0
    %v2056 = vadd.f32 0.0, %v2055
    %2057 = vmatmul.f32.gmra.mxu0 %v1994
    %v2058 = vpop.f32.mrf.mxu0
    %v2059 = vadd.f32 0.0, %v2058
    %2060 = vmatmul.f32.gmra.mxu0 %v1995
    %v2061 = vpop.f32.mrf.mxu0
    %v2062 = vadd.f32 0.0, %v2061
    %2063 = vmatmul.f32.gmra.mxu0 %v1996
    %v2064 = vpop.f32.mrf.mxu0
    %v2065 = vadd.f32 0.0, %v2064
    %2066 = vmatmul.f32.gmra.mxu0 %v1997
    %v2067 = vpop.f32.mrf.mxu0
    %v2068 = vadd.f32 0.0, %v2067
    %2069 = vmatmul.f32.gmra.mxu0 %v1998
    %v2070 = vpop.f32.mrf.mxu0
    %v2071 = vadd.f32 0.0, %v2070
    %2072 = vmatmul.f32.gmra.mxu0 %v1999
    %v2073 = vpop.f32.mrf.mxu0
    %v2074 = vadd.f32 0.0, %v2073
    %2075 = vmatmul.f32.gmra.mxu0 %v2000
    %v2076 = vpop.f32.mrf.mxu0
    %v2077 = vadd.f32 0.0, %v2076
    %2078 = vmatmul.f32.gmra.mxu0 %v2001
    %v2079 = vpop.f32.mrf.mxu0
    %v2080 = vadd.f32 0.0, %v2079
    %2081 = vmatmul.f32.gmra.mxu0 %v2002
    %v2082 = vpop.f32.mrf.mxu0
    %v2083 = vadd.f32 0.0, %v2082
    %2084 = vdwg.mxu0
    %v2085 = vadd.f32 %v1971, %v2038
    %v2086 = vadd.f32 %v1972, %v2041
    %v2087 = vadd.f32 %v1973, %v2044
    %v2088 = vadd.f32 %v1974, %v2047
    %v2089 = vadd.f32 %v1975, %v2050
    %v2090 = vadd.f32 %v1976, %v2053
    %v2091 = vadd.f32 %v1977, %v2056
    %v2092 = vadd.f32 %v1978, %v2059
    %v2093 = vadd.f32 %v1979, %v2062
    %v2094 = vadd.f32 %v1980, %v2065
    %v2095 = vadd.f32 %v1981, %v2068
    %v2096 = vadd.f32 %v1982, %v2071
    %v2097 = vadd.f32 %v1983, %v2074
    %v2098 = vadd.f32 %v1984, %v2077
    %v2099 = vadd.f32 %v1985, %v2080
    %v2100 = vadd.f32 %v1986, %v2083
    %v2101 = vld [vmem:[%s1758 + $0x3] sm:$0xff]
    %v2102 = vld [vmem:[%s1758 + $0x13] sm:$0xff]
    %v2103 = vld [vmem:[%s1758 + $0x23] sm:$0xff]
    %v2104 = vld [vmem:[%s1758 + $0x33] sm:$0xff]
    %v2105 = vld [vmem:[%s1758 + $0x43] sm:$0xff]
    %v2106 = vld [vmem:[%s1758 + $0x53] sm:$0xff]
    %v2107 = vld [vmem:[%s1758 + $0x63] sm:$0xff]
    %v2108 = vld [vmem:[%s1758 + $0x73] sm:$0xff]
    %v2109 = vld [vmem:[%s1758 + $0xc3] sm:$0xff]
    %v2110 = vld [vmem:[%s1758 + $0xd3] sm:$0xff]
    %v2111 = vld [vmem:[%s1758 + $0xe3] sm:$0xff]
    %v2112 = vld [vmem:[%s1758 + $0xf3] sm:$0xff]
    %v2113 = vld [vmem:[%s1758 + $0x103] sm:$0xff]
    %v2114 = vld [vmem:[%s1758 + $0x113] sm:$0xff]
    %v2115 = vld [vmem:[%s1758 + $0x123] sm:$0xff]
    %v2116 = vld [vmem:[%s1758 + $0x133] sm:$0xff]
    %s2117 = scalar_lea.vmem %s3, 1024
    %v2118 = vld [vmem:[%s2117] sm:$0xff]
    %v2119 = vld [vmem:[%s2117 + $0x8] sm:$0xff]
    %v2120 = vld [vmem:[%s2117 + $0x10] sm:$0xff]
    %v2121 = vld [vmem:[%s2117 + $0x18] sm:$0xff]
    %v2122 = vld [vmem:[%s2117 + $0x20] sm:$0xff]
    %v2123 = vld [vmem:[%s2117 + $0x28] sm:$0xff]
    %v2124 = vld [vmem:[%s2117 + $0x30] sm:$0xff]
    %v2125 = vld [vmem:[%s2117 + $0x38] sm:$0xff]
    %v2126 = vld [vmem:[%s2117 + $0x40] sm:$0xff]
    %v2127 = vld [vmem:[%s2117 + $0x48] sm:$0xff]
    %v2128 = vld [vmem:[%s2117 + $0x50] sm:$0xff]
    %v2129 = vld [vmem:[%s2117 + $0x58] sm:$0xff]
    %v2130 = vld [vmem:[%s2117 + $0x60] sm:$0xff]
    %v2131 = vld [vmem:[%s2117 + $0x68] sm:$0xff]
    %v2132 = vld [vmem:[%s2117 + $0x70] sm:$0xff]
    %v2133 = vld [vmem:[%s2117 + $0x78] sm:$0xff]
    %2134 = vmatpush.msra.mxu0 %v2133
    %2135 = vmatpush.msra.mxu0 %v2132
    %2136 = vmatpush.msra.mxu0 %v2131
    %2137 = vmatpush.msra.mxu0 %v2130
    %2138 = vmatpush.msra.mxu0 %v2129
    %2139 = vmatpush.msra.mxu0 %v2128
    %2140 = vmatpush.msra.mxu0 %v2127
    %2141 = vmatpush.msra.mxu0 %v2126
    %2142 = vmatpush.msra.mxu0 %v2125
    %2143 = vmatpush.msra.mxu0 %v2124
    %2144 = vmatpush.msra.mxu0 %v2123
    %2145 = vmatpush.msra.mxu0 %v2122
    %2146 = vmatpush.msra.mxu0 %v2121
    %2147 = vmatpush.msra.mxu0 %v2120
    %2148 = vmatpush.msra.mxu0 %v2119
    %2149 = vmatpush.msra.mxu0 %v2118
    %2150 = vmatmul.f32.gmra.mxu0 %v2101
    %v2151 = vpop.f32.mrf.mxu0
    %v2152 = vadd.f32 0.0, %v2151
    %2153 = vmatmul.f32.gmra.mxu0 %v2102
    %v2154 = vpop.f32.mrf.mxu0
    %v2155 = vadd.f32 0.0, %v2154
    %2156 = vmatmul.f32.gmra.mxu0 %v2103
    %v2157 = vpop.f32.mrf.mxu0
    %v2158 = vadd.f32 0.0, %v2157
    %2159 = vmatmul.f32.gmra.mxu0 %v2104
    %v2160 = vpop.f32.mrf.mxu0
    %v2161 = vadd.f32 0.0, %v2160
    %2162 = vmatmul.f32.gmra.mxu0 %v2105
    %v2163 = vpop.f32.mrf.mxu0
    %v2164 = vadd.f32 0.0, %v2163
    %2165 = vmatmul.f32.gmra.mxu0 %v2106
    %v2166 = vpop.f32.mrf.mxu0
    %v2167 = vadd.f32 0.0, %v2166
    %2168 = vmatmul.f32.gmra.mxu0 %v2107
    %v2169 = vpop.f32.mrf.mxu0
    %v2170 = vadd.f32 0.0, %v2169
    %2171 = vmatmul.f32.gmra.mxu0 %v2108
    %v2172 = vpop.f32.mrf.mxu0
    %v2173 = vadd.f32 0.0, %v2172
    %2174 = vmatmul.f32.gmra.mxu0 %v2109
    %v2175 = vpop.f32.mrf.mxu0
    %v2176 = vadd.f32 0.0, %v2175
    %2177 = vmatmul.f32.gmra.mxu0 %v2110
    %v2178 = vpop.f32.mrf.mxu0
    %v2179 = vadd.f32 0.0, %v2178
    %2180 = vmatmul.f32.gmra.mxu0 %v2111
    %v2181 = vpop.f32.mrf.mxu0
    %v2182 = vadd.f32 0.0, %v2181
    %2183 = vmatmul.f32.gmra.mxu0 %v2112
    %v2184 = vpop.f32.mrf.mxu0
    %v2185 = vadd.f32 0.0, %v2184
    %2186 = vmatmul.f32.gmra.mxu0 %v2113
    %v2187 = vpop.f32.mrf.mxu0
    %v2188 = vadd.f32 0.0, %v2187
    %2189 = vmatmul.f32.gmra.mxu0 %v2114
    %v2190 = vpop.f32.mrf.mxu0
    %v2191 = vadd.f32 0.0, %v2190
    %2192 = vmatmul.f32.gmra.mxu0 %v2115
    %v2193 = vpop.f32.mrf.mxu0
    %v2194 = vadd.f32 0.0, %v2193
    %2195 = vmatmul.f32.gmra.mxu0 %v2116
    %v2196 = vpop.f32.mrf.mxu0
    %v2197 = vadd.f32 0.0, %v2196
    %2198 = vdwg.mxu0
    %v2199 = vadd.f32 %v2085, %v2152
    %v2200 = vadd.f32 %v2086, %v2155
    %v2201 = vadd.f32 %v2087, %v2158
    %v2202 = vadd.f32 %v2088, %v2161
    %v2203 = vadd.f32 %v2089, %v2164
    %v2204 = vadd.f32 %v2090, %v2167
    %v2205 = vadd.f32 %v2091, %v2170
    %v2206 = vadd.f32 %v2092, %v2173
    %v2207 = vadd.f32 %v2093, %v2176
    %v2208 = vadd.f32 %v2094, %v2179
    %v2209 = vadd.f32 %v2095, %v2182
    %v2210 = vadd.f32 %v2096, %v2185
    %v2211 = vadd.f32 %v2097, %v2188
    %v2212 = vadd.f32 %v2098, %v2191
    %v2213 = vadd.f32 %v2099, %v2194
    %v2214 = vadd.f32 %v2100, %v2197
    %v2215 = vld [vmem:[%s1758 + $0x4] sm:$0xff]
    %v2216 = vld [vmem:[%s1758 + $0x14] sm:$0xff]
    %v2217 = vld [vmem:[%s1758 + $0x24] sm:$0xff]
    %v2218 = vld [vmem:[%s1758 + $0x34] sm:$0xff]
    %v2219 = vld [vmem:[%s1758 + $0x44] sm:$0xff]
    %v2220 = vld [vmem:[%s1758 + $0x54] sm:$0xff]
    %v2221 = vld [vmem:[%s1758 + $0x64] sm:$0xff]
    %v2222 = vld [vmem:[%s1758 + $0x74] sm:$0xff]
    %v2223 = vld [vmem:[%s1758 + $0xc4] sm:$0xff]
    %v2224 = vld [vmem:[%s1758 + $0xd4] sm:$0xff]
    %v2225 = vld [vmem:[%s1758 + $0xe4] sm:$0xff]
    %v2226 = vld [vmem:[%s1758 + $0xf4] sm:$0xff]
    %v2227 = vld [vmem:[%s1758 + $0x104] sm:$0xff]
    %v2228 = vld [vmem:[%s1758 + $0x114] sm:$0xff]
    %v2229 = vld [vmem:[%s1758 + $0x124] sm:$0xff]
    %v2230 = vld [vmem:[%s1758 + $0x134] sm:$0xff]
    %s2231 = scalar_lea.vmem %s3, 1152
    %v2232 = vld [vmem:[%s2231] sm:$0xff]
    %v2233 = vld [vmem:[%s2231 + $0x8] sm:$0xff]
    %v2234 = vld [vmem:[%s2231 + $0x10] sm:$0xff]
    %v2235 = vld [vmem:[%s2231 + $0x18] sm:$0xff]
    %v2236 = vld [vmem:[%s2231 + $0x20] sm:$0xff]
    %v2237 = vld [vmem:[%s2231 + $0x28] sm:$0xff]
    %v2238 = vld [vmem:[%s2231 + $0x30] sm:$0xff]
    %v2239 = vld [vmem:[%s2231 + $0x38] sm:$0xff]
    %v2240 = vld [vmem:[%s2231 + $0x40] sm:$0xff]
    %v2241 = vld [vmem:[%s2231 + $0x48] sm:$0xff]
    %v2242 = vld [vmem:[%s2231 + $0x50] sm:$0xff]
    %v2243 = vld [vmem:[%s2231 + $0x58] sm:$0xff]
    %v2244 = vld [vmem:[%s2231 + $0x60] sm:$0xff]
    %v2245 = vld [vmem:[%s2231 + $0x68] sm:$0xff]
    %v2246 = vld [vmem:[%s2231 + $0x70] sm:$0xff]
    %v2247 = vld [vmem:[%s2231 + $0x78] sm:$0xff]
    %2248 = vmatpush.msra.mxu0 %v2247
    %2249 = vmatpush.msra.mxu0 %v2246
    %2250 = vmatpush.msra.mxu0 %v2245
    %2251 = vmatpush.msra.mxu0 %v2244
    %2252 = vmatpush.msra.mxu0 %v2243
    %2253 = vmatpush.msra.mxu0 %v2242
    %2254 = vmatpush.msra.mxu0 %v2241
    %2255 = vmatpush.msra.mxu0 %v2240
    %2256 = vmatpush.msra.mxu0 %v2239
    %2257 = vmatpush.msra.mxu0 %v2238
    %2258 = vmatpush.msra.mxu0 %v2237
    %2259 = vmatpush.msra.mxu0 %v2236
    %2260 = vmatpush.msra.mxu0 %v2235
    %2261 = vmatpush.msra.mxu0 %v2234
    %2262 = vmatpush.msra.mxu0 %v2233
    %2263 = vmatpush.msra.mxu0 %v2232
    %2264 = vmatmul.f32.gmra.mxu0 %v2215
    %v2265 = vpop.f32.mrf.mxu0
    %v2266 = vadd.f32 0.0, %v2265
    %2267 = vmatmul.f32.gmra.mxu0 %v2216
    %v2268 = vpop.f32.mrf.mxu0
    %v2269 = vadd.f32 0.0, %v2268
    %2270 = vmatmul.f32.gmra.mxu0 %v2217
    %v2271 = vpop.f32.mrf.mxu0
    %v2272 = vadd.f32 0.0, %v2271
    %2273 = vmatmul.f32.gmra.mxu0 %v2218
    %v2274 = vpop.f32.mrf.mxu0
    %v2275 = vadd.f32 0.0, %v2274
    %2276 = vmatmul.f32.gmra.mxu0 %v2219
    %v2277 = vpop.f32.mrf.mxu0
    %v2278 = vadd.f32 0.0, %v2277
    %2279 = vmatmul.f32.gmra.mxu0 %v2220
    %v2280 = vpop.f32.mrf.mxu0
    %v2281 = vadd.f32 0.0, %v2280
    %2282 = vmatmul.f32.gmra.mxu0 %v2221
    %v2283 = vpop.f32.mrf.mxu0
    %v2284 = vadd.f32 0.0, %v2283
    %2285 = vmatmul.f32.gmra.mxu0 %v2222
    %v2286 = vpop.f32.mrf.mxu0
    %v2287 = vadd.f32 0.0, %v2286
    %2288 = vmatmul.f32.gmra.mxu0 %v2223
    %v2289 = vpop.f32.mrf.mxu0
    %v2290 = vadd.f32 0.0, %v2289
    %2291 = vmatmul.f32.gmra.mxu0 %v2224
    %v2292 = vpop.f32.mrf.mxu0
    %v2293 = vadd.f32 0.0, %v2292
    %2294 = vmatmul.f32.gmra.mxu0 %v2225
    %v2295 = vpop.f32.mrf.mxu0
    %v2296 = vadd.f32 0.0, %v2295
    %2297 = vmatmul.f32.gmra.mxu0 %v2226
    %v2298 = vpop.f32.mrf.mxu0
    %v2299 = vadd.f32 0.0, %v2298
    %2300 = vmatmul.f32.gmra.mxu0 %v2227
    %v2301 = vpop.f32.mrf.mxu0
    %v2302 = vadd.f32 0.0, %v2301
    %2303 = vmatmul.f32.gmra.mxu0 %v2228
    %v2304 = vpop.f32.mrf.mxu0
    %v2305 = vadd.f32 0.0, %v2304
    %2306 = vmatmul.f32.gmra.mxu0 %v2229
    %v2307 = vpop.f32.mrf.mxu0
    %v2308 = vadd.f32 0.0, %v2307
    %2309 = vmatmul.f32.gmra.mxu0 %v2230
    %v2310 = vpop.f32.mrf.mxu0
    %v2311 = vadd.f32 0.0, %v2310
    %2312 = vdwg.mxu0
    %v2313 = vadd.f32 %v2199, %v2266
    %v2314 = vadd.f32 %v2200, %v2269
    %v2315 = vadd.f32 %v2201, %v2272
    %v2316 = vadd.f32 %v2202, %v2275
    %v2317 = vadd.f32 %v2203, %v2278
    %v2318 = vadd.f32 %v2204, %v2281
    %v2319 = vadd.f32 %v2205, %v2284
    %v2320 = vadd.f32 %v2206, %v2287
    %v2321 = vadd.f32 %v2207, %v2290
    %v2322 = vadd.f32 %v2208, %v2293
    %v2323 = vadd.f32 %v2209, %v2296
    %v2324 = vadd.f32 %v2210, %v2299
    %v2325 = vadd.f32 %v2211, %v2302
    %v2326 = vadd.f32 %v2212, %v2305
    %v2327 = vadd.f32 %v2213, %v2308
    %v2328 = vadd.f32 %v2214, %v2311
    %s2329 = scalar_lea.vmem [#allocation3], 32
    %v2330 = vld [vmem:[%s2329] sm:$0xff]
    %v2331 = vld [vmem:[%s2329 + $0x10] sm:$0xff]
    %v2332 = vld [vmem:[%s2329 + $0x20] sm:$0xff]
    %v2333 = vld [vmem:[%s2329 + $0x30] sm:$0xff]
    %v2334 = vld [vmem:[%s2329 + $0x40] sm:$0xff]
    %v2335 = vld [vmem:[%s2329 + $0x50] sm:$0xff]
    %v2336 = vld [vmem:[%s2329 + $0x60] sm:$0xff]
    %v2337 = vld [vmem:[%s2329 + $0x70] sm:$0xff]
    %v2338 = vld [vmem:[%s2329 + $0xc0] sm:$0xff]
    %v2339 = vld [vmem:[%s2329 + $0xd0] sm:$0xff]
    %v2340 = vld [vmem:[%s2329 + $0xe0] sm:$0xff]
    %v2341 = vld [vmem:[%s2329 + $0xf0] sm:$0xff]
    %v2342 = vld [vmem:[%s2329 + $0x100] sm:$0xff]
    %v2343 = vld [vmem:[%s2329 + $0x110] sm:$0xff]
    %v2344 = vld [vmem:[%s2329 + $0x120] sm:$0xff]
    %v2345 = vld [vmem:[%s2329 + $0x130] sm:$0xff]
    %s2346 = scalar_lea.vmem %s3, 1280
    %v2347 = vld [vmem:[%s2346] sm:$0xff]
    %v2348 = vld [vmem:[%s2346 + $0x8] sm:$0xff]
    %v2349 = vld [vmem:[%s2346 + $0x10] sm:$0xff]
    %v2350 = vld [vmem:[%s2346 + $0x18] sm:$0xff]
    %v2351 = vld [vmem:[%s2346 + $0x20] sm:$0xff]
    %v2352 = vld [vmem:[%s2346 + $0x28] sm:$0xff]
    %v2353 = vld [vmem:[%s2346 + $0x30] sm:$0xff]
    %v2354 = vld [vmem:[%s2346 + $0x38] sm:$0xff]
    %v2355 = vld [vmem:[%s2346 + $0x40] sm:$0xff]
    %v2356 = vld [vmem:[%s2346 + $0x48] sm:$0xff]
    %v2357 = vld [vmem:[%s2346 + $0x50] sm:$0xff]
    %v2358 = vld [vmem:[%s2346 + $0x58] sm:$0xff]
    %v2359 = vld [vmem:[%s2346 + $0x60] sm:$0xff]
    %v2360 = vld [vmem:[%s2346 + $0x68] sm:$0xff]
    %v2361 = vld [vmem:[%s2346 + $0x70] sm:$0xff]
    %v2362 = vld [vmem:[%s2346 + $0x78] sm:$0xff]
    %2363 = vmatpush.msra.mxu0 %v2362
    %2364 = vmatpush.msra.mxu0 %v2361
    %2365 = vmatpush.msra.mxu0 %v2360
    %2366 = vmatpush.msra.mxu0 %v2359
    %2367 = vmatpush.msra.mxu0 %v2358
    %2368 = vmatpush.msra.mxu0 %v2357
    %2369 = vmatpush.msra.mxu0 %v2356
    %2370 = vmatpush.msra.mxu0 %v2355
    %2371 = vmatpush.msra.mxu0 %v2354
    %2372 = vmatpush.msra.mxu0 %v2353
    %2373 = vmatpush.msra.mxu0 %v2352
    %2374 = vmatpush.msra.mxu0 %v2351
    %2375 = vmatpush.msra.mxu0 %v2350
    %2376 = vmatpush.msra.mxu0 %v2349
    %2377 = vmatpush.msra.mxu0 %v2348
    %2378 = vmatpush.msra.mxu0 %v2347
    %2379 = vmatmul.f32.gmra.mxu0 %v2330
    %v2380 = vpop.f32.mrf.mxu0
    %v2381 = vadd.f32 0.0, %v2380
    %2382 = vmatmul.f32.gmra.mxu0 %v2331
    %v2383 = vpop.f32.mrf.mxu0
    %v2384 = vadd.f32 0.0, %v2383
    %2385 = vmatmul.f32.gmra.mxu0 %v2332
    %v2386 = vpop.f32.mrf.mxu0
    %v2387 = vadd.f32 0.0, %v2386
    %2388 = vmatmul.f32.gmra.mxu0 %v2333
    %v2389 = vpop.f32.mrf.mxu0
    %v2390 = vadd.f32 0.0, %v2389
    %2391 = vmatmul.f32.gmra.mxu0 %v2334
    %v2392 = vpop.f32.mrf.mxu0
    %v2393 = vadd.f32 0.0, %v2392
    %2394 = vmatmul.f32.gmra.mxu0 %v2335
    %v2395 = vpop.f32.mrf.mxu0
    %v2396 = vadd.f32 0.0, %v2395
    %2397 = vmatmul.f32.gmra.mxu0 %v2336
    %v2398 = vpop.f32.mrf.mxu0
    %v2399 = vadd.f32 0.0, %v2398
    %2400 = vmatmul.f32.gmra.mxu0 %v2337
    %v2401 = vpop.f32.mrf.mxu0
    %v2402 = vadd.f32 0.0, %v2401
    %2403 = vmatmul.f32.gmra.mxu0 %v2338
    %v2404 = vpop.f32.mrf.mxu0
    %v2405 = vadd.f32 0.0, %v2404
    %2406 = vmatmul.f32.gmra.mxu0 %v2339
    %v2407 = vpop.f32.mrf.mxu0
    %v2408 = vadd.f32 0.0, %v2407
    %2409 = vmatmul.f32.gmra.mxu0 %v2340
    %v2410 = vpop.f32.mrf.mxu0
    %v2411 = vadd.f32 0.0, %v2410
    %2412 = vmatmul.f32.gmra.mxu0 %v2341
    %v2413 = vpop.f32.mrf.mxu0
    %v2414 = vadd.f32 0.0, %v2413
    %2415 = vmatmul.f32.gmra.mxu0 %v2342
    %v2416 = vpop.f32.mrf.mxu0
    %v2417 = vadd.f32 0.0, %v2416
    %2418 = vmatmul.f32.gmra.mxu0 %v2343
    %v2419 = vpop.f32.mrf.mxu0
    %v2420 = vadd.f32 0.0, %v2419
    %2421 = vmatmul.f32.gmra.mxu0 %v2344
    %v2422 = vpop.f32.mrf.mxu0
    %v2423 = vadd.f32 0.0, %v2422
    %2424 = vmatmul.f32.gmra.mxu0 %v2345
    %v2425 = vpop.f32.mrf.mxu0
    %v2426 = vadd.f32 0.0, %v2425
    %2427 = vdwg.mxu0
    %v2428 = vadd.f32 %v2313, %v2381
    %v2429 = vadd.f32 %v2314, %v2384
    %v2430 = vadd.f32 %v2315, %v2387
    %v2431 = vadd.f32 %v2316, %v2390
    %v2432 = vadd.f32 %v2317, %v2393
    %v2433 = vadd.f32 %v2318, %v2396
    %v2434 = vadd.f32 %v2319, %v2399
    %v2435 = vadd.f32 %v2320, %v2402
    %v2436 = vadd.f32 %v2321, %v2405
    %v2437 = vadd.f32 %v2322, %v2408
    %v2438 = vadd.f32 %v2323, %v2411
    %v2439 = vadd.f32 %v2324, %v2414
    %v2440 = vadd.f32 %v2325, %v2417
    %v2441 = vadd.f32 %v2326, %v2420
    %v2442 = vadd.f32 %v2327, %v2423
    %v2443 = vadd.f32 %v2328, %v2426
    %v2444 = vld [vmem:[%s2329 + $0x1] sm:$0xff]
    %v2445 = vld [vmem:[%s2329 + $0x11] sm:$0xff]
    %v2446 = vld [vmem:[%s2329 + $0x21] sm:$0xff]
    %v2447 = vld [vmem:[%s2329 + $0x31] sm:$0xff]
    %v2448 = vld [vmem:[%s2329 + $0x41] sm:$0xff]
    %v2449 = vld [vmem:[%s2329 + $0x51] sm:$0xff]
    %v2450 = vld [vmem:[%s2329 + $0x61] sm:$0xff]
    %v2451 = vld [vmem:[%s2329 + $0x71] sm:$0xff]
    %v2452 = vld [vmem:[%s2329 + $0xc1] sm:$0xff]
    %v2453 = vld [vmem:[%s2329 + $0xd1] sm:$0xff]
    %v2454 = vld [vmem:[%s2329 + $0xe1] sm:$0xff]
    %v2455 = vld [vmem:[%s2329 + $0xf1] sm:$0xff]
    %v2456 = vld [vmem:[%s2329 + $0x101] sm:$0xff]
    %v2457 = vld [vmem:[%s2329 + $0x111] sm:$0xff]
    %v2458 = vld [vmem:[%s2329 + $0x121] sm:$0xff]
    %v2459 = vld [vmem:[%s2329 + $0x131] sm:$0xff]
    %s2460 = scalar_lea.vmem %s3, 1408
    %v2461 = vld [vmem:[%s2460] sm:$0xff]
    %v2462 = vld [vmem:[%s2460 + $0x8] sm:$0xff]
    %v2463 = vld [vmem:[%s2460 + $0x10] sm:$0xff]
    %v2464 = vld [vmem:[%s2460 + $0x18] sm:$0xff]
    %v2465 = vld [vmem:[%s2460 + $0x20] sm:$0xff]
    %v2466 = vld [vmem:[%s2460 + $0x28] sm:$0xff]
    %v2467 = vld [vmem:[%s2460 + $0x30] sm:$0xff]
    %v2468 = vld [vmem:[%s2460 + $0x38] sm:$0xff]
    %v2469 = vld [vmem:[%s2460 + $0x40] sm:$0xff]
    %v2470 = vld [vmem:[%s2460 + $0x48] sm:$0xff]
    %v2471 = vld [vmem:[%s2460 + $0x50] sm:$0xff]
    %v2472 = vld [vmem:[%s2460 + $0x58] sm:$0xff]
    %v2473 = vld [vmem:[%s2460 + $0x60] sm:$0xff]
    %v2474 = vld [vmem:[%s2460 + $0x68] sm:$0xff]
    %v2475 = vld [vmem:[%s2460 + $0x70] sm:$0xff]
    %v2476 = vld [vmem:[%s2460 + $0x78] sm:$0xff]
    %2477 = vmatpush.msra.mxu0 %v2476
    %2478 = vmatpush.msra.mxu0 %v2475
    %2479 = vmatpush.msra.mxu0 %v2474
    %2480 = vmatpush.msra.mxu0 %v2473
    %2481 = vmatpush.msra.mxu0 %v2472
    %2482 = vmatpush.msra.mxu0 %v2471
    %2483 = vmatpush.msra.mxu0 %v2470
    %2484 = vmatpush.msra.mxu0 %v2469
    %2485 = vmatpush.msra.mxu0 %v2468
    %2486 = vmatpush.msra.mxu0 %v2467
    %2487 = vmatpush.msra.mxu0 %v2466
    %2488 = vmatpush.msra.mxu0 %v2465
    %2489 = vmatpush.msra.mxu0 %v2464
    %2490 = vmatpush.msra.mxu0 %v2463
    %2491 = vmatpush.msra.mxu0 %v2462
    %2492 = vmatpush.msra.mxu0 %v2461
    %2493 = vmatmul.f32.gmra.mxu0 %v2444
    %v2494 = vpop.f32.mrf.mxu0
    %v2495 = vadd.f32 0.0, %v2494
    %2496 = vmatmul.f32.gmra.mxu0 %v2445
    %v2497 = vpop.f32.mrf.mxu0
    %v2498 = vadd.f32 0.0, %v2497
    %2499 = vmatmul.f32.gmra.mxu0 %v2446
    %v2500 = vpop.f32.mrf.mxu0
    %v2501 = vadd.f32 0.0, %v2500
    %2502 = vmatmul.f32.gmra.mxu0 %v2447
    %v2503 = vpop.f32.mrf.mxu0
    %v2504 = vadd.f32 0.0, %v2503
    %2505 = vmatmul.f32.gmra.mxu0 %v2448
    %v2506 = vpop.f32.mrf.mxu0
    %v2507 = vadd.f32 0.0, %v2506
    %2508 = vmatmul.f32.gmra.mxu0 %v2449
    %v2509 = vpop.f32.mrf.mxu0
    %v2510 = vadd.f32 0.0, %v2509
    %2511 = vmatmul.f32.gmra.mxu0 %v2450
    %v2512 = vpop.f32.mrf.mxu0
    %v2513 = vadd.f32 0.0, %v2512
    %2514 = vmatmul.f32.gmra.mxu0 %v2451
    %v2515 = vpop.f32.mrf.mxu0
    %v2516 = vadd.f32 0.0, %v2515
    %2517 = vmatmul.f32.gmra.mxu0 %v2452
    %v2518 = vpop.f32.mrf.mxu0
    %v2519 = vadd.f32 0.0, %v2518
    %2520 = vmatmul.f32.gmra.mxu0 %v2453
    %v2521 = vpop.f32.mrf.mxu0
    %v2522 = vadd.f32 0.0, %v2521
    %2523 = vmatmul.f32.gmra.mxu0 %v2454
    %v2524 = vpop.f32.mrf.mxu0
    %v2525 = vadd.f32 0.0, %v2524
    %2526 = vmatmul.f32.gmra.mxu0 %v2455
    %v2527 = vpop.f32.mrf.mxu0
    %v2528 = vadd.f32 0.0, %v2527
    %2529 = vmatmul.f32.gmra.mxu0 %v2456
    %v2530 = vpop.f32.mrf.mxu0
    %v2531 = vadd.f32 0.0, %v2530
    %2532 = vmatmul.f32.gmra.mxu0 %v2457
    %v2533 = vpop.f32.mrf.mxu0
    %v2534 = vadd.f32 0.0, %v2533
    %2535 = vmatmul.f32.gmra.mxu0 %v2458
    %v2536 = vpop.f32.mrf.mxu0
    %v2537 = vadd.f32 0.0, %v2536
    %2538 = vmatmul.f32.gmra.mxu0 %v2459
    %v2539 = vpop.f32.mrf.mxu0
    %v2540 = vadd.f32 0.0, %v2539
    %2541 = vdwg.mxu0
    %v2542 = vadd.f32 %v2428, %v2495
    %v2543 = vadd.f32 %v2429, %v2498
    %v2544 = vadd.f32 %v2430, %v2501
    %v2545 = vadd.f32 %v2431, %v2504
    %v2546 = vadd.f32 %v2432, %v2507
    %v2547 = vadd.f32 %v2433, %v2510
    %v2548 = vadd.f32 %v2434, %v2513
    %v2549 = vadd.f32 %v2435, %v2516
    %v2550 = vadd.f32 %v2436, %v2519
    %v2551 = vadd.f32 %v2437, %v2522
    %v2552 = vadd.f32 %v2438, %v2525
    %v2553 = vadd.f32 %v2439, %v2528
    %v2554 = vadd.f32 %v2440, %v2531
    %v2555 = vadd.f32 %v2441, %v2534
    %v2556 = vadd.f32 %v2442, %v2537
    %v2557 = vadd.f32 %v2443, %v2540
    %v2558 = vld [vmem:[%s2329 + $0x2] sm:$0xff]
    %v2559 = vld [vmem:[%s2329 + $0x12] sm:$0xff]
    %v2560 = vld [vmem:[%s2329 + $0x22] sm:$0xff]
    %v2561 = vld [vmem:[%s2329 + $0x32] sm:$0xff]
    %v2562 = vld [vmem:[%s2329 + $0x42] sm:$0xff]
    %v2563 = vld [vmem:[%s2329 + $0x52] sm:$0xff]
    %v2564 = vld [vmem:[%s2329 + $0x62] sm:$0xff]
    %v2565 = vld [vmem:[%s2329 + $0x72] sm:$0xff]
    %v2566 = vld [vmem:[%s2329 + $0xc2] sm:$0xff]
    %v2567 = vld [vmem:[%s2329 + $0xd2] sm:$0xff]
    %v2568 = vld [vmem:[%s2329 + $0xe2] sm:$0xff]
    %v2569 = vld [vmem:[%s2329 + $0xf2] sm:$0xff]
    %v2570 = vld [vmem:[%s2329 + $0x102] sm:$0xff]
    %v2571 = vld [vmem:[%s2329 + $0x112] sm:$0xff]
    %v2572 = vld [vmem:[%s2329 + $0x122] sm:$0xff]
    %v2573 = vld [vmem:[%s2329 + $0x132] sm:$0xff]
    %s2574 = scalar_lea.vmem %s3, 1536
    %v2575 = vld [vmem:[%s2574] sm:$0xff]
    %v2576 = vld [vmem:[%s2574 + $0x8] sm:$0xff]
    %v2577 = vld [vmem:[%s2574 + $0x10] sm:$0xff]
    %v2578 = vld [vmem:[%s2574 + $0x18] sm:$0xff]
    %v2579 = vld [vmem:[%s2574 + $0x20] sm:$0xff]
    %v2580 = vld [vmem:[%s2574 + $0x28] sm:$0xff]
    %v2581 = vld [vmem:[%s2574 + $0x30] sm:$0xff]
    %v2582 = vld [vmem:[%s2574 + $0x38] sm:$0xff]
    %v2583 = vld [vmem:[%s2574 + $0x40] sm:$0xff]
    %v2584 = vld [vmem:[%s2574 + $0x48] sm:$0xff]
    %v2585 = vld [vmem:[%s2574 + $0x50] sm:$0xff]
    %v2586 = vld [vmem:[%s2574 + $0x58] sm:$0xff]
    %v2587 = vld [vmem:[%s2574 + $0x60] sm:$0xff]
    %v2588 = vld [vmem:[%s2574 + $0x68] sm:$0xff]
    %v2589 = vld [vmem:[%s2574 + $0x70] sm:$0xff]
    %v2590 = vld [vmem:[%s2574 + $0x78] sm:$0xff]
    %2591 = vmatpush.msra.mxu0 %v2590
    %2592 = vmatpush.msra.mxu0 %v2589
    %2593 = vmatpush.msra.mxu0 %v2588
    %2594 = vmatpush.msra.mxu0 %v2587
    %2595 = vmatpush.msra.mxu0 %v2586
    %2596 = vmatpush.msra.mxu0 %v2585
    %2597 = vmatpush.msra.mxu0 %v2584
    %2598 = vmatpush.msra.mxu0 %v2583
    %2599 = vmatpush.msra.mxu0 %v2582
    %2600 = vmatpush.msra.mxu0 %v2581
    %2601 = vmatpush.msra.mxu0 %v2580
    %2602 = vmatpush.msra.mxu0 %v2579
    %2603 = vmatpush.msra.mxu0 %v2578
    %2604 = vmatpush.msra.mxu0 %v2577
    %2605 = vmatpush.msra.mxu0 %v2576
    %2606 = vmatpush.msra.mxu0 %v2575
    %2607 = vmatmul.f32.gmra.mxu0 %v2558
    %v2608 = vpop.f32.mrf.mxu0
    %v2609 = vadd.f32 0.0, %v2608
    %2610 = vmatmul.f32.gmra.mxu0 %v2559
    %v2611 = vpop.f32.mrf.mxu0
    %v2612 = vadd.f32 0.0, %v2611
    %2613 = vmatmul.f32.gmra.mxu0 %v2560
    %v2614 = vpop.f32.mrf.mxu0
    %v2615 = vadd.f32 0.0, %v2614
    %2616 = vmatmul.f32.gmra.mxu0 %v2561
    %v2617 = vpop.f32.mrf.mxu0
    %v2618 = vadd.f32 0.0, %v2617
    %2619 = vmatmul.f32.gmra.mxu0 %v2562
    %v2620 = vpop.f32.mrf.mxu0
    %v2621 = vadd.f32 0.0, %v2620
    %2622 = vmatmul.f32.gmra.mxu0 %v2563
    %v2623 = vpop.f32.mrf.mxu0
    %v2624 = vadd.f32 0.0, %v2623
    %2625 = vmatmul.f32.gmra.mxu0 %v2564
    %v2626 = vpop.f32.mrf.mxu0
    %v2627 = vadd.f32 0.0, %v2626
    %2628 = vmatmul.f32.gmra.mxu0 %v2565
    %v2629 = vpop.f32.mrf.mxu0
    %v2630 = vadd.f32 0.0, %v2629
    %2631 = vmatmul.f32.gmra.mxu0 %v2566
    %v2632 = vpop.f32.mrf.mxu0
    %v2633 = vadd.f32 0.0, %v2632
    %2634 = vmatmul.f32.gmra.mxu0 %v2567
    %v2635 = vpop.f32.mrf.mxu0
    %v2636 = vadd.f32 0.0, %v2635
    %2637 = vmatmul.f32.gmra.mxu0 %v2568
    %v2638 = vpop.f32.mrf.mxu0
    %v2639 = vadd.f32 0.0, %v2638
    %2640 = vmatmul.f32.gmra.mxu0 %v2569
    %v2641 = vpop.f32.mrf.mxu0
    %v2642 = vadd.f32 0.0, %v2641
    %2643 = vmatmul.f32.gmra.mxu0 %v2570
    %v2644 = vpop.f32.mrf.mxu0
    %v2645 = vadd.f32 0.0, %v2644
    %2646 = vmatmul.f32.gmra.mxu0 %v2571
    %v2647 = vpop.f32.mrf.mxu0
    %v2648 = vadd.f32 0.0, %v2647
    %2649 = vmatmul.f32.gmra.mxu0 %v2572
    %v2650 = vpop.f32.mrf.mxu0
    %v2651 = vadd.f32 0.0, %v2650
    %2652 = vmatmul.f32.gmra.mxu0 %v2573
    %v2653 = vpop.f32.mrf.mxu0
    %v2654 = vadd.f32 0.0, %v2653
    %2655 = vdwg.mxu0
    %v2656 = vadd.f32 %v2542, %v2609
    %v2657 = vadd.f32 %v2543, %v2612
    %v2658 = vadd.f32 %v2544, %v2615
    %v2659 = vadd.f32 %v2545, %v2618
    %v2660 = vadd.f32 %v2546, %v2621
    %v2661 = vadd.f32 %v2547, %v2624
    %v2662 = vadd.f32 %v2548, %v2627
    %v2663 = vadd.f32 %v2549, %v2630
    %v2664 = vadd.f32 %v2550, %v2633
    %v2665 = vadd.f32 %v2551, %v2636
    %v2666 = vadd.f32 %v2552, %v2639
    %v2667 = vadd.f32 %v2553, %v2642
    %v2668 = vadd.f32 %v2554, %v2645
    %v2669 = vadd.f32 %v2555, %v2648
    %v2670 = vadd.f32 %v2556, %v2651
    %v2671 = vadd.f32 %v2557, %v2654
    %v2672 = vld [vmem:[%s2329 + $0x3] sm:$0xff]
    %v2673 = vld [vmem:[%s2329 + $0x13] sm:$0xff]
    %v2674 = vld [vmem:[%s2329 + $0x23] sm:$0xff]
    %v2675 = vld [vmem:[%s2329 + $0x33] sm:$0xff]
    %v2676 = vld [vmem:[%s2329 + $0x43] sm:$0xff]
    %v2677 = vld [vmem:[%s2329 + $0x53] sm:$0xff]
    %v2678 = vld [vmem:[%s2329 + $0x63] sm:$0xff]
    %v2679 = vld [vmem:[%s2329 + $0x73] sm:$0xff]
    %v2680 = vld [vmem:[%s2329 + $0xc3] sm:$0xff]
    %v2681 = vld [vmem:[%s2329 + $0xd3] sm:$0xff]
    %v2682 = vld [vmem:[%s2329 + $0xe3] sm:$0xff]
    %v2683 = vld [vmem:[%s2329 + $0xf3] sm:$0xff]
    %v2684 = vld [vmem:[%s2329 + $0x103] sm:$0xff]
    %v2685 = vld [vmem:[%s2329 + $0x113] sm:$0xff]
    %v2686 = vld [vmem:[%s2329 + $0x123] sm:$0xff]
    %v2687 = vld [vmem:[%s2329 + $0x133] sm:$0xff]
    %s2688 = scalar_lea.vmem %s3, 1664
    %v2689 = vld [vmem:[%s2688] sm:$0xff]
    %v2690 = vld [vmem:[%s2688 + $0x8] sm:$0xff]
    %v2691 = vld [vmem:[%s2688 + $0x10] sm:$0xff]
    %v2692 = vld [vmem:[%s2688 + $0x18] sm:$0xff]
    %v2693 = vld [vmem:[%s2688 + $0x20] sm:$0xff]
    %v2694 = vld [vmem:[%s2688 + $0x28] sm:$0xff]
    %v2695 = vld [vmem:[%s2688 + $0x30] sm:$0xff]
    %v2696 = vld [vmem:[%s2688 + $0x38] sm:$0xff]
    %v2697 = vld [vmem:[%s2688 + $0x40] sm:$0xff]
    %v2698 = vld [vmem:[%s2688 + $0x48] sm:$0xff]
    %v2699 = vld [vmem:[%s2688 + $0x50] sm:$0xff]
    %v2700 = vld [vmem:[%s2688 + $0x58] sm:$0xff]
    %v2701 = vld [vmem:[%s2688 + $0x60] sm:$0xff]
    %v2702 = vld [vmem:[%s2688 + $0x68] sm:$0xff]
    %v2703 = vld [vmem:[%s2688 + $0x70] sm:$0xff]
    %v2704 = vld [vmem:[%s2688 + $0x78] sm:$0xff]
    %2705 = vmatpush.msra.mxu0 %v2704
    %2706 = vmatpush.msra.mxu0 %v2703
    %2707 = vmatpush.msra.mxu0 %v2702
    %2708 = vmatpush.msra.mxu0 %v2701
    %2709 = vmatpush.msra.mxu0 %v2700
    %2710 = vmatpush.msra.mxu0 %v2699
    %2711 = vmatpush.msra.mxu0 %v2698
    %2712 = vmatpush.msra.mxu0 %v2697
    %2713 = vmatpush.msra.mxu0 %v2696
    %2714 = vmatpush.msra.mxu0 %v2695
    %2715 = vmatpush.msra.mxu0 %v2694
    %2716 = vmatpush.msra.mxu0 %v2693
    %2717 = vmatpush.msra.mxu0 %v2692
    %2718 = vmatpush.msra.mxu0 %v2691
    %2719 = vmatpush.msra.mxu0 %v2690
    %2720 = vmatpush.msra.mxu0 %v2689
    %2721 = vmatmul.f32.gmra.mxu0 %v2672
    %v2722 = vpop.f32.mrf.mxu0
    %v2723 = vadd.f32 0.0, %v2722
    %2724 = vmatmul.f32.gmra.mxu0 %v2673
    %v2725 = vpop.f32.mrf.mxu0
    %v2726 = vadd.f32 0.0, %v2725
    %2727 = vmatmul.f32.gmra.mxu0 %v2674
    %v2728 = vpop.f32.mrf.mxu0
    %v2729 = vadd.f32 0.0, %v2728
    %2730 = vmatmul.f32.gmra.mxu0 %v2675
    %v2731 = vpop.f32.mrf.mxu0
    %v2732 = vadd.f32 0.0, %v2731
    %2733 = vmatmul.f32.gmra.mxu0 %v2676
    %v2734 = vpop.f32.mrf.mxu0
    %v2735 = vadd.f32 0.0, %v2734
    %2736 = vmatmul.f32.gmra.mxu0 %v2677
    %v2737 = vpop.f32.mrf.mxu0
    %v2738 = vadd.f32 0.0, %v2737
    %2739 = vmatmul.f32.gmra.mxu0 %v2678
    %v2740 = vpop.f32.mrf.mxu0
    %v2741 = vadd.f32 0.0, %v2740
    %2742 = vmatmul.f32.gmra.mxu0 %v2679
    %v2743 = vpop.f32.mrf.mxu0
    %v2744 = vadd.f32 0.0, %v2743
    %2745 = vmatmul.f32.gmra.mxu0 %v2680
    %v2746 = vpop.f32.mrf.mxu0
    %v2747 = vadd.f32 0.0, %v2746
    %2748 = vmatmul.f32.gmra.mxu0 %v2681
    %v2749 = vpop.f32.mrf.mxu0
    %v2750 = vadd.f32 0.0, %v2749
    %2751 = vmatmul.f32.gmra.mxu0 %v2682
    %v2752 = vpop.f32.mrf.mxu0
    %v2753 = vadd.f32 0.0, %v2752
    %2754 = vmatmul.f32.gmra.mxu0 %v2683
    %v2755 = vpop.f32.mrf.mxu0
    %v2756 = vadd.f32 0.0, %v2755
    %2757 = vmatmul.f32.gmra.mxu0 %v2684
    %v2758 = vpop.f32.mrf.mxu0
    %v2759 = vadd.f32 0.0, %v2758
    %2760 = vmatmul.f32.gmra.mxu0 %v2685
    %v2761 = vpop.f32.mrf.mxu0
    %v2762 = vadd.f32 0.0, %v2761
    %2763 = vmatmul.f32.gmra.mxu0 %v2686
    %v2764 = vpop.f32.mrf.mxu0
    %v2765 = vadd.f32 0.0, %v2764
    %2766 = vmatmul.f32.gmra.mxu0 %v2687
    %v2767 = vpop.f32.mrf.mxu0
    %v2768 = vadd.f32 0.0, %v2767
    %2769 = vdwg.mxu0
    %v2770 = vadd.f32 %v2656, %v2723
    %v2771 = vadd.f32 %v2657, %v2726
    %v2772 = vadd.f32 %v2658, %v2729
    %v2773 = vadd.f32 %v2659, %v2732
    %v2774 = vadd.f32 %v2660, %v2735
    %v2775 = vadd.f32 %v2661, %v2738
    %v2776 = vadd.f32 %v2662, %v2741
    %v2777 = vadd.f32 %v2663, %v2744
    %v2778 = vadd.f32 %v2664, %v2747
    %v2779 = vadd.f32 %v2665, %v2750
    %v2780 = vadd.f32 %v2666, %v2753
    %v2781 = vadd.f32 %v2667, %v2756
    %v2782 = vadd.f32 %v2668, %v2759
    %v2783 = vadd.f32 %v2669, %v2762
    %v2784 = vadd.f32 %v2670, %v2765
    %v2785 = vadd.f32 %v2671, %v2768
    %v2786 = vld [vmem:[%s2329 + $0x4] sm:$0xff]
    %v2787 = vld [vmem:[%s2329 + $0x14] sm:$0xff]
    %v2788 = vld [vmem:[%s2329 + $0x24] sm:$0xff]
    %v2789 = vld [vmem:[%s2329 + $0x34] sm:$0xff]
    %v2790 = vld [vmem:[%s2329 + $0x44] sm:$0xff]
    %v2791 = vld [vmem:[%s2329 + $0x54] sm:$0xff]
    %v2792 = vld [vmem:[%s2329 + $0x64] sm:$0xff]
    %v2793 = vld [vmem:[%s2329 + $0x74] sm:$0xff]
    %v2794 = vld [vmem:[%s2329 + $0xc4] sm:$0xff]
    %v2795 = vld [vmem:[%s2329 + $0xd4] sm:$0xff]
    %v2796 = vld [vmem:[%s2329 + $0xe4] sm:$0xff]
    %v2797 = vld [vmem:[%s2329 + $0xf4] sm:$0xff]
    %v2798 = vld [vmem:[%s2329 + $0x104] sm:$0xff]
    %v2799 = vld [vmem:[%s2329 + $0x114] sm:$0xff]
    %v2800 = vld [vmem:[%s2329 + $0x124] sm:$0xff]
    %v2801 = vld [vmem:[%s2329 + $0x134] sm:$0xff]
    %s2802 = scalar_lea.vmem %s3, 1792
    %v2803 = vld [vmem:[%s2802] sm:$0xff]
    %v2804 = vld [vmem:[%s2802 + $0x8] sm:$0xff]
    %v2805 = vld [vmem:[%s2802 + $0x10] sm:$0xff]
    %v2806 = vld [vmem:[%s2802 + $0x18] sm:$0xff]
    %v2807 = vld [vmem:[%s2802 + $0x20] sm:$0xff]
    %v2808 = vld [vmem:[%s2802 + $0x28] sm:$0xff]
    %v2809 = vld [vmem:[%s2802 + $0x30] sm:$0xff]
    %v2810 = vld [vmem:[%s2802 + $0x38] sm:$0xff]
    %v2811 = vld [vmem:[%s2802 + $0x40] sm:$0xff]
    %v2812 = vld [vmem:[%s2802 + $0x48] sm:$0xff]
    %v2813 = vld [vmem:[%s2802 + $0x50] sm:$0xff]
    %v2814 = vld [vmem:[%s2802 + $0x58] sm:$0xff]
    %v2815 = vld [vmem:[%s2802 + $0x60] sm:$0xff]
    %v2816 = vld [vmem:[%s2802 + $0x68] sm:$0xff]
    %v2817 = vld [vmem:[%s2802 + $0x70] sm:$0xff]
    %v2818 = vld [vmem:[%s2802 + $0x78] sm:$0xff]
    %2819 = vmatpush.msra.mxu0 %v2818
    %2820 = vmatpush.msra.mxu0 %v2817
    %2821 = vmatpush.msra.mxu0 %v2816
    %2822 = vmatpush.msra.mxu0 %v2815
    %2823 = vmatpush.msra.mxu0 %v2814
    %2824 = vmatpush.msra.mxu0 %v2813
    %2825 = vmatpush.msra.mxu0 %v2812
    %2826 = vmatpush.msra.mxu0 %v2811
    %2827 = vmatpush.msra.mxu0 %v2810
    %2828 = vmatpush.msra.mxu0 %v2809
    %2829 = vmatpush.msra.mxu0 %v2808
    %2830 = vmatpush.msra.mxu0 %v2807
    %2831 = vmatpush.msra.mxu0 %v2806
    %2832 = vmatpush.msra.mxu0 %v2805
    %2833 = vmatpush.msra.mxu0 %v2804
    %2834 = vmatpush.msra.mxu0 %v2803
    %2835 = vmatmul.f32.gmra.mxu0 %v2786
    %v2836 = vpop.f32.mrf.mxu0
    %v2837 = vadd.f32 0.0, %v2836
    %2838 = vmatmul.f32.gmra.mxu0 %v2787
    %v2839 = vpop.f32.mrf.mxu0
    %v2840 = vadd.f32 0.0, %v2839
    %2841 = vmatmul.f32.gmra.mxu0 %v2788
    %v2842 = vpop.f32.mrf.mxu0
    %v2843 = vadd.f32 0.0, %v2842
    %2844 = vmatmul.f32.gmra.mxu0 %v2789
    %v2845 = vpop.f32.mrf.mxu0
    %v2846 = vadd.f32 0.0, %v2845
    %2847 = vmatmul.f32.gmra.mxu0 %v2790
    %v2848 = vpop.f32.mrf.mxu0
    %v2849 = vadd.f32 0.0, %v2848
    %2850 = vmatmul.f32.gmra.mxu0 %v2791
    %v2851 = vpop.f32.mrf.mxu0
    %v2852 = vadd.f32 0.0, %v2851
    %2853 = vmatmul.f32.gmra.mxu0 %v2792
    %v2854 = vpop.f32.mrf.mxu0
    %v2855 = vadd.f32 0.0, %v2854
    %2856 = vmatmul.f32.gmra.mxu0 %v2793
    %v2857 = vpop.f32.mrf.mxu0
    %v2858 = vadd.f32 0.0, %v2857
    %2859 = vmatmul.f32.gmra.mxu0 %v2794
    %v2860 = vpop.f32.mrf.mxu0
    %v2861 = vadd.f32 0.0, %v2860
    %2862 = vmatmul.f32.gmra.mxu0 %v2795
    %v2863 = vpop.f32.mrf.mxu0
    %v2864 = vadd.f32 0.0, %v2863
    %2865 = vmatmul.f32.gmra.mxu0 %v2796
    %v2866 = vpop.f32.mrf.mxu0
    %v2867 = vadd.f32 0.0, %v2866
    %2868 = vmatmul.f32.gmra.mxu0 %v2797
    %v2869 = vpop.f32.mrf.mxu0
    %v2870 = vadd.f32 0.0, %v2869
    %2871 = vmatmul.f32.gmra.mxu0 %v2798
    %v2872 = vpop.f32.mrf.mxu0
    %v2873 = vadd.f32 0.0, %v2872
    %2874 = vmatmul.f32.gmra.mxu0 %v2799
    %v2875 = vpop.f32.mrf.mxu0
    %v2876 = vadd.f32 0.0, %v2875
    %2877 = vmatmul.f32.gmra.mxu0 %v2800
    %v2878 = vpop.f32.mrf.mxu0
    %v2879 = vadd.f32 0.0, %v2878
    %2880 = vmatmul.f32.gmra.mxu0 %v2801
    %v2881 = vpop.f32.mrf.mxu0
    %v2882 = vadd.f32 0.0, %v2881
    %2883 = vdwg.mxu0
    %v2884 = vadd.f32 %v2770, %v2837
    %v2885 = vadd.f32 %v2771, %v2840
    %v2886 = vadd.f32 %v2772, %v2843
    %v2887 = vadd.f32 %v2773, %v2846
    %v2888 = vadd.f32 %v2774, %v2849
    %v2889 = vadd.f32 %v2775, %v2852
    %v2890 = vadd.f32 %v2776, %v2855
    %v2891 = vadd.f32 %v2777, %v2858
    %v2892 = vadd.f32 %v2778, %v2861
    %v2893 = vadd.f32 %v2779, %v2864
    %v2894 = vadd.f32 %v2780, %v2867
    %v2895 = vadd.f32 %v2781, %v2870
    %v2896 = vadd.f32 %v2782, %v2873
    %v2897 = vadd.f32 %v2783, %v2876
    %v2898 = vadd.f32 %v2784, %v2879
    %v2899 = vadd.f32 %v2785, %v2882
    %s2900 = scalar_lea.vmem [#allocation3], 48
    %v2901 = vld [vmem:[%s2900] sm:$0xff]
    %v2902 = vld [vmem:[%s2900 + $0x10] sm:$0xff]
    %v2903 = vld [vmem:[%s2900 + $0x20] sm:$0xff]
    %v2904 = vld [vmem:[%s2900 + $0x30] sm:$0xff]
    %v2905 = vld [vmem:[%s2900 + $0x40] sm:$0xff]
    %v2906 = vld [vmem:[%s2900 + $0x50] sm:$0xff]
    %v2907 = vld [vmem:[%s2900 + $0x60] sm:$0xff]
    %v2908 = vld [vmem:[%s2900 + $0x70] sm:$0xff]
    %v2909 = vld [vmem:[%s2900 + $0xc0] sm:$0xff]
    %v2910 = vld [vmem:[%s2900 + $0xd0] sm:$0xff]
    %v2911 = vld [vmem:[%s2900 + $0xe0] sm:$0xff]
    %v2912 = vld [vmem:[%s2900 + $0xf0] sm:$0xff]
    %v2913 = vld [vmem:[%s2900 + $0x100] sm:$0xff]
    %v2914 = vld [vmem:[%s2900 + $0x110] sm:$0xff]
    %v2915 = vld [vmem:[%s2900 + $0x120] sm:$0xff]
    %v2916 = vld [vmem:[%s2900 + $0x130] sm:$0xff]
    %s2917 = scalar_lea.vmem %s3, 1920
    %v2918 = vld [vmem:[%s2917] sm:$0xff]
    %v2919 = vld [vmem:[%s2917 + $0x8] sm:$0xff]
    %v2920 = vld [vmem:[%s2917 + $0x10] sm:$0xff]
    %v2921 = vld [vmem:[%s2917 + $0x18] sm:$0xff]
    %v2922 = vld [vmem:[%s2917 + $0x20] sm:$0xff]
    %v2923 = vld [vmem:[%s2917 + $0x28] sm:$0xff]
    %v2924 = vld [vmem:[%s2917 + $0x30] sm:$0xff]
    %v2925 = vld [vmem:[%s2917 + $0x38] sm:$0xff]
    %v2926 = vld [vmem:[%s2917 + $0x40] sm:$0xff]
    %v2927 = vld [vmem:[%s2917 + $0x48] sm:$0xff]
    %v2928 = vld [vmem:[%s2917 + $0x50] sm:$0xff]
    %v2929 = vld [vmem:[%s2917 + $0x58] sm:$0xff]
    %v2930 = vld [vmem:[%s2917 + $0x60] sm:$0xff]
    %v2931 = vld [vmem:[%s2917 + $0x68] sm:$0xff]
    %v2932 = vld [vmem:[%s2917 + $0x70] sm:$0xff]
    %v2933 = vld [vmem:[%s2917 + $0x78] sm:$0xff]
    %2934 = vmatpush.msra.mxu0 %v2933
    %2935 = vmatpush.msra.mxu0 %v2932
    %2936 = vmatpush.msra.mxu0 %v2931
    %2937 = vmatpush.msra.mxu0 %v2930
    %2938 = vmatpush.msra.mxu0 %v2929
    %2939 = vmatpush.msra.mxu0 %v2928
    %2940 = vmatpush.msra.mxu0 %v2927
    %2941 = vmatpush.msra.mxu0 %v2926
    %2942 = vmatpush.msra.mxu0 %v2925
    %2943 = vmatpush.msra.mxu0 %v2924
    %2944 = vmatpush.msra.mxu0 %v2923
    %2945 = vmatpush.msra.mxu0 %v2922
    %2946 = vmatpush.msra.mxu0 %v2921
    %2947 = vmatpush.msra.mxu0 %v2920
    %2948 = vmatpush.msra.mxu0 %v2919
    %2949 = vmatpush.msra.mxu0 %v2918
    %2950 = vmatmul.f32.gmra.mxu0 %v2901
    %v2951 = vpop.f32.mrf.mxu0
    %v2952 = vadd.f32 0.0, %v2951
    %2953 = vmatmul.f32.gmra.mxu0 %v2902
    %v2954 = vpop.f32.mrf.mxu0
    %v2955 = vadd.f32 0.0, %v2954
    %2956 = vmatmul.f32.gmra.mxu0 %v2903
    %v2957 = vpop.f32.mrf.mxu0
    %v2958 = vadd.f32 0.0, %v2957
    %2959 = vmatmul.f32.gmra.mxu0 %v2904
    %v2960 = vpop.f32.mrf.mxu0
    %v2961 = vadd.f32 0.0, %v2960
    %2962 = vmatmul.f32.gmra.mxu0 %v2905
    %v2963 = vpop.f32.mrf.mxu0
    %v2964 = vadd.f32 0.0, %v2963
    %2965 = vmatmul.f32.gmra.mxu0 %v2906
    %v2966 = vpop.f32.mrf.mxu0
    %v2967 = vadd.f32 0.0, %v2966
    %2968 = vmatmul.f32.gmra.mxu0 %v2907
    %v2969 = vpop.f32.mrf.mxu0
    %v2970 = vadd.f32 0.0, %v2969
    %2971 = vmatmul.f32.gmra.mxu0 %v2908
    %v2972 = vpop.f32.mrf.mxu0
    %v2973 = vadd.f32 0.0, %v2972
    %2974 = vmatmul.f32.gmra.mxu0 %v2909
    %v2975 = vpop.f32.mrf.mxu0
    %v2976 = vadd.f32 0.0, %v2975
    %2977 = vmatmul.f32.gmra.mxu0 %v2910
    %v2978 = vpop.f32.mrf.mxu0
    %v2979 = vadd.f32 0.0, %v2978
    %2980 = vmatmul.f32.gmra.mxu0 %v2911
    %v2981 = vpop.f32.mrf.mxu0
    %v2982 = vadd.f32 0.0, %v2981
    %2983 = vmatmul.f32.gmra.mxu0 %v2912
    %v2984 = vpop.f32.mrf.mxu0
    %v2985 = vadd.f32 0.0, %v2984
    %2986 = vmatmul.f32.gmra.mxu0 %v2913
    %v2987 = vpop.f32.mrf.mxu0
    %v2988 = vadd.f32 0.0, %v2987
    %2989 = vmatmul.f32.gmra.mxu0 %v2914
    %v2990 = vpop.f32.mrf.mxu0
    %v2991 = vadd.f32 0.0, %v2990
    %2992 = vmatmul.f32.gmra.mxu0 %v2915
    %v2993 = vpop.f32.mrf.mxu0
    %v2994 = vadd.f32 0.0, %v2993
    %2995 = vmatmul.f32.gmra.mxu0 %v2916
    %v2996 = vpop.f32.mrf.mxu0
    %v2997 = vadd.f32 0.0, %v2996
    %2998 = vdwg.mxu0
    %v2999 = vadd.f32 %v2884, %v2952
    %v3000 = vadd.f32 %v2885, %v2955
    %v3001 = vadd.f32 %v2886, %v2958
    %v3002 = vadd.f32 %v2887, %v2961
    %v3003 = vadd.f32 %v2888, %v2964
    %v3004 = vadd.f32 %v2889, %v2967
    %v3005 = vadd.f32 %v2890, %v2970
    %v3006 = vadd.f32 %v2891, %v2973
    %v3007 = vadd.f32 %v2892, %v2976
    %v3008 = vadd.f32 %v2893, %v2979
    %v3009 = vadd.f32 %v2894, %v2982
    %v3010 = vadd.f32 %v2895, %v2985
    %v3011 = vadd.f32 %v2896, %v2988
    %v3012 = vadd.f32 %v2897, %v2991
    %v3013 = vadd.f32 %v2898, %v2994
    %v3014 = vadd.f32 %v2899, %v2997
    %v3015 = vld [vmem:[%s2900 + $0x1] sm:$0xff]
    %v3016 = vld [vmem:[%s2900 + $0x11] sm:$0xff]
    %v3017 = vld [vmem:[%s2900 + $0x21] sm:$0xff]
    %v3018 = vld [vmem:[%s2900 + $0x31] sm:$0xff]
    %v3019 = vld [vmem:[%s2900 + $0x41] sm:$0xff]
    %v3020 = vld [vmem:[%s2900 + $0x51] sm:$0xff]
    %v3021 = vld [vmem:[%s2900 + $0x61] sm:$0xff]
    %v3022 = vld [vmem:[%s2900 + $0x71] sm:$0xff]
    %v3023 = vld [vmem:[%s2900 + $0xc1] sm:$0xff]
    %v3024 = vld [vmem:[%s2900 + $0xd1] sm:$0xff]
    %v3025 = vld [vmem:[%s2900 + $0xe1] sm:$0xff]
    %v3026 = vld [vmem:[%s2900 + $0xf1] sm:$0xff]
    %v3027 = vld [vmem:[%s2900 + $0x101] sm:$0xff]
    %v3028 = vld [vmem:[%s2900 + $0x111] sm:$0xff]
    %v3029 = vld [vmem:[%s2900 + $0x121] sm:$0xff]
    %v3030 = vld [vmem:[%s2900 + $0x131] sm:$0xff]
    %s3031 = scalar_lea.vmem %s3, 2048
    %v3032 = vld [vmem:[%s3031] sm:$0xff]
    %v3033 = vld [vmem:[%s3031 + $0x8] sm:$0xff]
    %v3034 = vld [vmem:[%s3031 + $0x10] sm:$0xff]
    %v3035 = vld [vmem:[%s3031 + $0x18] sm:$0xff]
    %v3036 = vld [vmem:[%s3031 + $0x20] sm:$0xff]
    %v3037 = vld [vmem:[%s3031 + $0x28] sm:$0xff]
    %v3038 = vld [vmem:[%s3031 + $0x30] sm:$0xff]
    %v3039 = vld [vmem:[%s3031 + $0x38] sm:$0xff]
    %v3040 = vld [vmem:[%s3031 + $0x40] sm:$0xff]
    %v3041 = vld [vmem:[%s3031 + $0x48] sm:$0xff]
    %v3042 = vld [vmem:[%s3031 + $0x50] sm:$0xff]
    %v3043 = vld [vmem:[%s3031 + $0x58] sm:$0xff]
    %v3044 = vld [vmem:[%s3031 + $0x60] sm:$0xff]
    %v3045 = vld [vmem:[%s3031 + $0x68] sm:$0xff]
    %v3046 = vld [vmem:[%s3031 + $0x70] sm:$0xff]
    %v3047 = vld [vmem:[%s3031 + $0x78] sm:$0xff]
    %3048 = vmatpush.msra.mxu0 %v3047
    %3049 = vmatpush.msra.mxu0 %v3046
    %3050 = vmatpush.msra.mxu0 %v3045
    %3051 = vmatpush.msra.mxu0 %v3044
    %3052 = vmatpush.msra.mxu0 %v3043
    %3053 = vmatpush.msra.mxu0 %v3042
    %3054 = vmatpush.msra.mxu0 %v3041
    %3055 = vmatpush.msra.mxu0 %v3040
    %3056 = vmatpush.msra.mxu0 %v3039
    %3057 = vmatpush.msra.mxu0 %v3038
    %3058 = vmatpush.msra.mxu0 %v3037
    %3059 = vmatpush.msra.mxu0 %v3036
    %3060 = vmatpush.msra.mxu0 %v3035
    %3061 = vmatpush.msra.mxu0 %v3034
    %3062 = vmatpush.msra.mxu0 %v3033
    %3063 = vmatpush.msra.mxu0 %v3032
    %3064 = vmatmul.f32.gmra.mxu0 %v3015
    %v3065 = vpop.f32.mrf.mxu0
    %v3066 = vadd.f32 0.0, %v3065
    %3067 = vmatmul.f32.gmra.mxu0 %v3016
    %v3068 = vpop.f32.mrf.mxu0
    %v3069 = vadd.f32 0.0, %v3068
    %3070 = vmatmul.f32.gmra.mxu0 %v3017
    %v3071 = vpop.f32.mrf.mxu0
    %v3072 = vadd.f32 0.0, %v3071
    %3073 = vmatmul.f32.gmra.mxu0 %v3018
    %v3074 = vpop.f32.mrf.mxu0
    %v3075 = vadd.f32 0.0, %v3074
    %3076 = vmatmul.f32.gmra.mxu0 %v3019
    %v3077 = vpop.f32.mrf.mxu0
    %v3078 = vadd.f32 0.0, %v3077
    %3079 = vmatmul.f32.gmra.mxu0 %v3020
    %v3080 = vpop.f32.mrf.mxu0
    %v3081 = vadd.f32 0.0, %v3080
    %3082 = vmatmul.f32.gmra.mxu0 %v3021
    %v3083 = vpop.f32.mrf.mxu0
    %v3084 = vadd.f32 0.0, %v3083
    %3085 = vmatmul.f32.gmra.mxu0 %v3022
    %v3086 = vpop.f32.mrf.mxu0
    %v3087 = vadd.f32 0.0, %v3086
    %3088 = vmatmul.f32.gmra.mxu0 %v3023
    %v3089 = vpop.f32.mrf.mxu0
    %v3090 = vadd.f32 0.0, %v3089
    %3091 = vmatmul.f32.gmra.mxu0 %v3024
    %v3092 = vpop.f32.mrf.mxu0
    %v3093 = vadd.f32 0.0, %v3092
    %3094 = vmatmul.f32.gmra.mxu0 %v3025
    %v3095 = vpop.f32.mrf.mxu0
    %v3096 = vadd.f32 0.0, %v3095
    %3097 = vmatmul.f32.gmra.mxu0 %v3026
    %v3098 = vpop.f32.mrf.mxu0
    %v3099 = vadd.f32 0.0, %v3098
    %3100 = vmatmul.f32.gmra.mxu0 %v3027
    %v3101 = vpop.f32.mrf.mxu0
    %v3102 = vadd.f32 0.0, %v3101
    %3103 = vmatmul.f32.gmra.mxu0 %v3028
    %v3104 = vpop.f32.mrf.mxu0
    %v3105 = vadd.f32 0.0, %v3104
    %3106 = vmatmul.f32.gmra.mxu0 %v3029
    %v3107 = vpop.f32.mrf.mxu0
    %v3108 = vadd.f32 0.0, %v3107
    %3109 = vmatmul.f32.gmra.mxu0 %v3030
    %v3110 = vpop.f32.mrf.mxu0
    %v3111 = vadd.f32 0.0, %v3110
    %3112 = vdwg.mxu0
    %v3113 = vadd.f32 %v2999, %v3066
    %v3114 = vadd.f32 %v3000, %v3069
    %v3115 = vadd.f32 %v3001, %v3072
    %v3116 = vadd.f32 %v3002, %v3075
    %v3117 = vadd.f32 %v3003, %v3078
    %v3118 = vadd.f32 %v3004, %v3081
    %v3119 = vadd.f32 %v3005, %v3084
    %v3120 = vadd.f32 %v3006, %v3087
    %v3121 = vadd.f32 %v3007, %v3090
    %v3122 = vadd.f32 %v3008, %v3093
    %v3123 = vadd.f32 %v3009, %v3096
    %v3124 = vadd.f32 %v3010, %v3099
    %v3125 = vadd.f32 %v3011, %v3102
    %v3126 = vadd.f32 %v3012, %v3105
    %v3127 = vadd.f32 %v3013, %v3108
    %v3128 = vadd.f32 %v3014, %v3111
    %v3129 = vld [vmem:[%s2900 + $0x2] sm:$0xff]
    %v3130 = vld [vmem:[%s2900 + $0x12] sm:$0xff]
    %v3131 = vld [vmem:[%s2900 + $0x22] sm:$0xff]
    %v3132 = vld [vmem:[%s2900 + $0x32] sm:$0xff]
    %v3133 = vld [vmem:[%s2900 + $0x42] sm:$0xff]
    %v3134 = vld [vmem:[%s2900 + $0x52] sm:$0xff]
    %v3135 = vld [vmem:[%s2900 + $0x62] sm:$0xff]
    %v3136 = vld [vmem:[%s2900 + $0x72] sm:$0xff]
    %v3137 = vld [vmem:[%s2900 + $0xc2] sm:$0xff]
    %v3138 = vld [vmem:[%s2900 + $0xd2] sm:$0xff]
    %v3139 = vld [vmem:[%s2900 + $0xe2] sm:$0xff]
    %v3140 = vld [vmem:[%s2900 + $0xf2] sm:$0xff]
    %v3141 = vld [vmem:[%s2900 + $0x102] sm:$0xff]
    %v3142 = vld [vmem:[%s2900 + $0x112] sm:$0xff]
    %v3143 = vld [vmem:[%s2900 + $0x122] sm:$0xff]
    %v3144 = vld [vmem:[%s2900 + $0x132] sm:$0xff]
    %s3145 = scalar_lea.vmem %s3, 2176
    %v3146 = vld [vmem:[%s3145] sm:$0xff]
    %v3147 = vld [vmem:[%s3145 + $0x8] sm:$0xff]
    %v3148 = vld [vmem:[%s3145 + $0x10] sm:$0xff]
    %v3149 = vld [vmem:[%s3145 + $0x18] sm:$0xff]
    %v3150 = vld [vmem:[%s3145 + $0x20] sm:$0xff]
    %v3151 = vld [vmem:[%s3145 + $0x28] sm:$0xff]
    %v3152 = vld [vmem:[%s3145 + $0x30] sm:$0xff]
    %v3153 = vld [vmem:[%s3145 + $0x38] sm:$0xff]
    %v3154 = vld [vmem:[%s3145 + $0x40] sm:$0xff]
    %v3155 = vld [vmem:[%s3145 + $0x48] sm:$0xff]
    %v3156 = vld [vmem:[%s3145 + $0x50] sm:$0xff]
    %v3157 = vld [vmem:[%s3145 + $0x58] sm:$0xff]
    %v3158 = vld [vmem:[%s3145 + $0x60] sm:$0xff]
    %v3159 = vld [vmem:[%s3145 + $0x68] sm:$0xff]
    %v3160 = vld [vmem:[%s3145 + $0x70] sm:$0xff]
    %v3161 = vld [vmem:[%s3145 + $0x78] sm:$0xff]
    %3162 = vmatpush.msra.mxu0 %v3161
    %3163 = vmatpush.msra.mxu0 %v3160
    %3164 = vmatpush.msra.mxu0 %v3159
    %3165 = vmatpush.msra.mxu0 %v3158
    %3166 = vmatpush.msra.mxu0 %v3157
    %3167 = vmatpush.msra.mxu0 %v3156
    %3168 = vmatpush.msra.mxu0 %v3155
    %3169 = vmatpush.msra.mxu0 %v3154
    %3170 = vmatpush.msra.mxu0 %v3153
    %3171 = vmatpush.msra.mxu0 %v3152
    %3172 = vmatpush.msra.mxu0 %v3151
    %3173 = vmatpush.msra.mxu0 %v3150
    %3174 = vmatpush.msra.mxu0 %v3149
    %3175 = vmatpush.msra.mxu0 %v3148
    %3176 = vmatpush.msra.mxu0 %v3147
    %3177 = vmatpush.msra.mxu0 %v3146
    %3178 = vmatmul.f32.gmra.mxu0 %v3129
    %v3179 = vpop.f32.mrf.mxu0
    %v3180 = vadd.f32 0.0, %v3179
    %3181 = vmatmul.f32.gmra.mxu0 %v3130
    %v3182 = vpop.f32.mrf.mxu0
    %v3183 = vadd.f32 0.0, %v3182
    %3184 = vmatmul.f32.gmra.mxu0 %v3131
    %v3185 = vpop.f32.mrf.mxu0
    %v3186 = vadd.f32 0.0, %v3185
    %3187 = vmatmul.f32.gmra.mxu0 %v3132
    %v3188 = vpop.f32.mrf.mxu0
    %v3189 = vadd.f32 0.0, %v3188
    %3190 = vmatmul.f32.gmra.mxu0 %v3133
    %v3191 = vpop.f32.mrf.mxu0
    %v3192 = vadd.f32 0.0, %v3191
    %3193 = vmatmul.f32.gmra.mxu0 %v3134
    %v3194 = vpop.f32.mrf.mxu0
    %v3195 = vadd.f32 0.0, %v3194
    %3196 = vmatmul.f32.gmra.mxu0 %v3135
    %v3197 = vpop.f32.mrf.mxu0
    %v3198 = vadd.f32 0.0, %v3197
    %3199 = vmatmul.f32.gmra.mxu0 %v3136
    %v3200 = vpop.f32.mrf.mxu0
    %v3201 = vadd.f32 0.0, %v3200
    %3202 = vmatmul.f32.gmra.mxu0 %v3137
    %v3203 = vpop.f32.mrf.mxu0
    %v3204 = vadd.f32 0.0, %v3203
    %3205 = vmatmul.f32.gmra.mxu0 %v3138
    %v3206 = vpop.f32.mrf.mxu0
    %v3207 = vadd.f32 0.0, %v3206
    %3208 = vmatmul.f32.gmra.mxu0 %v3139
    %v3209 = vpop.f32.mrf.mxu0
    %v3210 = vadd.f32 0.0, %v3209
    %3211 = vmatmul.f32.gmra.mxu0 %v3140
    %v3212 = vpop.f32.mrf.mxu0
    %v3213 = vadd.f32 0.0, %v3212
    %3214 = vmatmul.f32.gmra.mxu0 %v3141
    %v3215 = vpop.f32.mrf.mxu0
    %v3216 = vadd.f32 0.0, %v3215
    %3217 = vmatmul.f32.gmra.mxu0 %v3142
    %v3218 = vpop.f32.mrf.mxu0
    %v3219 = vadd.f32 0.0, %v3218
    %3220 = vmatmul.f32.gmra.mxu0 %v3143
    %v3221 = vpop.f32.mrf.mxu0
    %v3222 = vadd.f32 0.0, %v3221
    %3223 = vmatmul.f32.gmra.mxu0 %v3144
    %v3224 = vpop.f32.mrf.mxu0
    %v3225 = vadd.f32 0.0, %v3224
    %3226 = vdwg.mxu0
    %v3227 = vadd.f32 %v3113, %v3180
    %v3228 = vadd.f32 %v3114, %v3183
    %v3229 = vadd.f32 %v3115, %v3186
    %v3230 = vadd.f32 %v3116, %v3189
    %v3231 = vadd.f32 %v3117, %v3192
    %v3232 = vadd.f32 %v3118, %v3195
    %v3233 = vadd.f32 %v3119, %v3198
    %v3234 = vadd.f32 %v3120, %v3201
    %v3235 = vadd.f32 %v3121, %v3204
    %v3236 = vadd.f32 %v3122, %v3207
    %v3237 = vadd.f32 %v3123, %v3210
    %v3238 = vadd.f32 %v3124, %v3213
    %v3239 = vadd.f32 %v3125, %v3216
    %v3240 = vadd.f32 %v3126, %v3219
    %v3241 = vadd.f32 %v3127, %v3222
    %v3242 = vadd.f32 %v3128, %v3225
    %v3243 = vld [vmem:[%s2900 + $0x3] sm:$0xff]
    %v3244 = vld [vmem:[%s2900 + $0x13] sm:$0xff]
    %v3245 = vld [vmem:[%s2900 + $0x23] sm:$0xff]
    %v3246 = vld [vmem:[%s2900 + $0x33] sm:$0xff]
    %v3247 = vld [vmem:[%s2900 + $0x43] sm:$0xff]
    %v3248 = vld [vmem:[%s2900 + $0x53] sm:$0xff]
    %v3249 = vld [vmem:[%s2900 + $0x63] sm:$0xff]
    %v3250 = vld [vmem:[%s2900 + $0x73] sm:$0xff]
    %v3251 = vld [vmem:[%s2900 + $0xc3] sm:$0xff]
    %v3252 = vld [vmem:[%s2900 + $0xd3] sm:$0xff]
    %v3253 = vld [vmem:[%s2900 + $0xe3] sm:$0xff]
    %v3254 = vld [vmem:[%s2900 + $0xf3] sm:$0xff]
    %v3255 = vld [vmem:[%s2900 + $0x103] sm:$0xff]
    %v3256 = vld [vmem:[%s2900 + $0x113] sm:$0xff]
    %v3257 = vld [vmem:[%s2900 + $0x123] sm:$0xff]
    %v3258 = vld [vmem:[%s2900 + $0x133] sm:$0xff]
    %s3259 = scalar_lea.vmem %s3, 2304
    %v3260 = vld [vmem:[%s3259] sm:$0xff]
    %v3261 = vld [vmem:[%s3259 + $0x8] sm:$0xff]
    %v3262 = vld [vmem:[%s3259 + $0x10] sm:$0xff]
    %v3263 = vld [vmem:[%s3259 + $0x18] sm:$0xff]
    %v3264 = vld [vmem:[%s3259 + $0x20] sm:$0xff]
    %v3265 = vld [vmem:[%s3259 + $0x28] sm:$0xff]
    %v3266 = vld [vmem:[%s3259 + $0x30] sm:$0xff]
    %v3267 = vld [vmem:[%s3259 + $0x38] sm:$0xff]
    %v3268 = vld [vmem:[%s3259 + $0x40] sm:$0xff]
    %v3269 = vld [vmem:[%s3259 + $0x48] sm:$0xff]
    %v3270 = vld [vmem:[%s3259 + $0x50] sm:$0xff]
    %v3271 = vld [vmem:[%s3259 + $0x58] sm:$0xff]
    %v3272 = vld [vmem:[%s3259 + $0x60] sm:$0xff]
    %v3273 = vld [vmem:[%s3259 + $0x68] sm:$0xff]
    %v3274 = vld [vmem:[%s3259 + $0x70] sm:$0xff]
    %v3275 = vld [vmem:[%s3259 + $0x78] sm:$0xff]
    %3276 = vmatpush.msra.mxu0 %v3275
    %3277 = vmatpush.msra.mxu0 %v3274
    %3278 = vmatpush.msra.mxu0 %v3273
    %3279 = vmatpush.msra.mxu0 %v3272
    %3280 = vmatpush.msra.mxu0 %v3271
    %3281 = vmatpush.msra.mxu0 %v3270
    %3282 = vmatpush.msra.mxu0 %v3269
    %3283 = vmatpush.msra.mxu0 %v3268
    %3284 = vmatpush.msra.mxu0 %v3267
    %3285 = vmatpush.msra.mxu0 %v3266
    %3286 = vmatpush.msra.mxu0 %v3265
    %3287 = vmatpush.msra.mxu0 %v3264
    %3288 = vmatpush.msra.mxu0 %v3263
    %3289 = vmatpush.msra.mxu0 %v3262
    %3290 = vmatpush.msra.mxu0 %v3261
    %3291 = vmatpush.msra.mxu0 %v3260
    %3292 = vmatmul.f32.gmra.mxu0 %v3243
    %v3293 = vpop.f32.mrf.mxu0
    %v3294 = vadd.f32 0.0, %v3293
    %3295 = vmatmul.f32.gmra.mxu0 %v3244
    %v3296 = vpop.f32.mrf.mxu0
    %v3297 = vadd.f32 0.0, %v3296
    %3298 = vmatmul.f32.gmra.mxu0 %v3245
    %v3299 = vpop.f32.mrf.mxu0
    %v3300 = vadd.f32 0.0, %v3299
    %3301 = vmatmul.f32.gmra.mxu0 %v3246
    %v3302 = vpop.f32.mrf.mxu0
    %v3303 = vadd.f32 0.0, %v3302
    %3304 = vmatmul.f32.gmra.mxu0 %v3247
    %v3305 = vpop.f32.mrf.mxu0
    %v3306 = vadd.f32 0.0, %v3305
    %3307 = vmatmul.f32.gmra.mxu0 %v3248
    %v3308 = vpop.f32.mrf.mxu0
    %v3309 = vadd.f32 0.0, %v3308
    %3310 = vmatmul.f32.gmra.mxu0 %v3249
    %v3311 = vpop.f32.mrf.mxu0
    %v3312 = vadd.f32 0.0, %v3311
    %3313 = vmatmul.f32.gmra.mxu0 %v3250
    %v3314 = vpop.f32.mrf.mxu0
    %v3315 = vadd.f32 0.0, %v3314
    %3316 = vmatmul.f32.gmra.mxu0 %v3251
    %v3317 = vpop.f32.mrf.mxu0
    %v3318 = vadd.f32 0.0, %v3317
    %3319 = vmatmul.f32.gmra.mxu0 %v3252
    %v3320 = vpop.f32.mrf.mxu0
    %v3321 = vadd.f32 0.0, %v3320
    %3322 = vmatmul.f32.gmra.mxu0 %v3253
    %v3323 = vpop.f32.mrf.mxu0
    %v3324 = vadd.f32 0.0, %v3323
    %3325 = vmatmul.f32.gmra.mxu0 %v3254
    %v3326 = vpop.f32.mrf.mxu0
    %v3327 = vadd.f32 0.0, %v3326
    %3328 = vmatmul.f32.gmra.mxu0 %v3255
    %v3329 = vpop.f32.mrf.mxu0
    %v3330 = vadd.f32 0.0, %v3329
    %3331 = vmatmul.f32.gmra.mxu0 %v3256
    %v3332 = vpop.f32.mrf.mxu0
    %v3333 = vadd.f32 0.0, %v3332
    %3334 = vmatmul.f32.gmra.mxu0 %v3257
    %v3335 = vpop.f32.mrf.mxu0
    %v3336 = vadd.f32 0.0, %v3335
    %3337 = vmatmul.f32.gmra.mxu0 %v3258
    %v3338 = vpop.f32.mrf.mxu0
    %v3339 = vadd.f32 0.0, %v3338
    %3340 = vdwg.mxu0
    %v3341 = vadd.f32 %v3227, %v3294
    %v3342 = vadd.f32 %v3228, %v3297
    %v3343 = vadd.f32 %v3229, %v3300
    %v3344 = vadd.f32 %v3230, %v3303
    %v3345 = vadd.f32 %v3231, %v3306
    %v3346 = vadd.f32 %v3232, %v3309
    %v3347 = vadd.f32 %v3233, %v3312
    %v3348 = vadd.f32 %v3234, %v3315
    %v3349 = vadd.f32 %v3235, %v3318
    %v3350 = vadd.f32 %v3236, %v3321
    %v3351 = vadd.f32 %v3237, %v3324
    %v3352 = vadd.f32 %v3238, %v3327
    %v3353 = vadd.f32 %v3239, %v3330
    %v3354 = vadd.f32 %v3240, %v3333
    %v3355 = vadd.f32 %v3241, %v3336
    %v3356 = vadd.f32 %v3242, %v3339
    %v3357 = vld [vmem:[%s2900 + $0x4] sm:$0xff]
    %v3358 = vld [vmem:[%s2900 + $0x14] sm:$0xff]
    %v3359 = vld [vmem:[%s2900 + $0x24] sm:$0xff]
    %v3360 = vld [vmem:[%s2900 + $0x34] sm:$0xff]
    %v3361 = vld [vmem:[%s2900 + $0x44] sm:$0xff]
    %v3362 = vld [vmem:[%s2900 + $0x54] sm:$0xff]
    %v3363 = vld [vmem:[%s2900 + $0x64] sm:$0xff]
    %v3364 = vld [vmem:[%s2900 + $0x74] sm:$0xff]
    %v3365 = vld [vmem:[%s2900 + $0xc4] sm:$0xff]
    %v3366 = vld [vmem:[%s2900 + $0xd4] sm:$0xff]
    %v3367 = vld [vmem:[%s2900 + $0xe4] sm:$0xff]
    %v3368 = vld [vmem:[%s2900 + $0xf4] sm:$0xff]
    %v3369 = vld [vmem:[%s2900 + $0x104] sm:$0xff]
    %v3370 = vld [vmem:[%s2900 + $0x114] sm:$0xff]
    %v3371 = vld [vmem:[%s2900 + $0x124] sm:$0xff]
    %v3372 = vld [vmem:[%s2900 + $0x134] sm:$0xff]
    %s3373 = scalar_lea.vmem %s3, 2432
    %v3374 = vld [vmem:[%s3373] sm:$0xff]
    %v3375 = vld [vmem:[%s3373 + $0x8] sm:$0xff]
    %v3376 = vld [vmem:[%s3373 + $0x10] sm:$0xff]
    %v3377 = vld [vmem:[%s3373 + $0x18] sm:$0xff]
    %v3378 = vld [vmem:[%s3373 + $0x20] sm:$0xff]
    %v3379 = vld [vmem:[%s3373 + $0x28] sm:$0xff]
    %v3380 = vld [vmem:[%s3373 + $0x30] sm:$0xff]
    %v3381 = vld [vmem:[%s3373 + $0x38] sm:$0xff]
    %v3382 = vld [vmem:[%s3373 + $0x40] sm:$0xff]
    %v3383 = vld [vmem:[%s3373 + $0x48] sm:$0xff]
    %v3384 = vld [vmem:[%s3373 + $0x50] sm:$0xff]
    %v3385 = vld [vmem:[%s3373 + $0x58] sm:$0xff]
    %v3386 = vld [vmem:[%s3373 + $0x60] sm:$0xff]
    %v3387 = vld [vmem:[%s3373 + $0x68] sm:$0xff]
    %v3388 = vld [vmem:[%s3373 + $0x70] sm:$0xff]
    %v3389 = vld [vmem:[%s3373 + $0x78] sm:$0xff]
    %3390 = vmatpush.msra.mxu0 %v3389
    %3391 = vmatpush.msra.mxu0 %v3388
    %3392 = vmatpush.msra.mxu0 %v3387
    %3393 = vmatpush.msra.mxu0 %v3386
    %3394 = vmatpush.msra.mxu0 %v3385
    %3395 = vmatpush.msra.mxu0 %v3384
    %3396 = vmatpush.msra.mxu0 %v3383
    %3397 = vmatpush.msra.mxu0 %v3382
    %3398 = vmatpush.msra.mxu0 %v3381
    %3399 = vmatpush.msra.mxu0 %v3380
    %3400 = vmatpush.msra.mxu0 %v3379
    %3401 = vmatpush.msra.mxu0 %v3378
    %3402 = vmatpush.msra.mxu0 %v3377
    %3403 = vmatpush.msra.mxu0 %v3376
    %3404 = vmatpush.msra.mxu0 %v3375
    %3405 = vmatpush.msra.mxu0 %v3374
    %3406 = vmatmul.f32.gmra.mxu0 %v3357
    %v3407 = vpop.f32.mrf.mxu0
    %v3408 = vadd.f32 0.0, %v3407
    %3409 = vmatmul.f32.gmra.mxu0 %v3358
    %v3410 = vpop.f32.mrf.mxu0
    %v3411 = vadd.f32 0.0, %v3410
    %3412 = vmatmul.f32.gmra.mxu0 %v3359
    %v3413 = vpop.f32.mrf.mxu0
    %v3414 = vadd.f32 0.0, %v3413
    %3415 = vmatmul.f32.gmra.mxu0 %v3360
    %v3416 = vpop.f32.mrf.mxu0
    %v3417 = vadd.f32 0.0, %v3416
    %3418 = vmatmul.f32.gmra.mxu0 %v3361
    %v3419 = vpop.f32.mrf.mxu0
    %v3420 = vadd.f32 0.0, %v3419
    %3421 = vmatmul.f32.gmra.mxu0 %v3362
    %v3422 = vpop.f32.mrf.mxu0
    %v3423 = vadd.f32 0.0, %v3422
    %3424 = vmatmul.f32.gmra.mxu0 %v3363
    %v3425 = vpop.f32.mrf.mxu0
    %v3426 = vadd.f32 0.0, %v3425
    %3427 = vmatmul.f32.gmra.mxu0 %v3364
    %v3428 = vpop.f32.mrf.mxu0
    %v3429 = vadd.f32 0.0, %v3428
    %3430 = vmatmul.f32.gmra.mxu0 %v3365
    %v3431 = vpop.f32.mrf.mxu0
    %v3432 = vadd.f32 0.0, %v3431
    %3433 = vmatmul.f32.gmra.mxu0 %v3366
    %v3434 = vpop.f32.mrf.mxu0
    %v3435 = vadd.f32 0.0, %v3434
    %3436 = vmatmul.f32.gmra.mxu0 %v3367
    %v3437 = vpop.f32.mrf.mxu0
    %v3438 = vadd.f32 0.0, %v3437
    %3439 = vmatmul.f32.gmra.mxu0 %v3368
    %v3440 = vpop.f32.mrf.mxu0
    %v3441 = vadd.f32 0.0, %v3440
    %3442 = vmatmul.f32.gmra.mxu0 %v3369
    %v3443 = vpop.f32.mrf.mxu0
    %v3444 = vadd.f32 0.0, %v3443
    %3445 = vmatmul.f32.gmra.mxu0 %v3370
    %v3446 = vpop.f32.mrf.mxu0
    %v3447 = vadd.f32 0.0, %v3446
    %3448 = vmatmul.f32.gmra.mxu0 %v3371
    %v3449 = vpop.f32.mrf.mxu0
    %v3450 = vadd.f32 0.0, %v3449
    %3451 = vmatmul.f32.gmra.mxu0 %v3372
    %v3452 = vpop.f32.mrf.mxu0
    %v3453 = vadd.f32 0.0, %v3452
    %3454 = vdwg.mxu0
    %v3455 = vadd.f32 %v3341, %v3408
    %v3456 = vadd.f32 %v3342, %v3411
    %v3457 = vadd.f32 %v3343, %v3414
    %v3458 = vadd.f32 %v3344, %v3417
    %v3459 = vadd.f32 %v3345, %v3420
    %v3460 = vadd.f32 %v3346, %v3423
    %v3461 = vadd.f32 %v3347, %v3426
    %v3462 = vadd.f32 %v3348, %v3429
    %v3463 = vadd.f32 %v3349, %v3432
    %v3464 = vadd.f32 %v3350, %v3435
    %v3465 = vadd.f32 %v3351, %v3438
    %v3466 = vadd.f32 %v3352, %v3441
    %v3467 = vadd.f32 %v3353, %v3444
    %v3468 = vadd.f32 %v3354, %v3447
    %v3469 = vadd.f32 %v3355, %v3450
    %v3470 = vadd.f32 %v3356, %v3453
    %s3471 = scalar_lea.vmem [#allocation3], 64
    %v3472 = vld [vmem:[%s3471] sm:$0xff]
    %v3473 = vld [vmem:[%s3471 + $0x10] sm:$0xff]
    %v3474 = vld [vmem:[%s3471 + $0x20] sm:$0xff]
    %v3475 = vld [vmem:[%s3471 + $0x30] sm:$0xff]
    %v3476 = vld [vmem:[%s3471 + $0x40] sm:$0xff]
    %v3477 = vld [vmem:[%s3471 + $0x50] sm:$0xff]
    %v3478 = vld [vmem:[%s3471 + $0x60] sm:$0xff]
    %v3479 = vld [vmem:[%s3471 + $0x70] sm:$0xff]
    %v3480 = vld [vmem:[%s3471 + $0xc0] sm:$0xff]
    %v3481 = vld [vmem:[%s3471 + $0xd0] sm:$0xff]
    %v3482 = vld [vmem:[%s3471 + $0xe0] sm:$0xff]
    %v3483 = vld [vmem:[%s3471 + $0xf0] sm:$0xff]
    %v3484 = vld [vmem:[%s3471 + $0x100] sm:$0xff]
    %v3485 = vld [vmem:[%s3471 + $0x110] sm:$0xff]
    %v3486 = vld [vmem:[%s3471 + $0x120] sm:$0xff]
    %v3487 = vld [vmem:[%s3471 + $0x130] sm:$0xff]
    %s3488 = scalar_lea.vmem %s3, 2560
    %v3489 = vld [vmem:[%s3488] sm:$0xff]
    %v3490 = vld [vmem:[%s3488 + $0x8] sm:$0xff]
    %v3491 = vld [vmem:[%s3488 + $0x10] sm:$0xff]
    %v3492 = vld [vmem:[%s3488 + $0x18] sm:$0xff]
    %v3493 = vld [vmem:[%s3488 + $0x20] sm:$0xff]
    %v3494 = vld [vmem:[%s3488 + $0x28] sm:$0xff]
    %v3495 = vld [vmem:[%s3488 + $0x30] sm:$0xff]
    %v3496 = vld [vmem:[%s3488 + $0x38] sm:$0xff]
    %v3497 = vld [vmem:[%s3488 + $0x40] sm:$0xff]
    %v3498 = vld [vmem:[%s3488 + $0x48] sm:$0xff]
    %v3499 = vld [vmem:[%s3488 + $0x50] sm:$0xff]
    %v3500 = vld [vmem:[%s3488 + $0x58] sm:$0xff]
    %v3501 = vld [vmem:[%s3488 + $0x60] sm:$0xff]
    %v3502 = vld [vmem:[%s3488 + $0x68] sm:$0xff]
    %v3503 = vld [vmem:[%s3488 + $0x70] sm:$0xff]
    %v3504 = vld [vmem:[%s3488 + $0x78] sm:$0xff]
    %3505 = vmatpush.msra.mxu0 %v3504
    %3506 = vmatpush.msra.mxu0 %v3503
    %3507 = vmatpush.msra.mxu0 %v3502
    %3508 = vmatpush.msra.mxu0 %v3501
    %3509 = vmatpush.msra.mxu0 %v3500
    %3510 = vmatpush.msra.mxu0 %v3499
    %3511 = vmatpush.msra.mxu0 %v3498
    %3512 = vmatpush.msra.mxu0 %v3497
    %3513 = vmatpush.msra.mxu0 %v3496
    %3514 = vmatpush.msra.mxu0 %v3495
    %3515 = vmatpush.msra.mxu0 %v3494
    %3516 = vmatpush.msra.mxu0 %v3493
    %3517 = vmatpush.msra.mxu0 %v3492
    %3518 = vmatpush.msra.mxu0 %v3491
    %3519 = vmatpush.msra.mxu0 %v3490
    %3520 = vmatpush.msra.mxu0 %v3489
    %3521 = vmatmul.f32.gmra.mxu0 %v3472
    %v3522 = vpop.f32.mrf.mxu0
    %v3523 = vadd.f32 0.0, %v3522
    %3524 = vmatmul.f32.gmra.mxu0 %v3473
    %v3525 = vpop.f32.mrf.mxu0
    %v3526 = vadd.f32 0.0, %v3525
    %3527 = vmatmul.f32.gmra.mxu0 %v3474
    %v3528 = vpop.f32.mrf.mxu0
    %v3529 = vadd.f32 0.0, %v3528
    %3530 = vmatmul.f32.gmra.mxu0 %v3475
    %v3531 = vpop.f32.mrf.mxu0
    %v3532 = vadd.f32 0.0, %v3531
    %3533 = vmatmul.f32.gmra.mxu0 %v3476
    %v3534 = vpop.f32.mrf.mxu0
    %v3535 = vadd.f32 0.0, %v3534
    %3536 = vmatmul.f32.gmra.mxu0 %v3477
    %v3537 = vpop.f32.mrf.mxu0
    %v3538 = vadd.f32 0.0, %v3537
    %3539 = vmatmul.f32.gmra.mxu0 %v3478
    %v3540 = vpop.f32.mrf.mxu0
    %v3541 = vadd.f32 0.0, %v3540
    %3542 = vmatmul.f32.gmra.mxu0 %v3479
    %v3543 = vpop.f32.mrf.mxu0
    %v3544 = vadd.f32 0.0, %v3543
    %3545 = vmatmul.f32.gmra.mxu0 %v3480
    %v3546 = vpop.f32.mrf.mxu0
    %v3547 = vadd.f32 0.0, %v3546
    %3548 = vmatmul.f32.gmra.mxu0 %v3481
    %v3549 = vpop.f32.mrf.mxu0
    %v3550 = vadd.f32 0.0, %v3549
    %3551 = vmatmul.f32.gmra.mxu0 %v3482
    %v3552 = vpop.f32.mrf.mxu0
    %v3553 = vadd.f32 0.0, %v3552
    %3554 = vmatmul.f32.gmra.mxu0 %v3483
    %v3555 = vpop.f32.mrf.mxu0
    %v3556 = vadd.f32 0.0, %v3555
    %3557 = vmatmul.f32.gmra.mxu0 %v3484
    %v3558 = vpop.f32.mrf.mxu0
    %v3559 = vadd.f32 0.0, %v3558
    %3560 = vmatmul.f32.gmra.mxu0 %v3485
    %v3561 = vpop.f32.mrf.mxu0
    %v3562 = vadd.f32 0.0, %v3561
    %3563 = vmatmul.f32.gmra.mxu0 %v3486
    %v3564 = vpop.f32.mrf.mxu0
    %v3565 = vadd.f32 0.0, %v3564
    %3566 = vmatmul.f32.gmra.mxu0 %v3487
    %v3567 = vpop.f32.mrf.mxu0
    %v3568 = vadd.f32 0.0, %v3567
    %3569 = vdwg.mxu0
    %v3570 = vadd.f32 %v3455, %v3523
    %v3571 = vadd.f32 %v3456, %v3526
    %v3572 = vadd.f32 %v3457, %v3529
    %v3573 = vadd.f32 %v3458, %v3532
    %v3574 = vadd.f32 %v3459, %v3535
    %v3575 = vadd.f32 %v3460, %v3538
    %v3576 = vadd.f32 %v3461, %v3541
    %v3577 = vadd.f32 %v3462, %v3544
    %v3578 = vadd.f32 %v3463, %v3547
    %v3579 = vadd.f32 %v3464, %v3550
    %v3580 = vadd.f32 %v3465, %v3553
    %v3581 = vadd.f32 %v3466, %v3556
    %v3582 = vadd.f32 %v3467, %v3559
    %v3583 = vadd.f32 %v3468, %v3562
    %v3584 = vadd.f32 %v3469, %v3565
    %v3585 = vadd.f32 %v3470, %v3568
    %v3586 = vld [vmem:[%s3471 + $0x1] sm:$0xff]
    %v3587 = vld [vmem:[%s3471 + $0x11] sm:$0xff]
    %v3588 = vld [vmem:[%s3471 + $0x21] sm:$0xff]
    %v3589 = vld [vmem:[%s3471 + $0x31] sm:$0xff]
    %v3590 = vld [vmem:[%s3471 + $0x41] sm:$0xff]
    %v3591 = vld [vmem:[%s3471 + $0x51] sm:$0xff]
    %v3592 = vld [vmem:[%s3471 + $0x61] sm:$0xff]
    %v3593 = vld [vmem:[%s3471 + $0x71] sm:$0xff]
    %v3594 = vld [vmem:[%s3471 + $0xc1] sm:$0xff]
    %v3595 = vld [vmem:[%s3471 + $0xd1] sm:$0xff]
    %v3596 = vld [vmem:[%s3471 + $0xe1] sm:$0xff]
    %v3597 = vld [vmem:[%s3471 + $0xf1] sm:$0xff]
    %v3598 = vld [vmem:[%s3471 + $0x101] sm:$0xff]
    %v3599 = vld [vmem:[%s3471 + $0x111] sm:$0xff]
    %v3600 = vld [vmem:[%s3471 + $0x121] sm:$0xff]
    %v3601 = vld [vmem:[%s3471 + $0x131] sm:$0xff]
    %s3602 = scalar_lea.vmem %s3, 2688
    %v3603 = vld [vmem:[%s3602] sm:$0xff]
    %v3604 = vld [vmem:[%s3602 + $0x8] sm:$0xff]
    %v3605 = vld [vmem:[%s3602 + $0x10] sm:$0xff]
    %v3606 = vld [vmem:[%s3602 + $0x18] sm:$0xff]
    %v3607 = vld [vmem:[%s3602 + $0x20] sm:$0xff]
    %v3608 = vld [vmem:[%s3602 + $0x28] sm:$0xff]
    %v3609 = vld [vmem:[%s3602 + $0x30] sm:$0xff]
    %v3610 = vld [vmem:[%s3602 + $0x38] sm:$0xff]
    %v3611 = vld [vmem:[%s3602 + $0x40] sm:$0xff]
    %v3612 = vld [vmem:[%s3602 + $0x48] sm:$0xff]
    %v3613 = vld [vmem:[%s3602 + $0x50] sm:$0xff]
    %v3614 = vld [vmem:[%s3602 + $0x58] sm:$0xff]
    %v3615 = vld [vmem:[%s3602 + $0x60] sm:$0xff]
    %v3616 = vld [vmem:[%s3602 + $0x68] sm:$0xff]
    %v3617 = vld [vmem:[%s3602 + $0x70] sm:$0xff]
    %v3618 = vld [vmem:[%s3602 + $0x78] sm:$0xff]
    %3619 = vmatpush.msra.mxu0 %v3618
    %3620 = vmatpush.msra.mxu0 %v3617
    %3621 = vmatpush.msra.mxu0 %v3616
    %3622 = vmatpush.msra.mxu0 %v3615
    %3623 = vmatpush.msra.mxu0 %v3614
    %3624 = vmatpush.msra.mxu0 %v3613
    %3625 = vmatpush.msra.mxu0 %v3612
    %3626 = vmatpush.msra.mxu0 %v3611
    %3627 = vmatpush.msra.mxu0 %v3610
    %3628 = vmatpush.msra.mxu0 %v3609
    %3629 = vmatpush.msra.mxu0 %v3608
    %3630 = vmatpush.msra.mxu0 %v3607
    %3631 = vmatpush.msra.mxu0 %v3606
    %3632 = vmatpush.msra.mxu0 %v3605
    %3633 = vmatpush.msra.mxu0 %v3604
    %3634 = vmatpush.msra.mxu0 %v3603
    %3635 = vmatmul.f32.gmra.mxu0 %v3586
    %v3636 = vpop.f32.mrf.mxu0
    %v3637 = vadd.f32 0.0, %v3636
    %3638 = vmatmul.f32.gmra.mxu0 %v3587
    %v3639 = vpop.f32.mrf.mxu0
    %v3640 = vadd.f32 0.0, %v3639
    %3641 = vmatmul.f32.gmra.mxu0 %v3588
    %v3642 = vpop.f32.mrf.mxu0
    %v3643 = vadd.f32 0.0, %v3642
    %3644 = vmatmul.f32.gmra.mxu0 %v3589
    %v3645 = vpop.f32.mrf.mxu0
    %v3646 = vadd.f32 0.0, %v3645
    %3647 = vmatmul.f32.gmra.mxu0 %v3590
    %v3648 = vpop.f32.mrf.mxu0
    %v3649 = vadd.f32 0.0, %v3648
    %3650 = vmatmul.f32.gmra.mxu0 %v3591
    %v3651 = vpop.f32.mrf.mxu0
    %v3652 = vadd.f32 0.0, %v3651
    %3653 = vmatmul.f32.gmra.mxu0 %v3592
    %v3654 = vpop.f32.mrf.mxu0
    %v3655 = vadd.f32 0.0, %v3654
    %3656 = vmatmul.f32.gmra.mxu0 %v3593
    %v3657 = vpop.f32.mrf.mxu0
    %v3658 = vadd.f32 0.0, %v3657
    %3659 = vmatmul.f32.gmra.mxu0 %v3594
    %v3660 = vpop.f32.mrf.mxu0
    %v3661 = vadd.f32 0.0, %v3660
    %3662 = vmatmul.f32.gmra.mxu0 %v3595
    %v3663 = vpop.f32.mrf.mxu0
    %v3664 = vadd.f32 0.0, %v3663
    %3665 = vmatmul.f32.gmra.mxu0 %v3596
    %v3666 = vpop.f32.mrf.mxu0
    %v3667 = vadd.f32 0.0, %v3666
    %3668 = vmatmul.f32.gmra.mxu0 %v3597
    %v3669 = vpop.f32.mrf.mxu0
    %v3670 = vadd.f32 0.0, %v3669
    %3671 = vmatmul.f32.gmra.mxu0 %v3598
    %v3672 = vpop.f32.mrf.mxu0
    %v3673 = vadd.f32 0.0, %v3672
    %3674 = vmatmul.f32.gmra.mxu0 %v3599
    %v3675 = vpop.f32.mrf.mxu0
    %v3676 = vadd.f32 0.0, %v3675
    %3677 = vmatmul.f32.gmra.mxu0 %v3600
    %v3678 = vpop.f32.mrf.mxu0
    %v3679 = vadd.f32 0.0, %v3678
    %3680 = vmatmul.f32.gmra.mxu0 %v3601
    %v3681 = vpop.f32.mrf.mxu0
    %v3682 = vadd.f32 0.0, %v3681
    %3683 = vdwg.mxu0
    %v3684 = vadd.f32 %v3570, %v3637
    %v3685 = vadd.f32 %v3571, %v3640
    %v3686 = vadd.f32 %v3572, %v3643
    %v3687 = vadd.f32 %v3573, %v3646
    %v3688 = vadd.f32 %v3574, %v3649
    %v3689 = vadd.f32 %v3575, %v3652
    %v3690 = vadd.f32 %v3576, %v3655
    %v3691 = vadd.f32 %v3577, %v3658
    %v3692 = vadd.f32 %v3578, %v3661
    %v3693 = vadd.f32 %v3579, %v3664
    %v3694 = vadd.f32 %v3580, %v3667
    %v3695 = vadd.f32 %v3581, %v3670
    %v3696 = vadd.f32 %v3582, %v3673
    %v3697 = vadd.f32 %v3583, %v3676
    %v3698 = vadd.f32 %v3584, %v3679
    %v3699 = vadd.f32 %v3585, %v3682
    %v3700 = vld [vmem:[%s3471 + $0x2] sm:$0xff]
    %v3701 = vld [vmem:[%s3471 + $0x12] sm:$0xff]
    %v3702 = vld [vmem:[%s3471 + $0x22] sm:$0xff]
    %v3703 = vld [vmem:[%s3471 + $0x32] sm:$0xff]
    %v3704 = vld [vmem:[%s3471 + $0x42] sm:$0xff]
    %v3705 = vld [vmem:[%s3471 + $0x52] sm:$0xff]
    %v3706 = vld [vmem:[%s3471 + $0x62] sm:$0xff]
    %v3707 = vld [vmem:[%s3471 + $0x72] sm:$0xff]
    %v3708 = vld [vmem:[%s3471 + $0xc2] sm:$0xff]
    %v3709 = vld [vmem:[%s3471 + $0xd2] sm:$0xff]
    %v3710 = vld [vmem:[%s3471 + $0xe2] sm:$0xff]
    %v3711 = vld [vmem:[%s3471 + $0xf2] sm:$0xff]
    %v3712 = vld [vmem:[%s3471 + $0x102] sm:$0xff]
    %v3713 = vld [vmem:[%s3471 + $0x112] sm:$0xff]
    %v3714 = vld [vmem:[%s3471 + $0x122] sm:$0xff]
    %v3715 = vld [vmem:[%s3471 + $0x132] sm:$0xff]
    %s3716 = scalar_lea.vmem %s3, 2816
    %v3717 = vld [vmem:[%s3716] sm:$0xff]
    %v3718 = vld [vmem:[%s3716 + $0x8] sm:$0xff]
    %v3719 = vld [vmem:[%s3716 + $0x10] sm:$0xff]
    %v3720 = vld [vmem:[%s3716 + $0x18] sm:$0xff]
    %v3721 = vld [vmem:[%s3716 + $0x20] sm:$0xff]
    %v3722 = vld [vmem:[%s3716 + $0x28] sm:$0xff]
    %v3723 = vld [vmem:[%s3716 + $0x30] sm:$0xff]
    %v3724 = vld [vmem:[%s3716 + $0x38] sm:$0xff]
    %v3725 = vld [vmem:[%s3716 + $0x40] sm:$0xff]
    %v3726 = vld [vmem:[%s3716 + $0x48] sm:$0xff]
    %v3727 = vld [vmem:[%s3716 + $0x50] sm:$0xff]
    %v3728 = vld [vmem:[%s3716 + $0x58] sm:$0xff]
    %v3729 = vld [vmem:[%s3716 + $0x60] sm:$0xff]
    %v3730 = vld [vmem:[%s3716 + $0x68] sm:$0xff]
    %v3731 = vld [vmem:[%s3716 + $0x70] sm:$0xff]
    %v3732 = vld [vmem:[%s3716 + $0x78] sm:$0xff]
    %3733 = vmatpush.msra.mxu0 %v3732
    %3734 = vmatpush.msra.mxu0 %v3731
    %3735 = vmatpush.msra.mxu0 %v3730
    %3736 = vmatpush.msra.mxu0 %v3729
    %3737 = vmatpush.msra.mxu0 %v3728
    %3738 = vmatpush.msra.mxu0 %v3727
    %3739 = vmatpush.msra.mxu0 %v3726
    %3740 = vmatpush.msra.mxu0 %v3725
    %3741 = vmatpush.msra.mxu0 %v3724
    %3742 = vmatpush.msra.mxu0 %v3723
    %3743 = vmatpush.msra.mxu0 %v3722
    %3744 = vmatpush.msra.mxu0 %v3721
    %3745 = vmatpush.msra.mxu0 %v3720
    %3746 = vmatpush.msra.mxu0 %v3719
    %3747 = vmatpush.msra.mxu0 %v3718
    %3748 = vmatpush.msra.mxu0 %v3717
    %3749 = vmatmul.f32.gmra.mxu0 %v3700
    %v3750 = vpop.f32.mrf.mxu0
    %v3751 = vadd.f32 0.0, %v3750
    %3752 = vmatmul.f32.gmra.mxu0 %v3701
    %v3753 = vpop.f32.mrf.mxu0
    %v3754 = vadd.f32 0.0, %v3753
    %3755 = vmatmul.f32.gmra.mxu0 %v3702
    %v3756 = vpop.f32.mrf.mxu0
    %v3757 = vadd.f32 0.0, %v3756
    %3758 = vmatmul.f32.gmra.mxu0 %v3703
    %v3759 = vpop.f32.mrf.mxu0
    %v3760 = vadd.f32 0.0, %v3759
    %3761 = vmatmul.f32.gmra.mxu0 %v3704
    %v3762 = vpop.f32.mrf.mxu0
    %v3763 = vadd.f32 0.0, %v3762
    %3764 = vmatmul.f32.gmra.mxu0 %v3705
    %v3765 = vpop.f32.mrf.mxu0
    %v3766 = vadd.f32 0.0, %v3765
    %3767 = vmatmul.f32.gmra.mxu0 %v3706
    %v3768 = vpop.f32.mrf.mxu0
    %v3769 = vadd.f32 0.0, %v3768
    %3770 = vmatmul.f32.gmra.mxu0 %v3707
    %v3771 = vpop.f32.mrf.mxu0
    %v3772 = vadd.f32 0.0, %v3771
    %3773 = vmatmul.f32.gmra.mxu0 %v3708
    %v3774 = vpop.f32.mrf.mxu0
    %v3775 = vadd.f32 0.0, %v3774
    %3776 = vmatmul.f32.gmra.mxu0 %v3709
    %v3777 = vpop.f32.mrf.mxu0
    %v3778 = vadd.f32 0.0, %v3777
    %3779 = vmatmul.f32.gmra.mxu0 %v3710
    %v3780 = vpop.f32.mrf.mxu0
    %v3781 = vadd.f32 0.0, %v3780
    %3782 = vmatmul.f32.gmra.mxu0 %v3711
    %v3783 = vpop.f32.mrf.mxu0
    %v3784 = vadd.f32 0.0, %v3783
    %3785 = vmatmul.f32.gmra.mxu0 %v3712
    %v3786 = vpop.f32.mrf.mxu0
    %v3787 = vadd.f32 0.0, %v3786
    %3788 = vmatmul.f32.gmra.mxu0 %v3713
    %v3789 = vpop.f32.mrf.mxu0
    %v3790 = vadd.f32 0.0, %v3789
    %3791 = vmatmul.f32.gmra.mxu0 %v3714
    %v3792 = vpop.f32.mrf.mxu0
    %v3793 = vadd.f32 0.0, %v3792
    %3794 = vmatmul.f32.gmra.mxu0 %v3715
    %v3795 = vpop.f32.mrf.mxu0
    %v3796 = vadd.f32 0.0, %v3795
    %3797 = vdwg.mxu0
    %v3798 = vadd.f32 %v3684, %v3751
    %v3799 = vadd.f32 %v3685, %v3754
    %v3800 = vadd.f32 %v3686, %v3757
    %v3801 = vadd.f32 %v3687, %v3760
    %v3802 = vadd.f32 %v3688, %v3763
    %v3803 = vadd.f32 %v3689, %v3766
    %v3804 = vadd.f32 %v3690, %v3769
    %v3805 = vadd.f32 %v3691, %v3772
    %v3806 = vadd.f32 %v3692, %v3775
    %v3807 = vadd.f32 %v3693, %v3778
    %v3808 = vadd.f32 %v3694, %v3781
    %v3809 = vadd.f32 %v3695, %v3784
    %v3810 = vadd.f32 %v3696, %v3787
    %v3811 = vadd.f32 %v3697, %v3790
    %v3812 = vadd.f32 %v3698, %v3793
    %v3813 = vadd.f32 %v3699, %v3796
    %v3814 = vld [vmem:[%s3471 + $0x3] sm:$0xff]
    %v3815 = vld [vmem:[%s3471 + $0x13] sm:$0xff]
    %v3816 = vld [vmem:[%s3471 + $0x23] sm:$0xff]
    %v3817 = vld [vmem:[%s3471 + $0x33] sm:$0xff]
    %v3818 = vld [vmem:[%s3471 + $0x43] sm:$0xff]
    %v3819 = vld [vmem:[%s3471 + $0x53] sm:$0xff]
    %v3820 = vld [vmem:[%s3471 + $0x63] sm:$0xff]
    %v3821 = vld [vmem:[%s3471 + $0x73] sm:$0xff]
    %v3822 = vld [vmem:[%s3471 + $0xc3] sm:$0xff]
    %v3823 = vld [vmem:[%s3471 + $0xd3] sm:$0xff]
    %v3824 = vld [vmem:[%s3471 + $0xe3] sm:$0xff]
    %v3825 = vld [vmem:[%s3471 + $0xf3] sm:$0xff]
    %v3826 = vld [vmem:[%s3471 + $0x103] sm:$0xff]
    %v3827 = vld [vmem:[%s3471 + $0x113] sm:$0xff]
    %v3828 = vld [vmem:[%s3471 + $0x123] sm:$0xff]
    %v3829 = vld [vmem:[%s3471 + $0x133] sm:$0xff]
    %s3830 = scalar_lea.vmem %s3, 2944
    %v3831 = vld [vmem:[%s3830] sm:$0xff]
    %v3832 = vld [vmem:[%s3830 + $0x8] sm:$0xff]
    %v3833 = vld [vmem:[%s3830 + $0x10] sm:$0xff]
    %v3834 = vld [vmem:[%s3830 + $0x18] sm:$0xff]
    %v3835 = vld [vmem:[%s3830 + $0x20] sm:$0xff]
    %v3836 = vld [vmem:[%s3830 + $0x28] sm:$0xff]
    %v3837 = vld [vmem:[%s3830 + $0x30] sm:$0xff]
    %v3838 = vld [vmem:[%s3830 + $0x38] sm:$0xff]
    %v3839 = vld [vmem:[%s3830 + $0x40] sm:$0xff]
    %v3840 = vld [vmem:[%s3830 + $0x48] sm:$0xff]
    %v3841 = vld [vmem:[%s3830 + $0x50] sm:$0xff]
    %v3842 = vld [vmem:[%s3830 + $0x58] sm:$0xff]
    %v3843 = vld [vmem:[%s3830 + $0x60] sm:$0xff]
    %v3844 = vld [vmem:[%s3830 + $0x68] sm:$0xff]
    %v3845 = vld [vmem:[%s3830 + $0x70] sm:$0xff]
    %v3846 = vld [vmem:[%s3830 + $0x78] sm:$0xff]
    %3847 = vmatpush.msra.mxu0 %v3846
    %3848 = vmatpush.msra.mxu0 %v3845
    %3849 = vmatpush.msra.mxu0 %v3844
    %3850 = vmatpush.msra.mxu0 %v3843
    %3851 = vmatpush.msra.mxu0 %v3842
    %3852 = vmatpush.msra.mxu0 %v3841
    %3853 = vmatpush.msra.mxu0 %v3840
    %3854 = vmatpush.msra.mxu0 %v3839
    %3855 = vmatpush.msra.mxu0 %v3838
    %3856 = vmatpush.msra.mxu0 %v3837
    %3857 = vmatpush.msra.mxu0 %v3836
    %3858 = vmatpush.msra.mxu0 %v3835
    %3859 = vmatpush.msra.mxu0 %v3834
    %3860 = vmatpush.msra.mxu0 %v3833
    %3861 = vmatpush.msra.mxu0 %v3832
    %3862 = vmatpush.msra.mxu0 %v3831
    %3863 = vmatmul.f32.gmra.mxu0 %v3814
    %v3864 = vpop.f32.mrf.mxu0
    %v3865 = vadd.f32 0.0, %v3864
    %3866 = vmatmul.f32.gmra.mxu0 %v3815
    %v3867 = vpop.f32.mrf.mxu0
    %v3868 = vadd.f32 0.0, %v3867
    %3869 = vmatmul.f32.gmra.mxu0 %v3816
    %v3870 = vpop.f32.mrf.mxu0
    %v3871 = vadd.f32 0.0, %v3870
    %3872 = vmatmul.f32.gmra.mxu0 %v3817
    %v3873 = vpop.f32.mrf.mxu0
    %v3874 = vadd.f32 0.0, %v3873
    %3875 = vmatmul.f32.gmra.mxu0 %v3818
    %v3876 = vpop.f32.mrf.mxu0
    %v3877 = vadd.f32 0.0, %v3876
    %3878 = vmatmul.f32.gmra.mxu0 %v3819
    %v3879 = vpop.f32.mrf.mxu0
    %v3880 = vadd.f32 0.0, %v3879
    %3881 = vmatmul.f32.gmra.mxu0 %v3820
    %v3882 = vpop.f32.mrf.mxu0
    %v3883 = vadd.f32 0.0, %v3882
    %3884 = vmatmul.f32.gmra.mxu0 %v3821
    %v3885 = vpop.f32.mrf.mxu0
    %v3886 = vadd.f32 0.0, %v3885
    %3887 = vmatmul.f32.gmra.mxu0 %v3822
    %v3888 = vpop.f32.mrf.mxu0
    %v3889 = vadd.f32 0.0, %v3888
    %3890 = vmatmul.f32.gmra.mxu0 %v3823
    %v3891 = vpop.f32.mrf.mxu0
    %v3892 = vadd.f32 0.0, %v3891
    %3893 = vmatmul.f32.gmra.mxu0 %v3824
    %v3894 = vpop.f32.mrf.mxu0
    %v3895 = vadd.f32 0.0, %v3894
    %3896 = vmatmul.f32.gmra.mxu0 %v3825
    %v3897 = vpop.f32.mrf.mxu0
    %v3898 = vadd.f32 0.0, %v3897
    %3899 = vmatmul.f32.gmra.mxu0 %v3826
    %v3900 = vpop.f32.mrf.mxu0
    %v3901 = vadd.f32 0.0, %v3900
    %3902 = vmatmul.f32.gmra.mxu0 %v3827
    %v3903 = vpop.f32.mrf.mxu0
    %v3904 = vadd.f32 0.0, %v3903
    %3905 = vmatmul.f32.gmra.mxu0 %v3828
    %v3906 = vpop.f32.mrf.mxu0
    %v3907 = vadd.f32 0.0, %v3906
    %3908 = vmatmul.f32.gmra.mxu0 %v3829
    %v3909 = vpop.f32.mrf.mxu0
    %v3910 = vadd.f32 0.0, %v3909
    %3911 = vdwg.mxu0
    %v3912 = vadd.f32 %v3798, %v3865
    %v3913 = vadd.f32 %v3799, %v3868
    %v3914 = vadd.f32 %v3800, %v3871
    %v3915 = vadd.f32 %v3801, %v3874
    %v3916 = vadd.f32 %v3802, %v3877
    %v3917 = vadd.f32 %v3803, %v3880
    %v3918 = vadd.f32 %v3804, %v3883
    %v3919 = vadd.f32 %v3805, %v3886
    %v3920 = vadd.f32 %v3806, %v3889
    %v3921 = vadd.f32 %v3807, %v3892
    %v3922 = vadd.f32 %v3808, %v3895
    %v3923 = vadd.f32 %v3809, %v3898
    %v3924 = vadd.f32 %v3810, %v3901
    %v3925 = vadd.f32 %v3811, %v3904
    %v3926 = vadd.f32 %v3812, %v3907
    %v3927 = vadd.f32 %v3813, %v3910
    %v3928 = vld [vmem:[%s3471 + $0x4] sm:$0xff]
    %v3929 = vld [vmem:[%s3471 + $0x14] sm:$0xff]
    %v3930 = vld [vmem:[%s3471 + $0x24] sm:$0xff]
    %v3931 = vld [vmem:[%s3471 + $0x34] sm:$0xff]
    %v3932 = vld [vmem:[%s3471 + $0x44] sm:$0xff]
    %v3933 = vld [vmem:[%s3471 + $0x54] sm:$0xff]
    %v3934 = vld [vmem:[%s3471 + $0x64] sm:$0xff]
    %v3935 = vld [vmem:[%s3471 + $0x74] sm:$0xff]
    %v3936 = vld [vmem:[%s3471 + $0xc4] sm:$0xff]
    %v3937 = vld [vmem:[%s3471 + $0xd4] sm:$0xff]
    %v3938 = vld [vmem:[%s3471 + $0xe4] sm:$0xff]
    %v3939 = vld [vmem:[%s3471 + $0xf4] sm:$0xff]
    %v3940 = vld [vmem:[%s3471 + $0x104] sm:$0xff]
    %v3941 = vld [vmem:[%s3471 + $0x114] sm:$0xff]
    %v3942 = vld [vmem:[%s3471 + $0x124] sm:$0xff]
    %v3943 = vld [vmem:[%s3471 + $0x134] sm:$0xff]
    %s3944 = scalar_lea.vmem %s3, 3072
    %v3945 = vld [vmem:[%s3944] sm:$0xff]
    %v3946 = vld [vmem:[%s3944 + $0x8] sm:$0xff]
    %v3947 = vld [vmem:[%s3944 + $0x10] sm:$0xff]
    %v3948 = vld [vmem:[%s3944 + $0x18] sm:$0xff]
    %v3949 = vld [vmem:[%s3944 + $0x20] sm:$0xff]
    %v3950 = vld [vmem:[%s3944 + $0x28] sm:$0xff]
    %v3951 = vld [vmem:[%s3944 + $0x30] sm:$0xff]
    %v3952 = vld [vmem:[%s3944 + $0x38] sm:$0xff]
    %v3953 = vld [vmem:[%s3944 + $0x40] sm:$0xff]
    %v3954 = vld [vmem:[%s3944 + $0x48] sm:$0xff]
    %v3955 = vld [vmem:[%s3944 + $0x50] sm:$0xff]
    %v3956 = vld [vmem:[%s3944 + $0x58] sm:$0xff]
    %v3957 = vld [vmem:[%s3944 + $0x60] sm:$0xff]
    %v3958 = vld [vmem:[%s3944 + $0x68] sm:$0xff]
    %v3959 = vld [vmem:[%s3944 + $0x70] sm:$0xff]
    %v3960 = vld [vmem:[%s3944 + $0x78] sm:$0xff]
    %3961 = vmatpush.msra.mxu0 %v3960
    %3962 = vmatpush.msra.mxu0 %v3959
    %3963 = vmatpush.msra.mxu0 %v3958
    %3964 = vmatpush.msra.mxu0 %v3957
    %3965 = vmatpush.msra.mxu0 %v3956
    %3966 = vmatpush.msra.mxu0 %v3955
    %3967 = vmatpush.msra.mxu0 %v3954
    %3968 = vmatpush.msra.mxu0 %v3953
    %3969 = vmatpush.msra.mxu0 %v3952
    %3970 = vmatpush.msra.mxu0 %v3951
    %3971 = vmatpush.msra.mxu0 %v3950
    %3972 = vmatpush.msra.mxu0 %v3949
    %3973 = vmatpush.msra.mxu0 %v3948
    %3974 = vmatpush.msra.mxu0 %v3947
    %3975 = vmatpush.msra.mxu0 %v3946
    %3976 = vmatpush.msra.mxu0 %v3945
    %3977 = vmatmul.f32.gmra.mxu0 %v3928
    %v3978 = vpop.f32.mrf.mxu0
    %v3979 = vadd.f32 0.0, %v3978
    %3980 = vmatmul.f32.gmra.mxu0 %v3929
    %v3981 = vpop.f32.mrf.mxu0
    %v3982 = vadd.f32 0.0, %v3981
    %3983 = vmatmul.f32.gmra.mxu0 %v3930
    %v3984 = vpop.f32.mrf.mxu0
    %v3985 = vadd.f32 0.0, %v3984
    %3986 = vmatmul.f32.gmra.mxu0 %v3931
    %v3987 = vpop.f32.mrf.mxu0
    %v3988 = vadd.f32 0.0, %v3987
    %3989 = vmatmul.f32.gmra.mxu0 %v3932
    %v3990 = vpop.f32.mrf.mxu0
    %v3991 = vadd.f32 0.0, %v3990
    %3992 = vmatmul.f32.gmra.mxu0 %v3933
    %v3993 = vpop.f32.mrf.mxu0
    %v3994 = vadd.f32 0.0, %v3993
    %3995 = vmatmul.f32.gmra.mxu0 %v3934
    %v3996 = vpop.f32.mrf.mxu0
    %v3997 = vadd.f32 0.0, %v3996
    %3998 = vmatmul.f32.gmra.mxu0 %v3935
    %v3999 = vpop.f32.mrf.mxu0
    %v4000 = vadd.f32 0.0, %v3999
    %4001 = vmatmul.f32.gmra.mxu0 %v3936
    %v4002 = vpop.f32.mrf.mxu0
    %v4003 = vadd.f32 0.0, %v4002
    %4004 = vmatmul.f32.gmra.mxu0 %v3937
    %v4005 = vpop.f32.mrf.mxu0
    %v4006 = vadd.f32 0.0, %v4005
    %4007 = vmatmul.f32.gmra.mxu0 %v3938
    %v4008 = vpop.f32.mrf.mxu0
    %v4009 = vadd.f32 0.0, %v4008
    %4010 = vmatmul.f32.gmra.mxu0 %v3939
    %v4011 = vpop.f32.mrf.mxu0
    %v4012 = vadd.f32 0.0, %v4011
    %4013 = vmatmul.f32.gmra.mxu0 %v3940
    %v4014 = vpop.f32.mrf.mxu0
    %v4015 = vadd.f32 0.0, %v4014
    %4016 = vmatmul.f32.gmra.mxu0 %v3941
    %v4017 = vpop.f32.mrf.mxu0
    %v4018 = vadd.f32 0.0, %v4017
    %4019 = vmatmul.f32.gmra.mxu0 %v3942
    %v4020 = vpop.f32.mrf.mxu0
    %v4021 = vadd.f32 0.0, %v4020
    %4022 = vmatmul.f32.gmra.mxu0 %v3943
    %v4023 = vpop.f32.mrf.mxu0
    %v4024 = vadd.f32 0.0, %v4023
    %4025 = vdwg.mxu0
    %v4026 = vadd.f32 %v3912, %v3979
    %v4027 = vadd.f32 %v3913, %v3982
    %v4028 = vadd.f32 %v3914, %v3985
    %v4029 = vadd.f32 %v3915, %v3988
    %v4030 = vadd.f32 %v3916, %v3991
    %v4031 = vadd.f32 %v3917, %v3994
    %v4032 = vadd.f32 %v3918, %v3997
    %v4033 = vadd.f32 %v3919, %v4000
    %v4034 = vadd.f32 %v3920, %v4003
    %v4035 = vadd.f32 %v3921, %v4006
    %v4036 = vadd.f32 %v3922, %v4009
    %v4037 = vadd.f32 %v3923, %v4012
    %v4038 = vadd.f32 %v3924, %v4015
    %v4039 = vadd.f32 %v3925, %v4018
    %v4040 = vadd.f32 %v3926, %v4021
    %v4041 = vadd.f32 %v3927, %v4024
    %v4042 = vld [vmem:[%s4] sm:$0x1]
    %v4044 = vperm.slane %v4042, 0
    %v4046 = vadd.f32 %v4026, %v4044
    %v4047 = vadd.f32 %v4027, %v4044
    %v4048 = vadd.f32 %v4028, %v4044
    %v4049 = vadd.f32 %v4029, %v4044
    %v4050 = vadd.f32 %v4030, %v4044
    %v4051 = vadd.f32 %v4031, %v4044
    %v4052 = vadd.f32 %v4032, %v4044
    %v4053 = vadd.f32 %v4033, %v4044
    %v4054 = vadd.f32 %v4034, %v4044
    %v4055 = vadd.f32 %v4035, %v4044
    %v4056 = vadd.f32 %v4036, %v4044
    %v4057 = vadd.f32 %v4037, %v4044
    %v4058 = vadd.f32 %v4038, %v4044
    %v4059 = vadd.f32 %v4039, %v4044
    %v4060 = vadd.f32 %v4040, %v4044
    %v4061 = vadd.f32 %v4041, %v4044
    %v4062 = vmax.f32 %v4046, 0.0
    %v4063 = vmax.f32 %v4047, 0.0
    %v4064 = vmax.f32 %v4048, 0.0
    %v4065 = vmax.f32 %v4049, 0.0
    %v4066 = vmax.f32 %v4050, 0.0
    %v4067 = vmax.f32 %v4051, 0.0
    %v4068 = vmax.f32 %v4052, 0.0
    %v4069 = vmax.f32 %v4053, 0.0
    %v4070 = vmax.f32 %v4054, 0.0
    %v4071 = vmax.f32 %v4055, 0.0
    %v4072 = vmax.f32 %v4056, 0.0
    %v4073 = vmax.f32 %v4057, 0.0
    %v4074 = vmax.f32 %v4058, 0.0
    %v4075 = vmax.f32 %v4059, 0.0
    %v4076 = vmax.f32 %v4060, 0.0
    %v4077 = vmax.f32 %v4061, 0.0
    %v4078 = vmax.f32 %v4062, %v4063
    %v4079 = vmax.f32 %v4064, %v4065
    %v4080 = vmax.f32 %v4066, %v4067
    %v4081 = vmax.f32 %v4068, %v4069
    %v4082 = vmax.f32 %v4070, %v4071
    %v4083 = vmax.f32 %v4072, %v4073
    %v4084 = vmax.f32 %v4074, %v4075
    %v4085 = vmax.f32 %v4076, %v4077
    %4086 = vst [vmem:[#allocation4] sm:$0xff] %v4078
    %4087 = vst [vmem:[#allocation4 + $0x8] sm:$0xff] %v4079
    %4088 = vst [vmem:[#allocation4 + $0x10] sm:$0xff] %v4080
    %4089 = vst [vmem:[#allocation4 + $0x18] sm:$0xff] %v4081
    %4090 = vst [vmem:[#allocation4 + $0x20] sm:$0xff] %v4082
    %4091 = vst [vmem:[#allocation4 + $0x28] sm:$0xff] %v4083
    %4092 = vst [vmem:[#allocation4 + $0x30] sm:$0xff] %v4084
    %4093 = vst [vmem:[#allocation4 + $0x38] sm:$0xff] %v4085
    %v4094 = vld [vmem:[#allocation4] sm:$0x1]
    %v4095 = vld [vmem:[#allocation4 + $0x20] sm:$0x1]
    %v4096 = vld [vmem:[#allocation4 + $0x1] sm:$0x1]
    %v4097 = vld [vmem:[#allocation4 + $0x21] sm:$0x1]
    %v4098 = vmax.f32 %v4094, %v4096
    %v4099 = vmax.f32 %v4095, %v4097
    %v4100 = vld [vmem:[%s5] sm:$0xff]
    %v4101 = vld [vmem:[%s5 + $0x8] sm:$0xff]
    %v4102 = vld [vmem:[%s5 + $0x10] sm:$0xff]
    %v4103 = vld [vmem:[%s5 + $0x18] sm:$0xff]
    %v4104 = vld [vmem:[%s5 + $0x20] sm:$0xff]
    %v4105 = vld [vmem:[%s5 + $0x28] sm:$0xff]
    %v4106 = vld [vmem:[%s5 + $0x30] sm:$0xff]
    %v4107 = vld [vmem:[%s5 + $0x38] sm:$0xff]
    %v4108 = vld [vmem:[%s5 + $0x40] sm:$0xff]
    %v4109 = vld [vmem:[%s5 + $0x48] sm:$0xff]
    %v4110 = vld [vmem:[%s5 + $0x50] sm:$0xff]
    %v4111 = vld [vmem:[%s5 + $0x58] sm:$0xff]
    %v4112 = vld [vmem:[%s5 + $0x60] sm:$0xff]
    %v4113 = vld [vmem:[%s5 + $0x68] sm:$0xff]
    %v4114 = vld [vmem:[%s5 + $0x70] sm:$0xff]
    %v4115 = vld [vmem:[%s5 + $0x78] sm:$0xff]
    %v4116 = vld [vmem:[#allocation4 + $0x2] sm:$0x1]
    %v4117 = vld [vmem:[#allocation4 + $0x22] sm:$0x1]
    %v4118 = vld [vmem:[#allocation4 + $0x3] sm:$0x1]
    %v4119 = vld [vmem:[#allocation4 + $0x23] sm:$0x1]
    %v4120 = vmax.f32 %v4116, %v4118
    %v4121 = vmax.f32 %v4117, %v4119
    %s4122 = scalar_lea.vmem %s5, 128
    %v4123 = vld [vmem:[%s4122] sm:$0xff]
    %v4124 = vld [vmem:[%s4122 + $0x8] sm:$0xff]
    %v4125 = vld [vmem:[%s4122 + $0x10] sm:$0xff]
    %v4126 = vld [vmem:[%s4122 + $0x18] sm:$0xff]
    %v4127 = vld [vmem:[%s4122 + $0x20] sm:$0xff]
    %v4128 = vld [vmem:[%s4122 + $0x28] sm:$0xff]
    %v4129 = vld [vmem:[%s4122 + $0x30] sm:$0xff]
    %v4130 = vld [vmem:[%s4122 + $0x38] sm:$0xff]
    %v4131 = vld [vmem:[%s4122 + $0x40] sm:$0xff]
    %v4132 = vld [vmem:[%s4122 + $0x48] sm:$0xff]
    %v4133 = vld [vmem:[%s4122 + $0x50] sm:$0xff]
    %v4134 = vld [vmem:[%s4122 + $0x58] sm:$0xff]
    %v4135 = vld [vmem:[%s4122 + $0x60] sm:$0xff]
    %v4136 = vld [vmem:[%s4122 + $0x68] sm:$0xff]
    %v4137 = vld [vmem:[%s4122 + $0x70] sm:$0xff]
    %v4138 = vld [vmem:[%s4122 + $0x78] sm:$0xff]
    %v4141 = vrot.slane %v4121, 7
    %vm4142 = vcmask 1041409
    %v4143 = vsel %vm4142, %v4141, %v4120
    %4145 = vmatpush.msra.mxu0 %v4138
    %4146 = vmatpush.msra.mxu0 %v4137
    %4147 = vmatpush.msra.mxu0 %v4136
    %4148 = vmatpush.msra.mxu0 %v4135
    %4149 = vmatpush.msra.mxu0 %v4134
    %4150 = vmatpush.msra.mxu0 %v4133
    %4151 = vmatpush.msra.mxu0 %v4132
    %4152 = vmatpush.msra.mxu0 %v4131
    %4153 = vmatpush.msra.mxu0 %v4130
    %4154 = vmatpush.msra.mxu0 %v4129
    %4155 = vmatpush.msra.mxu0 %v4128
    %4156 = vmatpush.msra.mxu0 %v4127
    %4157 = vmatpush.msra.mxu0 %v4126
    %4158 = vmatpush.msra.mxu0 %v4125
    %4159 = vmatpush.msra.mxu0 %v4124
    %4160 = vmatpush.msra.mxu0 %v4123
    %4161 = vmatmul.f32.gmra.mxu0 %v4143
    %v4162 = vpop.f32.mrf.mxu0
    %v4163 = vadd.f32 0.0, %v4162
    %4164 = vdwg.mxu0
    %v4167 = vrot.slane %v4099, 7
    %v4168 = vsel %vm4142, %v4167, %v4098
    %4170 = vmatpush.msra.mxu0 %v4115
    %4171 = vmatpush.msra.mxu0 %v4114
    %4172 = vmatpush.msra.mxu0 %v4113
    %4173 = vmatpush.msra.mxu0 %v4112
    %4174 = vmatpush.msra.mxu0 %v4111
    %4175 = vmatpush.msra.mxu0 %v4110
    %4176 = vmatpush.msra.mxu0 %v4109
    %4177 = vmatpush.msra.mxu0 %v4108
    %4178 = vmatpush.msra.mxu0 %v4107
    %4179 = vmatpush.msra.mxu0 %v4106
    %4180 = vmatpush.msra.mxu0 %v4105
    %4181 = vmatpush.msra.mxu0 %v4104
    %4182 = vmatpush.msra.mxu0 %v4103
    %4183 = vmatpush.msra.mxu0 %v4102
    %4184 = vmatpush.msra.mxu0 %v4101
    %4185 = vmatpush.msra.mxu0 %v4100
    %4186 = vmatmul.f32.gmra.mxu0 %v4168
    %v4187 = vpop.f32.mrf.mxu0
    %v4188 = vadd.f32 %v4163, %v4187
    %4189 = vdwg.mxu0
    %v4190 = vld [vmem:[#allocation4 + $0x4] sm:$0x1]
    %v4191 = vld [vmem:[#allocation4 + $0x24] sm:$0x1]
    %v4192 = vld [vmem:[#allocation4 + $0x5] sm:$0x1]
    %v4193 = vld [vmem:[#allocation4 + $0x25] sm:$0x1]
    %v4194 = vmax.f32 %v4190, %v4192
    %v4195 = vmax.f32 %v4191, %v4193
    %s4196 = scalar_lea.vmem %s5, 256
    %v4197 = vld [vmem:[%s4196] sm:$0xff]
    %v4198 = vld [vmem:[%s4196 + $0x8] sm:$0xff]
    %v4199 = vld [vmem:[%s4196 + $0x10] sm:$0xff]
    %v4200 = vld [vmem:[%s4196 + $0x18] sm:$0xff]
    %v4201 = vld [vmem:[%s4196 + $0x20] sm:$0xff]
    %v4202 = vld [vmem:[%s4196 + $0x28] sm:$0xff]
    %v4203 = vld [vmem:[%s4196 + $0x30] sm:$0xff]
    %v4204 = vld [vmem:[%s4196 + $0x38] sm:$0xff]
    %v4205 = vld [vmem:[%s4196 + $0x40] sm:$0xff]
    %v4206 = vld [vmem:[%s4196 + $0x48] sm:$0xff]
    %v4207 = vld [vmem:[%s4196 + $0x50] sm:$0xff]
    %v4208 = vld [vmem:[%s4196 + $0x58] sm:$0xff]
    %v4209 = vld [vmem:[%s4196 + $0x60] sm:$0xff]
    %v4210 = vld [vmem:[%s4196 + $0x68] sm:$0xff]
    %v4211 = vld [vmem:[%s4196 + $0x70] sm:$0xff]
    %v4212 = vld [vmem:[%s4196 + $0x78] sm:$0xff]
    %v4215 = vrot.slane %v4195, 7
    %v4216 = vsel %vm4142, %v4215, %v4194
    %4218 = vmatpush.msra.mxu0 %v4212
    %4219 = vmatpush.msra.mxu0 %v4211
    %4220 = vmatpush.msra.mxu0 %v4210
    %4221 = vmatpush.msra.mxu0 %v4209
    %4222 = vmatpush.msra.mxu0 %v4208
    %4223 = vmatpush.msra.mxu0 %v4207
    %4224 = vmatpush.msra.mxu0 %v4206
    %4225 = vmatpush.msra.mxu0 %v4205
    %4226 = vmatpush.msra.mxu0 %v4204
    %4227 = vmatpush.msra.mxu0 %v4203
    %4228 = vmatpush.msra.mxu0 %v4202
    %4229 = vmatpush.msra.mxu0 %v4201
    %4230 = vmatpush.msra.mxu0 %v4200
    %4231 = vmatpush.msra.mxu0 %v4199
    %4232 = vmatpush.msra.mxu0 %v4198
    %4233 = vmatpush.msra.mxu0 %v4197
    %4234 = vmatmul.f32.gmra.mxu0 %v4216
    %v4235 = vpop.f32.mrf.mxu0
    %v4236 = vadd.f32 0.0, %v4235
    %4237 = vdwg.mxu0
    %v4238 = vadd.f32 %v4188, %v4236
    %v4239 = vld [vmem:[#allocation4 + $0x6] sm:$0x1]
    %v4240 = vld [vmem:[#allocation4 + $0x26] sm:$0x1]
    %v4241 = vld [vmem:[#allocation4 + $0x7] sm:$0x1]
    %v4242 = vld [vmem:[#allocation4 + $0x27] sm:$0x1]
    %v4243 = vmax.f32 %v4239, %v4241
    %v4244 = vmax.f32 %v4240, %v4242
    %s4245 = scalar_lea.vmem %s5, 384
    %v4246 = vld [vmem:[%s4245] sm:$0xff]
    %v4247 = vld [vmem:[%s4245 + $0x8] sm:$0xff]
    %v4248 = vld [vmem:[%s4245 + $0x10] sm:$0xff]
    %v4249 = vld [vmem:[%s4245 + $0x18] sm:$0xff]
    %v4250 = vld [vmem:[%s4245 + $0x20] sm:$0xff]
    %v4251 = vld [vmem:[%s4245 + $0x28] sm:$0xff]
    %v4252 = vld [vmem:[%s4245 + $0x30] sm:$0xff]
    %v4253 = vld [vmem:[%s4245 + $0x38] sm:$0xff]
    %v4254 = vld [vmem:[%s4245 + $0x40] sm:$0xff]
    %v4255 = vld [vmem:[%s4245 + $0x48] sm:$0xff]
    %v4256 = vld [vmem:[%s4245 + $0x50] sm:$0xff]
    %v4257 = vld [vmem:[%s4245 + $0x58] sm:$0xff]
    %v4258 = vld [vmem:[%s4245 + $0x60] sm:$0xff]
    %v4259 = vld [vmem:[%s4245 + $0x68] sm:$0xff]
    %v4260 = vld [vmem:[%s4245 + $0x70] sm:$0xff]
    %v4261 = vld [vmem:[%s4245 + $0x78] sm:$0xff]
    %v4264 = vrot.slane %v4244, 7
    %v4265 = vsel %vm4142, %v4264, %v4243
    %4267 = vmatpush.msra.mxu0 %v4261
    %4268 = vmatpush.msra.mxu0 %v4260
    %4269 = vmatpush.msra.mxu0 %v4259
    %4270 = vmatpush.msra.mxu0 %v4258
    %4271 = vmatpush.msra.mxu0 %v4257
    %4272 = vmatpush.msra.mxu0 %v4256
    %4273 = vmatpush.msra.mxu0 %v4255
    %4274 = vmatpush.msra.mxu0 %v4254
    %4275 = vmatpush.msra.mxu0 %v4253
    %4276 = vmatpush.msra.mxu0 %v4252
    %4277 = vmatpush.msra.mxu0 %v4251
    %4278 = vmatpush.msra.mxu0 %v4250
    %4279 = vmatpush.msra.mxu0 %v4249
    %4280 = vmatpush.msra.mxu0 %v4248
    %4281 = vmatpush.msra.mxu0 %v4247
    %4282 = vmatpush.msra.mxu0 %v4246
    %4283 = vmatmul.f32.gmra.mxu0 %v4265
    %v4284 = vpop.f32.mrf.mxu0
    %v4285 = vadd.f32 0.0, %v4284
    %4286 = vdwg.mxu0
    %v4287 = vadd.f32 %v4238, %v4285
    %s4288 = scalar_lea.vmem [#allocation4], 8
    %v4289 = vld [vmem:[%s4288] sm:$0x1]
    %v4290 = vld [vmem:[%s4288 + $0x20] sm:$0x1]
    %v4291 = vld [vmem:[%s4288 + $0x1] sm:$0x1]
    %v4292 = vld [vmem:[%s4288 + $0x21] sm:$0x1]
    %v4293 = vmax.f32 %v4289, %v4291
    %v4294 = vmax.f32 %v4290, %v4292
    %s4295 = scalar_lea.vmem %s5, 512
    %v4296 = vld [vmem:[%s4295] sm:$0xff]
    %v4297 = vld [vmem:[%s4295 + $0x8] sm:$0xff]
    %v4298 = vld [vmem:[%s4295 + $0x10] sm:$0xff]
    %v4299 = vld [vmem:[%s4295 + $0x18] sm:$0xff]
    %v4300 = vld [vmem:[%s4295 + $0x20] sm:$0xff]
    %v4301 = vld [vmem:[%s4295 + $0x28] sm:$0xff]
    %v4302 = vld [vmem:[%s4295 + $0x30] sm:$0xff]
    %v4303 = vld [vmem:[%s4295 + $0x38] sm:$0xff]
    %v4304 = vld [vmem:[%s4295 + $0x40] sm:$0xff]
    %v4305 = vld [vmem:[%s4295 + $0x48] sm:$0xff]
    %v4306 = vld [vmem:[%s4295 + $0x50] sm:$0xff]
    %v4307 = vld [vmem:[%s4295 + $0x58] sm:$0xff]
    %v4308 = vld [vmem:[%s4295 + $0x60] sm:$0xff]
    %v4309 = vld [vmem:[%s4295 + $0x68] sm:$0xff]
    %v4310 = vld [vmem:[%s4295 + $0x70] sm:$0xff]
    %v4311 = vld [vmem:[%s4295 + $0x78] sm:$0xff]
    %v4314 = vrot.slane %v4294, 7
    %v4315 = vsel %vm4142, %v4314, %v4293
    %4317 = vmatpush.msra.mxu0 %v4311
    %4318 = vmatpush.msra.mxu0 %v4310
    %4319 = vmatpush.msra.mxu0 %v4309
    %4320 = vmatpush.msra.mxu0 %v4308
    %4321 = vmatpush.msra.mxu0 %v4307
    %4322 = vmatpush.msra.mxu0 %v4306
    %4323 = vmatpush.msra.mxu0 %v4305
    %4324 = vmatpush.msra.mxu0 %v4304
    %4325 = vmatpush.msra.mxu0 %v4303
    %4326 = vmatpush.msra.mxu0 %v4302
    %4327 = vmatpush.msra.mxu0 %v4301
    %4328 = vmatpush.msra.mxu0 %v4300
    %4329 = vmatpush.msra.mxu0 %v4299
    %4330 = vmatpush.msra.mxu0 %v4298
    %4331 = vmatpush.msra.mxu0 %v4297
    %4332 = vmatpush.msra.mxu0 %v4296
    %4333 = vmatmul.f32.gmra.mxu0 %v4315
    %v4334 = vpop.f32.mrf.mxu0
    %v4335 = vadd.f32 0.0, %v4334
    %4336 = vdwg.mxu0
    %v4337 = vadd.f32 %v4287, %v4335
    %v4338 = vld [vmem:[%s4288 + $0x2] sm:$0x1]
    %v4339 = vld [vmem:[%s4288 + $0x22] sm:$0x1]
    %v4340 = vld [vmem:[%s4288 + $0x3] sm:$0x1]
    %v4341 = vld [vmem:[%s4288 + $0x23] sm:$0x1]
    %v4342 = vmax.f32 %v4338, %v4340
    %v4343 = vmax.f32 %v4339, %v4341
    %s4344 = scalar_lea.vmem %s5, 640
    %v4345 = vld [vmem:[%s4344] sm:$0xff]
    %v4346 = vld [vmem:[%s4344 + $0x8] sm:$0xff]
    %v4347 = vld [vmem:[%s4344 + $0x10] sm:$0xff]
    %v4348 = vld [vmem:[%s4344 + $0x18] sm:$0xff]
    %v4349 = vld [vmem:[%s4344 + $0x20] sm:$0xff]
    %v4350 = vld [vmem:[%s4344 + $0x28] sm:$0xff]
    %v4351 = vld [vmem:[%s4344 + $0x30] sm:$0xff]
    %v4352 = vld [vmem:[%s4344 + $0x38] sm:$0xff]
    %v4353 = vld [vmem:[%s4344 + $0x40] sm:$0xff]
    %v4354 = vld [vmem:[%s4344 + $0x48] sm:$0xff]
    %v4355 = vld [vmem:[%s4344 + $0x50] sm:$0xff]
    %v4356 = vld [vmem:[%s4344 + $0x58] sm:$0xff]
    %v4357 = vld [vmem:[%s4344 + $0x60] sm:$0xff]
    %v4358 = vld [vmem:[%s4344 + $0x68] sm:$0xff]
    %v4359 = vld [vmem:[%s4344 + $0x70] sm:$0xff]
    %v4360 = vld [vmem:[%s4344 + $0x78] sm:$0xff]
    %v4363 = vrot.slane %v4343, 7
    %v4364 = vsel %vm4142, %v4363, %v4342
    %4366 = vmatpush.msra.mxu0 %v4360
    %4367 = vmatpush.msra.mxu0 %v4359
    %4368 = vmatpush.msra.mxu0 %v4358
    %4369 = vmatpush.msra.mxu0 %v4357
    %4370 = vmatpush.msra.mxu0 %v4356
    %4371 = vmatpush.msra.mxu0 %v4355
    %4372 = vmatpush.msra.mxu0 %v4354
    %4373 = vmatpush.msra.mxu0 %v4353
    %4374 = vmatpush.msra.mxu0 %v4352
    %4375 = vmatpush.msra.mxu0 %v4351
    %4376 = vmatpush.msra.mxu0 %v4350
    %4377 = vmatpush.msra.mxu0 %v4349
    %4378 = vmatpush.msra.mxu0 %v4348
    %4379 = vmatpush.msra.mxu0 %v4347
    %4380 = vmatpush.msra.mxu0 %v4346
    %4381 = vmatpush.msra.mxu0 %v4345
    %4382 = vmatmul.f32.gmra.mxu0 %v4364
    %v4383 = vpop.f32.mrf.mxu0
    %v4384 = vadd.f32 0.0, %v4383
    %4385 = vdwg.mxu0
    %v4386 = vadd.f32 %v4337, %v4384
    %v4387 = vld [vmem:[%s4288 + $0x4] sm:$0x1]
    %v4388 = vld [vmem:[%s4288 + $0x24] sm:$0x1]
    %v4389 = vld [vmem:[%s4288 + $0x5] sm:$0x1]
    %v4390 = vld [vmem:[%s4288 + $0x25] sm:$0x1]
    %v4391 = vmax.f32 %v4387, %v4389
    %v4392 = vmax.f32 %v4388, %v4390
    %s4393 = scalar_lea.vmem %s5, 768
    %v4394 = vld [vmem:[%s4393] sm:$0xff]
    %v4395 = vld [vmem:[%s4393 + $0x8] sm:$0xff]
    %v4396 = vld [vmem:[%s4393 + $0x10] sm:$0xff]
    %v4397 = vld [vmem:[%s4393 + $0x18] sm:$0xff]
    %v4398 = vld [vmem:[%s4393 + $0x20] sm:$0xff]
    %v4399 = vld [vmem:[%s4393 + $0x28] sm:$0xff]
    %v4400 = vld [vmem:[%s4393 + $0x30] sm:$0xff]
    %v4401 = vld [vmem:[%s4393 + $0x38] sm:$0xff]
    %v4402 = vld [vmem:[%s4393 + $0x40] sm:$0xff]
    %v4403 = vld [vmem:[%s4393 + $0x48] sm:$0xff]
    %v4404 = vld [vmem:[%s4393 + $0x50] sm:$0xff]
    %v4405 = vld [vmem:[%s4393 + $0x58] sm:$0xff]
    %v4406 = vld [vmem:[%s4393 + $0x60] sm:$0xff]
    %v4407 = vld [vmem:[%s4393 + $0x68] sm:$0xff]
    %v4408 = vld [vmem:[%s4393 + $0x70] sm:$0xff]
    %v4409 = vld [vmem:[%s4393 + $0x78] sm:$0xff]
    %v4412 = vrot.slane %v4392, 7
    %v4413 = vsel %vm4142, %v4412, %v4391
    %4415 = vmatpush.msra.mxu0 %v4409
    %4416 = vmatpush.msra.mxu0 %v4408
    %4417 = vmatpush.msra.mxu0 %v4407
    %4418 = vmatpush.msra.mxu0 %v4406
    %4419 = vmatpush.msra.mxu0 %v4405
    %4420 = vmatpush.msra.mxu0 %v4404
    %4421 = vmatpush.msra.mxu0 %v4403
    %4422 = vmatpush.msra.mxu0 %v4402
    %4423 = vmatpush.msra.mxu0 %v4401
    %4424 = vmatpush.msra.mxu0 %v4400
    %4425 = vmatpush.msra.mxu0 %v4399
    %4426 = vmatpush.msra.mxu0 %v4398
    %4427 = vmatpush.msra.mxu0 %v4397
    %4428 = vmatpush.msra.mxu0 %v4396
    %4429 = vmatpush.msra.mxu0 %v4395
    %4430 = vmatpush.msra.mxu0 %v4394
    %4431 = vmatmul.f32.gmra.mxu0 %v4413
    %v4432 = vpop.f32.mrf.mxu0
    %v4433 = vadd.f32 0.0, %v4432
    %4434 = vdwg.mxu0
    %v4435 = vadd.f32 %v4386, %v4433
    %v4436 = vld [vmem:[%s4288 + $0x6] sm:$0x1]
    %v4437 = vld [vmem:[%s4288 + $0x26] sm:$0x1]
    %v4438 = vld [vmem:[%s4288 + $0x7] sm:$0x1]
    %v4439 = vld [vmem:[%s4288 + $0x27] sm:$0x1]
    %v4440 = vmax.f32 %v4436, %v4438
    %v4441 = vmax.f32 %v4437, %v4439
    %s4442 = scalar_lea.vmem %s5, 896
    %v4443 = vld [vmem:[%s4442] sm:$0xff]
    %v4444 = vld [vmem:[%s4442 + $0x8] sm:$0xff]
    %v4445 = vld [vmem:[%s4442 + $0x10] sm:$0xff]
    %v4446 = vld [vmem:[%s4442 + $0x18] sm:$0xff]
    %v4447 = vld [vmem:[%s4442 + $0x20] sm:$0xff]
    %v4448 = vld [vmem:[%s4442 + $0x28] sm:$0xff]
    %v4449 = vld [vmem:[%s4442 + $0x30] sm:$0xff]
    %v4450 = vld [vmem:[%s4442 + $0x38] sm:$0xff]
    %v4451 = vld [vmem:[%s4442 + $0x40] sm:$0xff]
    %v4452 = vld [vmem:[%s4442 + $0x48] sm:$0xff]
    %v4453 = vld [vmem:[%s4442 + $0x50] sm:$0xff]
    %v4454 = vld [vmem:[%s4442 + $0x58] sm:$0xff]
    %v4455 = vld [vmem:[%s4442 + $0x60] sm:$0xff]
    %v4456 = vld [vmem:[%s4442 + $0x68] sm:$0xff]
    %v4457 = vld [vmem:[%s4442 + $0x70] sm:$0xff]
    %v4458 = vld [vmem:[%s4442 + $0x78] sm:$0xff]
    %v4461 = vrot.slane %v4441, 7
    %v4462 = vsel %vm4142, %v4461, %v4440
    %4464 = vmatpush.msra.mxu0 %v4458
    %4465 = vmatpush.msra.mxu0 %v4457
    %4466 = vmatpush.msra.mxu0 %v4456
    %4467 = vmatpush.msra.mxu0 %v4455
    %4468 = vmatpush.msra.mxu0 %v4454
    %4469 = vmatpush.msra.mxu0 %v4453
    %4470 = vmatpush.msra.mxu0 %v4452
    %4471 = vmatpush.msra.mxu0 %v4451
    %4472 = vmatpush.msra.mxu0 %v4450
    %4473 = vmatpush.msra.mxu0 %v4449
    %4474 = vmatpush.msra.mxu0 %v4448
    %4475 = vmatpush.msra.mxu0 %v4447
    %4476 = vmatpush.msra.mxu0 %v4446
    %4477 = vmatpush.msra.mxu0 %v4445
    %4478 = vmatpush.msra.mxu0 %v4444
    %4479 = vmatpush.msra.mxu0 %v4443
    %4480 = vmatmul.f32.gmra.mxu0 %v4462
    %v4481 = vpop.f32.mrf.mxu0
    %v4482 = vadd.f32 0.0, %v4481
    %4483 = vdwg.mxu0
    %v4484 = vadd.f32 %v4435, %v4482
    %s4485 = scalar_lea.vmem [#allocation4], 16
    %v4486 = vld [vmem:[%s4485] sm:$0x1]
    %v4487 = vld [vmem:[%s4485 + $0x20] sm:$0x1]
    %v4488 = vld [vmem:[%s4485 + $0x1] sm:$0x1]
    %v4489 = vld [vmem:[%s4485 + $0x21] sm:$0x1]
    %v4490 = vmax.f32 %v4486, %v4488
    %v4491 = vmax.f32 %v4487, %v4489
    %s4492 = scalar_lea.vmem %s5, 1024
    %v4493 = vld [vmem:[%s4492] sm:$0xff]
    %v4494 = vld [vmem:[%s4492 + $0x8] sm:$0xff]
    %v4495 = vld [vmem:[%s4492 + $0x10] sm:$0xff]
    %v4496 = vld [vmem:[%s4492 + $0x18] sm:$0xff]
    %v4497 = vld [vmem:[%s4492 + $0x20] sm:$0xff]
    %v4498 = vld [vmem:[%s4492 + $0x28] sm:$0xff]
    %v4499 = vld [vmem:[%s4492 + $0x30] sm:$0xff]
    %v4500 = vld [vmem:[%s4492 + $0x38] sm:$0xff]
    %v4501 = vld [vmem:[%s4492 + $0x40] sm:$0xff]
    %v4502 = vld [vmem:[%s4492 + $0x48] sm:$0xff]
    %v4503 = vld [vmem:[%s4492 + $0x50] sm:$0xff]
    %v4504 = vld [vmem:[%s4492 + $0x58] sm:$0xff]
    %v4505 = vld [vmem:[%s4492 + $0x60] sm:$0xff]
    %v4506 = vld [vmem:[%s4492 + $0x68] sm:$0xff]
    %v4507 = vld [vmem:[%s4492 + $0x70] sm:$0xff]
    %v4508 = vld [vmem:[%s4492 + $0x78] sm:$0xff]
    %v4511 = vrot.slane %v4491, 7
    %v4512 = vsel %vm4142, %v4511, %v4490
    %4514 = vmatpush.msra.mxu0 %v4508
    %4515 = vmatpush.msra.mxu0 %v4507
    %4516 = vmatpush.msra.mxu0 %v4506
    %4517 = vmatpush.msra.mxu0 %v4505
    %4518 = vmatpush.msra.mxu0 %v4504
    %4519 = vmatpush.msra.mxu0 %v4503
    %4520 = vmatpush.msra.mxu0 %v4502
    %4521 = vmatpush.msra.mxu0 %v4501
    %4522 = vmatpush.msra.mxu0 %v4500
    %4523 = vmatpush.msra.mxu0 %v4499
    %4524 = vmatpush.msra.mxu0 %v4498
    %4525 = vmatpush.msra.mxu0 %v4497
    %4526 = vmatpush.msra.mxu0 %v4496
    %4527 = vmatpush.msra.mxu0 %v4495
    %4528 = vmatpush.msra.mxu0 %v4494
    %4529 = vmatpush.msra.mxu0 %v4493
    %4530 = vmatmul.f32.gmra.mxu0 %v4512
    %v4531 = vpop.f32.mrf.mxu0
    %v4532 = vadd.f32 0.0, %v4531
    %4533 = vdwg.mxu0
    %v4534 = vadd.f32 %v4484, %v4532
    %v4535 = vld [vmem:[%s4485 + $0x2] sm:$0x1]
    %v4536 = vld [vmem:[%s4485 + $0x22] sm:$0x1]
    %v4537 = vld [vmem:[%s4485 + $0x3] sm:$0x1]
    %v4538 = vld [vmem:[%s4485 + $0x23] sm:$0x1]
    %v4539 = vmax.f32 %v4535, %v4537
    %v4540 = vmax.f32 %v4536, %v4538
    %s4541 = scalar_lea.vmem %s5, 1152
    %v4542 = vld [vmem:[%s4541] sm:$0xff]
    %v4543 = vld [vmem:[%s4541 + $0x8] sm:$0xff]
    %v4544 = vld [vmem:[%s4541 + $0x10] sm:$0xff]
    %v4545 = vld [vmem:[%s4541 + $0x18] sm:$0xff]
    %v4546 = vld [vmem:[%s4541 + $0x20] sm:$0xff]
    %v4547 = vld [vmem:[%s4541 + $0x28] sm:$0xff]
    %v4548 = vld [vmem:[%s4541 + $0x30] sm:$0xff]
    %v4549 = vld [vmem:[%s4541 + $0x38] sm:$0xff]
    %v4550 = vld [vmem:[%s4541 + $0x40] sm:$0xff]
    %v4551 = vld [vmem:[%s4541 + $0x48] sm:$0xff]
    %v4552 = vld [vmem:[%s4541 + $0x50] sm:$0xff]
    %v4553 = vld [vmem:[%s4541 + $0x58] sm:$0xff]
    %v4554 = vld [vmem:[%s4541 + $0x60] sm:$0xff]
    %v4555 = vld [vmem:[%s4541 + $0x68] sm:$0xff]
    %v4556 = vld [vmem:[%s4541 + $0x70] sm:$0xff]
    %v4557 = vld [vmem:[%s4541 + $0x78] sm:$0xff]
    %v4560 = vrot.slane %v4540, 7
    %v4561 = vsel %vm4142, %v4560, %v4539
    %4563 = vmatpush.msra.mxu0 %v4557
    %4564 = vmatpush.msra.mxu0 %v4556
    %4565 = vmatpush.msra.mxu0 %v4555
    %4566 = vmatpush.msra.mxu0 %v4554
    %4567 = vmatpush.msra.mxu0 %v4553
    %4568 = vmatpush.msra.mxu0 %v4552
    %4569 = vmatpush.msra.mxu0 %v4551
    %4570 = vmatpush.msra.mxu0 %v4550
    %4571 = vmatpush.msra.mxu0 %v4549
    %4572 = vmatpush.msra.mxu0 %v4548
    %4573 = vmatpush.msra.mxu0 %v4547
    %4574 = vmatpush.msra.mxu0 %v4546
    %4575 = vmatpush.msra.mxu0 %v4545
    %4576 = vmatpush.msra.mxu0 %v4544
    %4577 = vmatpush.msra.mxu0 %v4543
    %4578 = vmatpush.msra.mxu0 %v4542
    %4579 = vmatmul.f32.gmra.mxu0 %v4561
    %v4580 = vpop.f32.mrf.mxu0
    %v4581 = vadd.f32 0.0, %v4580
    %4582 = vdwg.mxu0
    %v4583 = vadd.f32 %v4534, %v4581
    %v4584 = vld [vmem:[%s4485 + $0x4] sm:$0x1]
    %v4585 = vld [vmem:[%s4485 + $0x24] sm:$0x1]
    %v4586 = vld [vmem:[%s4485 + $0x5] sm:$0x1]
    %v4587 = vld [vmem:[%s4485 + $0x25] sm:$0x1]
    %v4588 = vmax.f32 %v4584, %v4586
    %v4589 = vmax.f32 %v4585, %v4587
    %s4590 = scalar_lea.vmem %s5, 1280
    %v4591 = vld [vmem:[%s4590] sm:$0xff]
    %v4592 = vld [vmem:[%s4590 + $0x8] sm:$0xff]
    %v4593 = vld [vmem:[%s4590 + $0x10] sm:$0xff]
    %v4594 = vld [vmem:[%s4590 + $0x18] sm:$0xff]
    %v4595 = vld [vmem:[%s4590 + $0x20] sm:$0xff]
    %v4596 = vld [vmem:[%s4590 + $0x28] sm:$0xff]
    %v4597 = vld [vmem:[%s4590 + $0x30] sm:$0xff]
    %v4598 = vld [vmem:[%s4590 + $0x38] sm:$0xff]
    %v4599 = vld [vmem:[%s4590 + $0x40] sm:$0xff]
    %v4600 = vld [vmem:[%s4590 + $0x48] sm:$0xff]
    %v4601 = vld [vmem:[%s4590 + $0x50] sm:$0xff]
    %v4602 = vld [vmem:[%s4590 + $0x58] sm:$0xff]
    %v4603 = vld [vmem:[%s4590 + $0x60] sm:$0xff]
    %v4604 = vld [vmem:[%s4590 + $0x68] sm:$0xff]
    %v4605 = vld [vmem:[%s4590 + $0x70] sm:$0xff]
    %v4606 = vld [vmem:[%s4590 + $0x78] sm:$0xff]
    %v4609 = vrot.slane %v4589, 7
    %v4610 = vsel %vm4142, %v4609, %v4588
    %4612 = vmatpush.msra.mxu0 %v4606
    %4613 = vmatpush.msra.mxu0 %v4605
    %4614 = vmatpush.msra.mxu0 %v4604
    %4615 = vmatpush.msra.mxu0 %v4603
    %4616 = vmatpush.msra.mxu0 %v4602
    %4617 = vmatpush.msra.mxu0 %v4601
    %4618 = vmatpush.msra.mxu0 %v4600
    %4619 = vmatpush.msra.mxu0 %v4599
    %4620 = vmatpush.msra.mxu0 %v4598
    %4621 = vmatpush.msra.mxu0 %v4597
    %4622 = vmatpush.msra.mxu0 %v4596
    %4623 = vmatpush.msra.mxu0 %v4595
    %4624 = vmatpush.msra.mxu0 %v4594
    %4625 = vmatpush.msra.mxu0 %v4593
    %4626 = vmatpush.msra.mxu0 %v4592
    %4627 = vmatpush.msra.mxu0 %v4591
    %4628 = vmatmul.f32.gmra.mxu0 %v4610
    %v4629 = vpop.f32.mrf.mxu0
    %v4630 = vadd.f32 0.0, %v4629
    %4631 = vdwg.mxu0
    %v4632 = vadd.f32 %v4583, %v4630
    %v4633 = vld [vmem:[%s4485 + $0x6] sm:$0x1]
    %v4634 = vld [vmem:[%s4485 + $0x26] sm:$0x1]
    %v4635 = vld [vmem:[%s4485 + $0x7] sm:$0x1]
    %v4636 = vld [vmem:[%s4485 + $0x27] sm:$0x1]
    %v4637 = vmax.f32 %v4633, %v4635
    %v4638 = vmax.f32 %v4634, %v4636
    %s4639 = scalar_lea.vmem %s5, 1408
    %v4640 = vld [vmem:[%s4639] sm:$0xff]
    %v4641 = vld [vmem:[%s4639 + $0x8] sm:$0xff]
    %v4642 = vld [vmem:[%s4639 + $0x10] sm:$0xff]
    %v4643 = vld [vmem:[%s4639 + $0x18] sm:$0xff]
    %v4644 = vld [vmem:[%s4639 + $0x20] sm:$0xff]
    %v4645 = vld [vmem:[%s4639 + $0x28] sm:$0xff]
    %v4646 = vld [vmem:[%s4639 + $0x30] sm:$0xff]
    %v4647 = vld [vmem:[%s4639 + $0x38] sm:$0xff]
    %v4648 = vld [vmem:[%s4639 + $0x40] sm:$0xff]
    %v4649 = vld [vmem:[%s4639 + $0x48] sm:$0xff]
    %v4650 = vld [vmem:[%s4639 + $0x50] sm:$0xff]
    %v4651 = vld [vmem:[%s4639 + $0x58] sm:$0xff]
    %v4652 = vld [vmem:[%s4639 + $0x60] sm:$0xff]
    %v4653 = vld [vmem:[%s4639 + $0x68] sm:$0xff]
    %v4654 = vld [vmem:[%s4639 + $0x70] sm:$0xff]
    %v4655 = vld [vmem:[%s4639 + $0x78] sm:$0xff]
    %v4658 = vrot.slane %v4638, 7
    %v4659 = vsel %vm4142, %v4658, %v4637
    %4661 = vmatpush.msra.mxu0 %v4655
    %4662 = vmatpush.msra.mxu0 %v4654
    %4663 = vmatpush.msra.mxu0 %v4653
    %4664 = vmatpush.msra.mxu0 %v4652
    %4665 = vmatpush.msra.mxu0 %v4651
    %4666 = vmatpush.msra.mxu0 %v4650
    %4667 = vmatpush.msra.mxu0 %v4649
    %4668 = vmatpush.msra.mxu0 %v4648
    %4669 = vmatpush.msra.mxu0 %v4647
    %4670 = vmatpush.msra.mxu0 %v4646
    %4671 = vmatpush.msra.mxu0 %v4645
    %4672 = vmatpush.msra.mxu0 %v4644
    %4673 = vmatpush.msra.mxu0 %v4643
    %4674 = vmatpush.msra.mxu0 %v4642
    %4675 = vmatpush.msra.mxu0 %v4641
    %4676 = vmatpush.msra.mxu0 %v4640
    %4677 = vmatmul.f32.gmra.mxu0 %v4659
    %v4678 = vpop.f32.mrf.mxu0
    %v4679 = vadd.f32 0.0, %v4678
    %4680 = vdwg.mxu0
    %v4681 = vadd.f32 %v4632, %v4679
    %s4682 = scalar_lea.vmem [#allocation4], 24
    %v4683 = vld [vmem:[%s4682] sm:$0x1]
    %v4684 = vld [vmem:[%s4682 + $0x20] sm:$0x1]
    %v4685 = vld [vmem:[%s4682 + $0x1] sm:$0x1]
    %v4686 = vld [vmem:[%s4682 + $0x21] sm:$0x1]
    %v4687 = vmax.f32 %v4683, %v4685
    %v4688 = vmax.f32 %v4684, %v4686
    %s4689 = scalar_lea.vmem %s5, 1536
    %v4690 = vld [vmem:[%s4689] sm:$0xff]
    %v4691 = vld [vmem:[%s4689 + $0x8] sm:$0xff]
    %v4692 = vld [vmem:[%s4689 + $0x10] sm:$0xff]
    %v4693 = vld [vmem:[%s4689 + $0x18] sm:$0xff]
    %v4694 = vld [vmem:[%s4689 + $0x20] sm:$0xff]
    %v4695 = vld [vmem:[%s4689 + $0x28] sm:$0xff]
    %v4696 = vld [vmem:[%s4689 + $0x30] sm:$0xff]
    %v4697 = vld [vmem:[%s4689 + $0x38] sm:$0xff]
    %v4698 = vld [vmem:[%s4689 + $0x40] sm:$0xff]
    %v4699 = vld [vmem:[%s4689 + $0x48] sm:$0xff]
    %v4700 = vld [vmem:[%s4689 + $0x50] sm:$0xff]
    %v4701 = vld [vmem:[%s4689 + $0x58] sm:$0xff]
    %v4702 = vld [vmem:[%s4689 + $0x60] sm:$0xff]
    %v4703 = vld [vmem:[%s4689 + $0x68] sm:$0xff]
    %v4704 = vld [vmem:[%s4689 + $0x70] sm:$0xff]
    %v4705 = vld [vmem:[%s4689 + $0x78] sm:$0xff]
    %v4708 = vrot.slane %v4688, 7
    %v4709 = vsel %vm4142, %v4708, %v4687
    %4711 = vmatpush.msra.mxu0 %v4705
    %4712 = vmatpush.msra.mxu0 %v4704
    %4713 = vmatpush.msra.mxu0 %v4703
    %4714 = vmatpush.msra.mxu0 %v4702
    %4715 = vmatpush.msra.mxu0 %v4701
    %4716 = vmatpush.msra.mxu0 %v4700
    %4717 = vmatpush.msra.mxu0 %v4699
    %4718 = vmatpush.msra.mxu0 %v4698
    %4719 = vmatpush.msra.mxu0 %v4697
    %4720 = vmatpush.msra.mxu0 %v4696
    %4721 = vmatpush.msra.mxu0 %v4695
    %4722 = vmatpush.msra.mxu0 %v4694
    %4723 = vmatpush.msra.mxu0 %v4693
    %4724 = vmatpush.msra.mxu0 %v4692
    %4725 = vmatpush.msra.mxu0 %v4691
    %4726 = vmatpush.msra.mxu0 %v4690
    %4727 = vmatmul.f32.gmra.mxu0 %v4709
    %v4728 = vpop.f32.mrf.mxu0
    %v4729 = vadd.f32 0.0, %v4728
    %4730 = vdwg.mxu0
    %v4731 = vadd.f32 %v4681, %v4729
    %v4732 = vld [vmem:[%s4682 + $0x2] sm:$0x1]
    %v4733 = vld [vmem:[%s4682 + $0x22] sm:$0x1]
    %v4734 = vld [vmem:[%s4682 + $0x3] sm:$0x1]
    %v4735 = vld [vmem:[%s4682 + $0x23] sm:$0x1]
    %v4736 = vmax.f32 %v4732, %v4734
    %v4737 = vmax.f32 %v4733, %v4735
    %s4738 = scalar_lea.vmem %s5, 1664
    %v4739 = vld [vmem:[%s4738] sm:$0xff]
    %v4740 = vld [vmem:[%s4738 + $0x8] sm:$0xff]
    %v4741 = vld [vmem:[%s4738 + $0x10] sm:$0xff]
    %v4742 = vld [vmem:[%s4738 + $0x18] sm:$0xff]
    %v4743 = vld [vmem:[%s4738 + $0x20] sm:$0xff]
    %v4744 = vld [vmem:[%s4738 + $0x28] sm:$0xff]
    %v4745 = vld [vmem:[%s4738 + $0x30] sm:$0xff]
    %v4746 = vld [vmem:[%s4738 + $0x38] sm:$0xff]
    %v4747 = vld [vmem:[%s4738 + $0x40] sm:$0xff]
    %v4748 = vld [vmem:[%s4738 + $0x48] sm:$0xff]
    %v4749 = vld [vmem:[%s4738 + $0x50] sm:$0xff]
    %v4750 = vld [vmem:[%s4738 + $0x58] sm:$0xff]
    %v4751 = vld [vmem:[%s4738 + $0x60] sm:$0xff]
    %v4752 = vld [vmem:[%s4738 + $0x68] sm:$0xff]
    %v4753 = vld [vmem:[%s4738 + $0x70] sm:$0xff]
    %v4754 = vld [vmem:[%s4738 + $0x78] sm:$0xff]
    %v4757 = vrot.slane %v4737, 7
    %v4758 = vsel %vm4142, %v4757, %v4736
    %4760 = vmatpush.msra.mxu0 %v4754
    %4761 = vmatpush.msra.mxu0 %v4753
    %4762 = vmatpush.msra.mxu0 %v4752
    %4763 = vmatpush.msra.mxu0 %v4751
    %4764 = vmatpush.msra.mxu0 %v4750
    %4765 = vmatpush.msra.mxu0 %v4749
    %4766 = vmatpush.msra.mxu0 %v4748
    %4767 = vmatpush.msra.mxu0 %v4747
    %4768 = vmatpush.msra.mxu0 %v4746
    %4769 = vmatpush.msra.mxu0 %v4745
    %4770 = vmatpush.msra.mxu0 %v4744
    %4771 = vmatpush.msra.mxu0 %v4743
    %4772 = vmatpush.msra.mxu0 %v4742
    %4773 = vmatpush.msra.mxu0 %v4741
    %4774 = vmatpush.msra.mxu0 %v4740
    %4775 = vmatpush.msra.mxu0 %v4739
    %4776 = vmatmul.f32.gmra.mxu0 %v4758
    %v4777 = vpop.f32.mrf.mxu0
    %v4778 = vadd.f32 0.0, %v4777
    %4779 = vdwg.mxu0
    %v4780 = vadd.f32 %v4731, %v4778
    %v4781 = vld [vmem:[%s4682 + $0x4] sm:$0x1]
    %v4782 = vld [vmem:[%s4682 + $0x24] sm:$0x1]
    %v4783 = vld [vmem:[%s4682 + $0x5] sm:$0x1]
    %v4784 = vld [vmem:[%s4682 + $0x25] sm:$0x1]
    %v4785 = vmax.f32 %v4781, %v4783
    %v4786 = vmax.f32 %v4782, %v4784
    %s4787 = scalar_lea.vmem %s5, 1792
    %v4788 = vld [vmem:[%s4787] sm:$0xff]
    %v4789 = vld [vmem:[%s4787 + $0x8] sm:$0xff]
    %v4790 = vld [vmem:[%s4787 + $0x10] sm:$0xff]
    %v4791 = vld [vmem:[%s4787 + $0x18] sm:$0xff]
    %v4792 = vld [vmem:[%s4787 + $0x20] sm:$0xff]
    %v4793 = vld [vmem:[%s4787 + $0x28] sm:$0xff]
    %v4794 = vld [vmem:[%s4787 + $0x30] sm:$0xff]
    %v4795 = vld [vmem:[%s4787 + $0x38] sm:$0xff]
    %v4796 = vld [vmem:[%s4787 + $0x40] sm:$0xff]
    %v4797 = vld [vmem:[%s4787 + $0x48] sm:$0xff]
    %v4798 = vld [vmem:[%s4787 + $0x50] sm:$0xff]
    %v4799 = vld [vmem:[%s4787 + $0x58] sm:$0xff]
    %v4800 = vld [vmem:[%s4787 + $0x60] sm:$0xff]
    %v4801 = vld [vmem:[%s4787 + $0x68] sm:$0xff]
    %v4802 = vld [vmem:[%s4787 + $0x70] sm:$0xff]
    %v4803 = vld [vmem:[%s4787 + $0x78] sm:$0xff]
    %v4806 = vrot.slane %v4786, 7
    %v4807 = vsel %vm4142, %v4806, %v4785
    %4809 = vmatpush.msra.mxu0 %v4803
    %4810 = vmatpush.msra.mxu0 %v4802
    %4811 = vmatpush.msra.mxu0 %v4801
    %4812 = vmatpush.msra.mxu0 %v4800
    %4813 = vmatpush.msra.mxu0 %v4799
    %4814 = vmatpush.msra.mxu0 %v4798
    %4815 = vmatpush.msra.mxu0 %v4797
    %4816 = vmatpush.msra.mxu0 %v4796
    %4817 = vmatpush.msra.mxu0 %v4795
    %4818 = vmatpush.msra.mxu0 %v4794
    %4819 = vmatpush.msra.mxu0 %v4793
    %4820 = vmatpush.msra.mxu0 %v4792
    %4821 = vmatpush.msra.mxu0 %v4791
    %4822 = vmatpush.msra.mxu0 %v4790
    %4823 = vmatpush.msra.mxu0 %v4789
    %4824 = vmatpush.msra.mxu0 %v4788
    %4825 = vmatmul.f32.gmra.mxu0 %v4807
    %v4826 = vpop.f32.mrf.mxu0
    %v4827 = vadd.f32 0.0, %v4826
    %4828 = vdwg.mxu0
    %v4829 = vadd.f32 %v4780, %v4827
    %v4830 = vld [vmem:[%s4682 + $0x6] sm:$0x1]
    %v4831 = vld [vmem:[%s4682 + $0x26] sm:$0x1]
    %v4832 = vld [vmem:[%s4682 + $0x7] sm:$0x1]
    %v4833 = vld [vmem:[%s4682 + $0x27] sm:$0x1]
    %v4834 = vmax.f32 %v4830, %v4832
    %v4835 = vmax.f32 %v4831, %v4833
    %s4836 = scalar_lea.vmem %s5, 1920
    %v4837 = vld [vmem:[%s4836] sm:$0xff]
    %v4838 = vld [vmem:[%s4836 + $0x8] sm:$0xff]
    %v4839 = vld [vmem:[%s4836 + $0x10] sm:$0xff]
    %v4840 = vld [vmem:[%s4836 + $0x18] sm:$0xff]
    %v4841 = vld [vmem:[%s4836 + $0x20] sm:$0xff]
    %v4842 = vld [vmem:[%s4836 + $0x28] sm:$0xff]
    %v4843 = vld [vmem:[%s4836 + $0x30] sm:$0xff]
    %v4844 = vld [vmem:[%s4836 + $0x38] sm:$0xff]
    %v4845 = vld [vmem:[%s4836 + $0x40] sm:$0xff]
    %v4846 = vld [vmem:[%s4836 + $0x48] sm:$0xff]
    %v4847 = vld [vmem:[%s4836 + $0x50] sm:$0xff]
    %v4848 = vld [vmem:[%s4836 + $0x58] sm:$0xff]
    %v4849 = vld [vmem:[%s4836 + $0x60] sm:$0xff]
    %v4850 = vld [vmem:[%s4836 + $0x68] sm:$0xff]
    %v4851 = vld [vmem:[%s4836 + $0x70] sm:$0xff]
    %v4852 = vld [vmem:[%s4836 + $0x78] sm:$0xff]
    %v4855 = vrot.slane %v4835, 7
    %v4856 = vsel %vm4142, %v4855, %v4834
    %4858 = vmatpush.msra.mxu0 %v4852
    %4859 = vmatpush.msra.mxu0 %v4851
    %4860 = vmatpush.msra.mxu0 %v4850
    %4861 = vmatpush.msra.mxu0 %v4849
    %4862 = vmatpush.msra.mxu0 %v4848
    %4863 = vmatpush.msra.mxu0 %v4847
    %4864 = vmatpush.msra.mxu0 %v4846
    %4865 = vmatpush.msra.mxu0 %v4845
    %4866 = vmatpush.msra.mxu0 %v4844
    %4867 = vmatpush.msra.mxu0 %v4843
    %4868 = vmatpush.msra.mxu0 %v4842
    %4869 = vmatpush.msra.mxu0 %v4841
    %4870 = vmatpush.msra.mxu0 %v4840
    %4871 = vmatpush.msra.mxu0 %v4839
    %4872 = vmatpush.msra.mxu0 %v4838
    %4873 = vmatpush.msra.mxu0 %v4837
    %4874 = vmatmul.f32.gmra.mxu0 %v4856
    %v4875 = vpop.f32.mrf.mxu0
    %v4876 = vadd.f32 0.0, %v4875
    %4877 = vdwg.mxu0
    %v4878 = vadd.f32 %v4829, %v4876
    %v4879 = vld [vmem:[%s6] sm:$0x1]
    %v4881 = vperm.slane %v4879, 0
    %v4883 = vadd.f32 %v4878, %v4881
    %v4884 = vmax.f32 %v4883, 0.0
    %v4885 = vld [vmem:[%s7] sm:$0xff]
    %v4886 = vld [vmem:[%s7 + $0x8] sm:$0xff]
    %v4887 = vld [vmem:[%s7 + $0x10] sm:$0xff]
    %v4888 = vld [vmem:[%s7 + $0x18] sm:$0xff]
    %v4889 = vld [vmem:[%s7 + $0x20] sm:$0xff]
    %v4890 = vld [vmem:[%s7 + $0x28] sm:$0xff]
    %v4891 = vld [vmem:[%s7 + $0x30] sm:$0xff]
    %v4892 = vld [vmem:[%s7 + $0x38] sm:$0xff]
    %v4893 = vld [vmem:[%s7 + $0x40] sm:$0xff]
    %v4894 = vld [vmem:[%s7 + $0x48] sm:$0xff]
    %v4895 = vld [vmem:[%s7 + $0x50] sm:$0xff]
    %v4896 = vld [vmem:[%s7 + $0x58] sm:$0xff]
    %v4897 = vld [vmem:[%s7 + $0x60] sm:$0xff]
    %v4898 = vld [vmem:[%s7 + $0x68] sm:$0xff]
    %v4899 = vld [vmem:[%s7 + $0x70] sm:$0xff]
    %v4900 = vld [vmem:[%s7 + $0x78] sm:$0xff]
    %v4901 = vld [vmem:[%s8] sm:$0x1]
    %v4903 = vperm.slane %v4901, 0
    %4905 = vmatpush.msra.mxu0 %v4900
    %4906 = vmatpush.msra.mxu0 %v4899
    %4907 = vmatpush.msra.mxu0 %v4898
    %4908 = vmatpush.msra.mxu0 %v4897
    %4909 = vmatpush.msra.mxu0 %v4896
    %4910 = vmatpush.msra.mxu0 %v4895
    %4911 = vmatpush.msra.mxu0 %v4894
    %4912 = vmatpush.msra.mxu0 %v4893
    %4913 = vmatpush.msra.mxu0 %v4892
    %4914 = vmatpush.msra.mxu0 %v4891
    %4915 = vmatpush.msra.mxu0 %v4890
    %4916 = vmatpush.msra.mxu0 %v4889
    %4917 = vmatpush.msra.mxu0 %v4888
    %4918 = vmatpush.msra.mxu0 %v4887
    %4919 = vmatpush.msra.mxu0 %v4886
    %4920 = vmatpush.msra.mxu0 %v4885
    %4921 = vmatmul.f32.gmra.mxu0 %v4884
    %v4922 = vpop.f32.mrf.mxu0
    %v4923 = vadd.f32 %v4903, %v4922
    %4924 = vdwg.mxu0
    %v4925 = vlaneseq
    %v4926 = vand.u32 %v4925, 127
    %vm4927 = vcmp.lt.s32.totalorder %v4926, 10
    %v4928 = vsel %vm4927, %v4923, -1e+30
    %vm4929 = vcmask 1041408
    %v4930 = vsel %vm4929, %v4928, -inf
    %4931 = vmax.xlane.f32.xlu0 %v4930
    %v4932 = vpop.xlane.xlu0 %4931
    %v4933 = vsub.f32 %v4928, %v4932
    %v4934 = vmul.f32 %v4933, 1.442695
    %v4935 = vpow.pop %v4934
    %v4936 = vsel %vm4929, %v4935, 0.0
    %4937 = vadd.xlane.f32.xlu0 %v4936
    %v4938 = vpop.xlane.xlu0 %4937
    %v4939 = vlog2.pop %v4938
    %v4940 = vmul.f32 %v4939, 0.6931472
    %v4941 = vsub.f32 %v4933, %v4940
    %4942 = vst [vmem:[#allocation5] sm:$0x3] %v4941
    // Predicated region
    $region38: #{net_forward.1} parent=1 // pred_check
      _
    $region39: #{net_forward.1} parent=1 // pred_check_branch
      %4944 = sbr.rel (0) target = $region41
    $region40: #{net_forward.1} parent=1 // pred_region
      %4946 = vsyncadd [#allocation6], 0
      %s4948 = sshll.u32 [#allocation5], 4
      %s4949 = int_to_ptr.vmem [resolvable:$true] %s4948
      %s4950 = sshll.u32 %s9, 4
      %s4951 = int_to_ptr.hbm [resolvable:$true] %s4950
      %4953 = dma.vmem_to_hbm [thread:$0]  %s4949, 32, %s4951, [#allocation6]
    $region41: #{net_forward.1} parent=1 // pred_fallthru
      _
    // Predicated region
    $region42: #{net_forward.1} parent=1 // pred_check
      _
    $region43: #{net_forward.1} parent=1 // pred_check_branch
      %4955 = sbr.rel (0) target = $region45
    $region44: #{net_forward.1} parent=1 // pred_region
      %4957 = dma.done [#allocation6], 32
    $region45: #{net_forward.1} parent=1 // pred_fallthru
      _
    %4958 = vsyncpa [#allocation6], 1

</llo_original>
